<compile_context>
chip_gen: v7x
topology: tpu7x:2x2x1
jax: 0.10.0
libtpu: 0.0.40
codegen_flags: <defaults>
</compile_context>

<pallas_src>
import functools

import jax
import jax.numpy as jnp
from jax import lax
from jax.experimental import pallas as pl
from jax.experimental.pallas import tpu as pltpu

LANE = 128  # padded channel width (TPU lane count)

# Exact layer hyperparameters of the original module: (cin, cout, kernel, stride)
ORIGINAL_LAYERS = [
    (3, 64, 16, 16),
    (64, 64, 16, 8),
    (64, 128, 16, 8),
    (128, 64, 16, 8),
    (64, 64, 16, 8),
    (64, 128, 16, 8),
    (128, 64, 16, 8),
]

# TODO(synk): with kernel_size=16 / stride=8 / padding=0 the 7-conv chain is
# geometrically infeasible for any tractable input (the reference
# x1=(1,3,512,512) already fails at conv3: conv2's output is 3x3 < 16).  The
# runnable demo keeps the exact channel topology and valid-padding strided-conv
# + sigmoid semantics but scales kernel/stride (16->2, stride 16->2, 8->1).
DEMO_LAYERS = [
    (3, 64, 2, 2),
    (64, 64, 2, 1),
    (64, 128, 2, 1),
    (128, 64, 2, 1),
    (64, 64, 2, 1),
    (64, 128, 2, 1),
    (128, 64, 2, 1),
]


# ----------------------------------------------------------------------------
# Fused 7-layer Pallas kernel (one grid step per batch element)
# ----------------------------------------------------------------------------
def _fused_chain_kernel(p_ref, w1_ref, b1_ref, w_ref, b_ref, o_ref,
                        buf_a, buf_b, slab, *, grid_side, k, n_layers,
                        rows, buf_rows):
    # Halo-only zeroing: rows [0:rows) are fully rewritten by every layer, so
    # only the halo rows (read by shifted taps past the valid grid) need to be
    # zero.  Done every grid step -> safe under megacore grid sharding.
    halo = buf_rows - rows
    zero_halo = jnp.zeros((halo, LANE), jnp.bfloat16)
    buf_a[rows:buf_rows, :] = zero_halo
    buf_b[rows:buf_rows, :] = zero_halo

    # ---- layer 1: pre-im2col'ed patches -> single MXU matmul ---------------
    y = jnp.dot(p_ref[...], w1_ref[...], preferred_element_type=jnp.float32)
    buf_a[0:rows, :] = (y + b1_ref[...]).astype(jnp.bfloat16)

    # ---- layers 2..n: concatenated-K im2col slab -> ONE matmul per layer ---
    src, dst = buf_a, buf_b
    for layer in range(n_layers - 1):
        # Assemble (rows, k*k*LANE) bf16 slab: one shifted copy per tap.
        for kh in range(k):
            for kw in range(k):
                tap = kh * k + kw
                start = kh * grid_side + kw          # 0, 1, gs, gs+1
                slab[:, tap * LANE:(tap + 1) * LANE] = src[start:start + rows, :]
        acc = jnp.dot(slab[...], w_ref[layer],
                      preferred_element_type=jnp.float32)
        out = acc + b_ref[layer]                      # f32 bias epilogue
        if layer == n_layers - 2:
            o_ref[...] = jax.nn.sigmoid(out)          # fused final activation
        else:
            dst[0:rows, :] = out.astype(jnp.bfloat16)
            src, dst = dst, src


# ----------------------------------------------------------------------------
# Host-side packing + the fused forward pass
# ----------------------------------------------------------------------------
def _pack_first_layer(w, b, k1):
    cout = w.shape[0]
    w_mat = jnp.transpose(w, (2, 3, 1, 0)).reshape(k1, cout)   # (kh,kw,cin)->cout
    w_pad = jnp.zeros((LANE, LANE), jnp.bfloat16).at[:k1, :cout].set(
        w_mat.astype(jnp.bfloat16))
    b_pad = jnp.zeros((1, LANE), jnp.float32).at[0, :cout].set(b)
    return w_pad, b_pad


def _pack_inner_layer(w, b, k):
    """Weights as a (k*k*LANE, LANE) slab matching the in-kernel im2col layout."""
    cout, cin = w.shape[0], w.shape[1]
    w_t = jnp.transpose(w, (2, 3, 1, 0))                       # (kh,kw,cin,cout)
    w_pad = jnp.zeros((k, k, LANE, LANE), jnp.bfloat16)
    w_pad = w_pad.at[:, :, :cin, :cout].set(w_t.astype(jnp.bfloat16))
    w_mat = w_pad.reshape(k * k * LANE, LANE)
    b_pad = jnp.zeros((1, LANE), jnp.float32).at[0, :cout].set(b)
    return w_mat, b_pad


def forward(layers, params, x_nchw):
    """v1..v7 = conv_i(prev); v8 = sigmoid(v7). Whole chain in one pallas_call."""
    n_layers = len(layers)
    cin0, _, k, s0 = layers[0]
    assert s0 == k, "fused kernel assumes a non-overlapping first conv"
    for (ci, co, kk, s) in layers[1:]:
        assert kk == k and s == 1 and ci <= LANE and co <= LANE

    B, C, H, W = x_nchw.shape
    assert C == cin0 and H == W
    grid_side = (H - k) // k + 1
    rows = grid_side * grid_side
    assert rows % 8 == 0
    k1 = k * k * cin0
    assert k1 <= LANE

    # ---- layer-1 im2col: pure reshape/transpose (stride == kernel) ---------
    x = jnp.transpose(x_nchw, (0, 2, 3, 1))                     # NHWC (once)
    x = x.reshape(B, grid_side, k, grid_side, k, cin0)
    x = jnp.transpose(x, (0, 1, 3, 2, 4, 5)).reshape(B, rows, k1)
    patches = jnp.zeros((B, rows, LANE), jnp.bfloat16)
    patches = patches.at[:, :, :k1].set(x.astype(jnp.bfloat16))

    # ---- pack weights once: concatenated-K layout, zero-padded to 128 ------
    w1p, b1p = _pack_first_layer(params[0][0], params[0][1], k1)
    inner = [_pack_inner_layer(w, b, k) for (w, b) in params[1:]]
    w_all = jnp.stack([w for (w, _) in inner])   # (L-1, k*k*128, 128) bf16
    b_all = jnp.stack([b for (_, b) in inner])   # (L-1, 1, 128) f32

    buf_rows = rows + (k - 1) * (grid_side + 1)
    buf_rows = ((buf_rows + 15) // 16) * 16      # bf16 sublane pack = 16
    ktot = k * k * LANE

    cost = pl.CostEstimate(
        flops=2 * B * rows * LANE * LANE + 2 * B * (n_layers - 1) * rows * ktot * LANE,
        transcendentals=B * rows * LANE,
        bytes_accessed=(patches.size * 2 + w1p.size * 2 + b1p.size * 4
                        + w_all.size * 2 + b_all.size * 4
                        + B * rows * LANE * 4),
    )

    kernel = functools.partial(_fused_chain_kernel, grid_side=grid_side,
                               k=k, n_layers=n_layers, rows=rows,
                               buf_rows=buf_rows)
    out = pl.pallas_call(
        kernel,
        out_shape=jax.ShapeDtypeStruct((B, rows, LANE), jnp.float32),
        grid_spec=pltpu.PrefetchScalarGridSpec(
            num_scalar_prefetch=0,
            grid=(B,),
            in_specs=[
                pl.BlockSpec((None, rows, LANE), lambda b: (b, 0, 0)),
                pl.BlockSpec((LANE, LANE), lambda b: (0, 0)),
                pl.BlockSpec((1, LANE), lambda b: (0, 0)),
                pl.BlockSpec(w_all.shape, lambda b: (0, 0, 0)),
                pl.BlockSpec(b_all.shape, lambda b: (0, 0, 0)),
            ],
            out_specs=pl.BlockSpec((None, rows, LANE), lambda b: (b, 0, 0)),
            scratch_shapes=[pltpu.VMEM((buf_rows, LANE), jnp.bfloat16),
                            pltpu.VMEM((buf_rows, LANE), jnp.bfloat16),
                            pltpu.VMEM((rows, ktot), jnp.bfloat16)],
        ),
        compiler_params=pltpu.CompilerParams(
            dimension_semantics=("parallel",)),
        cost_estimate=cost,
    )(patches, w1p, b1p, w_all, b_all)

    # ---- slice the valid window + single transpose back to NCHW ------------
    out_side = grid_side - (n_layers - 1) * (k - 1)
    cout_last = layers[-1][1]
    out = out.reshape(B, grid_side, grid_side, LANE)
    out = out[:, :out_side, :out_side, :cout_last]
    return jnp.transpose(out, (0, 3, 1, 2))


# ----------------------------------------------------------------------------
# Reference + init
# ----------------------------------------------------------------------------
def forward_ref(layers, params, x):
    n = len(layers)
    for i, ((w, b), (_, _, _, s)) in enumerate(zip(params, layers)):
        x = lax.conv_general_dilated(
            x, w, window_strides=(s, s), padding="VALID",
            dimension_numbers=("NCHW", "OIHW", "NCHW"))
        x = x + b[None, :, None, None]
        if i == n - 1:
            x = jax.nn.sigmoid(x)
    return x


def init_params(layers, key):
    """Deterministic PyTorch-style (uniform) init."""
    params = []
    for (cin, cout, k, _) in layers:
        key, kw_, kb_ = jax.random.split(key, 3)
        fan_in = cin * k * k
        bound = 1.0 / (fan_in ** 0.5)
        w = jax.random.uniform(kw_, (cout, cin, k, k), jnp.float32, -bound, bound)
        b = jax.random.uniform(kb_, (cout,), jnp.float32, -bound, bound)
        params.append((w, b))
    return params


if __name__ == "__main__":
    key = jax.random.PRNGKey(0)
    kx, kp = jax.random.split(key)

    x = jax.random.normal(kx, (2, 3, 32, 32), jnp.float32)   # NCHW
    params = init_params(DEMO_LAYERS, kp)

    fwd = jax.jit(functools.partial(forward, DEMO_LAYERS))
    out = jax.block_until_ready(fwd(params, x))

    # spatial chain on the 16x16 layer-1 grid: 16 -> 15 -> ... -> 10
    assert out.shape == (2, 64, 10, 10), out.shape

    ref = jax.block_until_ready(
        jax.jit(functools.partial(forward_ref, DEMO_LAYERS))(params, x))
    err = float(jnp.max(jnp.abs(out - ref)))
    assert err < 5e-3, err   # bf16 MXU inputs / activations, f32 accumulation
    print("KERNEL_OK")
</pallas_src>

<mosaic_0001>
module attributes {stable_mosaic.version = 11 : i64} {
  func.func @_fused_chain_kernel(%arg0: i32, %arg1: memref<1x256x128xbf16, #tpu.memory_space<vmem>>, %arg2: memref<128x128xbf16, #tpu.memory_space<vmem>>, %arg3: memref<1x128xf32, #tpu.memory_space<vmem>>, %arg4: memref<6x512x128xbf16, #tpu.memory_space<vmem>>, %arg5: memref<6x1x128xf32, #tpu.memory_space<vmem>>, %arg6: memref<1x256x128xf32, #tpu.memory_space<vmem>>, %arg7: memref<288x128xbf16, #tpu.memory_space<vmem>>, %arg8: memref<288x128xbf16, #tpu.memory_space<vmem>>, %arg9: memref<256x512xbf16, #tpu.memory_space<vmem>>) attributes {dimension_semantics = [#tpu.dimension_semantics<parallel>], iteration_bounds = array<i64: 2>, scalar_prefetch = 0 : i64, scratch_operands = 3 : i64, tpu.core_type = #tpu.core_type<tc>, window_params = [{transform_indices = @transform_0, window_bounds = array<i64: 1, 256, 128>}, {pipeline_mode = #tpu.pipeline_mode<synchronous>, transform_indices = @transform_1, window_bounds = array<i64: 128, 128>}, {pipeline_mode = #tpu.pipeline_mode<synchronous>, transform_indices = @transform_2, window_bounds = array<i64: 1, 128>}, {pipeline_mode = #tpu.pipeline_mode<synchronous>, transform_indices = @transform_3, window_bounds = array<i64: 6, 512, 128>}, {pipeline_mode = #tpu.pipeline_mode<synchronous>, transform_indices = @transform_4, window_bounds = array<i64: 6, 1, 128>}, {transform_indices = @transform_5, window_bounds = array<i64: 1, 256, 128>}]} {
    %cst = arith.constant 0.000000e+00 : bf16
    %0 = vector.broadcast %cst : bf16 to vector<32x128xbf16>
    %c256 = arith.constant 256 : index
    %c0 = arith.constant 0 : index
    %1 = vector.load %arg7[%c256, %c0] : memref<288x128xbf16, #tpu.memory_space<vmem>>, vector<32x128xbf16>
    tpu.vector_store %arg7[%c256, %c0], %0 {strides = array<i32>} : memref<288x128xbf16, #tpu.memory_space<vmem>>, vector<32x128xbf16>,
    %c256_0 = arith.constant 256 : index
    %c0_1 = arith.constant 0 : index
    %2 = vector.load %arg8[%c256_0, %c0_1] : memref<288x128xbf16, #tpu.memory_space<vmem>>, vector<32x128xbf16>
    tpu.vector_store %arg8[%c256_0, %c0_1], %0 {strides = array<i32>} : memref<288x128xbf16, #tpu.memory_space<vmem>>, vector<32x128xbf16>,
    %c0_2 = arith.constant 0 : index
    %c0_3 = arith.constant 0 : index
    %c0_4 = arith.constant 0 : index
    %3 = vector.load %arg1[%c0_2, %c0_3, %c0_4] : memref<1x256x128xbf16, #tpu.memory_space<vmem>>, vector<1x256x128xbf16>
    %4 = vector.shape_cast %3 : vector<1x256x128xbf16> to vector<256x128xbf16>
    %c0_5 = arith.constant 0 : index
    %c0_6 = arith.constant 0 : index
    %5 = vector.load %arg2[%c0_5, %c0_6] : memref<128x128xbf16, #tpu.memory_space<vmem>>, vector<128x128xbf16>
    %cst_7 = arith.constant dense<0.000000e+00> : vector<256x128xf32>
    %6 = tpu.matmul %4, %5, %cst_7 {dimension_numbers = #tpu.dot_dimension_numbers<[1], [0], [0], [1], [0, 0, 1, 1], [], []>} : vector<256x128xbf16>, vector<128x128xbf16>, vector<256x128xf32> -> vector<256x128xf32>
    %c0_8 = arith.constant 0 : index
    %c0_9 = arith.constant 0 : index
    %7 = vector.load %arg3[%c0_8, %c0_9] : memref<1x128xf32, #tpu.memory_space<vmem>>, vector<1x128xf32>
    %8 = vector.broadcast %7 : vector<1x128xf32> to vector<256x128xf32>
    %9 = arith.addf %6, %8 : vector<256x128xf32>
    %10 = arith.truncf %9 : vector<256x128xf32> to vector<256x128xbf16>
    %c0_10 = arith.constant 0 : index
    %c0_11 = arith.constant 0 : index
    %11 = vector.load %arg7[%c0_10, %c0_11] : memref<288x128xbf16, #tpu.memory_space<vmem>>, vector<256x128xbf16>
    tpu.vector_store %arg7[%c0_10, %c0_11], %10 {strides = array<i32>} : memref<288x128xbf16, #tpu.memory_space<vmem>>, vector<256x128xbf16>,
    %c0_12 = arith.constant 0 : index
    %c0_13 = arith.constant 0 : index
    %12 = vector.load %arg7[%c0_12, %c0_13] : memref<288x128xbf16, #tpu.memory_space<vmem>>, vector<256x128xbf16>
    %c0_14 = arith.constant 0 : index
    %c0_15 = arith.constant 0 : index
    %13 = vector.load %arg9[%c0_14, %c0_15] : memref<256x512xbf16, #tpu.memory_space<vmem>>, vector<256x128xbf16>
    tpu.vector_store %arg9[%c0_14, %c0_15], %12 {strides = array<i32>} : memref<256x512xbf16, #tpu.memory_space<vmem>>, vector<256x128xbf16>,
    %c1 = arith.constant 1 : index
    %c0_16 = arith.constant 0 : index
    %14 = vector.load %arg7[%c1, %c0_16] : memref<288x128xbf16, #tpu.memory_space<vmem>>, vector<256x128xbf16>
    %c0_17 = arith.constant 0 : index
    %c128 = arith.constant 128 : index
    %15 = vector.load %arg9[%c0_17, %c128] : memref<256x512xbf16, #tpu.memory_space<vmem>>, vector<256x128xbf16>
    tpu.vector_store %arg9[%c0_17, %c128], %14 {strides = array<i32>} : memref<256x512xbf16, #tpu.memory_space<vmem>>, vector<256x128xbf16>,
    %c16 = arith.constant 16 : index
    %c0_18 = arith.constant 0 : index
    %16 = vector.load %arg7[%c16, %c0_18] : memref<288x128xbf16, #tpu.memory_space<vmem>>, vector<256x128xbf16>
    %c0_19 = arith.constant 0 : index
    %c256_20 = arith.constant 256 : index
    %17 = vector.load %arg9[%c0_19, %c256_20] : memref<256x512xbf16, #tpu.memory_space<vmem>>, vector<256x128xbf16>
    tpu.vector_store %arg9[%c0_19, %c256_20], %16 {strides = array<i32>} : memref<256x512xbf16, #tpu.memory_space<vmem>>, vector<256x128xbf16>,
    %c17 = arith.constant 17 : index
    %c0_21 = arith.constant 0 : index
    %18 = vector.load %arg7[%c17, %c0_21] : memref<288x128xbf16, #tpu.memory_space<vmem>>, vector<256x128xbf16>
    %c0_22 = arith.constant 0 : index
    %c384 = arith.constant 384 : index
    %19 = vector.load %arg9[%c0_22, %c384] : memref<256x512xbf16, #tpu.memory_space<vmem>>, vector<256x128xbf16>
    tpu.vector_store %arg9[%c0_22, %c384], %18 {strides = array<i32>} : memref<256x512xbf16, #tpu.memory_space<vmem>>, vector<256x128xbf16>,
    %c0_23 = arith.constant 0 : index
    %c0_24 = arith.constant 0 : index
    %20 = vector.load %arg9[%c0_23, %c0_24] : memref<256x512xbf16, #tpu.memory_space<vmem>>, vector<256x512xbf16>
    %c0_25 = arith.constant 0 : index
    %c0_26 = arith.constant 0 : index
    %c0_27 = arith.constant 0 : index
    %21 = vector.load %arg4[%c0_25, %c0_26, %c0_27] : memref<6x512x128xbf16, #tpu.memory_space<vmem>>, vector<1x512x128xbf16>
    %22 = vector.shape_cast %21 : vector<1x512x128xbf16> to vector<512x128xbf16>
    %cst_28 = arith.constant dense<0.000000e+00> : vector<256x128xf32>
    %23 = tpu.matmul %20, %22, %cst_28 {dimension_numbers = #tpu.dot_dimension_numbers<[1], [0], [0], [1], [0, 0, 1, 1], [], []>} : vector<256x512xbf16>, vector<512x128xbf16>, vector<256x128xf32> -> vector<256x128xf32>
    %c0_29 = arith.constant 0 : index
    %c0_30 = arith.constant 0 : index
    %c0_31 = arith.constant 0 : index
    %24 = vector.load %arg5[%c0_29, %c0_30, %c0_31] : memref<6x1x128xf32, #tpu.memory_space<vmem>>, vector<1x1x128xf32>
    %25 = vector.shape_cast %24 : vector<1x1x128xf32> to vector<1x128xf32>
    %26 = vector.broadcast %25 : vector<1x128xf32> to vector<256x128xf32>
    %27 = arith.addf %23, %26 : vector<256x128xf32>
    %28 = arith.truncf %27 : vector<256x128xf32> to vector<256x128xbf16>
    %c0_32 = arith.constant 0 : index
    %c0_33 = arith.constant 0 : index
    %29 = vector.load %arg8[%c0_32, %c0_33] : memref<288x128xbf16, #tpu.memory_space<vmem>>, vector<256x128xbf16>
    tpu.vector_store %arg8[%c0_32, %c0_33], %28 {strides = array<i32>} : memref<288x128xbf16, #tpu.memory_space<vmem>>, vector<256x128xbf16>,
    %c0_34 = arith.constant 0 : index
    %c0_35 = arith.constant 0 : index
    %30 = vector.load %arg8[%c0_34, %c0_35] : memref<288x128xbf16, #tpu.memory_space<vmem>>, vector<256x128xbf16>
    %c0_36 = arith.constant 0 : index
    %c0_37 = arith.constant 0 : index
    %31 = vector.load %arg9[%c0_36, %c0_37] : memref<256x512xbf16, #tpu.memory_space<vmem>>, vector<256x128xbf16>
    tpu.vector_store %arg9[%c0_36, %c0_37], %30 {strides = array<i32>} : memref<256x512xbf16, #tpu.memory_space<vmem>>, vector<256x128xbf16>,
    %c1_38 = arith.constant 1 : index
    %c0_39 = arith.constant 0 : index
    %32 = vector.load %arg8[%c1_38, %c0_39] : memref<288x128xbf16, #tpu.memory_space<vmem>>, vector<256x128xbf16>
    %c0_40 = arith.constant 0 : index
    %c128_41 = arith.constant 128 : index
    %33 = vector.load %arg9[%c0_40, %c128_41] : memref<256x512xbf16, #tpu.memory_space<vmem>>, vector<256x128xbf16>
    tpu.vector_store %arg9[%c0_40, %c128_41], %32 {strides = array<i32>} : memref<256x512xbf16, #tpu.memory_space<vmem>>, vector<256x128xbf16>,
    %c16_42 = arith.constant 16 : index
    %c0_43 = arith.constant 0 : index
    %34 = vector.load %arg8[%c16_42, %c0_43] : memref<288x128xbf16, #tpu.memory_space<vmem>>, vector<256x128xbf16>
    %c0_44 = arith.constant 0 : index
    %c256_45 = arith.constant 256 : index
    %35 = vector.load %arg9[%c0_44, %c256_45] : memref<256x512xbf16, #tpu.memory_space<vmem>>, vector<256x128xbf16>
    tpu.vector_store %arg9[%c0_44, %c256_45], %34 {strides = array<i32>} : memref<256x512xbf16, #tpu.memory_space<vmem>>, vector<256x128xbf16>,
    %c17_46 = arith.constant 17 : index
    %c0_47 = arith.constant 0 : index
    %36 = vector.load %arg8[%c17_46, %c0_47] : memref<288x128xbf16, #tpu.memory_space<vmem>>, vector<256x128xbf16>
    %c0_48 = arith.constant 0 : index
    %c384_49 = arith.constant 384 : index
    %37 = vector.load %arg9[%c0_48, %c384_49] : memref<256x512xbf16, #tpu.memory_space<vmem>>, vector<256x128xbf16>
    tpu.vector_store %arg9[%c0_48, %c384_49], %36 {strides = array<i32>} : memref<256x512xbf16, #tpu.memory_space<vmem>>, vector<256x128xbf16>,
    %c0_50 = arith.constant 0 : index
    %c0_51 = arith.constant 0 : index
    %38 = vector.load %arg9[%c0_50, %c0_51] : memref<256x512xbf16, #tpu.memory_space<vmem>>, vector<256x512xbf16>
    %c1_52 = arith.constant 1 : index
    %c0_53 = arith.constant 0 : index
    %c0_54 = arith.constant 0 : index
    %39 = vector.load %arg4[%c1_52, %c0_53, %c0_54] : memref<6x512x128xbf16, #tpu.memory_space<vmem>>, vector<1x512x128xbf16>
    %40 = vector.shape_cast %39 : vector<1x512x128xbf16> to vector<512x128xbf16>
    %cst_55 = arith.constant dense<0.000000e+00> : vector<256x128xf32>
    %41 = tpu.matmul %38, %40, %cst_55 {dimension_numbers = #tpu.dot_dimension_numbers<[1], [0], [0], [1], [0, 0, 1, 1], [], []>} : vector<256x512xbf16>, vector<512x128xbf16>, vector<256x128xf32> -> vector<256x128xf32>
    %c1_56 = arith.constant 1 : index
    %c0_57 = arith.constant 0 : index
    %c0_58 = arith.constant 0 : index
    %42 = vector.load %arg5[%c1_56, %c0_57, %c0_58] : memref<6x1x128xf32, #tpu.memory_space<vmem>>, vector<1x1x128xf32>
    %43 = vector.shape_cast %42 : vector<1x1x128xf32> to vector<1x128xf32>
    %44 = vector.broadcast %43 : vector<1x128xf32> to vector<256x128xf32>
    %45 = arith.addf %41, %44 : vector<256x128xf32>
    %46 = arith.truncf %45 : vector<256x128xf32> to vector<256x128xbf16>
    %c0_59 = arith.constant 0 : index
    %c0_60 = arith.constant 0 : index
    %47 = vector.load %arg7[%c0_59, %c0_60] : memref<288x128xbf16, #tpu.memory_space<vmem>>, vector<256x128xbf16>
    tpu.vector_store %arg7[%c0_59, %c0_60], %46 {strides = array<i32>} : memref<288x128xbf16, #tpu.memory_space<vmem>>, vector<256x128xbf16>,
    %c0_61 = arith.constant 0 : index
    %c0_62 = arith.constant 0 : index
    %48 = vector.load %arg7[%c0_61, %c0_62] : memref<288x128xbf16, #tpu.memory_space<vmem>>, vector<256x128xbf16>
    %c0_63 = arith.constant 0 : index
    %c0_64 = arith.constant 0 : index
    %49 = vector.load %arg9[%c0_63, %c0_64] : memref<256x512xbf16, #tpu.memory_space<vmem>>, vector<256x128xbf16>
    tpu.vector_store %arg9[%c0_63, %c0_64], %48 {strides = array<i32>} : memref<256x512xbf16, #tpu.memory_space<vmem>>, vector<256x128xbf16>,
    %c1_65 = arith.constant 1 : index
    %c0_66 = arith.constant 0 : index
    %50 = vector.load %arg7[%c1_65, %c0_66] : memref<288x128xbf16, #tpu.memory_space<vmem>>, vector<256x128xbf16>
    %c0_67 = arith.constant 0 : index
    %c128_68 = arith.constant 128 : index
    %51 = vector.load %arg9[%c0_67, %c128_68] : memref<256x512xbf16, #tpu.memory_space<vmem>>, vector<256x128xbf16>
    tpu.vector_store %arg9[%c0_67, %c128_68], %50 {strides = array<i32>} : memref<256x512xbf16, #tpu.memory_space<vmem>>, vector<256x128xbf16>,
    %c16_69 = arith.constant 16 : index
    %c0_70 = arith.constant 0 : index
    %52 = vector.load %arg7[%c16_69, %c0_70] : memref<288x128xbf16, #tpu.memory_space<vmem>>, vector<256x128xbf16>
    %c0_71 = arith.constant 0 : index
    %c256_72 = arith.constant 256 : index
    %53 = vector.load %arg9[%c0_71, %c256_72] : memref<256x512xbf16, #tpu.memory_space<vmem>>, vector<256x128xbf16>
    tpu.vector_store %arg9[%c0_71, %c256_72], %52 {strides = array<i32>} : memref<256x512xbf16, #tpu.memory_space<vmem>>, vector<256x128xbf16>,
    %c17_73 = arith.constant 17 : index
    %c0_74 = arith.constant 0 : index
    %54 = vector.load %arg7[%c17_73, %c0_74] : memref<288x128xbf16, #tpu.memory_space<vmem>>, vector<256x128xbf16>
    %c0_75 = arith.constant 0 : index
    %c384_76 = arith.constant 384 : index
    %55 = vector.load %arg9[%c0_75, %c384_76] : memref<256x512xbf16, #tpu.memory_space<vmem>>, vector<256x128xbf16>
    tpu.vector_store %arg9[%c0_75, %c384_76], %54 {strides = array<i32>} : memref<256x512xbf16, #tpu.memory_space<vmem>>, vector<256x128xbf16>,
    %c0_77 = arith.constant 0 : index
    %c0_78 = arith.constant 0 : index
    %56 = vector.load %arg9[%c0_77, %c0_78] : memref<256x512xbf16, #tpu.memory_space<vmem>>, vector<256x512xbf16>
    %c2 = arith.constant 2 : index
    %c0_79 = arith.constant 0 : index
    %c0_80 = arith.constant 0 : index
    %57 = vector.load %arg4[%c2, %c0_79, %c0_80] : memref<6x512x128xbf16, #tpu.memory_space<vmem>>, vector<1x512x128xbf16>
    %58 = vector.shape_cast %57 : vector<1x512x128xbf16> to vector<512x128xbf16>
    %cst_81 = arith.constant dense<0.000000e+00> : vector<256x128xf32>
    %59 = tpu.matmul %56, %58, %cst_81 {dimension_numbers = #tpu.dot_dimension_numbers<[1], [0], [0], [1], [0, 0, 1, 1], [], []>} : vector<256x512xbf16>, vector<512x128xbf16>, vector<256x128xf32> -> vector<256x128xf32>
    %c2_82 = arith.constant 2 : index
    %c0_83 = arith.constant 0 : index
    %c0_84 = arith.constant 0 : index
    %60 = vector.load %arg5[%c2_82, %c0_83, %c0_84] : memref<6x1x128xf32, #tpu.memory_space<vmem>>, vector<1x1x128xf32>
    %61 = vector.shape_cast %60 : vector<1x1x128xf32> to vector<1x128xf32>
    %62 = vector.broadcast %61 : vector<1x128xf32> to vector<256x128xf32>
    %63 = arith.addf %59, %62 : vector<256x128xf32>
    %64 = arith.truncf %63 : vector<256x128xf32> to vector<256x128xbf16>
    %c0_85 = arith.constant 0 : index
    %c0_86 = arith.constant 0 : index
    %65 = vector.load %arg8[%c0_85, %c0_86] : memref<288x128xbf16, #tpu.memory_space<vmem>>, vector<256x128xbf16>
    tpu.vector_store %arg8[%c0_85, %c0_86], %64 {strides = array<i32>} : memref<288x128xbf16, #tpu.memory_space<vmem>>, vector<256x128xbf16>,
    %c0_87 = arith.constant 0 : index
    %c0_88 = arith.constant 0 : index
    %66 = vector.load %arg8[%c0_87, %c0_88] : memref<288x128xbf16, #tpu.memory_space<vmem>>, vector<256x128xbf16>
    %c0_89 = arith.constant 0 : index
    %c0_90 = arith.constant 0 : index
    %67 = vector.load %arg9[%c0_89, %c0_90] : memref<256x512xbf16, #tpu.memory_space<vmem>>, vector<256x128xbf16>
    tpu.vector_store %arg9[%c0_89, %c0_90], %66 {strides = array<i32>} : memref<256x512xbf16, #tpu.memory_space<vmem>>, vector<256x128xbf16>,
    %c1_91 = arith.constant 1 : index
    %c0_92 = arith.constant 0 : index
    %68 = vector.load %arg8[%c1_91, %c0_92] : memref<288x128xbf16, #tpu.memory_space<vmem>>, vector<256x128xbf16>
    %c0_93 = arith.constant 0 : index
    %c128_94 = arith.constant 128 : index
    %69 = vector.load %arg9[%c0_93, %c128_94] : memref<256x512xbf16, #tpu.memory_space<vmem>>, vector<256x128xbf16>
    tpu.vector_store %arg9[%c0_93, %c128_94], %68 {strides = array<i32>} : memref<256x512xbf16, #tpu.memory_space<vmem>>, vector<256x128xbf16>,
    %c16_95 = arith.constant 16 : index
    %c0_96 = arith.constant 0 : index
    %70 = vector.load %arg8[%c16_95, %c0_96] : memref<288x128xbf16, #tpu.memory_space<vmem>>, vector<256x128xbf16>
    %c0_97 = arith.constant 0 : index
    %c256_98 = arith.constant 256 : index
    %71 = vector.load %arg9[%c0_97, %c256_98] : memref<256x512xbf16, #tpu.memory_space<vmem>>, vector<256x128xbf16>
    tpu.vector_store %arg9[%c0_97, %c256_98], %70 {strides = array<i32>} : memref<256x512xbf16, #tpu.memory_space<vmem>>, vector<256x128xbf16>,
    %c17_99 = arith.constant 17 : index
    %c0_100 = arith.constant 0 : index
    %72 = vector.load %arg8[%c17_99, %c0_100] : memref<288x128xbf16, #tpu.memory_space<vmem>>, vector<256x128xbf16>
    %c0_101 = arith.constant 0 : index
    %c384_102 = arith.constant 384 : index
    %73 = vector.load %arg9[%c0_101, %c384_102] : memref<256x512xbf16, #tpu.memory_space<vmem>>, vector<256x128xbf16>
    tpu.vector_store %arg9[%c0_101, %c384_102], %72 {strides = array<i32>} : memref<256x512xbf16, #tpu.memory_space<vmem>>, vector<256x128xbf16>,
    %c0_103 = arith.constant 0 : index
    %c0_104 = arith.constant 0 : index
    %74 = vector.load %arg9[%c0_103, %c0_104] : memref<256x512xbf16, #tpu.memory_space<vmem>>, vector<256x512xbf16>
    %c3 = arith.constant 3 : index
    %c0_105 = arith.constant 0 : index
    %c0_106 = arith.constant 0 : index
    %75 = vector.load %arg4[%c3, %c0_105, %c0_106] : memref<6x512x128xbf16, #tpu.memory_space<vmem>>, vector<1x512x128xbf16>
    %76 = vector.shape_cast %75 : vector<1x512x128xbf16> to vector<512x128xbf16>
    %cst_107 = arith.constant dense<0.000000e+00> : vector<256x128xf32>
    %77 = tpu.matmul %74, %76, %cst_107 {dimension_numbers = #tpu.dot_dimension_numbers<[1], [0], [0], [1], [0, 0, 1, 1], [], []>} : vector<256x512xbf16>, vector<512x128xbf16>, vector<256x128xf32> -> vector<256x128xf32>
    %c3_108 = arith.constant 3 : index
    %c0_109 = arith.constant 0 : index
    %c0_110 = arith.constant 0 : index
    %78 = vector.load %arg5[%c3_108, %c0_109, %c0_110] : memref<6x1x128xf32, #tpu.memory_space<vmem>>, vector<1x1x128xf32>
    %79 = vector.shape_cast %78 : vector<1x1x128xf32> to vector<1x128xf32>
    %80 = vector.broadcast %79 : vector<1x128xf32> to vector<256x128xf32>
    %81 = arith.addf %77, %80 : vector<256x128xf32>
    %82 = arith.truncf %81 : vector<256x128xf32> to vector<256x128xbf16>
    %c0_111 = arith.constant 0 : index
    %c0_112 = arith.constant 0 : index
    %83 = vector.load %arg7[%c0_111, %c0_112] : memref<288x128xbf16, #tpu.memory_space<vmem>>, vector<256x128xbf16>
    tpu.vector_store %arg7[%c0_111, %c0_112], %82 {strides = array<i32>} : memref<288x128xbf16, #tpu.memory_space<vmem>>, vector<256x128xbf16>,
    %c0_113 = arith.constant 0 : index
    %c0_114 = arith.constant 0 : index
    %84 = vector.load %arg7[%c0_113, %c0_114] : memref<288x128xbf16, #tpu.memory_space<vmem>>, vector<256x128xbf16>
    %c0_115 = arith.constant 0 : index
    %c0_116 = arith.constant 0 : index
    %85 = vector.load %arg9[%c0_115, %c0_116] : memref<256x512xbf16, #tpu.memory_space<vmem>>, vector<256x128xbf16>
    tpu.vector_store %arg9[%c0_115, %c0_116], %84 {strides = array<i32>} : memref<256x512xbf16, #tpu.memory_space<vmem>>, vector<256x128xbf16>,
    %c1_117 = arith.constant 1 : index
    %c0_118 = arith.constant 0 : index
    %86 = vector.load %arg7[%c1_117, %c0_118] : memref<288x128xbf16, #tpu.memory_space<vmem>>, vector<256x128xbf16>
    %c0_119 = arith.constant 0 : index
    %c128_120 = arith.constant 128 : index
    %87 = vector.load %arg9[%c0_119, %c128_120] : memref<256x512xbf16, #tpu.memory_space<vmem>>, vector<256x128xbf16>
    tpu.vector_store %arg9[%c0_119, %c128_120], %86 {strides = array<i32>} : memref<256x512xbf16, #tpu.memory_space<vmem>>, vector<256x128xbf16>,
    %c16_121 = arith.constant 16 : index
    %c0_122 = arith.constant 0 : index
    %88 = vector.load %arg7[%c16_121, %c0_122] : memref<288x128xbf16, #tpu.memory_space<vmem>>, vector<256x128xbf16>
    %c0_123 = arith.constant 0 : index
    %c256_124 = arith.constant 256 : index
    %89 = vector.load %arg9[%c0_123, %c256_124] : memref<256x512xbf16, #tpu.memory_space<vmem>>, vector<256x128xbf16>
    tpu.vector_store %arg9[%c0_123, %c256_124], %88 {strides = array<i32>} : memref<256x512xbf16, #tpu.memory_space<vmem>>, vector<256x128xbf16>,
    %c17_125 = arith.constant 17 : index
    %c0_126 = arith.constant 0 : index
    %90 = vector.load %arg7[%c17_125, %c0_126] : memref<288x128xbf16, #tpu.memory_space<vmem>>, vector<256x128xbf16>
    %c0_127 = arith.constant 0 : index
    %c384_128 = arith.constant 384 : index
    %91 = vector.load %arg9[%c0_127, %c384_128] : memref<256x512xbf16, #tpu.memory_space<vmem>>, vector<256x128xbf16>
    tpu.vector_store %arg9[%c0_127, %c384_128], %90 {strides = array<i32>} : memref<256x512xbf16, #tpu.memory_space<vmem>>, vector<256x128xbf16>,
    %c0_129 = arith.constant 0 : index
    %c0_130 = arith.constant 0 : index
    %92 = vector.load %arg9[%c0_129, %c0_130] : memref<256x512xbf16, #tpu.memory_space<vmem>>, vector<256x512xbf16>
    %c4 = arith.constant 4 : index
    %c0_131 = arith.constant 0 : index
    %c0_132 = arith.constant 0 : index
    %93 = vector.load %arg4[%c4, %c0_131, %c0_132] : memref<6x512x128xbf16, #tpu.memory_space<vmem>>, vector<1x512x128xbf16>
    %94 = vector.shape_cast %93 : vector<1x512x128xbf16> to vector<512x128xbf16>
    %cst_133 = arith.constant dense<0.000000e+00> : vector<256x128xf32>
    %95 = tpu.matmul %92, %94, %cst_133 {dimension_numbers = #tpu.dot_dimension_numbers<[1], [0], [0], [1], [0, 0, 1, 1], [], []>} : vector<256x512xbf16>, vector<512x128xbf16>, vector<256x128xf32> -> vector<256x128xf32>
    %c4_134 = arith.constant 4 : index
    %c0_135 = arith.constant 0 : index
    %c0_136 = arith.constant 0 : index
    %96 = vector.load %arg5[%c4_134, %c0_135, %c0_136] : memref<6x1x128xf32, #tpu.memory_space<vmem>>, vector<1x1x128xf32>
    %97 = vector.shape_cast %96 : vector<1x1x128xf32> to vector<1x128xf32>
    %98 = vector.broadcast %97 : vector<1x128xf32> to vector<256x128xf32>
    %99 = arith.addf %95, %98 : vector<256x128xf32>
    %100 = arith.truncf %99 : vector<256x128xf32> to vector<256x128xbf16>
    %c0_137 = arith.constant 0 : index
    %c0_138 = arith.constant 0 : index
    %101 = vector.load %arg8[%c0_137, %c0_138] : memref<288x128xbf16, #tpu.memory_space<vmem>>, vector<256x128xbf16>
    tpu.vector_store %arg8[%c0_137, %c0_138], %100 {strides = array<i32>} : memref<288x128xbf16, #tpu.memory_space<vmem>>, vector<256x128xbf16>,
    %c0_139 = arith.constant 0 : index
    %c0_140 = arith.constant 0 : index
    %102 = vector.load %arg8[%c0_139, %c0_140] : memref<288x128xbf16, #tpu.memory_space<vmem>>, vector<256x128xbf16>
    %c0_141 = arith.constant 0 : index
    %c0_142 = arith.constant 0 : index
    %103 = vector.load %arg9[%c0_141, %c0_142] : memref<256x512xbf16, #tpu.memory_space<vmem>>, vector<256x128xbf16>
    tpu.vector_store %arg9[%c0_141, %c0_142], %102 {strides = array<i32>} : memref<256x512xbf16, #tpu.memory_space<vmem>>, vector<256x128xbf16>,
    %c1_143 = arith.constant 1 : index
    %c0_144 = arith.constant 0 : index
    %104 = vector.load %arg8[%c1_143, %c0_144] : memref<288x128xbf16, #tpu.memory_space<vmem>>, vector<256x128xbf16>
    %c0_145 = arith.constant 0 : index
    %c128_146 = arith.constant 128 : index
    %105 = vector.load %arg9[%c0_145, %c128_146] : memref<256x512xbf16, #tpu.memory_space<vmem>>, vector<256x128xbf16>
    tpu.vector_store %arg9[%c0_145, %c128_146], %104 {strides = array<i32>} : memref<256x512xbf16, #tpu.memory_space<vmem>>, vector<256x128xbf16>,
    %c16_147 = arith.constant 16 : index
    %c0_148 = arith.constant 0 : index
    %106 = vector.load %arg8[%c16_147, %c0_148] : memref<288x128xbf16, #tpu.memory_space<vmem>>, vector<256x128xbf16>
    %c0_149 = arith.constant 0 : index
    %c256_150 = arith.constant 256 : index
    %107 = vector.load %arg9[%c0_149, %c256_150] : memref<256x512xbf16, #tpu.memory_space<vmem>>, vector<256x128xbf16>
    tpu.vector_store %arg9[%c0_149, %c256_150], %106 {strides = array<i32>} : memref<256x512xbf16, #tpu.memory_space<vmem>>, vector<256x128xbf16>,
    %c17_151 = arith.constant 17 : index
    %c0_152 = arith.constant 0 : index
    %108 = vector.load %arg8[%c17_151, %c0_152] : memref<288x128xbf16, #tpu.memory_space<vmem>>, vector<256x128xbf16>
    %c0_153 = arith.constant 0 : index
    %c384_154 = arith.constant 384 : index
    %109 = vector.load %arg9[%c0_153, %c384_154] : memref<256x512xbf16, #tpu.memory_space<vmem>>, vector<256x128xbf16>
    tpu.vector_store %arg9[%c0_153, %c384_154], %108 {strides = array<i32>} : memref<256x512xbf16, #tpu.memory_space<vmem>>, vector<256x128xbf16>,
    %c0_155 = arith.constant 0 : index
    %c0_156 = arith.constant 0 : index
    %110 = vector.load %arg9[%c0_155, %c0_156] : memref<256x512xbf16, #tpu.memory_space<vmem>>, vector<256x512xbf16>
    %c5 = arith.constant 5 : index
    %c0_157 = arith.constant 0 : index
    %c0_158 = arith.constant 0 : index
    %111 = vector.load %arg4[%c5, %c0_157, %c0_158] : memref<6x512x128xbf16, #tpu.memory_space<vmem>>, vector<1x512x128xbf16>
    %112 = vector.shape_cast %111 : vector<1x512x128xbf16> to vector<512x128xbf16>
    %cst_159 = arith.constant dense<0.000000e+00> : vector<256x128xf32>
    %113 = tpu.matmul %110, %112, %cst_159 {dimension_numbers = #tpu.dot_dimension_numbers<[1], [0], [0], [1], [0, 0, 1, 1], [], []>} : vector<256x512xbf16>, vector<512x128xbf16>, vector<256x128xf32> -> vector<256x128xf32>
    %c5_160 = arith.constant 5 : index
    %c0_161 = arith.constant 0 : index
    %c0_162 = arith.constant 0 : index
    %114 = vector.load %arg5[%c5_160, %c0_161, %c0_162] : memref<6x1x128xf32, #tpu.memory_space<vmem>>, vector<1x1x128xf32>
    %115 = vector.shape_cast %114 : vector<1x1x128xf32> to vector<1x128xf32>
    %116 = vector.broadcast %115 : vector<1x128xf32> to vector<256x128xf32>
    %117 = arith.addf %113, %116 : vector<256x128xf32>
    %118 = arith.negf %117 : vector<256x128xf32>
    %119 = math.exp %118 : vector<256x128xf32>
    %cst_163 = arith.constant 1.000000e+00 : f32
    %120 = vector.broadcast %cst_163 : f32 to vector<256x128xf32>
    %121 = arith.addf %120, %119 : vector<256x128xf32>
    %122 = arith.divf %120, %121 : vector<256x128xf32>
    %c0_164 = arith.constant 0 : index
    %c0_165 = arith.constant 0 : index
    %c0_166 = arith.constant 0 : index
    %123 = vector.load %arg6[%c0_164, %c0_165, %c0_166] : memref<1x256x128xf32, #tpu.memory_space<vmem>>, vector<1x256x128xf32>
    %124 = vector.shape_cast %123 : vector<1x256x128xf32> to vector<256x128xf32>
    %125 = vector.shape_cast %122 : vector<256x128xf32> to vector<1x256x128xf32>
    tpu.vector_store %arg6[%c0_164, %c0_165, %c0_166], %125 {strides = array<i32>} : memref<1x256x128xf32, #tpu.memory_space<vmem>>, vector<1x256x128xf32>,
    return
  }
  func.func @transform_0(%arg0: i32) -> (i32, i32, i32) {
    %c0_i32 = arith.constant 0 : i32
    %c0_i32_0 = arith.constant 0 : i32
    %c0_i32_1 = arith.constant 0 : i32
    return %arg0, %c0_i32, %c0_i32_0 : i32, i32, i32
  }
  func.func @transform_1(%arg0: i32) -> (i32, i32) {
    %c0_i32 = arith.constant 0 : i32
    %c0_i32_0 = arith.constant 0 : i32
    %c0_i32_1 = arith.constant 0 : i32
    return %c0_i32, %c0_i32_0 : i32, i32
  }
  func.func @transform_2(%arg0: i32) -> (i32, i32) {
    %c0_i32 = arith.constant 0 : i32
    %c0_i32_0 = arith.constant 0 : i32
    %c0_i32_1 = arith.constant 0 : i32
    return %c0_i32, %c0_i32_0 : i32, i32
  }
  func.func @transform_3(%arg0: i32) -> (i32, i32, i32) {
    %c0_i32 = arith.constant 0 : i32
    %c0_i32_0 = arith.constant 0 : i32
    %c0_i32_1 = arith.constant 0 : i32
    %c0_i32_2 = arith.constant 0 : i32
    return %c0_i32, %c0_i32_0, %c0_i32_1 : i32, i32, i32
  }
  func.func @transform_4(%arg0: i32) -> (i32, i32, i32) {
    %c0_i32 = arith.constant 0 : i32
    %c0_i32_0 = arith.constant 0 : i32
    %c0_i32_1 = arith.constant 0 : i32
    %c0_i32_2 = arith.constant 0 : i32
    return %c0_i32, %c0_i32_0, %c0_i32_1 : i32, i32, i32
  }
  func.func @transform_5(%arg0: i32) -> (i32, i32, i32) {
    %c0_i32 = arith.constant 0 : i32
    %c0_i32_0 = arith.constant 0 : i32
    %c0_i32_1 = arith.constant 0 : i32
    return %arg0, %c0_i32, %c0_i32_0 : i32, i32, i32
  }
}

</mosaic_0001>

<llo_original>
// kernel: forward.1
$region0: #{forward.1}
  #allocation0 [shape = 'u32[]', space=smem, size = 0x4, offset = 0x4, fixed_abs, tag = 'smem constant byte address 0x4 - core index']
  #allocation1 [shape = 'u32[144,128]{1,0:T(1,128)}', space=vmem, size = 0x12000, scoped, tag = 'internal scratch']
  #allocation2 [shape = 'bf16[288,128]{1,0:T(16,128)(2,1)}', space=vmem, size = 0x12000, scoped, tag = 'scratch operand']
  #allocation3 [shape = 'bf16[288,128]{1,0:T(16,128)(2,1)}', space=vmem, size = 0x12000, scoped, tag = 'scratch operand']
  #allocation4 [shape = 'bf16[256,512]{1,0:T(16,128)(2,1)}', space=vmem, size = 0x40000, scoped, tag = 'scratch operand']
  %s0 = inlined_call_operand.vmem [shape: bf16[2,256,128], index: 0, kind: input, shape index: {}]
  %s1 = inlined_call_operand.vmem [shape: bf16[128,128], index: 1, kind: input, shape index: {}]
  %s2 = inlined_call_operand.vmem [shape: f32[1,128], index: 2, kind: input, shape index: {}]
  %s3 = inlined_call_operand.vmem [shape: bf16[6,512,128], index: 3, kind: input, shape index: {}]
  %s4 = inlined_call_operand.vmem [shape: f32[6,1,128], index: 4, kind: input, shape index: {}]
  %s5 = inlined_call_operand.vmem [shape: f32[2,256,128], index: 5, kind: output, shape index: {}]
  %s6 = sld [smem:[#allocation0]]
  $region53: #{forward.1} parent=0
    _
  %s8 = ssub.s32 1, %s6
  %s9 = scalar_select 0, %s8, %s6
  loop: start=0, step=1, limit=4
  $region2: #{forward.1} parent=0 // loop_pre_header
    _
  $region3: #{forward.1} parent=0 // loop_header
    %s11 = sphi 0, %s15
    %p12 = scmp.ge.s32.totalorder %s11, 4
    %s21 = sphi 0, %s23
    %s24 = sphi 0, %s21
    %s25 = sphi 0, %s24
    %s41 = sphi 0, %s25
    %s45 = sphi 0, %s45
    %s47 = sphi 0, %s45
    %s48 = sphi 0, %s47
    %s62 = sphi 0, %s48
    %s66 = sphi 0, %s66
    %s68 = sphi 0, %s66
    %s69 = sphi 0, %s68
    %s83 = sphi 0, %s69
    %s87 = sphi 0, %s87
    %s89 = sphi 0, %s87
    %s90 = sphi 0, %s89
    %s104 = sphi 0, %s90
    %s108 = sphi 0, %s108
    %s110 = sphi 0, %s108
    %s111 = sphi 0, %s110
    %s125 = sphi 0, %s111
    %s131 = sphi 0, %s133
    %s134 = sphi 0, %s131
    %s135 = sphi 0, %s134
    %s151 = sphi 0, %s135
  $region4: #{forward.1} parent=0 // loop_header_branch
    %14 = sbr.rel (%p12) target = $region8
  $region5: #{forward.1} parent=0 // loop_body
    %s16 = ssub.s32 %s11, 1
    %s17 = ssub.s32 %s11, 2
    %s18 = sadd.s32 %s11, 1
    %s19 = ssub.s32 %s11, %s18
    %p20 = scmp.eq.s32.totalorder %s19, 0
    %s22 = sadd.s32 %s21, 1
    %s23 = scalar_select %p20, %s21, %s22
    %p26 = pneg %p20
    %p27 = scmp.eq.s32.totalorder %s11, 1
    %p28 = por %p26, %p27
    %p29 = scmp.ne.s32.totalorder %s21, %s24
    %p30 = scmp.eq.s32.totalorder %s11, 0
    %p31 = por %p29, %p30
    %p32 = scmp.ne.s32.totalorder %s21, %s24
    %p33 = scmp.eq.s32.totalorder %s16, 1
    %p34 = por %p32, %p33
    %p35 = scmp.ne.s32.totalorder %s24, %s25
    %p36 = scmp.eq.s32.totalorder %s16, 0
    %p37 = por %p35, %p36
    %p38 = scmp.ne.s32.totalorder %s24, %s25
    %p39 = scmp.eq.s32.totalorder %s17, 1
    %p40 = por %p38, %p39
    %p42 = scmp.ne.s32.totalorder %s25, %s41
    %p43 = scmp.eq.s32.totalorder %s17, 0
    %p44 = por %p42, %p43
    %s46 = sadd.s32 %s45, 1
    %p49 = scmp.eq.s32.totalorder %s11, 1
    %p50 = scmp.ne.s32.totalorder %s45, %s47
    %p51 = scmp.eq.s32.totalorder %s11, 0
    %p52 = por %p50, %p51
    %p53 = scmp.ne.s32.totalorder %s45, %s47
    %p54 = scmp.eq.s32.totalorder %s16, 1
    %p55 = por %p53, %p54
    %p56 = scmp.ne.s32.totalorder %s47, %s48
    %p57 = scmp.eq.s32.totalorder %s16, 0
    %p58 = por %p56, %p57
    %p59 = scmp.ne.s32.totalorder %s47, %s48
    %p60 = scmp.eq.s32.totalorder %s17, 1
    %p61 = por %p59, %p60
    %p63 = scmp.ne.s32.totalorder %s48, %s62
    %p64 = scmp.eq.s32.totalorder %s17, 0
    %p65 = por %p63, %p64
    %s67 = sadd.s32 %s66, 1
    %p70 = scmp.eq.s32.totalorder %s11, 1
    %p71 = scmp.ne.s32.totalorder %s66, %s68
    %p72 = scmp.eq.s32.totalorder %s11, 0
    %p73 = por %p71, %p72
    %p74 = scmp.ne.s32.totalorder %s66, %s68
    %p75 = scmp.eq.s32.totalorder %s16, 1
    %p76 = por %p74, %p75
    %p77 = scmp.ne.s32.totalorder %s68, %s69
    %p78 = scmp.eq.s32.totalorder %s16, 0
    %p79 = por %p77, %p78
    %p80 = scmp.ne.s32.totalorder %s68, %s69
    %p81 = scmp.eq.s32.totalorder %s17, 1
    %p82 = por %p80, %p81
    %p84 = scmp.ne.s32.totalorder %s69, %s83
    %p85 = scmp.eq.s32.totalorder %s17, 0
    %p86 = por %p84, %p85
    %s88 = sadd.s32 %s87, 1
    %p91 = scmp.eq.s32.totalorder %s11, 1
    %p92 = scmp.ne.s32.totalorder %s87, %s89
    %p93 = scmp.eq.s32.totalorder %s11, 0
    %p94 = por %p92, %p93
    %p95 = scmp.ne.s32.totalorder %s87, %s89
    %p96 = scmp.eq.s32.totalorder %s16, 1
    %p97 = por %p95, %p96
    %p98 = scmp.ne.s32.totalorder %s89, %s90
    %p99 = scmp.eq.s32.totalorder %s16, 0
    %p100 = por %p98, %p99
    %p101 = scmp.ne.s32.totalorder %s89, %s90
    %p102 = scmp.eq.s32.totalorder %s17, 1
    %p103 = por %p101, %p102
    %p105 = scmp.ne.s32.totalorder %s90, %s104
    %p106 = scmp.eq.s32.totalorder %s17, 0
    %p107 = por %p105, %p106
    %s109 = sadd.s32 %s108, 1
    %p112 = scmp.eq.s32.totalorder %s11, 1
    %p113 = scmp.ne.s32.totalorder %s108, %s110
    %p114 = scmp.eq.s32.totalorder %s11, 0
    %p115 = por %p113, %p114
    %p116 = scmp.ne.s32.totalorder %s108, %s110
    %p117 = scmp.eq.s32.totalorder %s16, 1
    %p118 = por %p116, %p117
    %p119 = scmp.ne.s32.totalorder %s110, %s111
    %p120 = scmp.eq.s32.totalorder %s16, 0
    %p121 = por %p119, %p120
    %p122 = scmp.ne.s32.totalorder %s110, %s111
    %p123 = scmp.eq.s32.totalorder %s17, 1
    %p124 = por %p122, %p123
    %p126 = scmp.ne.s32.totalorder %s111, %s125
    %p127 = scmp.eq.s32.totalorder %s17, 0
    %p128 = por %p126, %p127
    %s129 = ssub.s32 %s11, %s18
    %p130 = scmp.eq.s32.totalorder %s129, 0
    %s132 = sadd.s32 %s131, 1
    %s133 = scalar_select %p130, %s131, %s132
    %p136 = pneg %p130
    %p137 = scmp.eq.s32.totalorder %s11, 1
    %p138 = por %p136, %p137
    %p139 = scmp.ne.s32.totalorder %s131, %s134
    %p140 = scmp.eq.s32.totalorder %s11, 0
    %p141 = por %p139, %p140
    %p142 = scmp.ne.s32.totalorder %s131, %s134
    %p143 = scmp.eq.s32.totalorder %s16, 1
    %p144 = por %p142, %p143
    %p145 = scmp.ne.s32.totalorder %s134, %s135
    %p146 = scmp.eq.s32.totalorder %s16, 0
    %p147 = por %p145, %p146
    %p148 = scmp.ne.s32.totalorder %s134, %s135
    %p149 = scmp.eq.s32.totalorder %s17, 1
    %p150 = por %p148, %p149
    %p152 = scmp.ne.s32.totalorder %s135, %s151
    %p153 = scmp.eq.s32.totalorder %s17, 0
    %p154 = por %p152, %p153
    %p155 = scmp.le.s32.totalorder 1, %s11
    %p156 = scmp.lt.s32.totalorder %s11, 3
    %p157 = pnand %p155, %p156
    %p158 = pneg %p157
    // Predicated region
    $region9: #{forward.1} parent=5 // pred_check
      _
    $region10: #{forward.1} parent=5 // pred_check_branch
      %160 = sbr.rel (%p157) target = $region12
    $region11: #{forward.1} parent=5 // pred_region
      %s161 = ssub.s32 %s11, 1
      // Predicated region
      $region13: #{forward.1} parent=11 // pred_check
        %p162 = pneg %p58
      $region14: #{forward.1} parent=11 // pred_check_branch
        %164 = sbr.rel (%p162) target = $region16
      $region15: #{forward.1} parent=11 // pred_region
        _
      $region16: #{forward.1} parent=11 // pred_fallthru
        _
      // Predicated region
      $region17: #{forward.1} parent=11 // pred_check
        %p165 = pneg %p79
      $region18: #{forward.1} parent=11 // pred_check_branch
        %167 = sbr.rel (%p165) target = $region20
      $region19: #{forward.1} parent=11 // pred_region
        _
      $region20: #{forward.1} parent=11 // pred_fallthru
        _
      // Predicated region
      $region21: #{forward.1} parent=11 // pred_check
        %p168 = pneg %p100
      $region22: #{forward.1} parent=11 // pred_check_branch
        %170 = sbr.rel (%p168) target = $region24
      $region23: #{forward.1} parent=11 // pred_region
        _
      $region24: #{forward.1} parent=11 // pred_fallthru
        _
      // Predicated region
      $region25: #{forward.1} parent=11 // pred_check
        %p171 = pneg %p121
      $region26: #{forward.1} parent=11 // pred_check_branch
        %173 = sbr.rel (%p171) target = $region28
      $region27: #{forward.1} parent=11 // pred_region
        _
      $region28: #{forward.1} parent=11 // pred_fallthru
        _
    $region12: #{forward.1} parent=5 // pred_fallthru
      _
    %p174 = scmp.lt.s32.totalorder %s11, 2
    // Predicated region
    $region29: #{forward.1} parent=5 // pred_check
      %p175 = pneg %p174
    $region30: #{forward.1} parent=5 // pred_check_branch
      %177 = sbr.rel (%p175) target = $region32
    $region31: #{forward.1} parent=5 // pred_region
      // Predicated region
      $region33: #{forward.1} parent=31 // pred_check
        %p178 = pneg %p31
      $region34: #{forward.1} parent=31 // pred_check_branch
        %180 = sbr.rel (%p178) target = $region36
      $region35: #{forward.1} parent=31 // pred_region
        %p181 = scmp.lt.s32.totalorder %s11, 1
        %s182 = scalar_select %p181, %s11, 1
        %s183 = smul.addr %s182, 32
        %s184 = smul.addr %s183, 4
        %s185 = scalar_lea.vmem %s0, %s184
      $region36: #{forward.1} parent=31 // pred_fallthru
        _
    $region32: #{forward.1} parent=5 // pred_fallthru
      _
    %p186 = scmp.le.s32.totalorder 1, %s11
    %p187 = scmp.lt.s32.totalorder %s11, 3
    %p188 = pnand %p186, %p187
    %p189 = pneg %p188
    // Predicated region
    $region37: #{forward.1} parent=5 // pred_check
      _
    $region38: #{forward.1} parent=5 // pred_check_branch
      %191 = sbr.rel (%p188) target = $region40
    $region39: #{forward.1} parent=5 // pred_region
      %s192 = ssub.s32 %s11, 1
      %p193 = scmp.lt.s32.totalorder %s16, 1
      %s194 = scalar_select %p193, %s16, 1
      %s195 = smul.addr %s194, 32
      %s196 = smul.addr %s195, 4
      %s197 = scalar_lea.vmem %s0, %s196
      %p198 = pneg %p37
      %p199 = pneg %p34
      %p200 = pneg %p58
      %p201 = pneg %p55
      %p202 = pneg %p79
      %p203 = pneg %p76
      %p204 = pneg %p100
      %p205 = pneg %p97
      %p206 = pneg %p121
      %p207 = pneg %p118
      %p208 = pneg %p147
      %p209 = pneg %p144
      %p210 = scmp.lt.s32.totalorder %s16, 1
      %s211 = scalar_select %p210, %s16, 1
      %s212 = smul.addr %s211, 32
      %s213 = smul.addr %s212, 8
      %s214 = scalar_lea.vmem %s5, %s213
      %p215 = scmp.lt.s32.totalorder %s16, 1
      %s216 = scalar_select %p215, %s16, 1
      %s217 = smul.addr %s216, 32
      %s218 = smul.addr %s217, 4
      %s219 = scalar_lea.vmem %s0, %s218
      %p220 = scmp.lt.s32.totalorder %s16, 1
      %s221 = scalar_select %p220, %s16, 1
      %s222 = smul.addr %s221, 32
      %s223 = smul.addr %s222, 8
      %s224 = scalar_lea.vmem %s5, %s223
      %226 = vst [vmem:[#allocation2 + $0x80] sm:$0xff] 0
      %227 = vst [vmem:[#allocation2 + $0x88] sm:$0xff] 0
      %228 = vst [vmem:[#allocation3 + $0x80] sm:$0xff] 0
      %229 = vst [vmem:[#allocation3 + $0x88] sm:$0xff] 0
      %v230 = vld [vmem:[%s219] sm:$0xf]
      %v231 = vld [vmem:[%s219 + $0x4] sm:$0xf]
      %v232 = vld [vmem:[%s219 + $0x8] sm:$0xf]
      %v233 = vld [vmem:[%s219 + $0xc] sm:$0xf]
      %v234 = vld [vmem:[%s219 + $0x10] sm:$0xf]
      %v235 = vld [vmem:[%s219 + $0x14] sm:$0xf]
      %v236 = vld [vmem:[%s219 + $0x18] sm:$0xf]
      %v237 = vld [vmem:[%s219 + $0x1c] sm:$0xf]
      %v238 = vld [vmem:[%s219 + $0x20] sm:$0xf]
      %v239 = vld [vmem:[%s219 + $0x24] sm:$0xf]
      %v240 = vld [vmem:[%s219 + $0x28] sm:$0xf]
      %v241 = vld [vmem:[%s219 + $0x2c] sm:$0xf]
      %v242 = vld [vmem:[%s219 + $0x30] sm:$0xf]
      %v243 = vld [vmem:[%s219 + $0x34] sm:$0xf]
      %v244 = vld [vmem:[%s219 + $0x38] sm:$0xf]
      %v245 = vld [vmem:[%s219 + $0x3c] sm:$0xf]
      %v246 = vld [vmem:[%s219 + $0x40] sm:$0xf]
      %v247 = vld [vmem:[%s219 + $0x44] sm:$0xf]
      %v248 = vld [vmem:[%s219 + $0x48] sm:$0xf]
      %v249 = vld [vmem:[%s219 + $0x4c] sm:$0xf]
      %v250 = vld [vmem:[%s219 + $0x50] sm:$0xf]
      %v251 = vld [vmem:[%s219 + $0x54] sm:$0xf]
      %v252 = vld [vmem:[%s219 + $0x58] sm:$0xf]
      %v253 = vld [vmem:[%s219 + $0x5c] sm:$0xf]
      %v254 = vld [vmem:[%s219 + $0x60] sm:$0xf]
      %v255 = vld [vmem:[%s219 + $0x64] sm:$0xf]
      %v256 = vld [vmem:[%s219 + $0x68] sm:$0xf]
      %v257 = vld [vmem:[%s219 + $0x6c] sm:$0xf]
      %v258 = vld [vmem:[%s219 + $0x70] sm:$0xf]
      %v259 = vld [vmem:[%s219 + $0x74] sm:$0xf]
      %v260 = vld [vmem:[%s219 + $0x78] sm:$0xf]
      %v261 = vld [vmem:[%s219 + $0x7c] sm:$0xf]
      %v262 = vld [vmem:[%s1] sm:$0xf]
      %v263 = vld [vmem:[%s1 + $0x4] sm:$0xf]
      %v264 = vld [vmem:[%s1 + $0x8] sm:$0xf]
      %v265 = vld [vmem:[%s1 + $0xc] sm:$0xf]
      %v266 = vld [vmem:[%s1 + $0x10] sm:$0xf]
      %v267 = vld [vmem:[%s1 + $0x14] sm:$0xf]
      %v268 = vld [vmem:[%s1 + $0x18] sm:$0xf]
      %v269 = vld [vmem:[%s1 + $0x1c] sm:$0xf]
      %v270 = vld [vmem:[%s1 + $0x20] sm:$0xf]
      %v271 = vld [vmem:[%s1 + $0x24] sm:$0xf]
      %v272 = vld [vmem:[%s1 + $0x28] sm:$0xf]
      %v273 = vld [vmem:[%s1 + $0x2c] sm:$0xf]
      %v274 = vld [vmem:[%s1 + $0x30] sm:$0xf]
      %v275 = vld [vmem:[%s1 + $0x34] sm:$0xf]
      %v276 = vld [vmem:[%s1 + $0x38] sm:$0xf]
      %v277 = vld [vmem:[%s1 + $0x3c] sm:$0xf]
      %v278 = vld [vmem:[%s2] sm:$0x1]
      %v280 = vlaneseq
      %v281 = vshrl.u32 %v280, 7
      %v282 = vsub.s32 0, %v281
      %v283 = vrot.slane %v278, %v282
      %v317 = vunpack.c.l.b16 %v230
      %v318 = vunpack.c.l.b16 %v231
      %v319 = vunpack.c.l.b16 %v232
      %v320 = vunpack.c.l.b16 %v233
      %v321 = vunpack.c.l.b16 %v234
      %v322 = vunpack.c.l.b16 %v235
      %v323 = vunpack.c.l.b16 %v236
      %v324 = vunpack.c.l.b16 %v237
      %v325 = vunpack.c.l.b16 %v238
      %v326 = vunpack.c.l.b16 %v239
      %v327 = vunpack.c.l.b16 %v240
      %v328 = vunpack.c.l.b16 %v241
      %v329 = vunpack.c.l.b16 %v242
      %v330 = vunpack.c.l.b16 %v243
      %v331 = vunpack.c.l.b16 %v244
      %v332 = vunpack.c.l.b16 %v245
      %v333 = vunpack.c.l.b16 %v246
      %v334 = vunpack.c.l.b16 %v247
      %v335 = vunpack.c.l.b16 %v248
      %v336 = vunpack.c.l.b16 %v249
      %v337 = vunpack.c.l.b16 %v250
      %v338 = vunpack.c.l.b16 %v251
      %v339 = vunpack.c.l.b16 %v252
      %v340 = vunpack.c.l.b16 %v253
      %v341 = vunpack.c.l.b16 %v254
      %v342 = vunpack.c.l.b16 %v255
      %v343 = vunpack.c.l.b16 %v256
      %v344 = vunpack.c.l.b16 %v257
      %v345 = vunpack.c.l.b16 %v258
      %v346 = vunpack.c.l.b16 %v259
      %v347 = vunpack.c.l.b16 %v260
      %v348 = vunpack.c.l.b16 %v261
      %v349 = vpack.c.b16 %v318, %v317
      %v350 = vpack.c.b16 %v320, %v319
      %v351 = vpack.c.b16 %v322, %v321
      %v352 = vpack.c.b16 %v324, %v323
      %v353 = vpack.c.b16 %v326, %v325
      %v354 = vpack.c.b16 %v328, %v327
      %v355 = vpack.c.b16 %v330, %v329
      %v356 = vpack.c.b16 %v332, %v331
      %v357 = vpack.c.b16 %v334, %v333
      %v358 = vpack.c.b16 %v336, %v335
      %v359 = vpack.c.b16 %v338, %v337
      %v360 = vpack.c.b16 %v340, %v339
      %v361 = vpack.c.b16 %v342, %v341
      %v362 = vpack.c.b16 %v344, %v343
      %v363 = vpack.c.b16 %v346, %v345
      %v364 = vpack.c.b16 %v348, %v347
      %v397 = vunpack.c.l.b16 %v262
      %v398 = vunpack.c.l.b16 %v263
      %v399 = vunpack.c.l.b16 %v264
      %v400 = vunpack.c.l.b16 %v265
      %v401 = vunpack.c.l.b16 %v266
      %v402 = vunpack.c.l.b16 %v267
      %v403 = vunpack.c.l.b16 %v268
      %v404 = vunpack.c.l.b16 %v269
      %v405 = vunpack.c.l.b16 %v270
      %v406 = vunpack.c.l.b16 %v271
      %v407 = vunpack.c.l.b16 %v272
      %v408 = vunpack.c.l.b16 %v273
      %v409 = vunpack.c.l.b16 %v274
      %v410 = vunpack.c.l.b16 %v275
      %v411 = vunpack.c.l.b16 %v276
      %v412 = vunpack.c.l.b16 %v277
      %v413 = vpack.c.b16 %v398, %v397
      %v414 = vpack.c.b16 %v400, %v399
      %v415 = vpack.c.b16 %v402, %v401
      %v416 = vpack.c.b16 %v404, %v403
      %v417 = vpack.c.b16 %v406, %v405
      %v418 = vpack.c.b16 %v408, %v407
      %v419 = vpack.c.b16 %v410, %v409
      %v420 = vpack.c.b16 %v412, %v411
      %429 = vmatprep.subr.bf16.mxu0 0
      %430 = vmatpush1.bf16.msra.mxu0 %v413
      %431 = vmatprep.subr.bf16.mxu0 0
      %432 = vmatpush1.bf16.msra.mxu0 %v414
      %433 = vmatprep.subr.bf16.mxu0 0
      %434 = vmatpush1.bf16.msra.mxu0 %v415
      %435 = vmatprep.subr.bf16.mxu0 0
      %436 = vmatpush1.bf16.msra.mxu0 %v416
      %437 = vmatprep.subr.bf16.mxu0 0
      %438 = vmatpush1.bf16.msra.mxu0 %v417
      %439 = vmatprep.subr.bf16.mxu0 0
      %440 = vmatpush1.bf16.msra.mxu0 %v418
      %441 = vmatprep.subr.bf16.mxu0 0
      %442 = vmatpush1.bf16.msra.mxu0 %v419
      %443 = vmatprep.subr.bf16.mxu0 0
      %444 = vmatpush1.bf16.msra.mxu0 %v420
      %445 = vmatprep.subr.bf16.mxu0 0
      %446 = vmatpush1.bf16.msra.mxu0 0
      %447 = vmatprep.subr.bf16.mxu0 0
      %448 = vmatpush1.bf16.msra.mxu0 0
      %449 = vmatprep.subr.bf16.mxu0 0
      %450 = vmatpush1.bf16.msra.mxu0 0
      %451 = vmatprep.subr.bf16.mxu0 0
      %452 = vmatpush1.bf16.msra.mxu0 0
      %453 = vmatprep.subr.bf16.mxu0 0
      %454 = vmatpush1.bf16.msra.mxu0 0
      %455 = vmatprep.subr.bf16.mxu0 0
      %456 = vmatpush1.bf16.msra.mxu0 0
      %457 = vmatprep.subr.bf16.mxu0 0
      %458 = vmatpush1.bf16.msra.mxu0 0
      %459 = vmatprep.subr.bf16.mxu0 0
      %460 = vmatpush1.bf16.msra.mxu0 0
      %461 = vmatprep.mubr.bf16.mxu0 0
      %462 = vmatmul.mubr.bf16.gmra.mrb[0].mxu0 %v349
      %v463 = vpop.f32.mrb[0].mxu0
      %v464 = vadd.f32 %v283, %v463
      %v465 = vpop.f32.mrb[0].mxu0
      %v466 = vpop.f32.mrb[0].mxu0
      %v467 = vadd.f32 %v283, %v466
      %v468 = vpop.f32.mrb[0].mxu0
      %469 = vmatprep.mubr.bf16.mxu0 0
      %470 = vmatmul.mubr.bf16.gmra.mrb[0].mxu0 %v350
      %v471 = vpop.f32.mrb[0].mxu0
      %v472 = vadd.f32 %v283, %v471
      %v473 = vpop.f32.mrb[0].mxu0
      %v474 = vpop.f32.mrb[0].mxu0
      %v475 = vadd.f32 %v283, %v474
      %v476 = vpop.f32.mrb[0].mxu0
      %477 = vmatprep.mubr.bf16.mxu0 0
      %478 = vmatmul.mubr.bf16.gmra.mrb[0].mxu0 %v351
      %v479 = vpop.f32.mrb[0].mxu0
      %v480 = vadd.f32 %v283, %v479
      %v481 = vpop.f32.mrb[0].mxu0
      %v482 = vpop.f32.mrb[0].mxu0
      %v483 = vadd.f32 %v283, %v482
      %v484 = vpop.f32.mrb[0].mxu0
      %485 = vmatprep.mubr.bf16.mxu0 0
      %486 = vmatmul.mubr.bf16.gmra.mrb[0].mxu0 %v352
      %v487 = vpop.f32.mrb[0].mxu0
      %v488 = vadd.f32 %v283, %v487
      %v489 = vpop.f32.mrb[0].mxu0
      %v490 = vpop.f32.mrb[0].mxu0
      %v491 = vadd.f32 %v283, %v490
      %v492 = vpop.f32.mrb[0].mxu0
      %493 = vmatprep.mubr.bf16.mxu0 0
      %494 = vmatmul.mubr.bf16.gmra.mrb[0].mxu0 %v353
      %v495 = vpop.f32.mrb[0].mxu0
      %v496 = vadd.f32 %v283, %v495
      %v497 = vpop.f32.mrb[0].mxu0
      %v498 = vpop.f32.mrb[0].mxu0
      %v499 = vadd.f32 %v283, %v498
      %v500 = vpop.f32.mrb[0].mxu0
      %501 = vmatprep.mubr.bf16.mxu0 0
      %502 = vmatmul.mubr.bf16.gmra.mrb[0].mxu0 %v354
      %v503 = vpop.f32.mrb[0].mxu0
      %v504 = vadd.f32 %v283, %v503
      %v505 = vpop.f32.mrb[0].mxu0
      %v506 = vpop.f32.mrb[0].mxu0
      %v507 = vadd.f32 %v283, %v506
      %v508 = vpop.f32.mrb[0].mxu0
      %509 = vmatprep.mubr.bf16.mxu0 0
      %510 = vmatmul.mubr.bf16.gmra.mrb[0].mxu0 %v355
      %v511 = vpop.f32.mrb[0].mxu0
      %v512 = vadd.f32 %v283, %v511
      %v513 = vpop.f32.mrb[0].mxu0
      %v514 = vpop.f32.mrb[0].mxu0
      %v515 = vadd.f32 %v283, %v514
      %v516 = vpop.f32.mrb[0].mxu0
      %517 = vmatprep.mubr.bf16.mxu0 0
      %518 = vmatmul.mubr.bf16.gmra.mrb[0].mxu0 %v356
      %v519 = vpop.f32.mrb[0].mxu0
      %v520 = vadd.f32 %v283, %v519
      %v521 = vpop.f32.mrb[0].mxu0
      %v522 = vpop.f32.mrb[0].mxu0
      %v523 = vadd.f32 %v283, %v522
      %v524 = vpop.f32.mrb[0].mxu0
      %525 = vmatprep.mubr.bf16.mxu0 0
      %526 = vmatmul.mubr.bf16.gmra.mrb[0].mxu0 %v357
      %v527 = vpop.f32.mrb[0].mxu0
      %v528 = vadd.f32 %v283, %v527
      %v529 = vpop.f32.mrb[0].mxu0
      %v530 = vpop.f32.mrb[0].mxu0
      %v531 = vadd.f32 %v283, %v530
      %v532 = vpop.f32.mrb[0].mxu0
      %533 = vmatprep.mubr.bf16.mxu0 0
      %534 = vmatmul.mubr.bf16.gmra.mrb[0].mxu0 %v358
      %v535 = vpop.f32.mrb[0].mxu0
      %v536 = vadd.f32 %v283, %v535
      %v537 = vpop.f32.mrb[0].mxu0
      %v538 = vpop.f32.mrb[0].mxu0
      %v539 = vadd.f32 %v283, %v538
      %v540 = vpop.f32.mrb[0].mxu0
      %541 = vmatprep.mubr.bf16.mxu0 0
      %542 = vmatmul.mubr.bf16.gmra.mrb[0].mxu0 %v359
      %v543 = vpop.f32.mrb[0].mxu0
      %v544 = vadd.f32 %v283, %v543
      %v545 = vpop.f32.mrb[0].mxu0
      %v546 = vpop.f32.mrb[0].mxu0
      %v547 = vadd.f32 %v283, %v546
      %v548 = vpop.f32.mrb[0].mxu0
      %549 = vmatprep.mubr.bf16.mxu0 0
      %550 = vmatmul.mubr.bf16.gmra.mrb[0].mxu0 %v360
      %v551 = vpop.f32.mrb[0].mxu0
      %v552 = vadd.f32 %v283, %v551
      %v553 = vpop.f32.mrb[0].mxu0
      %v554 = vpop.f32.mrb[0].mxu0
      %v555 = vadd.f32 %v283, %v554
      %v556 = vpop.f32.mrb[0].mxu0
      %557 = vmatprep.mubr.bf16.mxu0 0
      %558 = vmatmul.mubr.bf16.gmra.mrb[0].mxu0 %v361
      %v559 = vpop.f32.mrb[0].mxu0
      %v560 = vadd.f32 %v283, %v559
      %v561 = vpop.f32.mrb[0].mxu0
      %v562 = vpop.f32.mrb[0].mxu0
      %v563 = vadd.f32 %v283, %v562
      %v564 = vpop.f32.mrb[0].mxu0
      %565 = vmatprep.mubr.bf16.mxu0 0
      %566 = vmatmul.mubr.bf16.gmra.mrb[0].mxu0 %v362
      %v567 = vpop.f32.mrb[0].mxu0
      %v568 = vadd.f32 %v283, %v567
      %v569 = vpop.f32.mrb[0].mxu0
      %v570 = vpop.f32.mrb[0].mxu0
      %v571 = vadd.f32 %v283, %v570
      %v572 = vpop.f32.mrb[0].mxu0
      %573 = vmatprep.mubr.bf16.mxu0 0
      %574 = vmatmul.mubr.bf16.gmra.mrb[0].mxu0 %v363
      %v575 = vpop.f32.mrb[0].mxu0
      %v576 = vadd.f32 %v283, %v575
      %v577 = vpop.f32.mrb[0].mxu0
      %v578 = vpop.f32.mrb[0].mxu0
      %v579 = vadd.f32 %v283, %v578
      %v580 = vpop.f32.mrb[0].mxu0
      %581 = vmatprep.mubr.bf16.mxu0 0
      %582 = vmatmul.mubr.bf16.gmra.mrb[0].mxu0 %v364
      %v583 = vpop.f32.mrb[0].mxu0
      %v584 = vadd.f32 %v283, %v583
      %v585 = vpop.f32.mrb[0].mxu0
      %v586 = vpop.f32.mrb[0].mxu0
      %v587 = vadd.f32 %v283, %v586
      %v588 = vpop.f32.mrb[0].mxu0
      %589 = vdwg.mxu0
      %v590 = vpack.c.bf16 %v467, %v464
      %v591 = vpack.c.bf16 %v475, %v472
      %v592 = vpack.c.bf16 %v483, %v480
      %v593 = vpack.c.bf16 %v491, %v488
      %v594 = vpack.c.bf16 %v499, %v496
      %v595 = vpack.c.bf16 %v507, %v504
      %v596 = vpack.c.bf16 %v515, %v512
      %v597 = vpack.c.bf16 %v523, %v520
      %v598 = vpack.c.bf16 %v531, %v528
      %v599 = vpack.c.bf16 %v539, %v536
      %v600 = vpack.c.bf16 %v547, %v544
      %v601 = vpack.c.bf16 %v555, %v552
      %v602 = vpack.c.bf16 %v563, %v560
      %v603 = vpack.c.bf16 %v571, %v568
      %v604 = vpack.c.bf16 %v579, %v576
      %v605 = vpack.c.bf16 %v587, %v584
      %606 = vst [vmem:[#allocation2] sm:$0xff] %v590
      %607 = vst [vmem:[#allocation2 + $0x8] sm:$0xff] %v591
      %608 = vst [vmem:[#allocation2 + $0x10] sm:$0xff] %v592
      %609 = vst [vmem:[#allocation2 + $0x18] sm:$0xff] %v593
      %610 = vst [vmem:[#allocation2 + $0x20] sm:$0xff] %v594
      %611 = vst [vmem:[#allocation2 + $0x28] sm:$0xff] %v595
      %612 = vst [vmem:[#allocation2 + $0x30] sm:$0xff] %v596
      %613 = vst [vmem:[#allocation2 + $0x38] sm:$0xff] %v597
      %614 = vst [vmem:[#allocation2 + $0x40] sm:$0xff] %v598
      %615 = vst [vmem:[#allocation2 + $0x48] sm:$0xff] %v599
      %616 = vst [vmem:[#allocation2 + $0x50] sm:$0xff] %v600
      %617 = vst [vmem:[#allocation2 + $0x58] sm:$0xff] %v601
      %618 = vst [vmem:[#allocation2 + $0x60] sm:$0xff] %v602
      %619 = vst [vmem:[#allocation2 + $0x68] sm:$0xff] %v603
      %620 = vst [vmem:[#allocation2 + $0x70] sm:$0xff] %v604
      %621 = vst [vmem:[#allocation2 + $0x78] sm:$0xff] %v605
      %v622 = vld [vmem:[#allocation2] sm:$0xff]
      %v623 = vld [vmem:[#allocation2 + $0x8] sm:$0xff]
      %v624 = vld [vmem:[#allocation2 + $0x10] sm:$0xff]
      %v625 = vld [vmem:[#allocation2 + $0x18] sm:$0xff]
      %v626 = vld [vmem:[#allocation2 + $0x20] sm:$0xff]
      %v627 = vld [vmem:[#allocation2 + $0x28] sm:$0xff]
      %v628 = vld [vmem:[#allocation2 + $0x30] sm:$0xff]
      %v629 = vld [vmem:[#allocation2 + $0x38] sm:$0xff]
      %v630 = vld [vmem:[#allocation2 + $0x40] sm:$0xff]
      %v631 = vld [vmem:[#allocation2 + $0x48] sm:$0xff]
      %v632 = vld [vmem:[#allocation2 + $0x50] sm:$0xff]
      %v633 = vld [vmem:[#allocation2 + $0x58] sm:$0xff]
      %v634 = vld [vmem:[#allocation2 + $0x60] sm:$0xff]
      %v635 = vld [vmem:[#allocation2 + $0x68] sm:$0xff]
      %v636 = vld [vmem:[#allocation2 + $0x70] sm:$0xff]
      %v637 = vld [vmem:[#allocation2 + $0x78] sm:$0xff]
      %638 = vst [vmem:[#allocation4] sm:$0xff] %v622
      %639 = vst [vmem:[#allocation4 + $0x20] sm:$0xff] %v623
      %640 = vst [vmem:[#allocation4 + $0x40] sm:$0xff] %v624
      %641 = vst [vmem:[#allocation4 + $0x60] sm:$0xff] %v625
      %642 = vst [vmem:[#allocation4 + $0x80] sm:$0xff] %v626
      %643 = vst [vmem:[#allocation4 + $0xa0] sm:$0xff] %v627
      %644 = vst [vmem:[#allocation4 + $0xc0] sm:$0xff] %v628
      %645 = vst [vmem:[#allocation4 + $0xe0] sm:$0xff] %v629
      %646 = vst [vmem:[#allocation4 + $0x100] sm:$0xff] %v630
      %647 = vst [vmem:[#allocation4 + $0x120] sm:$0xff] %v631
      %648 = vst [vmem:[#allocation4 + $0x140] sm:$0xff] %v632
      %649 = vst [vmem:[#allocation4 + $0x160] sm:$0xff] %v633
      %650 = vst [vmem:[#allocation4 + $0x180] sm:$0xff] %v634
      %651 = vst [vmem:[#allocation4 + $0x1a0] sm:$0xff] %v635
      %652 = vst [vmem:[#allocation4 + $0x1c0] sm:$0xff] %v636
      %653 = vst [vmem:[#allocation4 + $0x1e0] sm:$0xff] %v637
      %v654 = vld [vmem:[#allocation2] sm:$0xff]
      %v655 = vld [vmem:[#allocation2 + $0x8] sm:$0xff]
      %v656 = vld [vmem:[#allocation2 + $0x10] sm:$0xff]
      %v657 = vld [vmem:[#allocation2 + $0x18] sm:$0xff]
      %v658 = vld [vmem:[#allocation2 + $0x20] sm:$0xff]
      %v659 = vld [vmem:[#allocation2 + $0x28] sm:$0xff]
      %v660 = vld [vmem:[#allocation2 + $0x30] sm:$0xff]
      %v661 = vld [vmem:[#allocation2 + $0x38] sm:$0xff]
      %v662 = vld [vmem:[#allocation2 + $0x40] sm:$0xff]
      %v663 = vld [vmem:[#allocation2 + $0x48] sm:$0xff]
      %v664 = vld [vmem:[#allocation2 + $0x50] sm:$0xff]
      %v665 = vld [vmem:[#allocation2 + $0x58] sm:$0xff]
      %v666 = vld [vmem:[#allocation2 + $0x60] sm:$0xff]
      %v667 = vld [vmem:[#allocation2 + $0x68] sm:$0xff]
      %v668 = vld [vmem:[#allocation2 + $0x70] sm:$0xff]
      %v669 = vld [vmem:[#allocation2 + $0x78] sm:$0xff]
      %v670 = vld [vmem:[#allocation2 + $0x80] sm:$0x1]
      %vm671 = vsmask.f32 7424
      %v673 = vshrl.u32 %v654, 16
      %v675 = vshll.u32 %v654, 16
      %v677 = vrot.slane %v675, 1
      %v678 = vor.u32 %v673, %v677
      %v680 = vshll.u32 %v655, 16
      %v682 = vrot.slane %v680, 1
      %v683 = vsel %vm671, %v678, %v682
      %v684 = vshrl.u32 %v655, 16
      %v686 = vor.u32 %v684, %v682
      %v688 = vshll.u32 %v656, 16
      %v690 = vrot.slane %v688, 1
      %v691 = vsel %vm671, %v686, %v690
      %v692 = vshrl.u32 %v656, 16
      %v694 = vor.u32 %v692, %v690
      %v696 = vshll.u32 %v657, 16
      %v698 = vrot.slane %v696, 1
      %v699 = vsel %vm671, %v694, %v698
      %v700 = vshrl.u32 %v657, 16
      %v702 = vor.u32 %v700, %v698
      %v704 = vshll.u32 %v658, 16
      %v706 = vrot.slane %v704, 1
      %v707 = vsel %vm671, %v702, %v706
      %v708 = vshrl.u32 %v658, 16
      %v710 = vor.u32 %v708, %v706
      %v712 = vshll.u32 %v659, 16
      %v714 = vrot.slane %v712, 1
      %v715 = vsel %vm671, %v710, %v714
      %v716 = vshrl.u32 %v659, 16
      %v718 = vor.u32 %v716, %v714
      %v720 = vshll.u32 %v660, 16
      %v722 = vrot.slane %v720, 1
      %v723 = vsel %vm671, %v718, %v722
      %v724 = vshrl.u32 %v660, 16
      %v726 = vor.u32 %v724, %v722
      %v728 = vshll.u32 %v661, 16
      %v730 = vrot.slane %v728, 1
      %v731 = vsel %vm671, %v726, %v730
      %v732 = vshrl.u32 %v661, 16
      %v734 = vor.u32 %v732, %v730
      %v736 = vshll.u32 %v662, 16
      %v738 = vrot.slane %v736, 1
      %v739 = vsel %vm671, %v734, %v738
      %v740 = vshrl.u32 %v662, 16
      %v742 = vor.u32 %v740, %v738
      %v744 = vshll.u32 %v663, 16
      %v746 = vrot.slane %v744, 1
      %v747 = vsel %vm671, %v742, %v746
      %v748 = vshrl.u32 %v663, 16
      %v750 = vor.u32 %v748, %v746
      %v752 = vshll.u32 %v664, 16
      %v754 = vrot.slane %v752, 1
      %v755 = vsel %vm671, %v750, %v754
      %v756 = vshrl.u32 %v664, 16
      %v758 = vor.u32 %v756, %v754
      %v760 = vshll.u32 %v665, 16
      %v762 = vrot.slane %v760, 1
      %v763 = vsel %vm671, %v758, %v762
      %v764 = vshrl.u32 %v665, 16
      %v766 = vor.u32 %v764, %v762
      %v768 = vshll.u32 %v666, 16
      %v770 = vrot.slane %v768, 1
      %v771 = vsel %vm671, %v766, %v770
      %v772 = vshrl.u32 %v666, 16
      %v774 = vor.u32 %v772, %v770
      %v776 = vshll.u32 %v667, 16
      %v778 = vrot.slane %v776, 1
      %v779 = vsel %vm671, %v774, %v778
      %v780 = vshrl.u32 %v667, 16
      %v782 = vor.u32 %v780, %v778
      %v784 = vshll.u32 %v668, 16
      %v786 = vrot.slane %v784, 1
      %v787 = vsel %vm671, %v782, %v786
      %v788 = vshrl.u32 %v668, 16
      %v790 = vor.u32 %v788, %v786
      %v792 = vshll.u32 %v669, 16
      %v794 = vrot.slane %v792, 1
      %v795 = vsel %vm671, %v790, %v794
      %v796 = vshrl.u32 %v669, 16
      %v798 = vor.u32 %v796, %v794
      %v800 = vshll.u32 %v670, 16
      %v802 = vrot.slane %v800, 1
      %v803 = vsel %vm671, %v798, %v802
      %820 = vst [vmem:[#allocation4 + $0x8] sm:$0xff] %v683
      %821 = vst [vmem:[#allocation4 + $0x28] sm:$0xff] %v691
      %822 = vst [vmem:[#allocation4 + $0x48] sm:$0xff] %v699
      %823 = vst [vmem:[#allocation4 + $0x68] sm:$0xff] %v707
      %824 = vst [vmem:[#allocation4 + $0x88] sm:$0xff] %v715
      %825 = vst [vmem:[#allocation4 + $0xa8] sm:$0xff] %v723
      %826 = vst [vmem:[#allocation4 + $0xc8] sm:$0xff] %v731
      %827 = vst [vmem:[#allocation4 + $0xe8] sm:$0xff] %v739
      %828 = vst [vmem:[#allocation4 + $0x108] sm:$0xff] %v747
      %829 = vst [vmem:[#allocation4 + $0x128] sm:$0xff] %v755
      %830 = vst [vmem:[#allocation4 + $0x148] sm:$0xff] %v763
      %831 = vst [vmem:[#allocation4 + $0x168] sm:$0xff] %v771
      %832 = vst [vmem:[#allocation4 + $0x188] sm:$0xff] %v779
      %833 = vst [vmem:[#allocation4 + $0x1a8] sm:$0xff] %v787
      %834 = vst [vmem:[#allocation4 + $0x1c8] sm:$0xff] %v795
      %835 = vst [vmem:[#allocation4 + $0x1e8] sm:$0xff] %v803
      %v836 = vld [vmem:[#allocation2 + $0x8] sm:$0xff]
      %v837 = vld [vmem:[#allocation2 + $0x10] sm:$0xff]
      %v838 = vld [vmem:[#allocation2 + $0x18] sm:$0xff]
      %v839 = vld [vmem:[#allocation2 + $0x20] sm:$0xff]
      %v840 = vld [vmem:[#allocation2 + $0x28] sm:$0xff]
      %v841 = vld [vmem:[#allocation2 + $0x30] sm:$0xff]
      %v842 = vld [vmem:[#allocation2 + $0x38] sm:$0xff]
      %v843 = vld [vmem:[#allocation2 + $0x40] sm:$0xff]
      %v844 = vld [vmem:[#allocation2 + $0x48] sm:$0xff]
      %v845 = vld [vmem:[#allocation2 + $0x50] sm:$0xff]
      %v846 = vld [vmem:[#allocation2 + $0x58] sm:$0xff]
      %v847 = vld [vmem:[#allocation2 + $0x60] sm:$0xff]
      %v848 = vld [vmem:[#allocation2 + $0x68] sm:$0xff]
      %v849 = vld [vmem:[#allocation2 + $0x70] sm:$0xff]
      %v850 = vld [vmem:[#allocation2 + $0x78] sm:$0xff]
      %v851 = vld [vmem:[#allocation2 + $0x80] sm:$0xff]
      %852 = vst [vmem:[#allocation4 + $0x10] sm:$0xff] %v836
      %853 = vst [vmem:[#allocation4 + $0x30] sm:$0xff] %v837
      %854 = vst [vmem:[#allocation4 + $0x50] sm:$0xff] %v838
      %855 = vst [vmem:[#allocation4 + $0x70] sm:$0xff] %v839
      %856 = vst [vmem:[#allocation4 + $0x90] sm:$0xff] %v840
      %857 = vst [vmem:[#allocation4 + $0xb0] sm:$0xff] %v841
      %858 = vst [vmem:[#allocation4 + $0xd0] sm:$0xff] %v842
      %859 = vst [vmem:[#allocation4 + $0xf0] sm:$0xff] %v843
      %860 = vst [vmem:[#allocation4 + $0x110] sm:$0xff] %v844
      %861 = vst [vmem:[#allocation4 + $0x130] sm:$0xff] %v845
      %862 = vst [vmem:[#allocation4 + $0x150] sm:$0xff] %v846
      %863 = vst [vmem:[#allocation4 + $0x170] sm:$0xff] %v847
      %864 = vst [vmem:[#allocation4 + $0x190] sm:$0xff] %v848
      %865 = vst [vmem:[#allocation4 + $0x1b0] sm:$0xff] %v849
      %866 = vst [vmem:[#allocation4 + $0x1d0] sm:$0xff] %v850
      %867 = vst [vmem:[#allocation4 + $0x1f0] sm:$0xff] %v851
      %v868 = vld [vmem:[#allocation2 + $0x8] sm:$0xff]
      %v869 = vld [vmem:[#allocation2 + $0x10] sm:$0xff]
      %v870 = vld [vmem:[#allocation2 + $0x18] sm:$0xff]
      %v871 = vld [vmem:[#allocation2 + $0x20] sm:$0xff]
      %v872 = vld [vmem:[#allocation2 + $0x28] sm:$0xff]
      %v873 = vld [vmem:[#allocation2 + $0x30] sm:$0xff]
      %v874 = vld [vmem:[#allocation2 + $0x38] sm:$0xff]
      %v875 = vld [vmem:[#allocation2 + $0x40] sm:$0xff]
      %v876 = vld [vmem:[#allocation2 + $0x48] sm:$0xff]
      %v877 = vld [vmem:[#allocation2 + $0x50] sm:$0xff]
      %v878 = vld [vmem:[#allocation2 + $0x58] sm:$0xff]
      %v879 = vld [vmem:[#allocation2 + $0x60] sm:$0xff]
      %v880 = vld [vmem:[#allocation2 + $0x68] sm:$0xff]
      %v881 = vld [vmem:[#allocation2 + $0x70] sm:$0xff]
      %v882 = vld [vmem:[#allocation2 + $0x78] sm:$0xff]
      %v883 = vld [vmem:[#allocation2 + $0x80] sm:$0xff]
      %v884 = vld [vmem:[#allocation2 + $0x88] sm:$0x1]
      %v886 = vshrl.u32 %v868, 16
      %v888 = vshll.u32 %v868, 16
      %v890 = vrot.slane %v888, 1
      %v891 = vor.u32 %v886, %v890
      %v893 = vshll.u32 %v869, 16
      %v895 = vrot.slane %v893, 1
      %v896 = vsel %vm671, %v891, %v895
      %v897 = vshrl.u32 %v869, 16
      %v899 = vor.u32 %v897, %v895
      %v901 = vshll.u32 %v870, 16
      %v903 = vrot.slane %v901, 1
      %v904 = vsel %vm671, %v899, %v903
      %v905 = vshrl.u32 %v870, 16
      %v907 = vor.u32 %v905, %v903
      %v909 = vshll.u32 %v871, 16
      %v911 = vrot.slane %v909, 1
      %v912 = vsel %vm671, %v907, %v911
      %v913 = vshrl.u32 %v871, 16
      %v915 = vor.u32 %v913, %v911
      %v917 = vshll.u32 %v872, 16
      %v919 = vrot.slane %v917, 1
      %v920 = vsel %vm671, %v915, %v919
      %v921 = vshrl.u32 %v872, 16
      %v923 = vor.u32 %v921, %v919
      %v925 = vshll.u32 %v873, 16
      %v927 = vrot.slane %v925, 1
      %v928 = vsel %vm671, %v923, %v927
      %v929 = vshrl.u32 %v873, 16
      %v931 = vor.u32 %v929, %v927
      %v933 = vshll.u32 %v874, 16
      %v935 = vrot.slane %v933, 1
      %v936 = vsel %vm671, %v931, %v935
      %v937 = vshrl.u32 %v874, 16
      %v939 = vor.u32 %v937, %v935
      %v941 = vshll.u32 %v875, 16
      %v943 = vrot.slane %v941, 1
      %v944 = vsel %vm671, %v939, %v943
      %v945 = vshrl.u32 %v875, 16
      %v947 = vor.u32 %v945, %v943
      %v949 = vshll.u32 %v876, 16
      %v951 = vrot.slane %v949, 1
      %v952 = vsel %vm671, %v947, %v951
      %v953 = vshrl.u32 %v876, 16
      %v955 = vor.u32 %v953, %v951
      %v957 = vshll.u32 %v877, 16
      %v959 = vrot.slane %v957, 1
      %v960 = vsel %vm671, %v955, %v959
      %v961 = vshrl.u32 %v877, 16
      %v963 = vor.u32 %v961, %v959
      %v965 = vshll.u32 %v878, 16
      %v967 = vrot.slane %v965, 1
      %v968 = vsel %vm671, %v963, %v967
      %v969 = vshrl.u32 %v878, 16
      %v971 = vor.u32 %v969, %v967
      %v973 = vshll.u32 %v879, 16
      %v975 = vrot.slane %v973, 1
      %v976 = vsel %vm671, %v971, %v975
      %v977 = vshrl.u32 %v879, 16
      %v979 = vor.u32 %v977, %v975
      %v981 = vshll.u32 %v880, 16
      %v983 = vrot.slane %v981, 1
      %v984 = vsel %vm671, %v979, %v983
      %v985 = vshrl.u32 %v880, 16
      %v987 = vor.u32 %v985, %v983
      %v989 = vshll.u32 %v881, 16
      %v991 = vrot.slane %v989, 1
      %v992 = vsel %vm671, %v987, %v991
      %v993 = vshrl.u32 %v881, 16
      %v995 = vor.u32 %v993, %v991
      %v997 = vshll.u32 %v882, 16
      %v999 = vrot.slane %v997, 1
      %v1000 = vsel %vm671, %v995, %v999
      %v1001 = vshrl.u32 %v882, 16
      %v1003 = vor.u32 %v1001, %v999
      %v1005 = vshll.u32 %v883, 16
      %v1007 = vrot.slane %v1005, 1
      %v1008 = vsel %vm671, %v1003, %v1007
      %v1009 = vshrl.u32 %v883, 16
      %v1011 = vor.u32 %v1009, %v1007
      %v1013 = vshll.u32 %v884, 16
      %v1015 = vrot.slane %v1013, 1
      %v1016 = vsel %vm671, %v1011, %v1015
      %1033 = vst [vmem:[#allocation4 + $0x18] sm:$0xff] %v896
      %1034 = vst [vmem:[#allocation4 + $0x38] sm:$0xff] %v904
      %1035 = vst [vmem:[#allocation4 + $0x58] sm:$0xff] %v912
      %1036 = vst [vmem:[#allocation4 + $0x78] sm:$0xff] %v920
      %1037 = vst [vmem:[#allocation4 + $0x98] sm:$0xff] %v928
      %1038 = vst [vmem:[#allocation4 + $0xb8] sm:$0xff] %v936
      %1039 = vst [vmem:[#allocation4 + $0xd8] sm:$0xff] %v944
      %1040 = vst [vmem:[#allocation4 + $0xf8] sm:$0xff] %v952
      %1041 = vst [vmem:[#allocation4 + $0x118] sm:$0xff] %v960
      %1042 = vst [vmem:[#allocation4 + $0x138] sm:$0xff] %v968
      %1043 = vst [vmem:[#allocation4 + $0x158] sm:$0xff] %v976
      %1044 = vst [vmem:[#allocation4 + $0x178] sm:$0xff] %v984
      %1045 = vst [vmem:[#allocation4 + $0x198] sm:$0xff] %v992
      %1046 = vst [vmem:[#allocation4 + $0x1b8] sm:$0xff] %v1000
      %1047 = vst [vmem:[#allocation4 + $0x1d8] sm:$0xff] %v1008
      %1048 = vst [vmem:[#allocation4 + $0x1f8] sm:$0xff] %v1016
      %v1049 = vld [vmem:[#allocation4] sm:$0xff]
      %v1050 = vld [vmem:[#allocation4 + $0x8] sm:$0xff]
      %v1051 = vld [vmem:[#allocation4 + $0x10] sm:$0xff]
      %v1052 = vld [vmem:[#allocation4 + $0x18] sm:$0xff]
      %v1053 = vld [vmem:[#allocation4 + $0x20] sm:$0xff]
      %v1054 = vld [vmem:[#allocation4 + $0x28] sm:$0xff]
      %v1055 = vld [vmem:[#allocation4 + $0x30] sm:$0xff]
      %v1056 = vld [vmem:[#allocation4 + $0x38] sm:$0xff]
      %v1057 = vld [vmem:[#allocation4 + $0x40] sm:$0xff]
      %v1058 = vld [vmem:[#allocation4 + $0x48] sm:$0xff]
      %v1059 = vld [vmem:[#allocation4 + $0x50] sm:$0xff]
      %v1060 = vld [vmem:[#allocation4 + $0x58] sm:$0xff]
      %v1061 = vld [vmem:[#allocation4 + $0x60] sm:$0xff]
      %v1062 = vld [vmem:[#allocation4 + $0x68] sm:$0xff]
      %v1063 = vld [vmem:[#allocation4 + $0x70] sm:$0xff]
      %v1064 = vld [vmem:[#allocation4 + $0x78] sm:$0xff]
      %v1065 = vld [vmem:[#allocation4 + $0x80] sm:$0xff]
      %v1066 = vld [vmem:[#allocation4 + $0x88] sm:$0xff]
      %v1067 = vld [vmem:[#allocation4 + $0x90] sm:$0xff]
      %v1068 = vld [vmem:[#allocation4 + $0x98] sm:$0xff]
      %v1069 = vld [vmem:[#allocation4 + $0xa0] sm:$0xff]
      %v1070 = vld [vmem:[#allocation4 + $0xa8] sm:$0xff]
      %v1071 = vld [vmem:[#allocation4 + $0xb0] sm:$0xff]
      %v1072 = vld [vmem:[#allocation4 + $0xb8] sm:$0xff]
      %v1073 = vld [vmem:[#allocation4 + $0xc0] sm:$0xff]
      %v1074 = vld [vmem:[#allocation4 + $0xc8] sm:$0xff]
      %v1075 = vld [vmem:[#allocation4 + $0xd0] sm:$0xff]
      %v1076 = vld [vmem:[#allocation4 + $0xd8] sm:$0xff]
      %v1077 = vld [vmem:[#allocation4 + $0xe0] sm:$0xff]
      %v1078 = vld [vmem:[#allocation4 + $0xe8] sm:$0xff]
      %v1079 = vld [vmem:[#allocation4 + $0xf0] sm:$0xff]
      %v1080 = vld [vmem:[#allocation4 + $0xf8] sm:$0xff]
      %v1081 = vld [vmem:[#allocation4 + $0x100] sm:$0xff]
      %v1082 = vld [vmem:[#allocation4 + $0x108] sm:$0xff]
      %v1083 = vld [vmem:[#allocation4 + $0x110] sm:$0xff]
      %v1084 = vld [vmem:[#allocation4 + $0x118] sm:$0xff]
      %v1085 = vld [vmem:[#allocation4 + $0x120] sm:$0xff]
      %v1086 = vld [vmem:[#allocation4 + $0x128] sm:$0xff]
      %v1087 = vld [vmem:[#allocation4 + $0x130] sm:$0xff]
      %v1088 = vld [vmem:[#allocation4 + $0x138] sm:$0xff]
      %v1089 = vld [vmem:[#allocation4 + $0x140] sm:$0xff]
      %v1090 = vld [vmem:[#allocation4 + $0x148] sm:$0xff]
      %v1091 = vld [vmem:[#allocation4 + $0x150] sm:$0xff]
      %v1092 = vld [vmem:[#allocation4 + $0x158] sm:$0xff]
      %v1093 = vld [vmem:[#allocation4 + $0x160] sm:$0xff]
      %v1094 = vld [vmem:[#allocation4 + $0x168] sm:$0xff]
      %v1095 = vld [vmem:[#allocation4 + $0x170] sm:$0xff]
      %v1096 = vld [vmem:[#allocation4 + $0x178] sm:$0xff]
      %v1097 = vld [vmem:[#allocation4 + $0x180] sm:$0xff]
      %v1098 = vld [vmem:[#allocation4 + $0x188] sm:$0xff]
      %v1099 = vld [vmem:[#allocation4 + $0x190] sm:$0xff]
      %v1100 = vld [vmem:[#allocation4 + $0x198] sm:$0xff]
      %v1101 = vld [vmem:[#allocation4 + $0x1a0] sm:$0xff]
      %v1102 = vld [vmem:[#allocation4 + $0x1a8] sm:$0xff]
      %v1103 = vld [vmem:[#allocation4 + $0x1b0] sm:$0xff]
      %v1104 = vld [vmem:[#allocation4 + $0x1b8] sm:$0xff]
      %v1105 = vld [vmem:[#allocation4 + $0x1c0] sm:$0xff]
      %v1106 = vld [vmem:[#allocation4 + $0x1c8] sm:$0xff]
      %v1107 = vld [vmem:[#allocation4 + $0x1d0] sm:$0xff]
      %v1108 = vld [vmem:[#allocation4 + $0x1d8] sm:$0xff]
      %v1109 = vld [vmem:[#allocation4 + $0x1e0] sm:$0xff]
      %v1110 = vld [vmem:[#allocation4 + $0x1e8] sm:$0xff]
      %v1111 = vld [vmem:[#allocation4 + $0x1f0] sm:$0xff]
      %v1112 = vld [vmem:[#allocation4 + $0x1f8] sm:$0xff]
      %v1113 = vld [vmem:[%s3] sm:$0xf]
      %v1114 = vld [vmem:[%s3 + $0x4] sm:$0xf]
      %v1115 = vld [vmem:[%s3 + $0x8] sm:$0xf]
      %v1116 = vld [vmem:[%s3 + $0xc] sm:$0xf]
      %v1117 = vld [vmem:[%s3 + $0x10] sm:$0xf]
      %v1118 = vld [vmem:[%s3 + $0x14] sm:$0xf]
      %v1119 = vld [vmem:[%s3 + $0x18] sm:$0xf]
      %v1120 = vld [vmem:[%s3 + $0x1c] sm:$0xf]
      %v1121 = vld [vmem:[%s3 + $0x20] sm:$0xf]
      %v1122 = vld [vmem:[%s3 + $0x24] sm:$0xf]
      %v1123 = vld [vmem:[%s3 + $0x28] sm:$0xf]
      %v1124 = vld [vmem:[%s3 + $0x2c] sm:$0xf]
      %v1125 = vld [vmem:[%s3 + $0x30] sm:$0xf]
      %v1126 = vld [vmem:[%s3 + $0x34] sm:$0xf]
      %v1127 = vld [vmem:[%s3 + $0x38] sm:$0xf]
      %v1128 = vld [vmem:[%s3 + $0x3c] sm:$0xf]
      %v1129 = vld [vmem:[%s3 + $0x40] sm:$0xf]
      %v1130 = vld [vmem:[%s3 + $0x44] sm:$0xf]
      %v1131 = vld [vmem:[%s3 + $0x48] sm:$0xf]
      %v1132 = vld [vmem:[%s3 + $0x4c] sm:$0xf]
      %v1133 = vld [vmem:[%s3 + $0x50] sm:$0xf]
      %v1134 = vld [vmem:[%s3 + $0x54] sm:$0xf]
      %v1135 = vld [vmem:[%s3 + $0x58] sm:$0xf]
      %v1136 = vld [vmem:[%s3 + $0x5c] sm:$0xf]
      %v1137 = vld [vmem:[%s3 + $0x60] sm:$0xf]
      %v1138 = vld [vmem:[%s3 + $0x64] sm:$0xf]
      %v1139 = vld [vmem:[%s3 + $0x68] sm:$0xf]
      %v1140 = vld [vmem:[%s3 + $0x6c] sm:$0xf]
      %v1141 = vld [vmem:[%s3 + $0x70] sm:$0xf]
      %v1142 = vld [vmem:[%s3 + $0x74] sm:$0xf]
      %v1143 = vld [vmem:[%s3 + $0x78] sm:$0xf]
      %v1144 = vld [vmem:[%s3 + $0x7c] sm:$0xf]
      %v1145 = vld [vmem:[%s3 + $0x80] sm:$0xf]
      %v1146 = vld [vmem:[%s3 + $0x84] sm:$0xf]
      %v1147 = vld [vmem:[%s3 + $0x88] sm:$0xf]
      %v1148 = vld [vmem:[%s3 + $0x8c] sm:$0xf]
      %v1149 = vld [vmem:[%s3 + $0x90] sm:$0xf]
      %v1150 = vld [vmem:[%s3 + $0x94] sm:$0xf]
      %v1151 = vld [vmem:[%s3 + $0x98] sm:$0xf]
      %v1152 = vld [vmem:[%s3 + $0x9c] sm:$0xf]
      %v1153 = vld [vmem:[%s3 + $0xa0] sm:$0xf]
      %v1154 = vld [vmem:[%s3 + $0xa4] sm:$0xf]
      %v1155 = vld [vmem:[%s3 + $0xa8] sm:$0xf]
      %v1156 = vld [vmem:[%s3 + $0xac] sm:$0xf]
      %v1157 = vld [vmem:[%s3 + $0xb0] sm:$0xf]
      %v1158 = vld [vmem:[%s3 + $0xb4] sm:$0xf]
      %v1159 = vld [vmem:[%s3 + $0xb8] sm:$0xf]
      %v1160 = vld [vmem:[%s3 + $0xbc] sm:$0xf]
      %v1161 = vld [vmem:[%s3 + $0xc0] sm:$0xf]
      %v1162 = vld [vmem:[%s3 + $0xc4] sm:$0xf]
      %v1163 = vld [vmem:[%s3 + $0xc8] sm:$0xf]
      %v1164 = vld [vmem:[%s3 + $0xcc] sm:$0xf]
      %v1165 = vld [vmem:[%s3 + $0xd0] sm:$0xf]
      %v1166 = vld [vmem:[%s3 + $0xd4] sm:$0xf]
      %v1167 = vld [vmem:[%s3 + $0xd8] sm:$0xf]
      %v1168 = vld [vmem:[%s3 + $0xdc] sm:$0xf]
      %v1169 = vld [vmem:[%s3 + $0xe0] sm:$0xf]
      %v1170 = vld [vmem:[%s3 + $0xe4] sm:$0xf]
      %v1171 = vld [vmem:[%s3 + $0xe8] sm:$0xf]
      %v1172 = vld [vmem:[%s3 + $0xec] sm:$0xf]
      %v1173 = vld [vmem:[%s3 + $0xf0] sm:$0xf]
      %v1174 = vld [vmem:[%s3 + $0xf4] sm:$0xf]
      %v1175 = vld [vmem:[%s3 + $0xf8] sm:$0xf]
      %v1176 = vld [vmem:[%s3 + $0xfc] sm:$0xf]
      %v1177 = vld [vmem:[%s4] sm:$0x1]
      %v1179 = vlaneseq
      %v1180 = vshrl.u32 %v1179, 7
      %v1181 = vsub.s32 0, %v1180
      %v1182 = vrot.slane %v1177, %v1181
      %v1248 = vunpack.c.l.b16 %v1113
      %v1249 = vunpack.c.l.b16 %v1114
      %v1250 = vunpack.c.l.b16 %v1115
      %v1251 = vunpack.c.l.b16 %v1116
      %v1252 = vunpack.c.l.b16 %v1117
      %v1253 = vunpack.c.l.b16 %v1118
      %v1254 = vunpack.c.l.b16 %v1119
      %v1255 = vunpack.c.l.b16 %v1120
      %v1256 = vunpack.c.l.b16 %v1121
      %v1257 = vunpack.c.l.b16 %v1122
      %v1258 = vunpack.c.l.b16 %v1123
      %v1259 = vunpack.c.l.b16 %v1124
      %v1260 = vunpack.c.l.b16 %v1125
      %v1261 = vunpack.c.l.b16 %v1126
      %v1262 = vunpack.c.l.b16 %v1127
      %v1263 = vunpack.c.l.b16 %v1128
      %v1264 = vunpack.c.l.b16 %v1129
      %v1265 = vunpack.c.l.b16 %v1130
      %v1266 = vunpack.c.l.b16 %v1131
      %v1267 = vunpack.c.l.b16 %v1132
      %v1268 = vunpack.c.l.b16 %v1133
      %v1269 = vunpack.c.l.b16 %v1134
      %v1270 = vunpack.c.l.b16 %v1135
      %v1271 = vunpack.c.l.b16 %v1136
      %v1272 = vunpack.c.l.b16 %v1137
      %v1273 = vunpack.c.l.b16 %v1138
      %v1274 = vunpack.c.l.b16 %v1139
      %v1275 = vunpack.c.l.b16 %v1140
      %v1276 = vunpack.c.l.b16 %v1141
      %v1277 = vunpack.c.l.b16 %v1142
      %v1278 = vunpack.c.l.b16 %v1143
      %v1279 = vunpack.c.l.b16 %v1144
      %v1280 = vunpack.c.l.b16 %v1145
      %v1281 = vunpack.c.l.b16 %v1146
      %v1282 = vunpack.c.l.b16 %v1147
      %v1283 = vunpack.c.l.b16 %v1148
      %v1284 = vunpack.c.l.b16 %v1149
      %v1285 = vunpack.c.l.b16 %v1150
      %v1286 = vunpack.c.l.b16 %v1151
      %v1287 = vunpack.c.l.b16 %v1152
      %v1288 = vunpack.c.l.b16 %v1153
      %v1289 = vunpack.c.l.b16 %v1154
      %v1290 = vunpack.c.l.b16 %v1155
      %v1291 = vunpack.c.l.b16 %v1156
      %v1292 = vunpack.c.l.b16 %v1157
      %v1293 = vunpack.c.l.b16 %v1158
      %v1294 = vunpack.c.l.b16 %v1159
      %v1295 = vunpack.c.l.b16 %v1160
      %v1296 = vunpack.c.l.b16 %v1161
      %v1297 = vunpack.c.l.b16 %v1162
      %v1298 = vunpack.c.l.b16 %v1163
      %v1299 = vunpack.c.l.b16 %v1164
      %v1300 = vunpack.c.l.b16 %v1165
      %v1301 = vunpack.c.l.b16 %v1166
      %v1302 = vunpack.c.l.b16 %v1167
      %v1303 = vunpack.c.l.b16 %v1168
      %v1304 = vunpack.c.l.b16 %v1169
      %v1305 = vunpack.c.l.b16 %v1170
      %v1306 = vunpack.c.l.b16 %v1171
      %v1307 = vunpack.c.l.b16 %v1172
      %v1308 = vunpack.c.l.b16 %v1173
      %v1309 = vunpack.c.l.b16 %v1174
      %v1310 = vunpack.c.l.b16 %v1175
      %v1311 = vunpack.c.l.b16 %v1176
      %v1312 = vpack.c.b16 %v1249, %v1248
      %v1313 = vpack.c.b16 %v1251, %v1250
      %v1314 = vpack.c.b16 %v1253, %v1252
      %v1315 = vpack.c.b16 %v1255, %v1254
      %v1316 = vpack.c.b16 %v1257, %v1256
      %v1317 = vpack.c.b16 %v1259, %v1258
      %v1318 = vpack.c.b16 %v1261, %v1260
      %v1319 = vpack.c.b16 %v1263, %v1262
      %v1320 = vpack.c.b16 %v1265, %v1264
      %v1321 = vpack.c.b16 %v1267, %v1266
      %v1322 = vpack.c.b16 %v1269, %v1268
      %v1323 = vpack.c.b16 %v1271, %v1270
      %v1324 = vpack.c.b16 %v1273, %v1272
      %v1325 = vpack.c.b16 %v1275, %v1274
      %v1326 = vpack.c.b16 %v1277, %v1276
      %v1327 = vpack.c.b16 %v1279, %v1278
      %v1328 = vpack.c.b16 %v1281, %v1280
      %v1329 = vpack.c.b16 %v1283, %v1282
      %v1330 = vpack.c.b16 %v1285, %v1284
      %v1331 = vpack.c.b16 %v1287, %v1286
      %v1332 = vpack.c.b16 %v1289, %v1288
      %v1333 = vpack.c.b16 %v1291, %v1290
      %v1334 = vpack.c.b16 %v1293, %v1292
      %v1335 = vpack.c.b16 %v1295, %v1294
      %v1336 = vpack.c.b16 %v1297, %v1296
      %v1337 = vpack.c.b16 %v1299, %v1298
      %v1338 = vpack.c.b16 %v1301, %v1300
      %v1339 = vpack.c.b16 %v1303, %v1302
      %v1340 = vpack.c.b16 %v1305, %v1304
      %v1341 = vpack.c.b16 %v1307, %v1306
      %v1342 = vpack.c.b16 %v1309, %v1308
      %v1343 = vpack.c.b16 %v1311, %v1310
      %1376 = vmatprep.subr.bf16.mxu0 0
      %1377 = vmatpush1.bf16.msra.mxu0 %v1312
      %1378 = vmatprep.subr.bf16.mxu0 0
      %1379 = vmatpush1.bf16.msra.mxu0 %v1313
      %1380 = vmatprep.subr.bf16.mxu0 0
      %1381 = vmatpush1.bf16.msra.mxu0 %v1314
      %1382 = vmatprep.subr.bf16.mxu0 0
      %1383 = vmatpush1.bf16.msra.mxu0 %v1315
      %1384 = vmatprep.subr.bf16.mxu0 0
      %1385 = vmatpush1.bf16.msra.mxu0 %v1316
      %1386 = vmatprep.subr.bf16.mxu0 0
      %1387 = vmatpush1.bf16.msra.mxu0 %v1317
      %1388 = vmatprep.subr.bf16.mxu0 0
      %1389 = vmatpush1.bf16.msra.mxu0 %v1318
      %1390 = vmatprep.subr.bf16.mxu0 0
      %1391 = vmatpush1.bf16.msra.mxu0 %v1319
      %1392 = vmatprep.subr.bf16.mxu0 0
      %1393 = vmatpush1.bf16.msra.mxu0 %v1320
      %1394 = vmatprep.subr.bf16.mxu0 0
      %1395 = vmatpush1.bf16.msra.mxu0 %v1321
      %1396 = vmatprep.subr.bf16.mxu0 0
      %1397 = vmatpush1.bf16.msra.mxu0 %v1322
      %1398 = vmatprep.subr.bf16.mxu0 0
      %1399 = vmatpush1.bf16.msra.mxu0 %v1323
      %1400 = vmatprep.subr.bf16.mxu0 0
      %1401 = vmatpush1.bf16.msra.mxu0 %v1324
      %1402 = vmatprep.subr.bf16.mxu0 0
      %1403 = vmatpush1.bf16.msra.mxu0 %v1325
      %1404 = vmatprep.subr.bf16.mxu0 0
      %1405 = vmatpush1.bf16.msra.mxu0 %v1326
      %1406 = vmatprep.subr.bf16.mxu0 0
      %1407 = vmatpush1.bf16.msra.mxu0 %v1327
      %1408 = vmatprep.mubr.bf16.mxu0 %v1050
      %1409 = vmatmul.mubr.bf16.gmra.mrb[0].mxu0 %v1049
      %v1410 = vpop.f32.mrb[0].mxu0
      %v1411 = vadd.f32 %v1182, %v1410
      %v1412 = vpop.f32.mrb[0].mxu0
      %v1413 = vpop.f32.mrb[0].mxu0
      %v1414 = vadd.f32 %v1182, %v1413
      %v1415 = vpop.f32.mrb[0].mxu0
      %1416 = vmatprep.mubr.bf16.mxu0 %v1054
      %1417 = vmatmul.mubr.bf16.gmra.mrb[0].mxu0 %v1053
      %v1418 = vpop.f32.mrb[0].mxu0
      %v1419 = vadd.f32 %v1182, %v1418
      %v1420 = vpop.f32.mrb[0].mxu0
      %v1421 = vpop.f32.mrb[0].mxu0
      %v1422 = vadd.f32 %v1182, %v1421
      %v1423 = vpop.f32.mrb[0].mxu0
      %1424 = vmatprep.mubr.bf16.mxu0 %v1058
      %1425 = vmatmul.mubr.bf16.gmra.mrb[0].mxu0 %v1057
      %v1426 = vpop.f32.mrb[0].mxu0
      %v1427 = vadd.f32 %v1182, %v1426
      %v1428 = vpop.f32.mrb[0].mxu0
      %v1429 = vpop.f32.mrb[0].mxu0
      %v1430 = vadd.f32 %v1182, %v1429
      %v1431 = vpop.f32.mrb[0].mxu0
      %1432 = vmatprep.mubr.bf16.mxu0 %v1062
      %1433 = vmatmul.mubr.bf16.gmra.mrb[0].mxu0 %v1061
      %v1434 = vpop.f32.mrb[0].mxu0
      %v1435 = vadd.f32 %v1182, %v1434
      %v1436 = vpop.f32.mrb[0].mxu0
      %v1437 = vpop.f32.mrb[0].mxu0
      %v1438 = vadd.f32 %v1182, %v1437
      %v1439 = vpop.f32.mrb[0].mxu0
      %1440 = vmatprep.mubr.bf16.mxu0 %v1066
      %1441 = vmatmul.mubr.bf16.gmra.mrb[0].mxu0 %v1065
      %v1442 = vpop.f32.mrb[0].mxu0
      %v1443 = vadd.f32 %v1182, %v1442
      %v1444 = vpop.f32.mrb[0].mxu0
      %v1445 = vpop.f32.mrb[0].mxu0
      %v1446 = vadd.f32 %v1182, %v1445
      %v1447 = vpop.f32.mrb[0].mxu0
      %1448 = vmatprep.mubr.bf16.mxu0 %v1070
      %1449 = vmatmul.mubr.bf16.gmra.mrb[0].mxu0 %v1069
      %v1450 = vpop.f32.mrb[0].mxu0
      %v1451 = vadd.f32 %v1182, %v1450
      %v1452 = vpop.f32.mrb[0].mxu0
      %v1453 = vpop.f32.mrb[0].mxu0
      %v1454 = vadd.f32 %v1182, %v1453
      %v1455 = vpop.f32.mrb[0].mxu0
      %1456 = vmatprep.mubr.bf16.mxu0 %v1074
      %1457 = vmatmul.mubr.bf16.gmra.mrb[0].mxu0 %v1073
      %v1458 = vpop.f32.mrb[0].mxu0
      %v1459 = vadd.f32 %v1182, %v1458
      %v1460 = vpop.f32.mrb[0].mxu0
      %v1461 = vpop.f32.mrb[0].mxu0
      %v1462 = vadd.f32 %v1182, %v1461
      %v1463 = vpop.f32.mrb[0].mxu0
      %1464 = vmatprep.mubr.bf16.mxu0 %v1078
      %1465 = vmatmul.mubr.bf16.gmra.mrb[0].mxu0 %v1077
      %v1466 = vpop.f32.mrb[0].mxu0
      %v1467 = vadd.f32 %v1182, %v1466
      %v1468 = vpop.f32.mrb[0].mxu0
      %v1469 = vpop.f32.mrb[0].mxu0
      %v1470 = vadd.f32 %v1182, %v1469
      %v1471 = vpop.f32.mrb[0].mxu0
      %1472 = vmatprep.mubr.bf16.mxu0 %v1082
      %1473 = vmatmul.mubr.bf16.gmra.mrb[0].mxu0 %v1081
      %v1474 = vpop.f32.mrb[0].mxu0
      %v1475 = vadd.f32 %v1182, %v1474
      %v1476 = vpop.f32.mrb[0].mxu0
      %v1477 = vpop.f32.mrb[0].mxu0
      %v1478 = vadd.f32 %v1182, %v1477
      %v1479 = vpop.f32.mrb[0].mxu0
      %1480 = vmatprep.mubr.bf16.mxu0 %v1086
      %1481 = vmatmul.mubr.bf16.gmra.mrb[0].mxu0 %v1085
      %v1482 = vpop.f32.mrb[0].mxu0
      %v1483 = vadd.f32 %v1182, %v1482
      %v1484 = vpop.f32.mrb[0].mxu0
      %v1485 = vpop.f32.mrb[0].mxu0
      %v1486 = vadd.f32 %v1182, %v1485
      %v1487 = vpop.f32.mrb[0].mxu0
      %1488 = vmatprep.mubr.bf16.mxu0 %v1090
      %1489 = vmatmul.mubr.bf16.gmra.mrb[0].mxu0 %v1089
      %v1490 = vpop.f32.mrb[0].mxu0
      %v1491 = vadd.f32 %v1182, %v1490
      %v1492 = vpop.f32.mrb[0].mxu0
      %v1493 = vpop.f32.mrb[0].mxu0
      %v1494 = vadd.f32 %v1182, %v1493
      %v1495 = vpop.f32.mrb[0].mxu0
      %1496 = vmatprep.mubr.bf16.mxu0 %v1094
      %1497 = vmatmul.mubr.bf16.gmra.mrb[0].mxu0 %v1093
      %v1498 = vpop.f32.mrb[0].mxu0
      %v1499 = vadd.f32 %v1182, %v1498
      %v1500 = vpop.f32.mrb[0].mxu0
      %v1501 = vpop.f32.mrb[0].mxu0
      %v1502 = vadd.f32 %v1182, %v1501
      %v1503 = vpop.f32.mrb[0].mxu0
      %1504 = vmatprep.mubr.bf16.mxu0 %v1098
      %1505 = vmatmul.mubr.bf16.gmra.mrb[0].mxu0 %v1097
      %v1506 = vpop.f32.mrb[0].mxu0
      %v1507 = vadd.f32 %v1182, %v1506
      %v1508 = vpop.f32.mrb[0].mxu0
      %v1509 = vpop.f32.mrb[0].mxu0
      %v1510 = vadd.f32 %v1182, %v1509
      %v1511 = vpop.f32.mrb[0].mxu0
      %1512 = vmatprep.mubr.bf16.mxu0 %v1102
      %1513 = vmatmul.mubr.bf16.gmra.mrb[0].mxu0 %v1101
      %v1514 = vpop.f32.mrb[0].mxu0
      %v1515 = vadd.f32 %v1182, %v1514
      %v1516 = vpop.f32.mrb[0].mxu0
      %v1517 = vpop.f32.mrb[0].mxu0
      %v1518 = vadd.f32 %v1182, %v1517
      %v1519 = vpop.f32.mrb[0].mxu0
      %1520 = vmatprep.mubr.bf16.mxu0 %v1106
      %1521 = vmatmul.mubr.bf16.gmra.mrb[0].mxu0 %v1105
      %v1522 = vpop.f32.mrb[0].mxu0
      %v1523 = vadd.f32 %v1182, %v1522
      %v1524 = vpop.f32.mrb[0].mxu0
      %v1525 = vpop.f32.mrb[0].mxu0
      %v1526 = vadd.f32 %v1182, %v1525
      %v1527 = vpop.f32.mrb[0].mxu0
      %1528 = vmatprep.mubr.bf16.mxu0 %v1110
      %1529 = vmatmul.mubr.bf16.gmra.mrb[0].mxu0 %v1109
      %v1530 = vpop.f32.mrb[0].mxu0
      %v1531 = vadd.f32 %v1182, %v1530
      %v1532 = vpop.f32.mrb[0].mxu0
      %v1533 = vpop.f32.mrb[0].mxu0
      %v1534 = vadd.f32 %v1182, %v1533
      %v1535 = vpop.f32.mrb[0].mxu0
      %1536 = vdwg.mxu0
      %1537 = vmatprep.subr.bf16.mxu0 0
      %1538 = vmatpush1.bf16.msra.mxu0 %v1328
      %1539 = vmatprep.subr.bf16.mxu0 0
      %1540 = vmatpush1.bf16.msra.mxu0 %v1329
      %1541 = vmatprep.subr.bf16.mxu0 0
      %1542 = vmatpush1.bf16.msra.mxu0 %v1330
      %1543 = vmatprep.subr.bf16.mxu0 0
      %1544 = vmatpush1.bf16.msra.mxu0 %v1331
      %1545 = vmatprep.subr.bf16.mxu0 0
      %1546 = vmatpush1.bf16.msra.mxu0 %v1332
      %1547 = vmatprep.subr.bf16.mxu0 0
      %1548 = vmatpush1.bf16.msra.mxu0 %v1333
      %1549 = vmatprep.subr.bf16.mxu0 0
      %1550 = vmatpush1.bf16.msra.mxu0 %v1334
      %1551 = vmatprep.subr.bf16.mxu0 0
      %1552 = vmatpush1.bf16.msra.mxu0 %v1335
      %1553 = vmatprep.subr.bf16.mxu0 0
      %1554 = vmatpush1.bf16.msra.mxu0 %v1336
      %1555 = vmatprep.subr.bf16.mxu0 0
      %1556 = vmatpush1.bf16.msra.mxu0 %v1337
      %1557 = vmatprep.subr.bf16.mxu0 0
      %1558 = vmatpush1.bf16.msra.mxu0 %v1338
      %1559 = vmatprep.subr.bf16.mxu0 0
      %1560 = vmatpush1.bf16.msra.mxu0 %v1339
      %1561 = vmatprep.subr.bf16.mxu0 0
      %1562 = vmatpush1.bf16.msra.mxu0 %v1340
      %1563 = vmatprep.subr.bf16.mxu0 0
      %1564 = vmatpush1.bf16.msra.mxu0 %v1341
      %1565 = vmatprep.subr.bf16.mxu0 0
      %1566 = vmatpush1.bf16.msra.mxu0 %v1342
      %1567 = vmatprep.subr.bf16.mxu0 0
      %1568 = vmatpush1.bf16.msra.mxu0 %v1343
      %1569 = vmatprep.mubr.bf16.mxu0 %v1052
      %1570 = vmatmul.mubr.bf16.gmra.mrb[0].mxu0 %v1051
      %v1571 = vpop.f32.mrb[0].mxu0
      %v1572 = vadd.f32 %v1411, %v1571
      %v1573 = vpop.f32.mrb[0].mxu0
      %v1574 = vpop.f32.mrb[0].mxu0
      %v1575 = vadd.f32 %v1414, %v1574
      %v1576 = vpop.f32.mrb[0].mxu0
      %1577 = vmatprep.mubr.bf16.mxu0 %v1056
      %1578 = vmatmul.mubr.bf16.gmra.mrb[0].mxu0 %v1055
      %v1579 = vpop.f32.mrb[0].mxu0
      %v1580 = vadd.f32 %v1419, %v1579
      %v1581 = vpop.f32.mrb[0].mxu0
      %v1582 = vpop.f32.mrb[0].mxu0
      %v1583 = vadd.f32 %v1422, %v1582
      %v1584 = vpop.f32.mrb[0].mxu0
      %1585 = vmatprep.mubr.bf16.mxu0 %v1060
      %1586 = vmatmul.mubr.bf16.gmra.mrb[0].mxu0 %v1059
      %v1587 = vpop.f32.mrb[0].mxu0
      %v1588 = vadd.f32 %v1427, %v1587
      %v1589 = vpop.f32.mrb[0].mxu0
      %v1590 = vpop.f32.mrb[0].mxu0
      %v1591 = vadd.f32 %v1430, %v1590
      %v1592 = vpop.f32.mrb[0].mxu0
      %1593 = vmatprep.mubr.bf16.mxu0 %v1064
      %1594 = vmatmul.mubr.bf16.gmra.mrb[0].mxu0 %v1063
      %v1595 = vpop.f32.mrb[0].mxu0
      %v1596 = vadd.f32 %v1435, %v1595
      %v1597 = vpop.f32.mrb[0].mxu0
      %v1598 = vpop.f32.mrb[0].mxu0
      %v1599 = vadd.f32 %v1438, %v1598
      %v1600 = vpop.f32.mrb[0].mxu0
      %1601 = vmatprep.mubr.bf16.mxu0 %v1068
      %1602 = vmatmul.mubr.bf16.gmra.mrb[0].mxu0 %v1067
      %v1603 = vpop.f32.mrb[0].mxu0
      %v1604 = vadd.f32 %v1443, %v1603
      %v1605 = vpop.f32.mrb[0].mxu0
      %v1606 = vpop.f32.mrb[0].mxu0
      %v1607 = vadd.f32 %v1446, %v1606
      %v1608 = vpop.f32.mrb[0].mxu0
      %1609 = vmatprep.mubr.bf16.mxu0 %v1072
      %1610 = vmatmul.mubr.bf16.gmra.mrb[0].mxu0 %v1071
      %v1611 = vpop.f32.mrb[0].mxu0
      %v1612 = vadd.f32 %v1451, %v1611
      %v1613 = vpop.f32.mrb[0].mxu0
      %v1614 = vpop.f32.mrb[0].mxu0
      %v1615 = vadd.f32 %v1454, %v1614
      %v1616 = vpop.f32.mrb[0].mxu0
      %1617 = vmatprep.mubr.bf16.mxu0 %v1076
      %1618 = vmatmul.mubr.bf16.gmra.mrb[0].mxu0 %v1075
      %v1619 = vpop.f32.mrb[0].mxu0
      %v1620 = vadd.f32 %v1459, %v1619
      %v1621 = vpop.f32.mrb[0].mxu0
      %v1622 = vpop.f32.mrb[0].mxu0
      %v1623 = vadd.f32 %v1462, %v1622
      %v1624 = vpop.f32.mrb[0].mxu0
      %1625 = vmatprep.mubr.bf16.mxu0 %v1080
      %1626 = vmatmul.mubr.bf16.gmra.mrb[0].mxu0 %v1079
      %v1627 = vpop.f32.mrb[0].mxu0
      %v1628 = vadd.f32 %v1467, %v1627
      %v1629 = vpop.f32.mrb[0].mxu0
      %v1630 = vpop.f32.mrb[0].mxu0
      %v1631 = vadd.f32 %v1470, %v1630
      %v1632 = vpop.f32.mrb[0].mxu0
      %1633 = vmatprep.mubr.bf16.mxu0 %v1084
      %1634 = vmatmul.mubr.bf16.gmra.mrb[0].mxu0 %v1083
      %v1635 = vpop.f32.mrb[0].mxu0
      %v1636 = vadd.f32 %v1475, %v1635
      %v1637 = vpop.f32.mrb[0].mxu0
      %v1638 = vpop.f32.mrb[0].mxu0
      %v1639 = vadd.f32 %v1478, %v1638
      %v1640 = vpop.f32.mrb[0].mxu0
      %1641 = vmatprep.mubr.bf16.mxu0 %v1088
      %1642 = vmatmul.mubr.bf16.gmra.mrb[0].mxu0 %v1087
      %v1643 = vpop.f32.mrb[0].mxu0
      %v1644 = vadd.f32 %v1483, %v1643
      %v1645 = vpop.f32.mrb[0].mxu0
      %v1646 = vpop.f32.mrb[0].mxu0
      %v1647 = vadd.f32 %v1486, %v1646
      %v1648 = vpop.f32.mrb[0].mxu0
      %1649 = vmatprep.mubr.bf16.mxu0 %v1092
      %1650 = vmatmul.mubr.bf16.gmra.mrb[0].mxu0 %v1091
      %v1651 = vpop.f32.mrb[0].mxu0
      %v1652 = vadd.f32 %v1491, %v1651
      %v1653 = vpop.f32.mrb[0].mxu0
      %v1654 = vpop.f32.mrb[0].mxu0
      %v1655 = vadd.f32 %v1494, %v1654
      %v1656 = vpop.f32.mrb[0].mxu0
      %1657 = vmatprep.mubr.bf16.mxu0 %v1096
      %1658 = vmatmul.mubr.bf16.gmra.mrb[0].mxu0 %v1095
      %v1659 = vpop.f32.mrb[0].mxu0
      %v1660 = vadd.f32 %v1499, %v1659
      %v1661 = vpop.f32.mrb[0].mxu0
      %v1662 = vpop.f32.mrb[0].mxu0
      %v1663 = vadd.f32 %v1502, %v1662
      %v1664 = vpop.f32.mrb[0].mxu0
      %1665 = vmatprep.mubr.bf16.mxu0 %v1100
      %1666 = vmatmul.mubr.bf16.gmra.mrb[0].mxu0 %v1099
      %v1667 = vpop.f32.mrb[0].mxu0
      %v1668 = vadd.f32 %v1507, %v1667
      %v1669 = vpop.f32.mrb[0].mxu0
      %v1670 = vpop.f32.mrb[0].mxu0
      %v1671 = vadd.f32 %v1510, %v1670
      %v1672 = vpop.f32.mrb[0].mxu0
      %1673 = vmatprep.mubr.bf16.mxu0 %v1104
      %1674 = vmatmul.mubr.bf16.gmra.mrb[0].mxu0 %v1103
      %v1675 = vpop.f32.mrb[0].mxu0
      %v1676 = vadd.f32 %v1515, %v1675
      %v1677 = vpop.f32.mrb[0].mxu0
      %v1678 = vpop.f32.mrb[0].mxu0
      %v1679 = vadd.f32 %v1518, %v1678
      %v1680 = vpop.f32.mrb[0].mxu0
      %1681 = vmatprep.mubr.bf16.mxu0 %v1108
      %1682 = vmatmul.mubr.bf16.gmra.mrb[0].mxu0 %v1107
      %v1683 = vpop.f32.mrb[0].mxu0
      %v1684 = vadd.f32 %v1523, %v1683
      %v1685 = vpop.f32.mrb[0].mxu0
      %v1686 = vpop.f32.mrb[0].mxu0
      %v1687 = vadd.f32 %v1526, %v1686
      %v1688 = vpop.f32.mrb[0].mxu0
      %1689 = vmatprep.mubr.bf16.mxu0 %v1112
      %1690 = vmatmul.mubr.bf16.gmra.mrb[0].mxu0 %v1111
      %v1691 = vpop.f32.mrb[0].mxu0
      %v1692 = vadd.f32 %v1531, %v1691
      %v1693 = vpop.f32.mrb[0].mxu0
      %v1694 = vpop.f32.mrb[0].mxu0
      %v1695 = vadd.f32 %v1534, %v1694
      %v1696 = vpop.f32.mrb[0].mxu0
      %1697 = vdwg.mxu0
      %v1698 = vpack.c.bf16 %v1575, %v1572
      %v1699 = vpack.c.bf16 %v1583, %v1580
      %v1700 = vpack.c.bf16 %v1591, %v1588
      %v1701 = vpack.c.bf16 %v1599, %v1596
      %v1702 = vpack.c.bf16 %v1607, %v1604
      %v1703 = vpack.c.bf16 %v1615, %v1612
      %v1704 = vpack.c.bf16 %v1623, %v1620
      %v1705 = vpack.c.bf16 %v1631, %v1628
      %v1706 = vpack.c.bf16 %v1639, %v1636
      %v1707 = vpack.c.bf16 %v1647, %v1644
      %v1708 = vpack.c.bf16 %v1655, %v1652
      %v1709 = vpack.c.bf16 %v1663, %v1660
      %v1710 = vpack.c.bf16 %v1671, %v1668
      %v1711 = vpack.c.bf16 %v1679, %v1676
      %v1712 = vpack.c.bf16 %v1687, %v1684
      %v1713 = vpack.c.bf16 %v1695, %v1692
      %1714 = vst [vmem:[#allocation3] sm:$0xff] %v1698
      %1715 = vst [vmem:[#allocation3 + $0x8] sm:$0xff] %v1699
      %1716 = vst [vmem:[#allocation3 + $0x10] sm:$0xff] %v1700
      %1717 = vst [vmem:[#allocation3 + $0x18] sm:$0xff] %v1701
      %1718 = vst [vmem:[#allocation3 + $0x20] sm:$0xff] %v1702
      %1719 = vst [vmem:[#allocation3 + $0x28] sm:$0xff] %v1703
      %1720 = vst [vmem:[#allocation3 + $0x30] sm:$0xff] %v1704
      %1721 = vst [vmem:[#allocation3 + $0x38] sm:$0xff] %v1705
      %1722 = vst [vmem:[#allocation3 + $0x40] sm:$0xff] %v1706
      %1723 = vst [vmem:[#allocation3 + $0x48] sm:$0xff] %v1707
      %1724 = vst [vmem:[#allocation3 + $0x50] sm:$0xff] %v1708
      %1725 = vst [vmem:[#allocation3 + $0x58] sm:$0xff] %v1709
      %1726 = vst [vmem:[#allocation3 + $0x60] sm:$0xff] %v1710
      %1727 = vst [vmem:[#allocation3 + $0x68] sm:$0xff] %v1711
      %1728 = vst [vmem:[#allocation3 + $0x70] sm:$0xff] %v1712
      %1729 = vst [vmem:[#allocation3 + $0x78] sm:$0xff] %v1713
      %v1730 = vld [vmem:[#allocation3] sm:$0xff]
      %v1731 = vld [vmem:[#allocation3 + $0x8] sm:$0xff]
      %v1732 = vld [vmem:[#allocation3 + $0x10] sm:$0xff]
      %v1733 = vld [vmem:[#allocation3 + $0x18] sm:$0xff]
      %v1734 = vld [vmem:[#allocation3 + $0x20] sm:$0xff]
      %v1735 = vld [vmem:[#allocation3 + $0x28] sm:$0xff]
      %v1736 = vld [vmem:[#allocation3 + $0x30] sm:$0xff]
      %v1737 = vld [vmem:[#allocation3 + $0x38] sm:$0xff]
      %v1738 = vld [vmem:[#allocation3 + $0x40] sm:$0xff]
      %v1739 = vld [vmem:[#allocation3 + $0x48] sm:$0xff]
      %v1740 = vld [vmem:[#allocation3 + $0x50] sm:$0xff]
      %v1741 = vld [vmem:[#allocation3 + $0x58] sm:$0xff]
      %v1742 = vld [vmem:[#allocation3 + $0x60] sm:$0xff]
      %v1743 = vld [vmem:[#allocation3 + $0x68] sm:$0xff]
      %v1744 = vld [vmem:[#allocation3 + $0x70] sm:$0xff]
      %v1745 = vld [vmem:[#allocation3 + $0x78] sm:$0xff]
      %1746 = vst [vmem:[#allocation4] sm:$0xff] %v1730
      %1747 = vst [vmem:[#allocation4 + $0x20] sm:$0xff] %v1731
      %1748 = vst [vmem:[#allocation4 + $0x40] sm:$0xff] %v1732
      %1749 = vst [vmem:[#allocation4 + $0x60] sm:$0xff] %v1733
      %1750 = vst [vmem:[#allocation4 + $0x80] sm:$0xff] %v1734
      %1751 = vst [vmem:[#allocation4 + $0xa0] sm:$0xff] %v1735
      %1752 = vst [vmem:[#allocation4 + $0xc0] sm:$0xff] %v1736
      %1753 = vst [vmem:[#allocation4 + $0xe0] sm:$0xff] %v1737
      %1754 = vst [vmem:[#allocation4 + $0x100] sm:$0xff] %v1738
      %1755 = vst [vmem:[#allocation4 + $0x120] sm:$0xff] %v1739
      %1756 = vst [vmem:[#allocation4 + $0x140] sm:$0xff] %v1740
      %1757 = vst [vmem:[#allocation4 + $0x160] sm:$0xff] %v1741
      %1758 = vst [vmem:[#allocation4 + $0x180] sm:$0xff] %v1742
      %1759 = vst [vmem:[#allocation4 + $0x1a0] sm:$0xff] %v1743
      %1760 = vst [vmem:[#allocation4 + $0x1c0] sm:$0xff] %v1744
      %1761 = vst [vmem:[#allocation4 + $0x1e0] sm:$0xff] %v1745
      %v1762 = vld [vmem:[#allocation3] sm:$0xff]
      %v1763 = vld [vmem:[#allocation3 + $0x8] sm:$0xff]
      %v1764 = vld [vmem:[#allocation3 + $0x10] sm:$0xff]
      %v1765 = vld [vmem:[#allocation3 + $0x18] sm:$0xff]
      %v1766 = vld [vmem:[#allocation3 + $0x20] sm:$0xff]
      %v1767 = vld [vmem:[#allocation3 + $0x28] sm:$0xff]
      %v1768 = vld [vmem:[#allocation3 + $0x30] sm:$0xff]
      %v1769 = vld [vmem:[#allocation3 + $0x38] sm:$0xff]
      %v1770 = vld [vmem:[#allocation3 + $0x40] sm:$0xff]
      %v1771 = vld [vmem:[#allocation3 + $0x48] sm:$0xff]
      %v1772 = vld [vmem:[#allocation3 + $0x50] sm:$0xff]
      %v1773 = vld [vmem:[#allocation3 + $0x58] sm:$0xff]
      %v1774 = vld [vmem:[#allocation3 + $0x60] sm:$0xff]
      %v1775 = vld [vmem:[#allocation3 + $0x68] sm:$0xff]
      %v1776 = vld [vmem:[#allocation3 + $0x70] sm:$0xff]
      %v1777 = vld [vmem:[#allocation3 + $0x78] sm:$0xff]
      %v1778 = vld [vmem:[#allocation3 + $0x80] sm:$0x1]
      %v1780 = vshrl.u32 %v1762, 16
      %v1782 = vshll.u32 %v1762, 16
      %v1784 = vrot.slane %v1782, 1
      %v1785 = vor.u32 %v1780, %v1784
      %v1787 = vshll.u32 %v1763, 16
      %v1789 = vrot.slane %v1787, 1
      %v1790 = vsel %vm671, %v1785, %v1789
      %v1791 = vshrl.u32 %v1763, 16
      %v1793 = vor.u32 %v1791, %v1789
      %v1795 = vshll.u32 %v1764, 16
      %v1797 = vrot.slane %v1795, 1
      %v1798 = vsel %vm671, %v1793, %v1797
      %v1799 = vshrl.u32 %v1764, 16
      %v1801 = vor.u32 %v1799, %v1797
      %v1803 = vshll.u32 %v1765, 16
      %v1805 = vrot.slane %v1803, 1
      %v1806 = vsel %vm671, %v1801, %v1805
      %v1807 = vshrl.u32 %v1765, 16
      %v1809 = vor.u32 %v1807, %v1805
      %v1811 = vshll.u32 %v1766, 16
      %v1813 = vrot.slane %v1811, 1
      %v1814 = vsel %vm671, %v1809, %v1813
      %v1815 = vshrl.u32 %v1766, 16
      %v1817 = vor.u32 %v1815, %v1813
      %v1819 = vshll.u32 %v1767, 16
      %v1821 = vrot.slane %v1819, 1
      %v1822 = vsel %vm671, %v1817, %v1821
      %v1823 = vshrl.u32 %v1767, 16
      %v1825 = vor.u32 %v1823, %v1821
      %v1827 = vshll.u32 %v1768, 16
      %v1829 = vrot.slane %v1827, 1
      %v1830 = vsel %vm671, %v1825, %v1829
      %v1831 = vshrl.u32 %v1768, 16
      %v1833 = vor.u32 %v1831, %v1829
      %v1835 = vshll.u32 %v1769, 16
      %v1837 = vrot.slane %v1835, 1
      %v1838 = vsel %vm671, %v1833, %v1837
      %v1839 = vshrl.u32 %v1769, 16
      %v1841 = vor.u32 %v1839, %v1837
      %v1843 = vshll.u32 %v1770, 16
      %v1845 = vrot.slane %v1843, 1
      %v1846 = vsel %vm671, %v1841, %v1845
      %v1847 = vshrl.u32 %v1770, 16
      %v1849 = vor.u32 %v1847, %v1845
      %v1851 = vshll.u32 %v1771, 16
      %v1853 = vrot.slane %v1851, 1
      %v1854 = vsel %vm671, %v1849, %v1853
      %v1855 = vshrl.u32 %v1771, 16
      %v1857 = vor.u32 %v1855, %v1853
      %v1859 = vshll.u32 %v1772, 16
      %v1861 = vrot.slane %v1859, 1
      %v1862 = vsel %vm671, %v1857, %v1861
      %v1863 = vshrl.u32 %v1772, 16
      %v1865 = vor.u32 %v1863, %v1861
      %v1867 = vshll.u32 %v1773, 16
      %v1869 = vrot.slane %v1867, 1
      %v1870 = vsel %vm671, %v1865, %v1869
      %v1871 = vshrl.u32 %v1773, 16
      %v1873 = vor.u32 %v1871, %v1869
      %v1875 = vshll.u32 %v1774, 16
      %v1877 = vrot.slane %v1875, 1
      %v1878 = vsel %vm671, %v1873, %v1877
      %v1879 = vshrl.u32 %v1774, 16
      %v1881 = vor.u32 %v1879, %v1877
      %v1883 = vshll.u32 %v1775, 16
      %v1885 = vrot.slane %v1883, 1
      %v1886 = vsel %vm671, %v1881, %v1885
      %v1887 = vshrl.u32 %v1775, 16
      %v1889 = vor.u32 %v1887, %v1885
      %v1891 = vshll.u32 %v1776, 16
      %v1893 = vrot.slane %v1891, 1
      %v1894 = vsel %vm671, %v1889, %v1893
      %v1895 = vshrl.u32 %v1776, 16
      %v1897 = vor.u32 %v1895, %v1893
      %v1899 = vshll.u32 %v1777, 16
      %v1901 = vrot.slane %v1899, 1
      %v1902 = vsel %vm671, %v1897, %v1901
      %v1903 = vshrl.u32 %v1777, 16
      %v1905 = vor.u32 %v1903, %v1901
      %v1907 = vshll.u32 %v1778, 16
      %v1909 = vrot.slane %v1907, 1
      %v1910 = vsel %vm671, %v1905, %v1909
      %1927 = vst [vmem:[#allocation4 + $0x8] sm:$0xff] %v1790
      %1928 = vst [vmem:[#allocation4 + $0x28] sm:$0xff] %v1798
      %1929 = vst [vmem:[#allocation4 + $0x48] sm:$0xff] %v1806
      %1930 = vst [vmem:[#allocation4 + $0x68] sm:$0xff] %v1814
      %1931 = vst [vmem:[#allocation4 + $0x88] sm:$0xff] %v1822
      %1932 = vst [vmem:[#allocation4 + $0xa8] sm:$0xff] %v1830
      %1933 = vst [vmem:[#allocation4 + $0xc8] sm:$0xff] %v1838
      %1934 = vst [vmem:[#allocation4 + $0xe8] sm:$0xff] %v1846
      %1935 = vst [vmem:[#allocation4 + $0x108] sm:$0xff] %v1854
      %1936 = vst [vmem:[#allocation4 + $0x128] sm:$0xff] %v1862
      %1937 = vst [vmem:[#allocation4 + $0x148] sm:$0xff] %v1870
      %1938 = vst [vmem:[#allocation4 + $0x168] sm:$0xff] %v1878
      %1939 = vst [vmem:[#allocation4 + $0x188] sm:$0xff] %v1886
      %1940 = vst [vmem:[#allocation4 + $0x1a8] sm:$0xff] %v1894
      %1941 = vst [vmem:[#allocation4 + $0x1c8] sm:$0xff] %v1902
      %1942 = vst [vmem:[#allocation4 + $0x1e8] sm:$0xff] %v1910
      %v1943 = vld [vmem:[#allocation3 + $0x8] sm:$0xff]
      %v1944 = vld [vmem:[#allocation3 + $0x10] sm:$0xff]
      %v1945 = vld [vmem:[#allocation3 + $0x18] sm:$0xff]
      %v1946 = vld [vmem:[#allocation3 + $0x20] sm:$0xff]
      %v1947 = vld [vmem:[#allocation3 + $0x28] sm:$0xff]
      %v1948 = vld [vmem:[#allocation3 + $0x30] sm:$0xff]
      %v1949 = vld [vmem:[#allocation3 + $0x38] sm:$0xff]
      %v1950 = vld [vmem:[#allocation3 + $0x40] sm:$0xff]
      %v1951 = vld [vmem:[#allocation3 + $0x48] sm:$0xff]
      %v1952 = vld [vmem:[#allocation3 + $0x50] sm:$0xff]
      %v1953 = vld [vmem:[#allocation3 + $0x58] sm:$0xff]
      %v1954 = vld [vmem:[#allocation3 + $0x60] sm:$0xff]
      %v1955 = vld [vmem:[#allocation3 + $0x68] sm:$0xff]
      %v1956 = vld [vmem:[#allocation3 + $0x70] sm:$0xff]
      %v1957 = vld [vmem:[#allocation3 + $0x78] sm:$0xff]
      %v1958 = vld [vmem:[#allocation3 + $0x80] sm:$0xff]
      %1959 = vst [vmem:[#allocation4 + $0x10] sm:$0xff] %v1943
      %1960 = vst [vmem:[#allocation4 + $0x30] sm:$0xff] %v1944
      %1961 = vst [vmem:[#allocation4 + $0x50] sm:$0xff] %v1945
      %1962 = vst [vmem:[#allocation4 + $0x70] sm:$0xff] %v1946
      %1963 = vst [vmem:[#allocation4 + $0x90] sm:$0xff] %v1947
      %1964 = vst [vmem:[#allocation4 + $0xb0] sm:$0xff] %v1948
      %1965 = vst [vmem:[#allocation4 + $0xd0] sm:$0xff] %v1949
      %1966 = vst [vmem:[#allocation4 + $0xf0] sm:$0xff] %v1950
      %1967 = vst [vmem:[#allocation4 + $0x110] sm:$0xff] %v1951
      %1968 = vst [vmem:[#allocation4 + $0x130] sm:$0xff] %v1952
      %1969 = vst [vmem:[#allocation4 + $0x150] sm:$0xff] %v1953
      %1970 = vst [vmem:[#allocation4 + $0x170] sm:$0xff] %v1954
      %1971 = vst [vmem:[#allocation4 + $0x190] sm:$0xff] %v1955
      %1972 = vst [vmem:[#allocation4 + $0x1b0] sm:$0xff] %v1956
      %1973 = vst [vmem:[#allocation4 + $0x1d0] sm:$0xff] %v1957
      %1974 = vst [vmem:[#allocation4 + $0x1f0] sm:$0xff] %v1958
      %v1975 = vld [vmem:[#allocation3 + $0x8] sm:$0xff]
      %v1976 = vld [vmem:[#allocation3 + $0x10] sm:$0xff]
      %v1977 = vld [vmem:[#allocation3 + $0x18] sm:$0xff]
      %v1978 = vld [vmem:[#allocation3 + $0x20] sm:$0xff]
      %v1979 = vld [vmem:[#allocation3 + $0x28] sm:$0xff]
      %v1980 = vld [vmem:[#allocation3 + $0x30] sm:$0xff]
      %v1981 = vld [vmem:[#allocation3 + $0x38] sm:$0xff]
      %v1982 = vld [vmem:[#allocation3 + $0x40] sm:$0xff]
      %v1983 = vld [vmem:[#allocation3 + $0x48] sm:$0xff]
      %v1984 = vld [vmem:[#allocation3 + $0x50] sm:$0xff]
      %v1985 = vld [vmem:[#allocation3 + $0x58] sm:$0xff]
      %v1986 = vld [vmem:[#allocation3 + $0x60] sm:$0xff]
      %v1987 = vld [vmem:[#allocation3 + $0x68] sm:$0xff]
      %v1988 = vld [vmem:[#allocation3 + $0x70] sm:$0xff]
      %v1989 = vld [vmem:[#allocation3 + $0x78] sm:$0xff]
      %v1990 = vld [vmem:[#allocation3 + $0x80] sm:$0xff]
      %v1991 = vld [vmem:[#allocation3 + $0x88] sm:$0x1]
      %v1993 = vshrl.u32 %v1975, 16
      %v1995 = vshll.u32 %v1975, 16
      %v1997 = vrot.slane %v1995, 1
      %v1998 = vor.u32 %v1993, %v1997
      %v2000 = vshll.u32 %v1976, 16
      %v2002 = vrot.slane %v2000, 1
      %v2003 = vsel %vm671, %v1998, %v2002
      %v2004 = vshrl.u32 %v1976, 16
      %v2006 = vor.u32 %v2004, %v2002
      %v2008 = vshll.u32 %v1977, 16
      %v2010 = vrot.slane %v2008, 1
      %v2011 = vsel %vm671, %v2006, %v2010
      %v2012 = vshrl.u32 %v1977, 16
      %v2014 = vor.u32 %v2012, %v2010
      %v2016 = vshll.u32 %v1978, 16
      %v2018 = vrot.slane %v2016, 1
      %v2019 = vsel %vm671, %v2014, %v2018
      %v2020 = vshrl.u32 %v1978, 16
      %v2022 = vor.u32 %v2020, %v2018
      %v2024 = vshll.u32 %v1979, 16
      %v2026 = vrot.slane %v2024, 1
      %v2027 = vsel %vm671, %v2022, %v2026
      %v2028 = vshrl.u32 %v1979, 16
      %v2030 = vor.u32 %v2028, %v2026
      %v2032 = vshll.u32 %v1980, 16
      %v2034 = vrot.slane %v2032, 1
      %v2035 = vsel %vm671, %v2030, %v2034
      %v2036 = vshrl.u32 %v1980, 16
      %v2038 = vor.u32 %v2036, %v2034
      %v2040 = vshll.u32 %v1981, 16
      %v2042 = vrot.slane %v2040, 1
      %v2043 = vsel %vm671, %v2038, %v2042
      %v2044 = vshrl.u32 %v1981, 16
      %v2046 = vor.u32 %v2044, %v2042
      %v2048 = vshll.u32 %v1982, 16
      %v2050 = vrot.slane %v2048, 1
      %v2051 = vsel %vm671, %v2046, %v2050
      %v2052 = vshrl.u32 %v1982, 16
      %v2054 = vor.u32 %v2052, %v2050
      %v2056 = vshll.u32 %v1983, 16
      %v2058 = vrot.slane %v2056, 1
      %v2059 = vsel %vm671, %v2054, %v2058
      %v2060 = vshrl.u32 %v1983, 16
      %v2062 = vor.u32 %v2060, %v2058
      %v2064 = vshll.u32 %v1984, 16
      %v2066 = vrot.slane %v2064, 1
      %v2067 = vsel %vm671, %v2062, %v2066
      %v2068 = vshrl.u32 %v1984, 16
      %v2070 = vor.u32 %v2068, %v2066
      %v2072 = vshll.u32 %v1985, 16
      %v2074 = vrot.slane %v2072, 1
      %v2075 = vsel %vm671, %v2070, %v2074
      %v2076 = vshrl.u32 %v1985, 16
      %v2078 = vor.u32 %v2076, %v2074
      %v2080 = vshll.u32 %v1986, 16
      %v2082 = vrot.slane %v2080, 1
      %v2083 = vsel %vm671, %v2078, %v2082
      %v2084 = vshrl.u32 %v1986, 16
      %v2086 = vor.u32 %v2084, %v2082
      %v2088 = vshll.u32 %v1987, 16
      %v2090 = vrot.slane %v2088, 1
      %v2091 = vsel %vm671, %v2086, %v2090
      %v2092 = vshrl.u32 %v1987, 16
      %v2094 = vor.u32 %v2092, %v2090
      %v2096 = vshll.u32 %v1988, 16
      %v2098 = vrot.slane %v2096, 1
      %v2099 = vsel %vm671, %v2094, %v2098
      %v2100 = vshrl.u32 %v1988, 16
      %v2102 = vor.u32 %v2100, %v2098
      %v2104 = vshll.u32 %v1989, 16
      %v2106 = vrot.slane %v2104, 1
      %v2107 = vsel %vm671, %v2102, %v2106
      %v2108 = vshrl.u32 %v1989, 16
      %v2110 = vor.u32 %v2108, %v2106
      %v2112 = vshll.u32 %v1990, 16
      %v2114 = vrot.slane %v2112, 1
      %v2115 = vsel %vm671, %v2110, %v2114
      %v2116 = vshrl.u32 %v1990, 16
      %v2118 = vor.u32 %v2116, %v2114
      %v2120 = vshll.u32 %v1991, 16
      %v2122 = vrot.slane %v2120, 1
      %v2123 = vsel %vm671, %v2118, %v2122
      %2140 = vst [vmem:[#allocation4 + $0x18] sm:$0xff] %v2003
      %2141 = vst [vmem:[#allocation4 + $0x38] sm:$0xff] %v2011
      %2142 = vst [vmem:[#allocation4 + $0x58] sm:$0xff] %v2019
      %2143 = vst [vmem:[#allocation4 + $0x78] sm:$0xff] %v2027
      %2144 = vst [vmem:[#allocation4 + $0x98] sm:$0xff] %v2035
      %2145 = vst [vmem:[#allocation4 + $0xb8] sm:$0xff] %v2043
      %2146 = vst [vmem:[#allocation4 + $0xd8] sm:$0xff] %v2051
      %2147 = vst [vmem:[#allocation4 + $0xf8] sm:$0xff] %v2059
      %2148 = vst [vmem:[#allocation4 + $0x118] sm:$0xff] %v2067
      %2149 = vst [vmem:[#allocation4 + $0x138] sm:$0xff] %v2075
      %2150 = vst [vmem:[#allocation4 + $0x158] sm:$0xff] %v2083
      %2151 = vst [vmem:[#allocation4 + $0x178] sm:$0xff] %v2091
      %2152 = vst [vmem:[#allocation4 + $0x198] sm:$0xff] %v2099
      %2153 = vst [vmem:[#allocation4 + $0x1b8] sm:$0xff] %v2107
      %2154 = vst [vmem:[#allocation4 + $0x1d8] sm:$0xff] %v2115
      %2155 = vst [vmem:[#allocation4 + $0x1f8] sm:$0xff] %v2123
      %v2156 = vld [vmem:[#allocation4] sm:$0xff]
      %v2157 = vld [vmem:[#allocation4 + $0x8] sm:$0xff]
      %v2158 = vld [vmem:[#allocation4 + $0x10] sm:$0xff]
      %v2159 = vld [vmem:[#allocation4 + $0x18] sm:$0xff]
      %v2160 = vld [vmem:[#allocation4 + $0x20] sm:$0xff]
      %v2161 = vld [vmem:[#allocation4 + $0x28] sm:$0xff]
      %v2162 = vld [vmem:[#allocation4 + $0x30] sm:$0xff]
      %v2163 = vld [vmem:[#allocation4 + $0x38] sm:$0xff]
      %v2164 = vld [vmem:[#allocation4 + $0x40] sm:$0xff]
      %v2165 = vld [vmem:[#allocation4 + $0x48] sm:$0xff]
      %v2166 = vld [vmem:[#allocation4 + $0x50] sm:$0xff]
      %v2167 = vld [vmem:[#allocation4 + $0x58] sm:$0xff]
      %v2168 = vld [vmem:[#allocation4 + $0x60] sm:$0xff]
      %v2169 = vld [vmem:[#allocation4 + $0x68] sm:$0xff]
      %v2170 = vld [vmem:[#allocation4 + $0x70] sm:$0xff]
      %v2171 = vld [vmem:[#allocation4 + $0x78] sm:$0xff]
      %v2172 = vld [vmem:[#allocation4 + $0x80] sm:$0xff]
      %v2173 = vld [vmem:[#allocation4 + $0x88] sm:$0xff]
      %v2174 = vld [vmem:[#allocation4 + $0x90] sm:$0xff]
      %v2175 = vld [vmem:[#allocation4 + $0x98] sm:$0xff]
      %v2176 = vld [vmem:[#allocation4 + $0xa0] sm:$0xff]
      %v2177 = vld [vmem:[#allocation4 + $0xa8] sm:$0xff]
      %v2178 = vld [vmem:[#allocation4 + $0xb0] sm:$0xff]
      %v2179 = vld [vmem:[#allocation4 + $0xb8] sm:$0xff]
      %v2180 = vld [vmem:[#allocation4 + $0xc0] sm:$0xff]
      %v2181 = vld [vmem:[#allocation4 + $0xc8] sm:$0xff]
      %v2182 = vld [vmem:[#allocation4 + $0xd0] sm:$0xff]
      %v2183 = vld [vmem:[#allocation4 + $0xd8] sm:$0xff]
      %v2184 = vld [vmem:[#allocation4 + $0xe0] sm:$0xff]
      %v2185 = vld [vmem:[#allocation4 + $0xe8] sm:$0xff]
      %v2186 = vld [vmem:[#allocation4 + $0xf0] sm:$0xff]
      %v2187 = vld [vmem:[#allocation4 + $0xf8] sm:$0xff]
      %v2188 = vld [vmem:[#allocation4 + $0x100] sm:$0xff]
      %v2189 = vld [vmem:[#allocation4 + $0x108] sm:$0xff]
      %v2190 = vld [vmem:[#allocation4 + $0x110] sm:$0xff]
      %v2191 = vld [vmem:[#allocation4 + $0x118] sm:$0xff]
      %v2192 = vld [vmem:[#allocation4 + $0x120] sm:$0xff]
      %v2193 = vld [vmem:[#allocation4 + $0x128] sm:$0xff]
      %v2194 = vld [vmem:[#allocation4 + $0x130] sm:$0xff]
      %v2195 = vld [vmem:[#allocation4 + $0x138] sm:$0xff]
      %v2196 = vld [vmem:[#allocation4 + $0x140] sm:$0xff]
      %v2197 = vld [vmem:[#allocation4 + $0x148] sm:$0xff]
      %v2198 = vld [vmem:[#allocation4 + $0x150] sm:$0xff]
      %v2199 = vld [vmem:[#allocation4 + $0x158] sm:$0xff]
      %v2200 = vld [vmem:[#allocation4 + $0x160] sm:$0xff]
      %v2201 = vld [vmem:[#allocation4 + $0x168] sm:$0xff]
      %v2202 = vld [vmem:[#allocation4 + $0x170] sm:$0xff]
      %v2203 = vld [vmem:[#allocation4 + $0x178] sm:$0xff]
      %v2204 = vld [vmem:[#allocation4 + $0x180] sm:$0xff]
      %v2205 = vld [vmem:[#allocation4 + $0x188] sm:$0xff]
      %v2206 = vld [vmem:[#allocation4 + $0x190] sm:$0xff]
      %v2207 = vld [vmem:[#allocation4 + $0x198] sm:$0xff]
      %v2208 = vld [vmem:[#allocation4 + $0x1a0] sm:$0xff]
      %v2209 = vld [vmem:[#allocation4 + $0x1a8] sm:$0xff]
      %v2210 = vld [vmem:[#allocation4 + $0x1b0] sm:$0xff]
      %v2211 = vld [vmem:[#allocation4 + $0x1b8] sm:$0xff]
      %v2212 = vld [vmem:[#allocation4 + $0x1c0] sm:$0xff]
      %v2213 = vld [vmem:[#allocation4 + $0x1c8] sm:$0xff]
      %v2214 = vld [vmem:[#allocation4 + $0x1d0] sm:$0xff]
      %v2215 = vld [vmem:[#allocation4 + $0x1d8] sm:$0xff]
      %v2216 = vld [vmem:[#allocation4 + $0x1e0] sm:$0xff]
      %v2217 = vld [vmem:[#allocation4 + $0x1e8] sm:$0xff]
      %v2218 = vld [vmem:[#allocation4 + $0x1f0] sm:$0xff]
      %v2219 = vld [vmem:[#allocation4 + $0x1f8] sm:$0xff]
      %s2220 = scalar_lea.vmem %s3, 256
      %v2221 = vld [vmem:[%s2220] sm:$0xf]
      %v2222 = vld [vmem:[%s2220 + $0x4] sm:$0xf]
      %v2223 = vld [vmem:[%s2220 + $0x8] sm:$0xf]
      %v2224 = vld [vmem:[%s2220 + $0xc] sm:$0xf]
      %v2225 = vld [vmem:[%s2220 + $0x10] sm:$0xf]
      %v2226 = vld [vmem:[%s2220 + $0x14] sm:$0xf]
      %v2227 = vld [vmem:[%s2220 + $0x18] sm:$0xf]
      %v2228 = vld [vmem:[%s2220 + $0x1c] sm:$0xf]
      %v2229 = vld [vmem:[%s2220 + $0x20] sm:$0xf]
      %v2230 = vld [vmem:[%s2220 + $0x24] sm:$0xf]
      %v2231 = vld [vmem:[%s2220 + $0x28] sm:$0xf]
      %v2232 = vld [vmem:[%s2220 + $0x2c] sm:$0xf]
      %v2233 = vld [vmem:[%s2220 + $0x30] sm:$0xf]
      %v2234 = vld [vmem:[%s2220 + $0x34] sm:$0xf]
      %v2235 = vld [vmem:[%s2220 + $0x38] sm:$0xf]
      %v2236 = vld [vmem:[%s2220 + $0x3c] sm:$0xf]
      %v2237 = vld [vmem:[%s2220 + $0x40] sm:$0xf]
      %v2238 = vld [vmem:[%s2220 + $0x44] sm:$0xf]
      %v2239 = vld [vmem:[%s2220 + $0x48] sm:$0xf]
      %v2240 = vld [vmem:[%s2220 + $0x4c] sm:$0xf]
      %v2241 = vld [vmem:[%s2220 + $0x50] sm:$0xf]
      %v2242 = vld [vmem:[%s2220 + $0x54] sm:$0xf]
      %v2243 = vld [vmem:[%s2220 + $0x58] sm:$0xf]
      %v2244 = vld [vmem:[%s2220 + $0x5c] sm:$0xf]
      %v2245 = vld [vmem:[%s2220 + $0x60] sm:$0xf]
      %v2246 = vld [vmem:[%s2220 + $0x64] sm:$0xf]
      %v2247 = vld [vmem:[%s2220 + $0x68] sm:$0xf]
      %v2248 = vld [vmem:[%s2220 + $0x6c] sm:$0xf]
      %v2249 = vld [vmem:[%s2220 + $0x70] sm:$0xf]
      %v2250 = vld [vmem:[%s2220 + $0x74] sm:$0xf]
      %v2251 = vld [vmem:[%s2220 + $0x78] sm:$0xf]
      %v2252 = vld [vmem:[%s2220 + $0x7c] sm:$0xf]
      %v2253 = vld [vmem:[%s2220 + $0x80] sm:$0xf]
      %v2254 = vld [vmem:[%s2220 + $0x84] sm:$0xf]
      %v2255 = vld [vmem:[%s2220 + $0x88] sm:$0xf]
      %v2256 = vld [vmem:[%s2220 + $0x8c] sm:$0xf]
      %v2257 = vld [vmem:[%s2220 + $0x90] sm:$0xf]
      %v2258 = vld [vmem:[%s2220 + $0x94] sm:$0xf]
      %v2259 = vld [vmem:[%s2220 + $0x98] sm:$0xf]
      %v2260 = vld [vmem:[%s2220 + $0x9c] sm:$0xf]
      %v2261 = vld [vmem:[%s2220 + $0xa0] sm:$0xf]
      %v2262 = vld [vmem:[%s2220 + $0xa4] sm:$0xf]
      %v2263 = vld [vmem:[%s2220 + $0xa8] sm:$0xf]
      %v2264 = vld [vmem:[%s2220 + $0xac] sm:$0xf]
      %v2265 = vld [vmem:[%s2220 + $0xb0] sm:$0xf]
      %v2266 = vld [vmem:[%s2220 + $0xb4] sm:$0xf]
      %v2267 = vld [vmem:[%s2220 + $0xb8] sm:$0xf]
      %v2268 = vld [vmem:[%s2220 + $0xbc] sm:$0xf]
      %v2269 = vld [vmem:[%s2220 + $0xc0] sm:$0xf]
      %v2270 = vld [vmem:[%s2220 + $0xc4] sm:$0xf]
      %v2271 = vld [vmem:[%s2220 + $0xc8] sm:$0xf]
      %v2272 = vld [vmem:[%s2220 + $0xcc] sm:$0xf]
      %v2273 = vld [vmem:[%s2220 + $0xd0] sm:$0xf]
      %v2274 = vld [vmem:[%s2220 + $0xd4] sm:$0xf]
      %v2275 = vld [vmem:[%s2220 + $0xd8] sm:$0xf]
      %v2276 = vld [vmem:[%s2220 + $0xdc] sm:$0xf]
      %v2277 = vld [vmem:[%s2220 + $0xe0] sm:$0xf]
      %v2278 = vld [vmem:[%s2220 + $0xe4] sm:$0xf]
      %v2279 = vld [vmem:[%s2220 + $0xe8] sm:$0xf]
      %v2280 = vld [vmem:[%s2220 + $0xec] sm:$0xf]
      %v2281 = vld [vmem:[%s2220 + $0xf0] sm:$0xf]
      %v2282 = vld [vmem:[%s2220 + $0xf4] sm:$0xf]
      %v2283 = vld [vmem:[%s2220 + $0xf8] sm:$0xf]
      %v2284 = vld [vmem:[%s2220 + $0xfc] sm:$0xf]
      %s2285 = scalar_lea.vmem %s4, 1
      %v2286 = vld [vmem:[%s2285] sm:$0x1]
      %v2288 = vlaneseq
      %v2289 = vshrl.u32 %v2288, 7
      %v2290 = vsub.s32 0, %v2289
      %v2291 = vrot.slane %v2286, %v2290
      %v2357 = vunpack.c.l.b16 %v2221
      %v2358 = vunpack.c.l.b16 %v2222
      %v2359 = vunpack.c.l.b16 %v2223
      %v2360 = vunpack.c.l.b16 %v2224
      %v2361 = vunpack.c.l.b16 %v2225
      %v2362 = vunpack.c.l.b16 %v2226
      %v2363 = vunpack.c.l.b16 %v2227
      %v2364 = vunpack.c.l.b16 %v2228
      %v2365 = vunpack.c.l.b16 %v2229
      %v2366 = vunpack.c.l.b16 %v2230
      %v2367 = vunpack.c.l.b16 %v2231
      %v2368 = vunpack.c.l.b16 %v2232
      %v2369 = vunpack.c.l.b16 %v2233
      %v2370 = vunpack.c.l.b16 %v2234
      %v2371 = vunpack.c.l.b16 %v2235
      %v2372 = vunpack.c.l.b16 %v2236
      %v2373 = vunpack.c.l.b16 %v2237
      %v2374 = vunpack.c.l.b16 %v2238
      %v2375 = vunpack.c.l.b16 %v2239
      %v2376 = vunpack.c.l.b16 %v2240
      %v2377 = vunpack.c.l.b16 %v2241
      %v2378 = vunpack.c.l.b16 %v2242
      %v2379 = vunpack.c.l.b16 %v2243
      %v2380 = vunpack.c.l.b16 %v2244
      %v2381 = vunpack.c.l.b16 %v2245
      %v2382 = vunpack.c.l.b16 %v2246
      %v2383 = vunpack.c.l.b16 %v2247
      %v2384 = vunpack.c.l.b16 %v2248
      %v2385 = vunpack.c.l.b16 %v2249
      %v2386 = vunpack.c.l.b16 %v2250
      %v2387 = vunpack.c.l.b16 %v2251
      %v2388 = vunpack.c.l.b16 %v2252
      %v2389 = vunpack.c.l.b16 %v2253
      %v2390 = vunpack.c.l.b16 %v2254
      %v2391 = vunpack.c.l.b16 %v2255
      %v2392 = vunpack.c.l.b16 %v2256
      %v2393 = vunpack.c.l.b16 %v2257
      %v2394 = vunpack.c.l.b16 %v2258
      %v2395 = vunpack.c.l.b16 %v2259
      %v2396 = vunpack.c.l.b16 %v2260
      %v2397 = vunpack.c.l.b16 %v2261
      %v2398 = vunpack.c.l.b16 %v2262
      %v2399 = vunpack.c.l.b16 %v2263
      %v2400 = vunpack.c.l.b16 %v2264
      %v2401 = vunpack.c.l.b16 %v2265
      %v2402 = vunpack.c.l.b16 %v2266
      %v2403 = vunpack.c.l.b16 %v2267
      %v2404 = vunpack.c.l.b16 %v2268
      %v2405 = vunpack.c.l.b16 %v2269
      %v2406 = vunpack.c.l.b16 %v2270
      %v2407 = vunpack.c.l.b16 %v2271
      %v2408 = vunpack.c.l.b16 %v2272
      %v2409 = vunpack.c.l.b16 %v2273
      %v2410 = vunpack.c.l.b16 %v2274
      %v2411 = vunpack.c.l.b16 %v2275
      %v2412 = vunpack.c.l.b16 %v2276
      %v2413 = vunpack.c.l.b16 %v2277
      %v2414 = vunpack.c.l.b16 %v2278
      %v2415 = vunpack.c.l.b16 %v2279
      %v2416 = vunpack.c.l.b16 %v2280
      %v2417 = vunpack.c.l.b16 %v2281
      %v2418 = vunpack.c.l.b16 %v2282
      %v2419 = vunpack.c.l.b16 %v2283
      %v2420 = vunpack.c.l.b16 %v2284
      %v2421 = vpack.c.b16 %v2358, %v2357
      %v2422 = vpack.c.b16 %v2360, %v2359
      %v2423 = vpack.c.b16 %v2362, %v2361
      %v2424 = vpack.c.b16 %v2364, %v2363
      %v2425 = vpack.c.b16 %v2366, %v2365
      %v2426 = vpack.c.b16 %v2368, %v2367
      %v2427 = vpack.c.b16 %v2370, %v2369
      %v2428 = vpack.c.b16 %v2372, %v2371
      %v2429 = vpack.c.b16 %v2374, %v2373
      %v2430 = vpack.c.b16 %v2376, %v2375
      %v2431 = vpack.c.b16 %v2378, %v2377
      %v2432 = vpack.c.b16 %v2380, %v2379
      %v2433 = vpack.c.b16 %v2382, %v2381
      %v2434 = vpack.c.b16 %v2384, %v2383
      %v2435 = vpack.c.b16 %v2386, %v2385
      %v2436 = vpack.c.b16 %v2388, %v2387
      %v2437 = vpack.c.b16 %v2390, %v2389
      %v2438 = vpack.c.b16 %v2392, %v2391
      %v2439 = vpack.c.b16 %v2394, %v2393
      %v2440 = vpack.c.b16 %v2396, %v2395
      %v2441 = vpack.c.b16 %v2398, %v2397
      %v2442 = vpack.c.b16 %v2400, %v2399
      %v2443 = vpack.c.b16 %v2402, %v2401
      %v2444 = vpack.c.b16 %v2404, %v2403
      %v2445 = vpack.c.b16 %v2406, %v2405
      %v2446 = vpack.c.b16 %v2408, %v2407
      %v2447 = vpack.c.b16 %v2410, %v2409
      %v2448 = vpack.c.b16 %v2412, %v2411
      %v2449 = vpack.c.b16 %v2414, %v2413
      %v2450 = vpack.c.b16 %v2416, %v2415
      %v2451 = vpack.c.b16 %v2418, %v2417
      %v2452 = vpack.c.b16 %v2420, %v2419
      %2485 = vmatprep.subr.bf16.mxu0 0
      %2486 = vmatpush1.bf16.msra.mxu0 %v2421
      %2487 = vmatprep.subr.bf16.mxu0 0
      %2488 = vmatpush1.bf16.msra.mxu0 %v2422
      %2489 = vmatprep.subr.bf16.mxu0 0
      %2490 = vmatpush1.bf16.msra.mxu0 %v2423
      %2491 = vmatprep.subr.bf16.mxu0 0
      %2492 = vmatpush1.bf16.msra.mxu0 %v2424
      %2493 = vmatprep.subr.bf16.mxu0 0
      %2494 = vmatpush1.bf16.msra.mxu0 %v2425
      %2495 = vmatprep.subr.bf16.mxu0 0
      %2496 = vmatpush1.bf16.msra.mxu0 %v2426
      %2497 = vmatprep.subr.bf16.mxu0 0
      %2498 = vmatpush1.bf16.msra.mxu0 %v2427
      %2499 = vmatprep.subr.bf16.mxu0 0
      %2500 = vmatpush1.bf16.msra.mxu0 %v2428
      %2501 = vmatprep.subr.bf16.mxu0 0
      %2502 = vmatpush1.bf16.msra.mxu0 %v2429
      %2503 = vmatprep.subr.bf16.mxu0 0
      %2504 = vmatpush1.bf16.msra.mxu0 %v2430
      %2505 = vmatprep.subr.bf16.mxu0 0
      %2506 = vmatpush1.bf16.msra.mxu0 %v2431
      %2507 = vmatprep.subr.bf16.mxu0 0
      %2508 = vmatpush1.bf16.msra.mxu0 %v2432
      %2509 = vmatprep.subr.bf16.mxu0 0
      %2510 = vmatpush1.bf16.msra.mxu0 %v2433
      %2511 = vmatprep.subr.bf16.mxu0 0
      %2512 = vmatpush1.bf16.msra.mxu0 %v2434
      %2513 = vmatprep.subr.bf16.mxu0 0
      %2514 = vmatpush1.bf16.msra.mxu0 %v2435
      %2515 = vmatprep.subr.bf16.mxu0 0
      %2516 = vmatpush1.bf16.msra.mxu0 %v2436
      %2517 = vmatprep.mubr.bf16.mxu0 %v2157
      %2518 = vmatmul.mubr.bf16.gmra.mrb[0].mxu0 %v2156
      %v2519 = vpop.f32.mrb[0].mxu0
      %v2520 = vadd.f32 %v2291, %v2519
      %v2521 = vpop.f32.mrb[0].mxu0
      %v2522 = vpop.f32.mrb[0].mxu0
      %v2523 = vadd.f32 %v2291, %v2522
      %v2524 = vpop.f32.mrb[0].mxu0
      %2525 = vmatprep.mubr.bf16.mxu0 %v2161
      %2526 = vmatmul.mubr.bf16.gmra.mrb[0].mxu0 %v2160
      %v2527 = vpop.f32.mrb[0].mxu0
      %v2528 = vadd.f32 %v2291, %v2527
      %v2529 = vpop.f32.mrb[0].mxu0
      %v2530 = vpop.f32.mrb[0].mxu0
      %v2531 = vadd.f32 %v2291, %v2530
      %v2532 = vpop.f32.mrb[0].mxu0
      %2533 = vmatprep.mubr.bf16.mxu0 %v2165
      %2534 = vmatmul.mubr.bf16.gmra.mrb[0].mxu0 %v2164
      %v2535 = vpop.f32.mrb[0].mxu0
      %v2536 = vadd.f32 %v2291, %v2535
      %v2537 = vpop.f32.mrb[0].mxu0
      %v2538 = vpop.f32.mrb[0].mxu0
      %v2539 = vadd.f32 %v2291, %v2538
      %v2540 = vpop.f32.mrb[0].mxu0
      %2541 = vmatprep.mubr.bf16.mxu0 %v2169
      %2542 = vmatmul.mubr.bf16.gmra.mrb[0].mxu0 %v2168
      %v2543 = vpop.f32.mrb[0].mxu0
      %v2544 = vadd.f32 %v2291, %v2543
      %v2545 = vpop.f32.mrb[0].mxu0
      %v2546 = vpop.f32.mrb[0].mxu0
      %v2547 = vadd.f32 %v2291, %v2546
      %v2548 = vpop.f32.mrb[0].mxu0
      %2549 = vmatprep.mubr.bf16.mxu0 %v2173
      %2550 = vmatmul.mubr.bf16.gmra.mrb[0].mxu0 %v2172
      %v2551 = vpop.f32.mrb[0].mxu0
      %v2552 = vadd.f32 %v2291, %v2551
      %v2553 = vpop.f32.mrb[0].mxu0
      %v2554 = vpop.f32.mrb[0].mxu0
      %v2555 = vadd.f32 %v2291, %v2554
      %v2556 = vpop.f32.mrb[0].mxu0
      %2557 = vmatprep.mubr.bf16.mxu0 %v2177
      %2558 = vmatmul.mubr.bf16.gmra.mrb[0].mxu0 %v2176
      %v2559 = vpop.f32.mrb[0].mxu0
      %v2560 = vadd.f32 %v2291, %v2559
      %v2561 = vpop.f32.mrb[0].mxu0
      %v2562 = vpop.f32.mrb[0].mxu0
      %v2563 = vadd.f32 %v2291, %v2562
      %v2564 = vpop.f32.mrb[0].mxu0
      %2565 = vmatprep.mubr.bf16.mxu0 %v2181
      %2566 = vmatmul.mubr.bf16.gmra.mrb[0].mxu0 %v2180
      %v2567 = vpop.f32.mrb[0].mxu0
      %v2568 = vadd.f32 %v2291, %v2567
      %v2569 = vpop.f32.mrb[0].mxu0
      %v2570 = vpop.f32.mrb[0].mxu0
      %v2571 = vadd.f32 %v2291, %v2570
      %v2572 = vpop.f32.mrb[0].mxu0
      %2573 = vmatprep.mubr.bf16.mxu0 %v2185
      %2574 = vmatmul.mubr.bf16.gmra.mrb[0].mxu0 %v2184
      %v2575 = vpop.f32.mrb[0].mxu0
      %v2576 = vadd.f32 %v2291, %v2575
      %v2577 = vpop.f32.mrb[0].mxu0
      %v2578 = vpop.f32.mrb[0].mxu0
      %v2579 = vadd.f32 %v2291, %v2578
      %v2580 = vpop.f32.mrb[0].mxu0
      %2581 = vmatprep.mubr.bf16.mxu0 %v2189
      %2582 = vmatmul.mubr.bf16.gmra.mrb[0].mxu0 %v2188
      %v2583 = vpop.f32.mrb[0].mxu0
      %v2584 = vadd.f32 %v2291, %v2583
      %v2585 = vpop.f32.mrb[0].mxu0
      %v2586 = vpop.f32.mrb[0].mxu0
      %v2587 = vadd.f32 %v2291, %v2586
      %v2588 = vpop.f32.mrb[0].mxu0
      %2589 = vmatprep.mubr.bf16.mxu0 %v2193
      %2590 = vmatmul.mubr.bf16.gmra.mrb[0].mxu0 %v2192
      %v2591 = vpop.f32.mrb[0].mxu0
      %v2592 = vadd.f32 %v2291, %v2591
      %v2593 = vpop.f32.mrb[0].mxu0
      %v2594 = vpop.f32.mrb[0].mxu0
      %v2595 = vadd.f32 %v2291, %v2594
      %v2596 = vpop.f32.mrb[0].mxu0
      %2597 = vmatprep.mubr.bf16.mxu0 %v2197
      %2598 = vmatmul.mubr.bf16.gmra.mrb[0].mxu0 %v2196
      %v2599 = vpop.f32.mrb[0].mxu0
      %v2600 = vadd.f32 %v2291, %v2599
      %v2601 = vpop.f32.mrb[0].mxu0
      %v2602 = vpop.f32.mrb[0].mxu0
      %v2603 = vadd.f32 %v2291, %v2602
      %v2604 = vpop.f32.mrb[0].mxu0
      %2605 = vmatprep.mubr.bf16.mxu0 %v2201
      %2606 = vmatmul.mubr.bf16.gmra.mrb[0].mxu0 %v2200
      %v2607 = vpop.f32.mrb[0].mxu0
      %v2608 = vadd.f32 %v2291, %v2607
      %v2609 = vpop.f32.mrb[0].mxu0
      %v2610 = vpop.f32.mrb[0].mxu0
      %v2611 = vadd.f32 %v2291, %v2610
      %v2612 = vpop.f32.mrb[0].mxu0
      %2613 = vmatprep.mubr.bf16.mxu0 %v2205
      %2614 = vmatmul.mubr.bf16.gmra.mrb[0].mxu0 %v2204
      %v2615 = vpop.f32.mrb[0].mxu0
      %v2616 = vadd.f32 %v2291, %v2615
      %v2617 = vpop.f32.mrb[0].mxu0
      %v2618 = vpop.f32.mrb[0].mxu0
      %v2619 = vadd.f32 %v2291, %v2618
      %v2620 = vpop.f32.mrb[0].mxu0
      %2621 = vmatprep.mubr.bf16.mxu0 %v2209
      %2622 = vmatmul.mubr.bf16.gmra.mrb[0].mxu0 %v2208
      %v2623 = vpop.f32.mrb[0].mxu0
      %v2624 = vadd.f32 %v2291, %v2623
      %v2625 = vpop.f32.mrb[0].mxu0
      %v2626 = vpop.f32.mrb[0].mxu0
      %v2627 = vadd.f32 %v2291, %v2626
      %v2628 = vpop.f32.mrb[0].mxu0
      %2629 = vmatprep.mubr.bf16.mxu0 %v2213
      %2630 = vmatmul.mubr.bf16.gmra.mrb[0].mxu0 %v2212
      %v2631 = vpop.f32.mrb[0].mxu0
      %v2632 = vadd.f32 %v2291, %v2631
      %v2633 = vpop.f32.mrb[0].mxu0
      %v2634 = vpop.f32.mrb[0].mxu0
      %v2635 = vadd.f32 %v2291, %v2634
      %v2636 = vpop.f32.mrb[0].mxu0
      %2637 = vmatprep.mubr.bf16.mxu0 %v2217
      %2638 = vmatmul.mubr.bf16.gmra.mrb[0].mxu0 %v2216
      %v2639 = vpop.f32.mrb[0].mxu0
      %v2640 = vadd.f32 %v2291, %v2639
      %v2641 = vpop.f32.mrb[0].mxu0
      %v2642 = vpop.f32.mrb[0].mxu0
      %v2643 = vadd.f32 %v2291, %v2642
      %v2644 = vpop.f32.mrb[0].mxu0
      %2645 = vdwg.mxu0
      %2646 = vmatprep.subr.bf16.mxu0 0
      %2647 = vmatpush1.bf16.msra.mxu0 %v2437
      %2648 = vmatprep.subr.bf16.mxu0 0
      %2649 = vmatpush1.bf16.msra.mxu0 %v2438
      %2650 = vmatprep.subr.bf16.mxu0 0
      %2651 = vmatpush1.bf16.msra.mxu0 %v2439
      %2652 = vmatprep.subr.bf16.mxu0 0
      %2653 = vmatpush1.bf16.msra.mxu0 %v2440
      %2654 = vmatprep.subr.bf16.mxu0 0
      %2655 = vmatpush1.bf16.msra.mxu0 %v2441
      %2656 = vmatprep.subr.bf16.mxu0 0
      %2657 = vmatpush1.bf16.msra.mxu0 %v2442
      %2658 = vmatprep.subr.bf16.mxu0 0
      %2659 = vmatpush1.bf16.msra.mxu0 %v2443
      %2660 = vmatprep.subr.bf16.mxu0 0
      %2661 = vmatpush1.bf16.msra.mxu0 %v2444
      %2662 = vmatprep.subr.bf16.mxu0 0
      %2663 = vmatpush1.bf16.msra.mxu0 %v2445
      %2664 = vmatprep.subr.bf16.mxu0 0
      %2665 = vmatpush1.bf16.msra.mxu0 %v2446
      %2666 = vmatprep.subr.bf16.mxu0 0
      %2667 = vmatpush1.bf16.msra.mxu0 %v2447
      %2668 = vmatprep.subr.bf16.mxu0 0
      %2669 = vmatpush1.bf16.msra.mxu0 %v2448
      %2670 = vmatprep.subr.bf16.mxu0 0
      %2671 = vmatpush1.bf16.msra.mxu0 %v2449
      %2672 = vmatprep.subr.bf16.mxu0 0
      %2673 = vmatpush1.bf16.msra.mxu0 %v2450
      %2674 = vmatprep.subr.bf16.mxu0 0
      %2675 = vmatpush1.bf16.msra.mxu0 %v2451
      %2676 = vmatprep.subr.bf16.mxu0 0
      %2677 = vmatpush1.bf16.msra.mxu0 %v2452
      %2678 = vmatprep.mubr.bf16.mxu0 %v2159
      %2679 = vmatmul.mubr.bf16.gmra.mrb[0].mxu0 %v2158
      %v2680 = vpop.f32.mrb[0].mxu0
      %v2681 = vadd.f32 %v2520, %v2680
      %v2682 = vpop.f32.mrb[0].mxu0
      %v2683 = vpop.f32.mrb[0].mxu0
      %v2684 = vadd.f32 %v2523, %v2683
      %v2685 = vpop.f32.mrb[0].mxu0
      %2686 = vmatprep.mubr.bf16.mxu0 %v2163
      %2687 = vmatmul.mubr.bf16.gmra.mrb[0].mxu0 %v2162
      %v2688 = vpop.f32.mrb[0].mxu0
      %v2689 = vadd.f32 %v2528, %v2688
      %v2690 = vpop.f32.mrb[0].mxu0
      %v2691 = vpop.f32.mrb[0].mxu0
      %v2692 = vadd.f32 %v2531, %v2691
      %v2693 = vpop.f32.mrb[0].mxu0
      %2694 = vmatprep.mubr.bf16.mxu0 %v2167
      %2695 = vmatmul.mubr.bf16.gmra.mrb[0].mxu0 %v2166
      %v2696 = vpop.f32.mrb[0].mxu0
      %v2697 = vadd.f32 %v2536, %v2696
      %v2698 = vpop.f32.mrb[0].mxu0
      %v2699 = vpop.f32.mrb[0].mxu0
      %v2700 = vadd.f32 %v2539, %v2699
      %v2701 = vpop.f32.mrb[0].mxu0
      %2702 = vmatprep.mubr.bf16.mxu0 %v2171
      %2703 = vmatmul.mubr.bf16.gmra.mrb[0].mxu0 %v2170
      %v2704 = vpop.f32.mrb[0].mxu0
      %v2705 = vadd.f32 %v2544, %v2704
      %v2706 = vpop.f32.mrb[0].mxu0
      %v2707 = vpop.f32.mrb[0].mxu0
      %v2708 = vadd.f32 %v2547, %v2707
      %v2709 = vpop.f32.mrb[0].mxu0
      %2710 = vmatprep.mubr.bf16.mxu0 %v2175
      %2711 = vmatmul.mubr.bf16.gmra.mrb[0].mxu0 %v2174
      %v2712 = vpop.f32.mrb[0].mxu0
      %v2713 = vadd.f32 %v2552, %v2712
      %v2714 = vpop.f32.mrb[0].mxu0
      %v2715 = vpop.f32.mrb[0].mxu0
      %v2716 = vadd.f32 %v2555, %v2715
      %v2717 = vpop.f32.mrb[0].mxu0
      %2718 = vmatprep.mubr.bf16.mxu0 %v2179
      %2719 = vmatmul.mubr.bf16.gmra.mrb[0].mxu0 %v2178
      %v2720 = vpop.f32.mrb[0].mxu0
      %v2721 = vadd.f32 %v2560, %v2720
      %v2722 = vpop.f32.mrb[0].mxu0
      %v2723 = vpop.f32.mrb[0].mxu0
      %v2724 = vadd.f32 %v2563, %v2723
      %v2725 = vpop.f32.mrb[0].mxu0
      %2726 = vmatprep.mubr.bf16.mxu0 %v2183
      %2727 = vmatmul.mubr.bf16.gmra.mrb[0].mxu0 %v2182
      %v2728 = vpop.f32.mrb[0].mxu0
      %v2729 = vadd.f32 %v2568, %v2728
      %v2730 = vpop.f32.mrb[0].mxu0
      %v2731 = vpop.f32.mrb[0].mxu0
      %v2732 = vadd.f32 %v2571, %v2731
      %v2733 = vpop.f32.mrb[0].mxu0
      %2734 = vmatprep.mubr.bf16.mxu0 %v2187
      %2735 = vmatmul.mubr.bf16.gmra.mrb[0].mxu0 %v2186
      %v2736 = vpop.f32.mrb[0].mxu0
      %v2737 = vadd.f32 %v2576, %v2736
      %v2738 = vpop.f32.mrb[0].mxu0
      %v2739 = vpop.f32.mrb[0].mxu0
      %v2740 = vadd.f32 %v2579, %v2739
      %v2741 = vpop.f32.mrb[0].mxu0
      %2742 = vmatprep.mubr.bf16.mxu0 %v2191
      %2743 = vmatmul.mubr.bf16.gmra.mrb[0].mxu0 %v2190
      %v2744 = vpop.f32.mrb[0].mxu0
      %v2745 = vadd.f32 %v2584, %v2744
      %v2746 = vpop.f32.mrb[0].mxu0
      %v2747 = vpop.f32.mrb[0].mxu0
      %v2748 = vadd.f32 %v2587, %v2747
      %v2749 = vpop.f32.mrb[0].mxu0
      %2750 = vmatprep.mubr.bf16.mxu0 %v2195
      %2751 = vmatmul.mubr.bf16.gmra.mrb[0].mxu0 %v2194
      %v2752 = vpop.f32.mrb[0].mxu0
      %v2753 = vadd.f32 %v2592, %v2752
      %v2754 = vpop.f32.mrb[0].mxu0
      %v2755 = vpop.f32.mrb[0].mxu0
      %v2756 = vadd.f32 %v2595, %v2755
      %v2757 = vpop.f32.mrb[0].mxu0
      %2758 = vmatprep.mubr.bf16.mxu0 %v2199
      %2759 = vmatmul.mubr.bf16.gmra.mrb[0].mxu0 %v2198
      %v2760 = vpop.f32.mrb[0].mxu0
      %v2761 = vadd.f32 %v2600, %v2760
      %v2762 = vpop.f32.mrb[0].mxu0
      %v2763 = vpop.f32.mrb[0].mxu0
      %v2764 = vadd.f32 %v2603, %v2763
      %v2765 = vpop.f32.mrb[0].mxu0
      %2766 = vmatprep.mubr.bf16.mxu0 %v2203
      %2767 = vmatmul.mubr.bf16.gmra.mrb[0].mxu0 %v2202
      %v2768 = vpop.f32.mrb[0].mxu0
      %v2769 = vadd.f32 %v2608, %v2768
      %v2770 = vpop.f32.mrb[0].mxu0
      %v2771 = vpop.f32.mrb[0].mxu0
      %v2772 = vadd.f32 %v2611, %v2771
      %v2773 = vpop.f32.mrb[0].mxu0
      %2774 = vmatprep.mubr.bf16.mxu0 %v2207
      %2775 = vmatmul.mubr.bf16.gmra.mrb[0].mxu0 %v2206
      %v2776 = vpop.f32.mrb[0].mxu0
      %v2777 = vadd.f32 %v2616, %v2776
      %v2778 = vpop.f32.mrb[0].mxu0
      %v2779 = vpop.f32.mrb[0].mxu0
      %v2780 = vadd.f32 %v2619, %v2779
      %v2781 = vpop.f32.mrb[0].mxu0
      %2782 = vmatprep.mubr.bf16.mxu0 %v2211
      %2783 = vmatmul.mubr.bf16.gmra.mrb[0].mxu0 %v2210
      %v2784 = vpop.f32.mrb[0].mxu0
      %v2785 = vadd.f32 %v2624, %v2784
      %v2786 = vpop.f32.mrb[0].mxu0
      %v2787 = vpop.f32.mrb[0].mxu0
      %v2788 = vadd.f32 %v2627, %v2787
      %v2789 = vpop.f32.mrb[0].mxu0
      %2790 = vmatprep.mubr.bf16.mxu0 %v2215
      %2791 = vmatmul.mubr.bf16.gmra.mrb[0].mxu0 %v2214
      %v2792 = vpop.f32.mrb[0].mxu0
      %v2793 = vadd.f32 %v2632, %v2792
      %v2794 = vpop.f32.mrb[0].mxu0
      %v2795 = vpop.f32.mrb[0].mxu0
      %v2796 = vadd.f32 %v2635, %v2795
      %v2797 = vpop.f32.mrb[0].mxu0
      %2798 = vmatprep.mubr.bf16.mxu0 %v2219
      %2799 = vmatmul.mubr.bf16.gmra.mrb[0].mxu0 %v2218
      %v2800 = vpop.f32.mrb[0].mxu0
      %v2801 = vadd.f32 %v2640, %v2800
      %v2802 = vpop.f32.mrb[0].mxu0
      %v2803 = vpop.f32.mrb[0].mxu0
      %v2804 = vadd.f32 %v2643, %v2803
      %v2805 = vpop.f32.mrb[0].mxu0
      %2806 = vdwg.mxu0
      %v2807 = vpack.c.bf16 %v2684, %v2681
      %v2808 = vpack.c.bf16 %v2692, %v2689
      %v2809 = vpack.c.bf16 %v2700, %v2697
      %v2810 = vpack.c.bf16 %v2708, %v2705
      %v2811 = vpack.c.bf16 %v2716, %v2713
      %v2812 = vpack.c.bf16 %v2724, %v2721
      %v2813 = vpack.c.bf16 %v2732, %v2729
      %v2814 = vpack.c.bf16 %v2740, %v2737
      %v2815 = vpack.c.bf16 %v2748, %v2745
      %v2816 = vpack.c.bf16 %v2756, %v2753
      %v2817 = vpack.c.bf16 %v2764, %v2761
      %v2818 = vpack.c.bf16 %v2772, %v2769
      %v2819 = vpack.c.bf16 %v2780, %v2777
      %v2820 = vpack.c.bf16 %v2788, %v2785
      %v2821 = vpack.c.bf16 %v2796, %v2793
      %v2822 = vpack.c.bf16 %v2804, %v2801
      %2823 = vst [vmem:[#allocation2] sm:$0xff] %v2807
      %2824 = vst [vmem:[#allocation2 + $0x8] sm:$0xff] %v2808
      %2825 = vst [vmem:[#allocation2 + $0x10] sm:$0xff] %v2809
      %2826 = vst [vmem:[#allocation2 + $0x18] sm:$0xff] %v2810
      %2827 = vst [vmem:[#allocation2 + $0x20] sm:$0xff] %v2811
      %2828 = vst [vmem:[#allocation2 + $0x28] sm:$0xff] %v2812
      %2829 = vst [vmem:[#allocation2 + $0x30] sm:$0xff] %v2813
      %2830 = vst [vmem:[#allocation2 + $0x38] sm:$0xff] %v2814
      %2831 = vst [vmem:[#allocation2 + $0x40] sm:$0xff] %v2815
      %2832 = vst [vmem:[#allocation2 + $0x48] sm:$0xff] %v2816
      %2833 = vst [vmem:[#allocation2 + $0x50] sm:$0xff] %v2817
      %2834 = vst [vmem:[#allocation2 + $0x58] sm:$0xff] %v2818
      %2835 = vst [vmem:[#allocation2 + $0x60] sm:$0xff] %v2819
      %2836 = vst [vmem:[#allocation2 + $0x68] sm:$0xff] %v2820
      %2837 = vst [vmem:[#allocation2 + $0x70] sm:$0xff] %v2821
      %2838 = vst [vmem:[#allocation2 + $0x78] sm:$0xff] %v2822
      %v2839 = vld [vmem:[#allocation2] sm:$0xff]
      %v2840 = vld [vmem:[#allocation2 + $0x8] sm:$0xff]
      %v2841 = vld [vmem:[#allocation2 + $0x10] sm:$0xff]
      %v2842 = vld [vmem:[#allocation2 + $0x18] sm:$0xff]
      %v2843 = vld [vmem:[#allocation2 + $0x20] sm:$0xff]
      %v2844 = vld [vmem:[#allocation2 + $0x28] sm:$0xff]
      %v2845 = vld [vmem:[#allocation2 + $0x30] sm:$0xff]
      %v2846 = vld [vmem:[#allocation2 + $0x38] sm:$0xff]
      %v2847 = vld [vmem:[#allocation2 + $0x40] sm:$0xff]
      %v2848 = vld [vmem:[#allocation2 + $0x48] sm:$0xff]
      %v2849 = vld [vmem:[#allocation2 + $0x50] sm:$0xff]
      %v2850 = vld [vmem:[#allocation2 + $0x58] sm:$0xff]
      %v2851 = vld [vmem:[#allocation2 + $0x60] sm:$0xff]
      %v2852 = vld [vmem:[#allocation2 + $0x68] sm:$0xff]
      %v2853 = vld [vmem:[#allocation2 + $0x70] sm:$0xff]
      %v2854 = vld [vmem:[#allocation2 + $0x78] sm:$0xff]
      %2855 = vst [vmem:[#allocation4] sm:$0xff] %v2839
      %2856 = vst [vmem:[#allocation4 + $0x20] sm:$0xff] %v2840
      %2857 = vst [vmem:[#allocation4 + $0x40] sm:$0xff] %v2841
      %2858 = vst [vmem:[#allocation4 + $0x60] sm:$0xff] %v2842
      %2859 = vst [vmem:[#allocation4 + $0x80] sm:$0xff] %v2843
      %2860 = vst [vmem:[#allocation4 + $0xa0] sm:$0xff] %v2844
      %2861 = vst [vmem:[#allocation4 + $0xc0] sm:$0xff] %v2845
      %2862 = vst [vmem:[#allocation4 + $0xe0] sm:$0xff] %v2846
      %2863 = vst [vmem:[#allocation4 + $0x100] sm:$0xff] %v2847
      %2864 = vst [vmem:[#allocation4 + $0x120] sm:$0xff] %v2848
      %2865 = vst [vmem:[#allocation4 + $0x140] sm:$0xff] %v2849
      %2866 = vst [vmem:[#allocation4 + $0x160] sm:$0xff] %v2850
      %2867 = vst [vmem:[#allocation4 + $0x180] sm:$0xff] %v2851
      %2868 = vst [vmem:[#allocation4 + $0x1a0] sm:$0xff] %v2852
      %2869 = vst [vmem:[#allocation4 + $0x1c0] sm:$0xff] %v2853
      %2870 = vst [vmem:[#allocation4 + $0x1e0] sm:$0xff] %v2854
      %v2871 = vld [vmem:[#allocation2] sm:$0xff]
      %v2872 = vld [vmem:[#allocation2 + $0x8] sm:$0xff]
      %v2873 = vld [vmem:[#allocation2 + $0x10] sm:$0xff]
      %v2874 = vld [vmem:[#allocation2 + $0x18] sm:$0xff]
      %v2875 = vld [vmem:[#allocation2 + $0x20] sm:$0xff]
      %v2876 = vld [vmem:[#allocation2 + $0x28] sm:$0xff]
      %v2877 = vld [vmem:[#allocation2 + $0x30] sm:$0xff]
      %v2878 = vld [vmem:[#allocation2 + $0x38] sm:$0xff]
      %v2879 = vld [vmem:[#allocation2 + $0x40] sm:$0xff]
      %v2880 = vld [vmem:[#allocation2 + $0x48] sm:$0xff]
      %v2881 = vld [vmem:[#allocation2 + $0x50] sm:$0xff]
      %v2882 = vld [vmem:[#allocation2 + $0x58] sm:$0xff]
      %v2883 = vld [vmem:[#allocation2 + $0x60] sm:$0xff]
      %v2884 = vld [vmem:[#allocation2 + $0x68] sm:$0xff]
      %v2885 = vld [vmem:[#allocation2 + $0x70] sm:$0xff]
      %v2886 = vld [vmem:[#allocation2 + $0x78] sm:$0xff]
      %v2887 = vld [vmem:[#allocation2 + $0x80] sm:$0x1]
      %v2889 = vshrl.u32 %v2871, 16
      %v2891 = vshll.u32 %v2871, 16
      %v2893 = vrot.slane %v2891, 1
      %v2894 = vor.u32 %v2889, %v2893
      %v2896 = vshll.u32 %v2872, 16
      %v2898 = vrot.slane %v2896, 1
      %v2899 = vsel %vm671, %v2894, %v2898
      %v2900 = vshrl.u32 %v2872, 16
      %v2902 = vor.u32 %v2900, %v2898
      %v2904 = vshll.u32 %v2873, 16
      %v2906 = vrot.slane %v2904, 1
      %v2907 = vsel %vm671, %v2902, %v2906
      %v2908 = vshrl.u32 %v2873, 16
      %v2910 = vor.u32 %v2908, %v2906
      %v2912 = vshll.u32 %v2874, 16
      %v2914 = vrot.slane %v2912, 1
      %v2915 = vsel %vm671, %v2910, %v2914
      %v2916 = vshrl.u32 %v2874, 16
      %v2918 = vor.u32 %v2916, %v2914
      %v2920 = vshll.u32 %v2875, 16
      %v2922 = vrot.slane %v2920, 1
      %v2923 = vsel %vm671, %v2918, %v2922
      %v2924 = vshrl.u32 %v2875, 16
      %v2926 = vor.u32 %v2924, %v2922
      %v2928 = vshll.u32 %v2876, 16
      %v2930 = vrot.slane %v2928, 1
      %v2931 = vsel %vm671, %v2926, %v2930
      %v2932 = vshrl.u32 %v2876, 16
      %v2934 = vor.u32 %v2932, %v2930
      %v2936 = vshll.u32 %v2877, 16
      %v2938 = vrot.slane %v2936, 1
      %v2939 = vsel %vm671, %v2934, %v2938
      %v2940 = vshrl.u32 %v2877, 16
      %v2942 = vor.u32 %v2940, %v2938
      %v2944 = vshll.u32 %v2878, 16
      %v2946 = vrot.slane %v2944, 1
      %v2947 = vsel %vm671, %v2942, %v2946
      %v2948 = vshrl.u32 %v2878, 16
      %v2950 = vor.u32 %v2948, %v2946
      %v2952 = vshll.u32 %v2879, 16
      %v2954 = vrot.slane %v2952, 1
      %v2955 = vsel %vm671, %v2950, %v2954
      %v2956 = vshrl.u32 %v2879, 16
      %v2958 = vor.u32 %v2956, %v2954
      %v2960 = vshll.u32 %v2880, 16
      %v2962 = vrot.slane %v2960, 1
      %v2963 = vsel %vm671, %v2958, %v2962
      %v2964 = vshrl.u32 %v2880, 16
      %v2966 = vor.u32 %v2964, %v2962
      %v2968 = vshll.u32 %v2881, 16
      %v2970 = vrot.slane %v2968, 1
      %v2971 = vsel %vm671, %v2966, %v2970
      %v2972 = vshrl.u32 %v2881, 16
      %v2974 = vor.u32 %v2972, %v2970
      %v2976 = vshll.u32 %v2882, 16
      %v2978 = vrot.slane %v2976, 1
      %v2979 = vsel %vm671, %v2974, %v2978
      %v2980 = vshrl.u32 %v2882, 16
      %v2982 = vor.u32 %v2980, %v2978
      %v2984 = vshll.u32 %v2883, 16
      %v2986 = vrot.slane %v2984, 1
      %v2987 = vsel %vm671, %v2982, %v2986
      %v2988 = vshrl.u32 %v2883, 16
      %v2990 = vor.u32 %v2988, %v2986
      %v2992 = vshll.u32 %v2884, 16
      %v2994 = vrot.slane %v2992, 1
      %v2995 = vsel %vm671, %v2990, %v2994
      %v2996 = vshrl.u32 %v2884, 16
      %v2998 = vor.u32 %v2996, %v2994
      %v3000 = vshll.u32 %v2885, 16
      %v3002 = vrot.slane %v3000, 1
      %v3003 = vsel %vm671, %v2998, %v3002
      %v3004 = vshrl.u32 %v2885, 16
      %v3006 = vor.u32 %v3004, %v3002
      %v3008 = vshll.u32 %v2886, 16
      %v3010 = vrot.slane %v3008, 1
      %v3011 = vsel %vm671, %v3006, %v3010
      %v3012 = vshrl.u32 %v2886, 16
      %v3014 = vor.u32 %v3012, %v3010
      %v3016 = vshll.u32 %v2887, 16
      %v3018 = vrot.slane %v3016, 1
      %v3019 = vsel %vm671, %v3014, %v3018
      %3036 = vst [vmem:[#allocation4 + $0x8] sm:$0xff] %v2899
      %3037 = vst [vmem:[#allocation4 + $0x28] sm:$0xff] %v2907
      %3038 = vst [vmem:[#allocation4 + $0x48] sm:$0xff] %v2915
      %3039 = vst [vmem:[#allocation4 + $0x68] sm:$0xff] %v2923
      %3040 = vst [vmem:[#allocation4 + $0x88] sm:$0xff] %v2931
      %3041 = vst [vmem:[#allocation4 + $0xa8] sm:$0xff] %v2939
      %3042 = vst [vmem:[#allocation4 + $0xc8] sm:$0xff] %v2947
      %3043 = vst [vmem:[#allocation4 + $0xe8] sm:$0xff] %v2955
      %3044 = vst [vmem:[#allocation4 + $0x108] sm:$0xff] %v2963
      %3045 = vst [vmem:[#allocation4 + $0x128] sm:$0xff] %v2971
      %3046 = vst [vmem:[#allocation4 + $0x148] sm:$0xff] %v2979
      %3047 = vst [vmem:[#allocation4 + $0x168] sm:$0xff] %v2987
      %3048 = vst [vmem:[#allocation4 + $0x188] sm:$0xff] %v2995
      %3049 = vst [vmem:[#allocation4 + $0x1a8] sm:$0xff] %v3003
      %3050 = vst [vmem:[#allocation4 + $0x1c8] sm:$0xff] %v3011
      %3051 = vst [vmem:[#allocation4 + $0x1e8] sm:$0xff] %v3019
      %v3052 = vld [vmem:[#allocation2 + $0x8] sm:$0xff]
      %v3053 = vld [vmem:[#allocation2 + $0x10] sm:$0xff]
      %v3054 = vld [vmem:[#allocation2 + $0x18] sm:$0xff]
      %v3055 = vld [vmem:[#allocation2 + $0x20] sm:$0xff]
      %v3056 = vld [vmem:[#allocation2 + $0x28] sm:$0xff]
      %v3057 = vld [vmem:[#allocation2 + $0x30] sm:$0xff]
      %v3058 = vld [vmem:[#allocation2 + $0x38] sm:$0xff]
      %v3059 = vld [vmem:[#allocation2 + $0x40] sm:$0xff]
      %v3060 = vld [vmem:[#allocation2 + $0x48] sm:$0xff]
      %v3061 = vld [vmem:[#allocation2 + $0x50] sm:$0xff]
      %v3062 = vld [vmem:[#allocation2 + $0x58] sm:$0xff]
      %v3063 = vld [vmem:[#allocation2 + $0x60] sm:$0xff]
      %v3064 = vld [vmem:[#allocation2 + $0x68] sm:$0xff]
      %v3065 = vld [vmem:[#allocation2 + $0x70] sm:$0xff]
      %v3066 = vld [vmem:[#allocation2 + $0x78] sm:$0xff]
      %v3067 = vld [vmem:[#allocation2 + $0x80] sm:$0xff]
      %3068 = vst [vmem:[#allocation4 + $0x10] sm:$0xff] %v3052
      %3069 = vst [vmem:[#allocation4 + $0x30] sm:$0xff] %v3053
      %3070 = vst [vmem:[#allocation4 + $0x50] sm:$0xff] %v3054
      %3071 = vst [vmem:[#allocation4 + $0x70] sm:$0xff] %v3055
      %3072 = vst [vmem:[#allocation4 + $0x90] sm:$0xff] %v3056
      %3073 = vst [vmem:[#allocation4 + $0xb0] sm:$0xff] %v3057
      %3074 = vst [vmem:[#allocation4 + $0xd0] sm:$0xff] %v3058
      %3075 = vst [vmem:[#allocation4 + $0xf0] sm:$0xff] %v3059
      %3076 = vst [vmem:[#allocation4 + $0x110] sm:$0xff] %v3060
      %3077 = vst [vmem:[#allocation4 + $0x130] sm:$0xff] %v3061
      %3078 = vst [vmem:[#allocation4 + $0x150] sm:$0xff] %v3062
      %3079 = vst [vmem:[#allocation4 + $0x170] sm:$0xff] %v3063
      %3080 = vst [vmem:[#allocation4 + $0x190] sm:$0xff] %v3064
      %3081 = vst [vmem:[#allocation4 + $0x1b0] sm:$0xff] %v3065
      %3082 = vst [vmem:[#allocation4 + $0x1d0] sm:$0xff] %v3066
      %3083 = vst [vmem:[#allocation4 + $0x1f0] sm:$0xff] %v3067
      %v3084 = vld [vmem:[#allocation2 + $0x8] sm:$0xff]
      %v3085 = vld [vmem:[#allocation2 + $0x10] sm:$0xff]
      %v3086 = vld [vmem:[#allocation2 + $0x18] sm:$0xff]
      %v3087 = vld [vmem:[#allocation2 + $0x20] sm:$0xff]
      %v3088 = vld [vmem:[#allocation2 + $0x28] sm:$0xff]
      %v3089 = vld [vmem:[#allocation2 + $0x30] sm:$0xff]
      %v3090 = vld [vmem:[#allocation2 + $0x38] sm:$0xff]
      %v3091 = vld [vmem:[#allocation2 + $0x40] sm:$0xff]
      %v3092 = vld [vmem:[#allocation2 + $0x48] sm:$0xff]
      %v3093 = vld [vmem:[#allocation2 + $0x50] sm:$0xff]
      %v3094 = vld [vmem:[#allocation2 + $0x58] sm:$0xff]
      %v3095 = vld [vmem:[#allocation2 + $0x60] sm:$0xff]
      %v3096 = vld [vmem:[#allocation2 + $0x68] sm:$0xff]
      %v3097 = vld [vmem:[#allocation2 + $0x70] sm:$0xff]
      %v3098 = vld [vmem:[#allocation2 + $0x78] sm:$0xff]
      %v3099 = vld [vmem:[#allocation2 + $0x80] sm:$0xff]
      %v3100 = vld [vmem:[#allocation2 + $0x88] sm:$0x1]
      %v3102 = vshrl.u32 %v3084, 16
      %v3104 = vshll.u32 %v3084, 16
      %v3106 = vrot.slane %v3104, 1
      %v3107 = vor.u32 %v3102, %v3106
      %v3109 = vshll.u32 %v3085, 16
      %v3111 = vrot.slane %v3109, 1
      %v3112 = vsel %vm671, %v3107, %v3111
      %v3113 = vshrl.u32 %v3085, 16
      %v3115 = vor.u32 %v3113, %v3111
      %v3117 = vshll.u32 %v3086, 16
      %v3119 = vrot.slane %v3117, 1
      %v3120 = vsel %vm671, %v3115, %v3119
      %v3121 = vshrl.u32 %v3086, 16
      %v3123 = vor.u32 %v3121, %v3119
      %v3125 = vshll.u32 %v3087, 16
      %v3127 = vrot.slane %v3125, 1
      %v3128 = vsel %vm671, %v3123, %v3127
      %v3129 = vshrl.u32 %v3087, 16
      %v3131 = vor.u32 %v3129, %v3127
      %v3133 = vshll.u32 %v3088, 16
      %v3135 = vrot.slane %v3133, 1
      %v3136 = vsel %vm671, %v3131, %v3135
      %v3137 = vshrl.u32 %v3088, 16
      %v3139 = vor.u32 %v3137, %v3135
      %v3141 = vshll.u32 %v3089, 16
      %v3143 = vrot.slane %v3141, 1
      %v3144 = vsel %vm671, %v3139, %v3143
      %v3145 = vshrl.u32 %v3089, 16
      %v3147 = vor.u32 %v3145, %v3143
      %v3149 = vshll.u32 %v3090, 16
      %v3151 = vrot.slane %v3149, 1
      %v3152 = vsel %vm671, %v3147, %v3151
      %v3153 = vshrl.u32 %v3090, 16
      %v3155 = vor.u32 %v3153, %v3151
      %v3157 = vshll.u32 %v3091, 16
      %v3159 = vrot.slane %v3157, 1
      %v3160 = vsel %vm671, %v3155, %v3159
      %v3161 = vshrl.u32 %v3091, 16
      %v3163 = vor.u32 %v3161, %v3159
      %v3165 = vshll.u32 %v3092, 16
      %v3167 = vrot.slane %v3165, 1
      %v3168 = vsel %vm671, %v3163, %v3167
      %v3169 = vshrl.u32 %v3092, 16
      %v3171 = vor.u32 %v3169, %v3167
      %v3173 = vshll.u32 %v3093, 16
      %v3175 = vrot.slane %v3173, 1
      %v3176 = vsel %vm671, %v3171, %v3175
      %v3177 = vshrl.u32 %v3093, 16
      %v3179 = vor.u32 %v3177, %v3175
      %v3181 = vshll.u32 %v3094, 16
      %v3183 = vrot.slane %v3181, 1
      %v3184 = vsel %vm671, %v3179, %v3183
      %v3185 = vshrl.u32 %v3094, 16
      %v3187 = vor.u32 %v3185, %v3183
      %v3189 = vshll.u32 %v3095, 16
      %v3191 = vrot.slane %v3189, 1
      %v3192 = vsel %vm671, %v3187, %v3191
      %v3193 = vshrl.u32 %v3095, 16
      %v3195 = vor.u32 %v3193, %v3191
      %v3197 = vshll.u32 %v3096, 16
      %v3199 = vrot.slane %v3197, 1
      %v3200 = vsel %vm671, %v3195, %v3199
      %v3201 = vshrl.u32 %v3096, 16
      %v3203 = vor.u32 %v3201, %v3199
      %v3205 = vshll.u32 %v3097, 16
      %v3207 = vrot.slane %v3205, 1
      %v3208 = vsel %vm671, %v3203, %v3207
      %v3209 = vshrl.u32 %v3097, 16
      %v3211 = vor.u32 %v3209, %v3207
      %v3213 = vshll.u32 %v3098, 16
      %v3215 = vrot.slane %v3213, 1
      %v3216 = vsel %vm671, %v3211, %v3215
      %v3217 = vshrl.u32 %v3098, 16
      %v3219 = vor.u32 %v3217, %v3215
      %v3221 = vshll.u32 %v3099, 16
      %v3223 = vrot.slane %v3221, 1
      %v3224 = vsel %vm671, %v3219, %v3223
      %v3225 = vshrl.u32 %v3099, 16
      %v3227 = vor.u32 %v3225, %v3223
      %v3229 = vshll.u32 %v3100, 16
      %v3231 = vrot.slane %v3229, 1
      %v3232 = vsel %vm671, %v3227, %v3231
      %3249 = vst [vmem:[#allocation4 + $0x18] sm:$0xff] %v3112
      %3250 = vst [vmem:[#allocation4 + $0x38] sm:$0xff] %v3120
      %3251 = vst [vmem:[#allocation4 + $0x58] sm:$0xff] %v3128
      %3252 = vst [vmem:[#allocation4 + $0x78] sm:$0xff] %v3136
      %3253 = vst [vmem:[#allocation4 + $0x98] sm:$0xff] %v3144
      %3254 = vst [vmem:[#allocation4 + $0xb8] sm:$0xff] %v3152
      %3255 = vst [vmem:[#allocation4 + $0xd8] sm:$0xff] %v3160
      %3256 = vst [vmem:[#allocation4 + $0xf8] sm:$0xff] %v3168
      %3257 = vst [vmem:[#allocation4 + $0x118] sm:$0xff] %v3176
      %3258 = vst [vmem:[#allocation4 + $0x138] sm:$0xff] %v3184
      %3259 = vst [vmem:[#allocation4 + $0x158] sm:$0xff] %v3192
      %3260 = vst [vmem:[#allocation4 + $0x178] sm:$0xff] %v3200
      %3261 = vst [vmem:[#allocation4 + $0x198] sm:$0xff] %v3208
      %3262 = vst [vmem:[#allocation4 + $0x1b8] sm:$0xff] %v3216
      %3263 = vst [vmem:[#allocation4 + $0x1d8] sm:$0xff] %v3224
      %3264 = vst [vmem:[#allocation4 + $0x1f8] sm:$0xff] %v3232
      %v3265 = vld [vmem:[#allocation4] sm:$0xff]
      %v3266 = vld [vmem:[#allocation4 + $0x8] sm:$0xff]
      %v3267 = vld [vmem:[#allocation4 + $0x10] sm:$0xff]
      %v3268 = vld [vmem:[#allocation4 + $0x18] sm:$0xff]
      %v3269 = vld [vmem:[#allocation4 + $0x20] sm:$0xff]
      %v3270 = vld [vmem:[#allocation4 + $0x28] sm:$0xff]
      %v3271 = vld [vmem:[#allocation4 + $0x30] sm:$0xff]
      %v3272 = vld [vmem:[#allocation4 + $0x38] sm:$0xff]
      %v3273 = vld [vmem:[#allocation4 + $0x40] sm:$0xff]
      %v3274 = vld [vmem:[#allocation4 + $0x48] sm:$0xff]
      %v3275 = vld [vmem:[#allocation4 + $0x50] sm:$0xff]
      %v3276 = vld [vmem:[#allocation4 + $0x58] sm:$0xff]
      %v3277 = vld [vmem:[#allocation4 + $0x60] sm:$0xff]
      %v3278 = vld [vmem:[#allocation4 + $0x68] sm:$0xff]
      %v3279 = vld [vmem:[#allocation4 + $0x70] sm:$0xff]
      %v3280 = vld [vmem:[#allocation4 + $0x78] sm:$0xff]
      %v3281 = vld [vmem:[#allocation4 + $0x80] sm:$0xff]
      %v3282 = vld [vmem:[#allocation4 + $0x88] sm:$0xff]
      %v3283 = vld [vmem:[#allocation4 + $0x90] sm:$0xff]
      %v3284 = vld [vmem:[#allocation4 + $0x98] sm:$0xff]
      %v3285 = vld [vmem:[#allocation4 + $0xa0] sm:$0xff]
      %v3286 = vld [vmem:[#allocation4 + $0xa8] sm:$0xff]
      %v3287 = vld [vmem:[#allocation4 + $0xb0] sm:$0xff]
      %v3288 = vld [vmem:[#allocation4 + $0xb8] sm:$0xff]
      %v3289 = vld [vmem:[#allocation4 + $0xc0] sm:$0xff]
      %v3290 = vld [vmem:[#allocation4 + $0xc8] sm:$0xff]
      %v3291 = vld [vmem:[#allocation4 + $0xd0] sm:$0xff]
      %v3292 = vld [vmem:[#allocation4 + $0xd8] sm:$0xff]
      %v3293 = vld [vmem:[#allocation4 + $0xe0] sm:$0xff]
      %v3294 = vld [vmem:[#allocation4 + $0xe8] sm:$0xff]
      %v3295 = vld [vmem:[#allocation4 + $0xf0] sm:$0xff]
      %v3296 = vld [vmem:[#allocation4 + $0xf8] sm:$0xff]
      %v3297 = vld [vmem:[#allocation4 + $0x100] sm:$0xff]
      %v3298 = vld [vmem:[#allocation4 + $0x108] sm:$0xff]
      %v3299 = vld [vmem:[#allocation4 + $0x110] sm:$0xff]
      %v3300 = vld [vmem:[#allocation4 + $0x118] sm:$0xff]
      %v3301 = vld [vmem:[#allocation4 + $0x120] sm:$0xff]
      %v3302 = vld [vmem:[#allocation4 + $0x128] sm:$0xff]
      %v3303 = vld [vmem:[#allocation4 + $0x130] sm:$0xff]
      %v3304 = vld [vmem:[#allocation4 + $0x138] sm:$0xff]
      %v3305 = vld [vmem:[#allocation4 + $0x140] sm:$0xff]
      %v3306 = vld [vmem:[#allocation4 + $0x148] sm:$0xff]
      %v3307 = vld [vmem:[#allocation4 + $0x150] sm:$0xff]
      %v3308 = vld [vmem:[#allocation4 + $0x158] sm:$0xff]
      %v3309 = vld [vmem:[#allocation4 + $0x160] sm:$0xff]
      %v3310 = vld [vmem:[#allocation4 + $0x168] sm:$0xff]
      %v3311 = vld [vmem:[#allocation4 + $0x170] sm:$0xff]
      %v3312 = vld [vmem:[#allocation4 + $0x178] sm:$0xff]
      %v3313 = vld [vmem:[#allocation4 + $0x180] sm:$0xff]
      %v3314 = vld [vmem:[#allocation4 + $0x188] sm:$0xff]
      %v3315 = vld [vmem:[#allocation4 + $0x190] sm:$0xff]
      %v3316 = vld [vmem:[#allocation4 + $0x198] sm:$0xff]
      %v3317 = vld [vmem:[#allocation4 + $0x1a0] sm:$0xff]
      %v3318 = vld [vmem:[#allocation4 + $0x1a8] sm:$0xff]
      %v3319 = vld [vmem:[#allocation4 + $0x1b0] sm:$0xff]
      %v3320 = vld [vmem:[#allocation4 + $0x1b8] sm:$0xff]
      %v3321 = vld [vmem:[#allocation4 + $0x1c0] sm:$0xff]
      %v3322 = vld [vmem:[#allocation4 + $0x1c8] sm:$0xff]
      %v3323 = vld [vmem:[#allocation4 + $0x1d0] sm:$0xff]
      %v3324 = vld [vmem:[#allocation4 + $0x1d8] sm:$0xff]
      %v3325 = vld [vmem:[#allocation4 + $0x1e0] sm:$0xff]
      %v3326 = vld [vmem:[#allocation4 + $0x1e8] sm:$0xff]
      %v3327 = vld [vmem:[#allocation4 + $0x1f0] sm:$0xff]
      %v3328 = vld [vmem:[#allocation4 + $0x1f8] sm:$0xff]
      %s3329 = scalar_lea.vmem %s3, 512
      %v3330 = vld [vmem:[%s3329] sm:$0xf]
      %v3331 = vld [vmem:[%s3329 + $0x4] sm:$0xf]
      %v3332 = vld [vmem:[%s3329 + $0x8] sm:$0xf]
      %v3333 = vld [vmem:[%s3329 + $0xc] sm:$0xf]
      %v3334 = vld [vmem:[%s3329 + $0x10] sm:$0xf]
      %v3335 = vld [vmem:[%s3329 + $0x14] sm:$0xf]
      %v3336 = vld [vmem:[%s3329 + $0x18] sm:$0xf]
      %v3337 = vld [vmem:[%s3329 + $0x1c] sm:$0xf]
      %v3338 = vld [vmem:[%s3329 + $0x20] sm:$0xf]
      %v3339 = vld [vmem:[%s3329 + $0x24] sm:$0xf]
      %v3340 = vld [vmem:[%s3329 + $0x28] sm:$0xf]
      %v3341 = vld [vmem:[%s3329 + $0x2c] sm:$0xf]
      %v3342 = vld [vmem:[%s3329 + $0x30] sm:$0xf]
      %v3343 = vld [vmem:[%s3329 + $0x34] sm:$0xf]
      %v3344 = vld [vmem:[%s3329 + $0x38] sm:$0xf]
      %v3345 = vld [vmem:[%s3329 + $0x3c] sm:$0xf]
      %v3346 = vld [vmem:[%s3329 + $0x40] sm:$0xf]
      %v3347 = vld [vmem:[%s3329 + $0x44] sm:$0xf]
      %v3348 = vld [vmem:[%s3329 + $0x48] sm:$0xf]
      %v3349 = vld [vmem:[%s3329 + $0x4c] sm:$0xf]
      %v3350 = vld [vmem:[%s3329 + $0x50] sm:$0xf]
      %v3351 = vld [vmem:[%s3329 + $0x54] sm:$0xf]
      %v3352 = vld [vmem:[%s3329 + $0x58] sm:$0xf]
      %v3353 = vld [vmem:[%s3329 + $0x5c] sm:$0xf]
      %v3354 = vld [vmem:[%s3329 + $0x60] sm:$0xf]
      %v3355 = vld [vmem:[%s3329 + $0x64] sm:$0xf]
      %v3356 = vld [vmem:[%s3329 + $0x68] sm:$0xf]
      %v3357 = vld [vmem:[%s3329 + $0x6c] sm:$0xf]
      %v3358 = vld [vmem:[%s3329 + $0x70] sm:$0xf]
      %v3359 = vld [vmem:[%s3329 + $0x74] sm:$0xf]
      %v3360 = vld [vmem:[%s3329 + $0x78] sm:$0xf]
      %v3361 = vld [vmem:[%s3329 + $0x7c] sm:$0xf]
      %v3362 = vld [vmem:[%s3329 + $0x80] sm:$0xf]
      %v3363 = vld [vmem:[%s3329 + $0x84] sm:$0xf]
      %v3364 = vld [vmem:[%s3329 + $0x88] sm:$0xf]
      %v3365 = vld [vmem:[%s3329 + $0x8c] sm:$0xf]
      %v3366 = vld [vmem:[%s3329 + $0x90] sm:$0xf]
      %v3367 = vld [vmem:[%s3329 + $0x94] sm:$0xf]
      %v3368 = vld [vmem:[%s3329 + $0x98] sm:$0xf]
      %v3369 = vld [vmem:[%s3329 + $0x9c] sm:$0xf]
      %v3370 = vld [vmem:[%s3329 + $0xa0] sm:$0xf]
      %v3371 = vld [vmem:[%s3329 + $0xa4] sm:$0xf]
      %v3372 = vld [vmem:[%s3329 + $0xa8] sm:$0xf]
      %v3373 = vld [vmem:[%s3329 + $0xac] sm:$0xf]
      %v3374 = vld [vmem:[%s3329 + $0xb0] sm:$0xf]
      %v3375 = vld [vmem:[%s3329 + $0xb4] sm:$0xf]
      %v3376 = vld [vmem:[%s3329 + $0xb8] sm:$0xf]
      %v3377 = vld [vmem:[%s3329 + $0xbc] sm:$0xf]
      %v3378 = vld [vmem:[%s3329 + $0xc0] sm:$0xf]
      %v3379 = vld [vmem:[%s3329 + $0xc4] sm:$0xf]
      %v3380 = vld [vmem:[%s3329 + $0xc8] sm:$0xf]
      %v3381 = vld [vmem:[%s3329 + $0xcc] sm:$0xf]
      %v3382 = vld [vmem:[%s3329 + $0xd0] sm:$0xf]
      %v3383 = vld [vmem:[%s3329 + $0xd4] sm:$0xf]
      %v3384 = vld [vmem:[%s3329 + $0xd8] sm:$0xf]
      %v3385 = vld [vmem:[%s3329 + $0xdc] sm:$0xf]
      %v3386 = vld [vmem:[%s3329 + $0xe0] sm:$0xf]
      %v3387 = vld [vmem:[%s3329 + $0xe4] sm:$0xf]
      %v3388 = vld [vmem:[%s3329 + $0xe8] sm:$0xf]
      %v3389 = vld [vmem:[%s3329 + $0xec] sm:$0xf]
      %v3390 = vld [vmem:[%s3329 + $0xf0] sm:$0xf]
      %v3391 = vld [vmem:[%s3329 + $0xf4] sm:$0xf]
      %v3392 = vld [vmem:[%s3329 + $0xf8] sm:$0xf]
      %v3393 = vld [vmem:[%s3329 + $0xfc] sm:$0xf]
      %s3394 = scalar_lea.vmem %s4, 2
      %v3395 = vld [vmem:[%s3394] sm:$0x1]
      %v3397 = vlaneseq
      %v3398 = vshrl.u32 %v3397, 7
      %v3399 = vsub.s32 0, %v3398
      %v3400 = vrot.slane %v3395, %v3399
      %v3466 = vunpack.c.l.b16 %v3330
      %v3467 = vunpack.c.l.b16 %v3331
      %v3468 = vunpack.c.l.b16 %v3332
      %v3469 = vunpack.c.l.b16 %v3333
      %v3470 = vunpack.c.l.b16 %v3334
      %v3471 = vunpack.c.l.b16 %v3335
      %v3472 = vunpack.c.l.b16 %v3336
      %v3473 = vunpack.c.l.b16 %v3337
      %v3474 = vunpack.c.l.b16 %v3338
      %v3475 = vunpack.c.l.b16 %v3339
      %v3476 = vunpack.c.l.b16 %v3340
      %v3477 = vunpack.c.l.b16 %v3341
      %v3478 = vunpack.c.l.b16 %v3342
      %v3479 = vunpack.c.l.b16 %v3343
      %v3480 = vunpack.c.l.b16 %v3344
      %v3481 = vunpack.c.l.b16 %v3345
      %v3482 = vunpack.c.l.b16 %v3346
      %v3483 = vunpack.c.l.b16 %v3347
      %v3484 = vunpack.c.l.b16 %v3348
      %v3485 = vunpack.c.l.b16 %v3349
      %v3486 = vunpack.c.l.b16 %v3350
      %v3487 = vunpack.c.l.b16 %v3351
      %v3488 = vunpack.c.l.b16 %v3352
      %v3489 = vunpack.c.l.b16 %v3353
      %v3490 = vunpack.c.l.b16 %v3354
      %v3491 = vunpack.c.l.b16 %v3355
      %v3492 = vunpack.c.l.b16 %v3356
      %v3493 = vunpack.c.l.b16 %v3357
      %v3494 = vunpack.c.l.b16 %v3358
      %v3495 = vunpack.c.l.b16 %v3359
      %v3496 = vunpack.c.l.b16 %v3360
      %v3497 = vunpack.c.l.b16 %v3361
      %v3498 = vunpack.c.l.b16 %v3362
      %v3499 = vunpack.c.l.b16 %v3363
      %v3500 = vunpack.c.l.b16 %v3364
      %v3501 = vunpack.c.l.b16 %v3365
      %v3502 = vunpack.c.l.b16 %v3366
      %v3503 = vunpack.c.l.b16 %v3367
      %v3504 = vunpack.c.l.b16 %v3368
      %v3505 = vunpack.c.l.b16 %v3369
      %v3506 = vunpack.c.l.b16 %v3370
      %v3507 = vunpack.c.l.b16 %v3371
      %v3508 = vunpack.c.l.b16 %v3372
      %v3509 = vunpack.c.l.b16 %v3373
      %v3510 = vunpack.c.l.b16 %v3374
      %v3511 = vunpack.c.l.b16 %v3375
      %v3512 = vunpack.c.l.b16 %v3376
      %v3513 = vunpack.c.l.b16 %v3377
      %v3514 = vunpack.c.l.b16 %v3378
      %v3515 = vunpack.c.l.b16 %v3379
      %v3516 = vunpack.c.l.b16 %v3380
      %v3517 = vunpack.c.l.b16 %v3381
      %v3518 = vunpack.c.l.b16 %v3382
      %v3519 = vunpack.c.l.b16 %v3383
      %v3520 = vunpack.c.l.b16 %v3384
      %v3521 = vunpack.c.l.b16 %v3385
      %v3522 = vunpack.c.l.b16 %v3386
      %v3523 = vunpack.c.l.b16 %v3387
      %v3524 = vunpack.c.l.b16 %v3388
      %v3525 = vunpack.c.l.b16 %v3389
      %v3526 = vunpack.c.l.b16 %v3390
      %v3527 = vunpack.c.l.b16 %v3391
      %v3528 = vunpack.c.l.b16 %v3392
      %v3529 = vunpack.c.l.b16 %v3393
      %v3530 = vpack.c.b16 %v3467, %v3466
      %v3531 = vpack.c.b16 %v3469, %v3468
      %v3532 = vpack.c.b16 %v3471, %v3470
      %v3533 = vpack.c.b16 %v3473, %v3472
      %v3534 = vpack.c.b16 %v3475, %v3474
      %v3535 = vpack.c.b16 %v3477, %v3476
      %v3536 = vpack.c.b16 %v3479, %v3478
      %v3537 = vpack.c.b16 %v3481, %v3480
      %v3538 = vpack.c.b16 %v3483, %v3482
      %v3539 = vpack.c.b16 %v3485, %v3484
      %v3540 = vpack.c.b16 %v3487, %v3486
      %v3541 = vpack.c.b16 %v3489, %v3488
      %v3542 = vpack.c.b16 %v3491, %v3490
      %v3543 = vpack.c.b16 %v3493, %v3492
      %v3544 = vpack.c.b16 %v3495, %v3494
      %v3545 = vpack.c.b16 %v3497, %v3496
      %v3546 = vpack.c.b16 %v3499, %v3498
      %v3547 = vpack.c.b16 %v3501, %v3500
      %v3548 = vpack.c.b16 %v3503, %v3502
      %v3549 = vpack.c.b16 %v3505, %v3504
      %v3550 = vpack.c.b16 %v3507, %v3506
      %v3551 = vpack.c.b16 %v3509, %v3508
      %v3552 = vpack.c.b16 %v3511, %v3510
      %v3553 = vpack.c.b16 %v3513, %v3512
      %v3554 = vpack.c.b16 %v3515, %v3514
      %v3555 = vpack.c.b16 %v3517, %v3516
      %v3556 = vpack.c.b16 %v3519, %v3518
      %v3557 = vpack.c.b16 %v3521, %v3520
      %v3558 = vpack.c.b16 %v3523, %v3522
      %v3559 = vpack.c.b16 %v3525, %v3524
      %v3560 = vpack.c.b16 %v3527, %v3526
      %v3561 = vpack.c.b16 %v3529, %v3528
      %3594 = vmatprep.subr.bf16.mxu0 0
      %3595 = vmatpush1.bf16.msra.mxu0 %v3530
      %3596 = vmatprep.subr.bf16.mxu0 0
      %3597 = vmatpush1.bf16.msra.mxu0 %v3531
      %3598 = vmatprep.subr.bf16.mxu0 0
      %3599 = vmatpush1.bf16.msra.mxu0 %v3532
      %3600 = vmatprep.subr.bf16.mxu0 0
      %3601 = vmatpush1.bf16.msra.mxu0 %v3533
      %3602 = vmatprep.subr.bf16.mxu0 0
      %3603 = vmatpush1.bf16.msra.mxu0 %v3534
      %3604 = vmatprep.subr.bf16.mxu0 0
      %3605 = vmatpush1.bf16.msra.mxu0 %v3535
      %3606 = vmatprep.subr.bf16.mxu0 0
      %3607 = vmatpush1.bf16.msra.mxu0 %v3536
      %3608 = vmatprep.subr.bf16.mxu0 0
      %3609 = vmatpush1.bf16.msra.mxu0 %v3537
      %3610 = vmatprep.subr.bf16.mxu0 0
      %3611 = vmatpush1.bf16.msra.mxu0 %v3538
      %3612 = vmatprep.subr.bf16.mxu0 0
      %3613 = vmatpush1.bf16.msra.mxu0 %v3539
      %3614 = vmatprep.subr.bf16.mxu0 0
      %3615 = vmatpush1.bf16.msra.mxu0 %v3540
      %3616 = vmatprep.subr.bf16.mxu0 0
      %3617 = vmatpush1.bf16.msra.mxu0 %v3541
      %3618 = vmatprep.subr.bf16.mxu0 0
      %3619 = vmatpush1.bf16.msra.mxu0 %v3542
      %3620 = vmatprep.subr.bf16.mxu0 0
      %3621 = vmatpush1.bf16.msra.mxu0 %v3543
      %3622 = vmatprep.subr.bf16.mxu0 0
      %3623 = vmatpush1.bf16.msra.mxu0 %v3544
      %3624 = vmatprep.subr.bf16.mxu0 0
      %3625 = vmatpush1.bf16.msra.mxu0 %v3545
      %3626 = vmatprep.mubr.bf16.mxu0 %v3266
      %3627 = vmatmul.mubr.bf16.gmra.mrb[0].mxu0 %v3265
      %v3628 = vpop.f32.mrb[0].mxu0
      %v3629 = vadd.f32 %v3400, %v3628
      %v3630 = vpop.f32.mrb[0].mxu0
      %v3631 = vpop.f32.mrb[0].mxu0
      %v3632 = vadd.f32 %v3400, %v3631
      %v3633 = vpop.f32.mrb[0].mxu0
      %3634 = vmatprep.mubr.bf16.mxu0 %v3270
      %3635 = vmatmul.mubr.bf16.gmra.mrb[0].mxu0 %v3269
      %v3636 = vpop.f32.mrb[0].mxu0
      %v3637 = vadd.f32 %v3400, %v3636
      %v3638 = vpop.f32.mrb[0].mxu0
      %v3639 = vpop.f32.mrb[0].mxu0
      %v3640 = vadd.f32 %v3400, %v3639
      %v3641 = vpop.f32.mrb[0].mxu0
      %3642 = vmatprep.mubr.bf16.mxu0 %v3274
      %3643 = vmatmul.mubr.bf16.gmra.mrb[0].mxu0 %v3273
      %v3644 = vpop.f32.mrb[0].mxu0
      %v3645 = vadd.f32 %v3400, %v3644
      %v3646 = vpop.f32.mrb[0].mxu0
      %v3647 = vpop.f32.mrb[0].mxu0
      %v3648 = vadd.f32 %v3400, %v3647
      %v3649 = vpop.f32.mrb[0].mxu0
      %3650 = vmatprep.mubr.bf16.mxu0 %v3278
      %3651 = vmatmul.mubr.bf16.gmra.mrb[0].mxu0 %v3277
      %v3652 = vpop.f32.mrb[0].mxu0
      %v3653 = vadd.f32 %v3400, %v3652
      %v3654 = vpop.f32.mrb[0].mxu0
      %v3655 = vpop.f32.mrb[0].mxu0
      %v3656 = vadd.f32 %v3400, %v3655
      %v3657 = vpop.f32.mrb[0].mxu0
      %3658 = vmatprep.mubr.bf16.mxu0 %v3282
      %3659 = vmatmul.mubr.bf16.gmra.mrb[0].mxu0 %v3281
      %v3660 = vpop.f32.mrb[0].mxu0
      %v3661 = vadd.f32 %v3400, %v3660
      %v3662 = vpop.f32.mrb[0].mxu0
      %v3663 = vpop.f32.mrb[0].mxu0
      %v3664 = vadd.f32 %v3400, %v3663
      %v3665 = vpop.f32.mrb[0].mxu0
      %3666 = vmatprep.mubr.bf16.mxu0 %v3286
      %3667 = vmatmul.mubr.bf16.gmra.mrb[0].mxu0 %v3285
      %v3668 = vpop.f32.mrb[0].mxu0
      %v3669 = vadd.f32 %v3400, %v3668
      %v3670 = vpop.f32.mrb[0].mxu0
      %v3671 = vpop.f32.mrb[0].mxu0
      %v3672 = vadd.f32 %v3400, %v3671
      %v3673 = vpop.f32.mrb[0].mxu0
      %3674 = vmatprep.mubr.bf16.mxu0 %v3290
      %3675 = vmatmul.mubr.bf16.gmra.mrb[0].mxu0 %v3289
      %v3676 = vpop.f32.mrb[0].mxu0
      %v3677 = vadd.f32 %v3400, %v3676
      %v3678 = vpop.f32.mrb[0].mxu0
      %v3679 = vpop.f32.mrb[0].mxu0
      %v3680 = vadd.f32 %v3400, %v3679
      %v3681 = vpop.f32.mrb[0].mxu0
      %3682 = vmatprep.mubr.bf16.mxu0 %v3294
      %3683 = vmatmul.mubr.bf16.gmra.mrb[0].mxu0 %v3293
      %v3684 = vpop.f32.mrb[0].mxu0
      %v3685 = vadd.f32 %v3400, %v3684
      %v3686 = vpop.f32.mrb[0].mxu0
      %v3687 = vpop.f32.mrb[0].mxu0
      %v3688 = vadd.f32 %v3400, %v3687
      %v3689 = vpop.f32.mrb[0].mxu0
      %3690 = vmatprep.mubr.bf16.mxu0 %v3298
      %3691 = vmatmul.mubr.bf16.gmra.mrb[0].mxu0 %v3297
      %v3692 = vpop.f32.mrb[0].mxu0
      %v3693 = vadd.f32 %v3400, %v3692
      %v3694 = vpop.f32.mrb[0].mxu0
      %v3695 = vpop.f32.mrb[0].mxu0
      %v3696 = vadd.f32 %v3400, %v3695
      %v3697 = vpop.f32.mrb[0].mxu0
      %3698 = vmatprep.mubr.bf16.mxu0 %v3302
      %3699 = vmatmul.mubr.bf16.gmra.mrb[0].mxu0 %v3301
      %v3700 = vpop.f32.mrb[0].mxu0
      %v3701 = vadd.f32 %v3400, %v3700
      %v3702 = vpop.f32.mrb[0].mxu0
      %v3703 = vpop.f32.mrb[0].mxu0
      %v3704 = vadd.f32 %v3400, %v3703
      %v3705 = vpop.f32.mrb[0].mxu0
      %3706 = vmatprep.mubr.bf16.mxu0 %v3306
      %3707 = vmatmul.mubr.bf16.gmra.mrb[0].mxu0 %v3305
      %v3708 = vpop.f32.mrb[0].mxu0
      %v3709 = vadd.f32 %v3400, %v3708
      %v3710 = vpop.f32.mrb[0].mxu0
      %v3711 = vpop.f32.mrb[0].mxu0
      %v3712 = vadd.f32 %v3400, %v3711
      %v3713 = vpop.f32.mrb[0].mxu0
      %3714 = vmatprep.mubr.bf16.mxu0 %v3310
      %3715 = vmatmul.mubr.bf16.gmra.mrb[0].mxu0 %v3309
      %v3716 = vpop.f32.mrb[0].mxu0
      %v3717 = vadd.f32 %v3400, %v3716
      %v3718 = vpop.f32.mrb[0].mxu0
      %v3719 = vpop.f32.mrb[0].mxu0
      %v3720 = vadd.f32 %v3400, %v3719
      %v3721 = vpop.f32.mrb[0].mxu0
      %3722 = vmatprep.mubr.bf16.mxu0 %v3314
      %3723 = vmatmul.mubr.bf16.gmra.mrb[0].mxu0 %v3313
      %v3724 = vpop.f32.mrb[0].mxu0
      %v3725 = vadd.f32 %v3400, %v3724
      %v3726 = vpop.f32.mrb[0].mxu0
      %v3727 = vpop.f32.mrb[0].mxu0
      %v3728 = vadd.f32 %v3400, %v3727
      %v3729 = vpop.f32.mrb[0].mxu0
      %3730 = vmatprep.mubr.bf16.mxu0 %v3318
      %3731 = vmatmul.mubr.bf16.gmra.mrb[0].mxu0 %v3317
      %v3732 = vpop.f32.mrb[0].mxu0
      %v3733 = vadd.f32 %v3400, %v3732
      %v3734 = vpop.f32.mrb[0].mxu0
      %v3735 = vpop.f32.mrb[0].mxu0
      %v3736 = vadd.f32 %v3400, %v3735
      %v3737 = vpop.f32.mrb[0].mxu0
      %3738 = vmatprep.mubr.bf16.mxu0 %v3322
      %3739 = vmatmul.mubr.bf16.gmra.mrb[0].mxu0 %v3321
      %v3740 = vpop.f32.mrb[0].mxu0
      %v3741 = vadd.f32 %v3400, %v3740
      %v3742 = vpop.f32.mrb[0].mxu0
      %v3743 = vpop.f32.mrb[0].mxu0
      %v3744 = vadd.f32 %v3400, %v3743
      %v3745 = vpop.f32.mrb[0].mxu0
      %3746 = vmatprep.mubr.bf16.mxu0 %v3326
      %3747 = vmatmul.mubr.bf16.gmra.mrb[0].mxu0 %v3325
      %v3748 = vpop.f32.mrb[0].mxu0
      %v3749 = vadd.f32 %v3400, %v3748
      %v3750 = vpop.f32.mrb[0].mxu0
      %v3751 = vpop.f32.mrb[0].mxu0
      %v3752 = vadd.f32 %v3400, %v3751
      %v3753 = vpop.f32.mrb[0].mxu0
      %3754 = vdwg.mxu0
      %3755 = vmatprep.subr.bf16.mxu0 0
      %3756 = vmatpush1.bf16.msra.mxu0 %v3546
      %3757 = vmatprep.subr.bf16.mxu0 0
      %3758 = vmatpush1.bf16.msra.mxu0 %v3547
      %3759 = vmatprep.subr.bf16.mxu0 0
      %3760 = vmatpush1.bf16.msra.mxu0 %v3548
      %3761 = vmatprep.subr.bf16.mxu0 0
      %3762 = vmatpush1.bf16.msra.mxu0 %v3549
      %3763 = vmatprep.subr.bf16.mxu0 0
      %3764 = vmatpush1.bf16.msra.mxu0 %v3550
      %3765 = vmatprep.subr.bf16.mxu0 0
      %3766 = vmatpush1.bf16.msra.mxu0 %v3551
      %3767 = vmatprep.subr.bf16.mxu0 0
      %3768 = vmatpush1.bf16.msra.mxu0 %v3552
      %3769 = vmatprep.subr.bf16.mxu0 0
      %3770 = vmatpush1.bf16.msra.mxu0 %v3553
      %3771 = vmatprep.subr.bf16.mxu0 0
      %3772 = vmatpush1.bf16.msra.mxu0 %v3554
      %3773 = vmatprep.subr.bf16.mxu0 0
      %3774 = vmatpush1.bf16.msra.mxu0 %v3555
      %3775 = vmatprep.subr.bf16.mxu0 0
      %3776 = vmatpush1.bf16.msra.mxu0 %v3556
      %3777 = vmatprep.subr.bf16.mxu0 0
      %3778 = vmatpush1.bf16.msra.mxu0 %v3557
      %3779 = vmatprep.subr.bf16.mxu0 0
      %3780 = vmatpush1.bf16.msra.mxu0 %v3558
      %3781 = vmatprep.subr.bf16.mxu0 0
      %3782 = vmatpush1.bf16.msra.mxu0 %v3559
      %3783 = vmatprep.subr.bf16.mxu0 0
      %3784 = vmatpush1.bf16.msra.mxu0 %v3560
      %3785 = vmatprep.subr.bf16.mxu0 0
      %3786 = vmatpush1.bf16.msra.mxu0 %v3561
      %3787 = vmatprep.mubr.bf16.mxu0 %v3268
      %3788 = vmatmul.mubr.bf16.gmra.mrb[0].mxu0 %v3267
      %v3789 = vpop.f32.mrb[0].mxu0
      %v3790 = vadd.f32 %v3629, %v3789
      %v3791 = vpop.f32.mrb[0].mxu0
      %v3792 = vpop.f32.mrb[0].mxu0
      %v3793 = vadd.f32 %v3632, %v3792
      %v3794 = vpop.f32.mrb[0].mxu0
      %3795 = vmatprep.mubr.bf16.mxu0 %v3272
      %3796 = vmatmul.mubr.bf16.gmra.mrb[0].mxu0 %v3271
      %v3797 = vpop.f32.mrb[0].mxu0
      %v3798 = vadd.f32 %v3637, %v3797
      %v3799 = vpop.f32.mrb[0].mxu0
      %v3800 = vpop.f32.mrb[0].mxu0
      %v3801 = vadd.f32 %v3640, %v3800
      %v3802 = vpop.f32.mrb[0].mxu0
      %3803 = vmatprep.mubr.bf16.mxu0 %v3276
      %3804 = vmatmul.mubr.bf16.gmra.mrb[0].mxu0 %v3275
      %v3805 = vpop.f32.mrb[0].mxu0
      %v3806 = vadd.f32 %v3645, %v3805
      %v3807 = vpop.f32.mrb[0].mxu0
      %v3808 = vpop.f32.mrb[0].mxu0
      %v3809 = vadd.f32 %v3648, %v3808
      %v3810 = vpop.f32.mrb[0].mxu0
      %3811 = vmatprep.mubr.bf16.mxu0 %v3280
      %3812 = vmatmul.mubr.bf16.gmra.mrb[0].mxu0 %v3279
      %v3813 = vpop.f32.mrb[0].mxu0
      %v3814 = vadd.f32 %v3653, %v3813
      %v3815 = vpop.f32.mrb[0].mxu0
      %v3816 = vpop.f32.mrb[0].mxu0
      %v3817 = vadd.f32 %v3656, %v3816
      %v3818 = vpop.f32.mrb[0].mxu0
      %3819 = vmatprep.mubr.bf16.mxu0 %v3284
      %3820 = vmatmul.mubr.bf16.gmra.mrb[0].mxu0 %v3283
      %v3821 = vpop.f32.mrb[0].mxu0
      %v3822 = vadd.f32 %v3661, %v3821
      %v3823 = vpop.f32.mrb[0].mxu0
      %v3824 = vpop.f32.mrb[0].mxu0
      %v3825 = vadd.f32 %v3664, %v3824
      %v3826 = vpop.f32.mrb[0].mxu0
      %3827 = vmatprep.mubr.bf16.mxu0 %v3288
      %3828 = vmatmul.mubr.bf16.gmra.mrb[0].mxu0 %v3287
      %v3829 = vpop.f32.mrb[0].mxu0
      %v3830 = vadd.f32 %v3669, %v3829
      %v3831 = vpop.f32.mrb[0].mxu0
      %v3832 = vpop.f32.mrb[0].mxu0
      %v3833 = vadd.f32 %v3672, %v3832
      %v3834 = vpop.f32.mrb[0].mxu0
      %3835 = vmatprep.mubr.bf16.mxu0 %v3292
      %3836 = vmatmul.mubr.bf16.gmra.mrb[0].mxu0 %v3291
      %v3837 = vpop.f32.mrb[0].mxu0
      %v3838 = vadd.f32 %v3677, %v3837
      %v3839 = vpop.f32.mrb[0].mxu0
      %v3840 = vpop.f32.mrb[0].mxu0
      %v3841 = vadd.f32 %v3680, %v3840
      %v3842 = vpop.f32.mrb[0].mxu0
      %3843 = vmatprep.mubr.bf16.mxu0 %v3296
      %3844 = vmatmul.mubr.bf16.gmra.mrb[0].mxu0 %v3295
      %v3845 = vpop.f32.mrb[0].mxu0
      %v3846 = vadd.f32 %v3685, %v3845
      %v3847 = vpop.f32.mrb[0].mxu0
      %v3848 = vpop.f32.mrb[0].mxu0
      %v3849 = vadd.f32 %v3688, %v3848
      %v3850 = vpop.f32.mrb[0].mxu0
      %3851 = vmatprep.mubr.bf16.mxu0 %v3300
      %3852 = vmatmul.mubr.bf16.gmra.mrb[0].mxu0 %v3299
      %v3853 = vpop.f32.mrb[0].mxu0
      %v3854 = vadd.f32 %v3693, %v3853
      %v3855 = vpop.f32.mrb[0].mxu0
      %v3856 = vpop.f32.mrb[0].mxu0
      %v3857 = vadd.f32 %v3696, %v3856
      %v3858 = vpop.f32.mrb[0].mxu0
      %3859 = vmatprep.mubr.bf16.mxu0 %v3304
      %3860 = vmatmul.mubr.bf16.gmra.mrb[0].mxu0 %v3303
      %v3861 = vpop.f32.mrb[0].mxu0
      %v3862 = vadd.f32 %v3701, %v3861
      %v3863 = vpop.f32.mrb[0].mxu0
      %v3864 = vpop.f32.mrb[0].mxu0
      %v3865 = vadd.f32 %v3704, %v3864
      %v3866 = vpop.f32.mrb[0].mxu0
      %3867 = vmatprep.mubr.bf16.mxu0 %v3308
      %3868 = vmatmul.mubr.bf16.gmra.mrb[0].mxu0 %v3307
      %v3869 = vpop.f32.mrb[0].mxu0
      %v3870 = vadd.f32 %v3709, %v3869
      %v3871 = vpop.f32.mrb[0].mxu0
      %v3872 = vpop.f32.mrb[0].mxu0
      %v3873 = vadd.f32 %v3712, %v3872
      %v3874 = vpop.f32.mrb[0].mxu0
      %3875 = vmatprep.mubr.bf16.mxu0 %v3312
      %3876 = vmatmul.mubr.bf16.gmra.mrb[0].mxu0 %v3311
      %v3877 = vpop.f32.mrb[0].mxu0
      %v3878 = vadd.f32 %v3717, %v3877
      %v3879 = vpop.f32.mrb[0].mxu0
      %v3880 = vpop.f32.mrb[0].mxu0
      %v3881 = vadd.f32 %v3720, %v3880
      %v3882 = vpop.f32.mrb[0].mxu0
      %3883 = vmatprep.mubr.bf16.mxu0 %v3316
      %3884 = vmatmul.mubr.bf16.gmra.mrb[0].mxu0 %v3315
      %v3885 = vpop.f32.mrb[0].mxu0
      %v3886 = vadd.f32 %v3725, %v3885
      %v3887 = vpop.f32.mrb[0].mxu0
      %v3888 = vpop.f32.mrb[0].mxu0
      %v3889 = vadd.f32 %v3728, %v3888
      %v3890 = vpop.f32.mrb[0].mxu0
      %3891 = vmatprep.mubr.bf16.mxu0 %v3320
      %3892 = vmatmul.mubr.bf16.gmra.mrb[0].mxu0 %v3319
      %v3893 = vpop.f32.mrb[0].mxu0
      %v3894 = vadd.f32 %v3733, %v3893
      %v3895 = vpop.f32.mrb[0].mxu0
      %v3896 = vpop.f32.mrb[0].mxu0
      %v3897 = vadd.f32 %v3736, %v3896
      %v3898 = vpop.f32.mrb[0].mxu0
      %3899 = vmatprep.mubr.bf16.mxu0 %v3324
      %3900 = vmatmul.mubr.bf16.gmra.mrb[0].mxu0 %v3323
      %v3901 = vpop.f32.mrb[0].mxu0
      %v3902 = vadd.f32 %v3741, %v3901
      %v3903 = vpop.f32.mrb[0].mxu0
      %v3904 = vpop.f32.mrb[0].mxu0
      %v3905 = vadd.f32 %v3744, %v3904
      %v3906 = vpop.f32.mrb[0].mxu0
      %3907 = vmatprep.mubr.bf16.mxu0 %v3328
      %3908 = vmatmul.mubr.bf16.gmra.mrb[0].mxu0 %v3327
      %v3909 = vpop.f32.mrb[0].mxu0
      %v3910 = vadd.f32 %v3749, %v3909
      %v3911 = vpop.f32.mrb[0].mxu0
      %v3912 = vpop.f32.mrb[0].mxu0
      %v3913 = vadd.f32 %v3752, %v3912
      %v3914 = vpop.f32.mrb[0].mxu0
      %3915 = vdwg.mxu0
      %v3916 = vpack.c.bf16 %v3793, %v3790
      %v3917 = vpack.c.bf16 %v3801, %v3798
      %v3918 = vpack.c.bf16 %v3809, %v3806
      %v3919 = vpack.c.bf16 %v3817, %v3814
      %v3920 = vpack.c.bf16 %v3825, %v3822
      %v3921 = vpack.c.bf16 %v3833, %v3830
      %v3922 = vpack.c.bf16 %v3841, %v3838
      %v3923 = vpack.c.bf16 %v3849, %v3846
      %v3924 = vpack.c.bf16 %v3857, %v3854
      %v3925 = vpack.c.bf16 %v3865, %v3862
      %v3926 = vpack.c.bf16 %v3873, %v3870
      %v3927 = vpack.c.bf16 %v3881, %v3878
      %v3928 = vpack.c.bf16 %v3889, %v3886
      %v3929 = vpack.c.bf16 %v3897, %v3894
      %v3930 = vpack.c.bf16 %v3905, %v3902
      %v3931 = vpack.c.bf16 %v3913, %v3910
      %3932 = vst [vmem:[#allocation3] sm:$0xff] %v3916
      %3933 = vst [vmem:[#allocation3 + $0x8] sm:$0xff] %v3917
      %3934 = vst [vmem:[#allocation3 + $0x10] sm:$0xff] %v3918
      %3935 = vst [vmem:[#allocation3 + $0x18] sm:$0xff] %v3919
      %3936 = vst [vmem:[#allocation3 + $0x20] sm:$0xff] %v3920
      %3937 = vst [vmem:[#allocation3 + $0x28] sm:$0xff] %v3921
      %3938 = vst [vmem:[#allocation3 + $0x30] sm:$0xff] %v3922
      %3939 = vst [vmem:[#allocation3 + $0x38] sm:$0xff] %v3923
      %3940 = vst [vmem:[#allocation3 + $0x40] sm:$0xff] %v3924
      %3941 = vst [vmem:[#allocation3 + $0x48] sm:$0xff] %v3925
      %3942 = vst [vmem:[#allocation3 + $0x50] sm:$0xff] %v3926
      %3943 = vst [vmem:[#allocation3 + $0x58] sm:$0xff] %v3927
      %3944 = vst [vmem:[#allocation3 + $0x60] sm:$0xff] %v3928
      %3945 = vst [vmem:[#allocation3 + $0x68] sm:$0xff] %v3929
      %3946 = vst [vmem:[#allocation3 + $0x70] sm:$0xff] %v3930
      %3947 = vst [vmem:[#allocation3 + $0x78] sm:$0xff] %v3931
      %v3948 = vld [vmem:[#allocation3] sm:$0xff]
      %v3949 = vld [vmem:[#allocation3 + $0x8] sm:$0xff]
      %v3950 = vld [vmem:[#allocation3 + $0x10] sm:$0xff]
      %v3951 = vld [vmem:[#allocation3 + $0x18] sm:$0xff]
      %v3952 = vld [vmem:[#allocation3 + $0x20] sm:$0xff]
      %v3953 = vld [vmem:[#allocation3 + $0x28] sm:$0xff]
      %v3954 = vld [vmem:[#allocation3 + $0x30] sm:$0xff]
      %v3955 = vld [vmem:[#allocation3 + $0x38] sm:$0xff]
      %v3956 = vld [vmem:[#allocation3 + $0x40] sm:$0xff]
      %v3957 = vld [vmem:[#allocation3 + $0x48] sm:$0xff]
      %v3958 = vld [vmem:[#allocation3 + $0x50] sm:$0xff]
      %v3959 = vld [vmem:[#allocation3 + $0x58] sm:$0xff]
      %v3960 = vld [vmem:[#allocation3 + $0x60] sm:$0xff]
      %v3961 = vld [vmem:[#allocation3 + $0x68] sm:$0xff]
      %v3962 = vld [vmem:[#allocation3 + $0x70] sm:$0xff]
      %v3963 = vld [vmem:[#allocation3 + $0x78] sm:$0xff]
      %3964 = vst [vmem:[#allocation4] sm:$0xff] %v3948
      %3965 = vst [vmem:[#allocation4 + $0x20] sm:$0xff] %v3949
      %3966 = vst [vmem:[#allocation4 + $0x40] sm:$0xff] %v3950
      %3967 = vst [vmem:[#allocation4 + $0x60] sm:$0xff] %v3951
      %3968 = vst [vmem:[#allocation4 + $0x80] sm:$0xff] %v3952
      %3969 = vst [vmem:[#allocation4 + $0xa0] sm:$0xff] %v3953
      %3970 = vst [vmem:[#allocation4 + $0xc0] sm:$0xff] %v3954
      %3971 = vst [vmem:[#allocation4 + $0xe0] sm:$0xff] %v3955
      %3972 = vst [vmem:[#allocation4 + $0x100] sm:$0xff] %v3956
      %3973 = vst [vmem:[#allocation4 + $0x120] sm:$0xff] %v3957
      %3974 = vst [vmem:[#allocation4 + $0x140] sm:$0xff] %v3958
      %3975 = vst [vmem:[#allocation4 + $0x160] sm:$0xff] %v3959
      %3976 = vst [vmem:[#allocation4 + $0x180] sm:$0xff] %v3960
      %3977 = vst [vmem:[#allocation4 + $0x1a0] sm:$0xff] %v3961
      %3978 = vst [vmem:[#allocation4 + $0x1c0] sm:$0xff] %v3962
      %3979 = vst [vmem:[#allocation4 + $0x1e0] sm:$0xff] %v3963
      %v3980 = vld [vmem:[#allocation3] sm:$0xff]
      %v3981 = vld [vmem:[#allocation3 + $0x8] sm:$0xff]
      %v3982 = vld [vmem:[#allocation3 + $0x10] sm:$0xff]
      %v3983 = vld [vmem:[#allocation3 + $0x18] sm:$0xff]
      %v3984 = vld [vmem:[#allocation3 + $0x20] sm:$0xff]
      %v3985 = vld [vmem:[#allocation3 + $0x28] sm:$0xff]
      %v3986 = vld [vmem:[#allocation3 + $0x30] sm:$0xff]
      %v3987 = vld [vmem:[#allocation3 + $0x38] sm:$0xff]
      %v3988 = vld [vmem:[#allocation3 + $0x40] sm:$0xff]
      %v3989 = vld [vmem:[#allocation3 + $0x48] sm:$0xff]
      %v3990 = vld [vmem:[#allocation3 + $0x50] sm:$0xff]
      %v3991 = vld [vmem:[#allocation3 + $0x58] sm:$0xff]
      %v3992 = vld [vmem:[#allocation3 + $0x60] sm:$0xff]
      %v3993 = vld [vmem:[#allocation3 + $0x68] sm:$0xff]
      %v3994 = vld [vmem:[#allocation3 + $0x70] sm:$0xff]
      %v3995 = vld [vmem:[#allocation3 + $0x78] sm:$0xff]
      %v3996 = vld [vmem:[#allocation3 + $0x80] sm:$0x1]
      %v3998 = vshrl.u32 %v3980, 16
      %v4000 = vshll.u32 %v3980, 16
      %v4002 = vrot.slane %v4000, 1
      %v4003 = vor.u32 %v3998, %v4002
      %v4005 = vshll.u32 %v3981, 16
      %v4007 = vrot.slane %v4005, 1
      %v4008 = vsel %vm671, %v4003, %v4007
      %v4009 = vshrl.u32 %v3981, 16
      %v4011 = vor.u32 %v4009, %v4007
      %v4013 = vshll.u32 %v3982, 16
      %v4015 = vrot.slane %v4013, 1
      %v4016 = vsel %vm671, %v4011, %v4015
      %v4017 = vshrl.u32 %v3982, 16
      %v4019 = vor.u32 %v4017, %v4015
      %v4021 = vshll.u32 %v3983, 16
      %v4023 = vrot.slane %v4021, 1
      %v4024 = vsel %vm671, %v4019, %v4023
      %v4025 = vshrl.u32 %v3983, 16
      %v4027 = vor.u32 %v4025, %v4023
      %v4029 = vshll.u32 %v3984, 16
      %v4031 = vrot.slane %v4029, 1
      %v4032 = vsel %vm671, %v4027, %v4031
      %v4033 = vshrl.u32 %v3984, 16
      %v4035 = vor.u32 %v4033, %v4031
      %v4037 = vshll.u32 %v3985, 16
      %v4039 = vrot.slane %v4037, 1
      %v4040 = vsel %vm671, %v4035, %v4039
      %v4041 = vshrl.u32 %v3985, 16
      %v4043 = vor.u32 %v4041, %v4039
      %v4045 = vshll.u32 %v3986, 16
      %v4047 = vrot.slane %v4045, 1
      %v4048 = vsel %vm671, %v4043, %v4047
      %v4049 = vshrl.u32 %v3986, 16
      %v4051 = vor.u32 %v4049, %v4047
      %v4053 = vshll.u32 %v3987, 16
      %v4055 = vrot.slane %v4053, 1
      %v4056 = vsel %vm671, %v4051, %v4055
      %v4057 = vshrl.u32 %v3987, 16
      %v4059 = vor.u32 %v4057, %v4055
      %v4061 = vshll.u32 %v3988, 16
      %v4063 = vrot.slane %v4061, 1
      %v4064 = vsel %vm671, %v4059, %v4063
      %v4065 = vshrl.u32 %v3988, 16
      %v4067 = vor.u32 %v4065, %v4063
      %v4069 = vshll.u32 %v3989, 16
      %v4071 = vrot.slane %v4069, 1
      %v4072 = vsel %vm671, %v4067, %v4071
      %v4073 = vshrl.u32 %v3989, 16
      %v4075 = vor.u32 %v4073, %v4071
      %v4077 = vshll.u32 %v3990, 16
      %v4079 = vrot.slane %v4077, 1
      %v4080 = vsel %vm671, %v4075, %v4079
      %v4081 = vshrl.u32 %v3990, 16
      %v4083 = vor.u32 %v4081, %v4079
      %v4085 = vshll.u32 %v3991, 16
      %v4087 = vrot.slane %v4085, 1
      %v4088 = vsel %vm671, %v4083, %v4087
      %v4089 = vshrl.u32 %v3991, 16
      %v4091 = vor.u32 %v4089, %v4087
      %v4093 = vshll.u32 %v3992, 16
      %v4095 = vrot.slane %v4093, 1
      %v4096 = vsel %vm671, %v4091, %v4095
      %v4097 = vshrl.u32 %v3992, 16
      %v4099 = vor.u32 %v4097, %v4095
      %v4101 = vshll.u32 %v3993, 16
      %v4103 = vrot.slane %v4101, 1
      %v4104 = vsel %vm671, %v4099, %v4103
      %v4105 = vshrl.u32 %v3993, 16
      %v4107 = vor.u32 %v4105, %v4103
      %v4109 = vshll.u32 %v3994, 16
      %v4111 = vrot.slane %v4109, 1
      %v4112 = vsel %vm671, %v4107, %v4111
      %v4113 = vshrl.u32 %v3994, 16
      %v4115 = vor.u32 %v4113, %v4111
      %v4117 = vshll.u32 %v3995, 16
      %v4119 = vrot.slane %v4117, 1
      %v4120 = vsel %vm671, %v4115, %v4119
      %v4121 = vshrl.u32 %v3995, 16
      %v4123 = vor.u32 %v4121, %v4119
      %v4125 = vshll.u32 %v3996, 16
      %v4127 = vrot.slane %v4125, 1
      %v4128 = vsel %vm671, %v4123, %v4127
      %4145 = vst [vmem:[#allocation4 + $0x8] sm:$0xff] %v4008
      %4146 = vst [vmem:[#allocation4 + $0x28] sm:$0xff] %v4016
      %4147 = vst [vmem:[#allocation4 + $0x48] sm:$0xff] %v4024
      %4148 = vst [vmem:[#allocation4 + $0x68] sm:$0xff] %v4032
      %4149 = vst [vmem:[#allocation4 + $0x88] sm:$0xff] %v4040
      %4150 = vst [vmem:[#allocation4 + $0xa8] sm:$0xff] %v4048
      %4151 = vst [vmem:[#allocation4 + $0xc8] sm:$0xff] %v4056
      %4152 = vst [vmem:[#allocation4 + $0xe8] sm:$0xff] %v4064
      %4153 = vst [vmem:[#allocation4 + $0x108] sm:$0xff] %v4072
      %4154 = vst [vmem:[#allocation4 + $0x128] sm:$0xff] %v4080
      %4155 = vst [vmem:[#allocation4 + $0x148] sm:$0xff] %v4088
      %4156 = vst [vmem:[#allocation4 + $0x168] sm:$0xff] %v4096
      %4157 = vst [vmem:[#allocation4 + $0x188] sm:$0xff] %v4104
      %4158 = vst [vmem:[#allocation4 + $0x1a8] sm:$0xff] %v4112
      %4159 = vst [vmem:[#allocation4 + $0x1c8] sm:$0xff] %v4120
      %4160 = vst [vmem:[#allocation4 + $0x1e8] sm:$0xff] %v4128
      %v4161 = vld [vmem:[#allocation3 + $0x8] sm:$0xff]
      %v4162 = vld [vmem:[#allocation3 + $0x10] sm:$0xff]
      %v4163 = vld [vmem:[#allocation3 + $0x18] sm:$0xff]
      %v4164 = vld [vmem:[#allocation3 + $0x20] sm:$0xff]
      %v4165 = vld [vmem:[#allocation3 + $0x28] sm:$0xff]
      %v4166 = vld [vmem:[#allocation3 + $0x30] sm:$0xff]
      %v4167 = vld [vmem:[#allocation3 + $0x38] sm:$0xff]
      %v4168 = vld [vmem:[#allocation3 + $0x40] sm:$0xff]
      %v4169 = vld [vmem:[#allocation3 + $0x48] sm:$0xff]
      %v4170 = vld [vmem:[#allocation3 + $0x50] sm:$0xff]
      %v4171 = vld [vmem:[#allocation3 + $0x58] sm:$0xff]
      %v4172 = vld [vmem:[#allocation3 + $0x60] sm:$0xff]
      %v4173 = vld [vmem:[#allocation3 + $0x68] sm:$0xff]
      %v4174 = vld [vmem:[#allocation3 + $0x70] sm:$0xff]
      %v4175 = vld [vmem:[#allocation3 + $0x78] sm:$0xff]
      %v4176 = vld [vmem:[#allocation3 + $0x80] sm:$0xff]
      %4177 = vst [vmem:[#allocation4 + $0x10] sm:$0xff] %v4161
      %4178 = vst [vmem:[#allocation4 + $0x30] sm:$0xff] %v4162
      %4179 = vst [vmem:[#allocation4 + $0x50] sm:$0xff] %v4163
      %4180 = vst [vmem:[#allocation4 + $0x70] sm:$0xff] %v4164
      %4181 = vst [vmem:[#allocation4 + $0x90] sm:$0xff] %v4165
      %4182 = vst [vmem:[#allocation4 + $0xb0] sm:$0xff] %v4166
      %4183 = vst [vmem:[#allocation4 + $0xd0] sm:$0xff] %v4167
      %4184 = vst [vmem:[#allocation4 + $0xf0] sm:$0xff] %v4168
      %4185 = vst [vmem:[#allocation4 + $0x110] sm:$0xff] %v4169
      %4186 = vst [vmem:[#allocation4 + $0x130] sm:$0xff] %v4170
      %4187 = vst [vmem:[#allocation4 + $0x150] sm:$0xff] %v4171
      %4188 = vst [vmem:[#allocation4 + $0x170] sm:$0xff] %v4172
      %4189 = vst [vmem:[#allocation4 + $0x190] sm:$0xff] %v4173
      %4190 = vst [vmem:[#allocation4 + $0x1b0] sm:$0xff] %v4174
      %4191 = vst [vmem:[#allocation4 + $0x1d0] sm:$0xff] %v4175
      %4192 = vst [vmem:[#allocation4 + $0x1f0] sm:$0xff] %v4176
      %v4193 = vld [vmem:[#allocation3 + $0x8] sm:$0xff]
      %v4194 = vld [vmem:[#allocation3 + $0x10] sm:$0xff]
      %v4195 = vld [vmem:[#allocation3 + $0x18] sm:$0xff]
      %v4196 = vld [vmem:[#allocation3 + $0x20] sm:$0xff]
      %v4197 = vld [vmem:[#allocation3 + $0x28] sm:$0xff]
      %v4198 = vld [vmem:[#allocation3 + $0x30] sm:$0xff]
      %v4199 = vld [vmem:[#allocation3 + $0x38] sm:$0xff]
      %v4200 = vld [vmem:[#allocation3 + $0x40] sm:$0xff]
      %v4201 = vld [vmem:[#allocation3 + $0x48] sm:$0xff]
      %v4202 = vld [vmem:[#allocation3 + $0x50] sm:$0xff]
      %v4203 = vld [vmem:[#allocation3 + $0x58] sm:$0xff]
      %v4204 = vld [vmem:[#allocation3 + $0x60] sm:$0xff]
      %v4205 = vld [vmem:[#allocation3 + $0x68] sm:$0xff]
      %v4206 = vld [vmem:[#allocation3 + $0x70] sm:$0xff]
      %v4207 = vld [vmem:[#allocation3 + $0x78] sm:$0xff]
      %v4208 = vld [vmem:[#allocation3 + $0x80] sm:$0xff]
      %v4209 = vld [vmem:[#allocation3 + $0x88] sm:$0x1]
      %v4211 = vshrl.u32 %v4193, 16
      %v4213 = vshll.u32 %v4193, 16
      %v4215 = vrot.slane %v4213, 1
      %v4216 = vor.u32 %v4211, %v4215
      %v4218 = vshll.u32 %v4194, 16
      %v4220 = vrot.slane %v4218, 1
      %v4221 = vsel %vm671, %v4216, %v4220
      %v4222 = vshrl.u32 %v4194, 16
      %v4224 = vor.u32 %v4222, %v4220
      %v4226 = vshll.u32 %v4195, 16
      %v4228 = vrot.slane %v4226, 1
      %v4229 = vsel %vm671, %v4224, %v4228
      %v4230 = vshrl.u32 %v4195, 16
      %v4232 = vor.u32 %v4230, %v4228
      %v4234 = vshll.u32 %v4196, 16
      %v4236 = vrot.slane %v4234, 1
      %v4237 = vsel %vm671, %v4232, %v4236
      %v4238 = vshrl.u32 %v4196, 16
      %v4240 = vor.u32 %v4238, %v4236
      %v4242 = vshll.u32 %v4197, 16
      %v4244 = vrot.slane %v4242, 1
      %v4245 = vsel %vm671, %v4240, %v4244
      %v4246 = vshrl.u32 %v4197, 16
      %v4248 = vor.u32 %v4246, %v4244
      %v4250 = vshll.u32 %v4198, 16
      %v4252 = vrot.slane %v4250, 1
      %v4253 = vsel %vm671, %v4248, %v4252
      %v4254 = vshrl.u32 %v4198, 16
      %v4256 = vor.u32 %v4254, %v4252
      %v4258 = vshll.u32 %v4199, 16
      %v4260 = vrot.slane %v4258, 1
      %v4261 = vsel %vm671, %v4256, %v4260
      %v4262 = vshrl.u32 %v4199, 16
      %v4264 = vor.u32 %v4262, %v4260
      %v4266 = vshll.u32 %v4200, 16
      %v4268 = vrot.slane %v4266, 1
      %v4269 = vsel %vm671, %v4264, %v4268
      %v4270 = vshrl.u32 %v4200, 16
      %v4272 = vor.u32 %v4270, %v4268
      %v4274 = vshll.u32 %v4201, 16
      %v4276 = vrot.slane %v4274, 1
      %v4277 = vsel %vm671, %v4272, %v4276
      %v4278 = vshrl.u32 %v4201, 16
      %v4280 = vor.u32 %v4278, %v4276
      %v4282 = vshll.u32 %v4202, 16
      %v4284 = vrot.slane %v4282, 1
      %v4285 = vsel %vm671, %v4280, %v4284
      %v4286 = vshrl.u32 %v4202, 16
      %v4288 = vor.u32 %v4286, %v4284
      %v4290 = vshll.u32 %v4203, 16
      %v4292 = vrot.slane %v4290, 1
      %v4293 = vsel %vm671, %v4288, %v4292
      %v4294 = vshrl.u32 %v4203, 16
      %v4296 = vor.u32 %v4294, %v4292
      %v4298 = vshll.u32 %v4204, 16
      %v4300 = vrot.slane %v4298, 1
      %v4301 = vsel %vm671, %v4296, %v4300
      %v4302 = vshrl.u32 %v4204, 16
      %v4304 = vor.u32 %v4302, %v4300
      %v4306 = vshll.u32 %v4205, 16
      %v4308 = vrot.slane %v4306, 1
      %v4309 = vsel %vm671, %v4304, %v4308
      %v4310 = vshrl.u32 %v4205, 16
      %v4312 = vor.u32 %v4310, %v4308
      %v4314 = vshll.u32 %v4206, 16
      %v4316 = vrot.slane %v4314, 1
      %v4317 = vsel %vm671, %v4312, %v4316
      %v4318 = vshrl.u32 %v4206, 16
      %v4320 = vor.u32 %v4318, %v4316
      %v4322 = vshll.u32 %v4207, 16
      %v4324 = vrot.slane %v4322, 1
      %v4325 = vsel %vm671, %v4320, %v4324
      %v4326 = vshrl.u32 %v4207, 16
      %v4328 = vor.u32 %v4326, %v4324
      %v4330 = vshll.u32 %v4208, 16
      %v4332 = vrot.slane %v4330, 1
      %v4333 = vsel %vm671, %v4328, %v4332
      %v4334 = vshrl.u32 %v4208, 16
      %v4336 = vor.u32 %v4334, %v4332
      %v4338 = vshll.u32 %v4209, 16
      %v4340 = vrot.slane %v4338, 1
      %v4341 = vsel %vm671, %v4336, %v4340
      %4358 = vst [vmem:[#allocation4 + $0x18] sm:$0xff] %v4221
      %4359 = vst [vmem:[#allocation4 + $0x38] sm:$0xff] %v4229
      %4360 = vst [vmem:[#allocation4 + $0x58] sm:$0xff] %v4237
      %4361 = vst [vmem:[#allocation4 + $0x78] sm:$0xff] %v4245
      %4362 = vst [vmem:[#allocation4 + $0x98] sm:$0xff] %v4253
      %4363 = vst [vmem:[#allocation4 + $0xb8] sm:$0xff] %v4261
      %4364 = vst [vmem:[#allocation4 + $0xd8] sm:$0xff] %v4269
      %4365 = vst [vmem:[#allocation4 + $0xf8] sm:$0xff] %v4277
      %4366 = vst [vmem:[#allocation4 + $0x118] sm:$0xff] %v4285
      %4367 = vst [vmem:[#allocation4 + $0x138] sm:$0xff] %v4293
      %4368 = vst [vmem:[#allocation4 + $0x158] sm:$0xff] %v4301
      %4369 = vst [vmem:[#allocation4 + $0x178] sm:$0xff] %v4309
      %4370 = vst [vmem:[#allocation4 + $0x198] sm:$0xff] %v4317
      %4371 = vst [vmem:[#allocation4 + $0x1b8] sm:$0xff] %v4325
      %4372 = vst [vmem:[#allocation4 + $0x1d8] sm:$0xff] %v4333
      %4373 = vst [vmem:[#allocation4 + $0x1f8] sm:$0xff] %v4341
      %v4374 = vld [vmem:[#allocation4] sm:$0xff]
      %v4375 = vld [vmem:[#allocation4 + $0x8] sm:$0xff]
      %v4376 = vld [vmem:[#allocation4 + $0x10] sm:$0xff]
      %v4377 = vld [vmem:[#allocation4 + $0x18] sm:$0xff]
      %v4378 = vld [vmem:[#allocation4 + $0x20] sm:$0xff]
      %v4379 = vld [vmem:[#allocation4 + $0x28] sm:$0xff]
      %v4380 = vld [vmem:[#allocation4 + $0x30] sm:$0xff]
      %v4381 = vld [vmem:[#allocation4 + $0x38] sm:$0xff]
      %v4382 = vld [vmem:[#allocation4 + $0x40] sm:$0xff]
      %v4383 = vld [vmem:[#allocation4 + $0x48] sm:$0xff]
      %v4384 = vld [vmem:[#allocation4 + $0x50] sm:$0xff]
      %v4385 = vld [vmem:[#allocation4 + $0x58] sm:$0xff]
      %v4386 = vld [vmem:[#allocation4 + $0x60] sm:$0xff]
      %v4387 = vld [vmem:[#allocation4 + $0x68] sm:$0xff]
      %v4388 = vld [vmem:[#allocation4 + $0x70] sm:$0xff]
      %v4389 = vld [vmem:[#allocation4 + $0x78] sm:$0xff]
      %v4390 = vld [vmem:[#allocation4 + $0x80] sm:$0xff]
      %v4391 = vld [vmem:[#allocation4 + $0x88] sm:$0xff]
      %v4392 = vld [vmem:[#allocation4 + $0x90] sm:$0xff]
      %v4393 = vld [vmem:[#allocation4 + $0x98] sm:$0xff]
      %v4394 = vld [vmem:[#allocation4 + $0xa0] sm:$0xff]
      %v4395 = vld [vmem:[#allocation4 + $0xa8] sm:$0xff]
      %v4396 = vld [vmem:[#allocation4 + $0xb0] sm:$0xff]
      %v4397 = vld [vmem:[#allocation4 + $0xb8] sm:$0xff]
      %v4398 = vld [vmem:[#allocation4 + $0xc0] sm:$0xff]
      %v4399 = vld [vmem:[#allocation4 + $0xc8] sm:$0xff]
      %v4400 = vld [vmem:[#allocation4 + $0xd0] sm:$0xff]
      %v4401 = vld [vmem:[#allocation4 + $0xd8] sm:$0xff]
      %v4402 = vld [vmem:[#allocation4 + $0xe0] sm:$0xff]
      %v4403 = vld [vmem:[#allocation4 + $0xe8] sm:$0xff]
      %v4404 = vld [vmem:[#allocation4 + $0xf0] sm:$0xff]
      %v4405 = vld [vmem:[#allocation4 + $0xf8] sm:$0xff]
      %v4406 = vld [vmem:[#allocation4 + $0x100] sm:$0xff]
      %v4407 = vld [vmem:[#allocation4 + $0x108] sm:$0xff]
      %v4408 = vld [vmem:[#allocation4 + $0x110] sm:$0xff]
      %v4409 = vld [vmem:[#allocation4 + $0x118] sm:$0xff]
      %v4410 = vld [vmem:[#allocation4 + $0x120] sm:$0xff]
      %v4411 = vld [vmem:[#allocation4 + $0x128] sm:$0xff]
      %v4412 = vld [vmem:[#allocation4 + $0x130] sm:$0xff]
      %v4413 = vld [vmem:[#allocation4 + $0x138] sm:$0xff]
      %v4414 = vld [vmem:[#allocation4 + $0x140] sm:$0xff]
      %v4415 = vld [vmem:[#allocation4 + $0x148] sm:$0xff]
      %v4416 = vld [vmem:[#allocation4 + $0x150] sm:$0xff]
      %v4417 = vld [vmem:[#allocation4 + $0x158] sm:$0xff]
      %v4418 = vld [vmem:[#allocation4 + $0x160] sm:$0xff]
      %v4419 = vld [vmem:[#allocation4 + $0x168] sm:$0xff]
      %v4420 = vld [vmem:[#allocation4 + $0x170] sm:$0xff]
      %v4421 = vld [vmem:[#allocation4 + $0x178] sm:$0xff]
      %v4422 = vld [vmem:[#allocation4 + $0x180] sm:$0xff]
      %v4423 = vld [vmem:[#allocation4 + $0x188] sm:$0xff]
      %v4424 = vld [vmem:[#allocation4 + $0x190] sm:$0xff]
      %v4425 = vld [vmem:[#allocation4 + $0x198] sm:$0xff]
      %v4426 = vld [vmem:[#allocation4 + $0x1a0] sm:$0xff]
      %v4427 = vld [vmem:[#allocation4 + $0x1a8] sm:$0xff]
      %v4428 = vld [vmem:[#allocation4 + $0x1b0] sm:$0xff]
      %v4429 = vld [vmem:[#allocation4 + $0x1b8] sm:$0xff]
      %v4430 = vld [vmem:[#allocation4 + $0x1c0] sm:$0xff]
      %v4431 = vld [vmem:[#allocation4 + $0x1c8] sm:$0xff]
      %v4432 = vld [vmem:[#allocation4 + $0x1d0] sm:$0xff]
      %v4433 = vld [vmem:[#allocation4 + $0x1d8] sm:$0xff]
      %v4434 = vld [vmem:[#allocation4 + $0x1e0] sm:$0xff]
      %v4435 = vld [vmem:[#allocation4 + $0x1e8] sm:$0xff]
      %v4436 = vld [vmem:[#allocation4 + $0x1f0] sm:$0xff]
      %v4437 = vld [vmem:[#allocation4 + $0x1f8] sm:$0xff]
      %s4438 = scalar_lea.vmem %s3, 768
      %v4439 = vld [vmem:[%s4438] sm:$0xf]
      %v4440 = vld [vmem:[%s4438 + $0x4] sm:$0xf]
      %v4441 = vld [vmem:[%s4438 + $0x8] sm:$0xf]
      %v4442 = vld [vmem:[%s4438 + $0xc] sm:$0xf]
      %v4443 = vld [vmem:[%s4438 + $0x10] sm:$0xf]
      %v4444 = vld [vmem:[%s4438 + $0x14] sm:$0xf]
      %v4445 = vld [vmem:[%s4438 + $0x18] sm:$0xf]
      %v4446 = vld [vmem:[%s4438 + $0x1c] sm:$0xf]
      %v4447 = vld [vmem:[%s4438 + $0x20] sm:$0xf]
      %v4448 = vld [vmem:[%s4438 + $0x24] sm:$0xf]
      %v4449 = vld [vmem:[%s4438 + $0x28] sm:$0xf]
      %v4450 = vld [vmem:[%s4438 + $0x2c] sm:$0xf]
      %v4451 = vld [vmem:[%s4438 + $0x30] sm:$0xf]
      %v4452 = vld [vmem:[%s4438 + $0x34] sm:$0xf]
      %v4453 = vld [vmem:[%s4438 + $0x38] sm:$0xf]
      %v4454 = vld [vmem:[%s4438 + $0x3c] sm:$0xf]
      %v4455 = vld [vmem:[%s4438 + $0x40] sm:$0xf]
      %v4456 = vld [vmem:[%s4438 + $0x44] sm:$0xf]
      %v4457 = vld [vmem:[%s4438 + $0x48] sm:$0xf]
      %v4458 = vld [vmem:[%s4438 + $0x4c] sm:$0xf]
      %v4459 = vld [vmem:[%s4438 + $0x50] sm:$0xf]
      %v4460 = vld [vmem:[%s4438 + $0x54] sm:$0xf]
      %v4461 = vld [vmem:[%s4438 + $0x58] sm:$0xf]
      %v4462 = vld [vmem:[%s4438 + $0x5c] sm:$0xf]
      %v4463 = vld [vmem:[%s4438 + $0x60] sm:$0xf]
      %v4464 = vld [vmem:[%s4438 + $0x64] sm:$0xf]
      %v4465 = vld [vmem:[%s4438 + $0x68] sm:$0xf]
      %v4466 = vld [vmem:[%s4438 + $0x6c] sm:$0xf]
      %v4467 = vld [vmem:[%s4438 + $0x70] sm:$0xf]
      %v4468 = vld [vmem:[%s4438 + $0x74] sm:$0xf]
      %v4469 = vld [vmem:[%s4438 + $0x78] sm:$0xf]
      %v4470 = vld [vmem:[%s4438 + $0x7c] sm:$0xf]
      %v4471 = vld [vmem:[%s4438 + $0x80] sm:$0xf]
      %v4472 = vld [vmem:[%s4438 + $0x84] sm:$0xf]
      %v4473 = vld [vmem:[%s4438 + $0x88] sm:$0xf]
      %v4474 = vld [vmem:[%s4438 + $0x8c] sm:$0xf]
      %v4475 = vld [vmem:[%s4438 + $0x90] sm:$0xf]
      %v4476 = vld [vmem:[%s4438 + $0x94] sm:$0xf]
      %v4477 = vld [vmem:[%s4438 + $0x98] sm:$0xf]
      %v4478 = vld [vmem:[%s4438 + $0x9c] sm:$0xf]
      %v4479 = vld [vmem:[%s4438 + $0xa0] sm:$0xf]
      %v4480 = vld [vmem:[%s4438 + $0xa4] sm:$0xf]
      %v4481 = vld [vmem:[%s4438 + $0xa8] sm:$0xf]
      %v4482 = vld [vmem:[%s4438 + $0xac] sm:$0xf]
      %v4483 = vld [vmem:[%s4438 + $0xb0] sm:$0xf]
      %v4484 = vld [vmem:[%s4438 + $0xb4] sm:$0xf]
      %v4485 = vld [vmem:[%s4438 + $0xb8] sm:$0xf]
      %v4486 = vld [vmem:[%s4438 + $0xbc] sm:$0xf]
      %v4487 = vld [vmem:[%s4438 + $0xc0] sm:$0xf]
      %v4488 = vld [vmem:[%s4438 + $0xc4] sm:$0xf]
      %v4489 = vld [vmem:[%s4438 + $0xc8] sm:$0xf]
      %v4490 = vld [vmem:[%s4438 + $0xcc] sm:$0xf]
      %v4491 = vld [vmem:[%s4438 + $0xd0] sm:$0xf]
      %v4492 = vld [vmem:[%s4438 + $0xd4] sm:$0xf]
      %v4493 = vld [vmem:[%s4438 + $0xd8] sm:$0xf]
      %v4494 = vld [vmem:[%s4438 + $0xdc] sm:$0xf]
      %v4495 = vld [vmem:[%s4438 + $0xe0] sm:$0xf]
      %v4496 = vld [vmem:[%s4438 + $0xe4] sm:$0xf]
      %v4497 = vld [vmem:[%s4438 + $0xe8] sm:$0xf]
      %v4498 = vld [vmem:[%s4438 + $0xec] sm:$0xf]
      %v4499 = vld [vmem:[%s4438 + $0xf0] sm:$0xf]
      %v4500 = vld [vmem:[%s4438 + $0xf4] sm:$0xf]
      %v4501 = vld [vmem:[%s4438 + $0xf8] sm:$0xf]
      %v4502 = vld [vmem:[%s4438 + $0xfc] sm:$0xf]
      %s4503 = scalar_lea.vmem %s4, 3
      %v4504 = vld [vmem:[%s4503] sm:$0x1]
      %v4506 = vlaneseq
      %v4507 = vshrl.u32 %v4506, 7
      %v4508 = vsub.s32 0, %v4507
      %v4509 = vrot.slane %v4504, %v4508
      %v4575 = vunpack.c.l.b16 %v4439
      %v4576 = vunpack.c.l.b16 %v4440
      %v4577 = vunpack.c.l.b16 %v4441
      %v4578 = vunpack.c.l.b16 %v4442
      %v4579 = vunpack.c.l.b16 %v4443
      %v4580 = vunpack.c.l.b16 %v4444
      %v4581 = vunpack.c.l.b16 %v4445
      %v4582 = vunpack.c.l.b16 %v4446
      %v4583 = vunpack.c.l.b16 %v4447
      %v4584 = vunpack.c.l.b16 %v4448
      %v4585 = vunpack.c.l.b16 %v4449
      %v4586 = vunpack.c.l.b16 %v4450
      %v4587 = vunpack.c.l.b16 %v4451
      %v4588 = vunpack.c.l.b16 %v4452
      %v4589 = vunpack.c.l.b16 %v4453
      %v4590 = vunpack.c.l.b16 %v4454
      %v4591 = vunpack.c.l.b16 %v4455
      %v4592 = vunpack.c.l.b16 %v4456
      %v4593 = vunpack.c.l.b16 %v4457
      %v4594 = vunpack.c.l.b16 %v4458
      %v4595 = vunpack.c.l.b16 %v4459
      %v4596 = vunpack.c.l.b16 %v4460
      %v4597 = vunpack.c.l.b16 %v4461
      %v4598 = vunpack.c.l.b16 %v4462
      %v4599 = vunpack.c.l.b16 %v4463
      %v4600 = vunpack.c.l.b16 %v4464
      %v4601 = vunpack.c.l.b16 %v4465
      %v4602 = vunpack.c.l.b16 %v4466
      %v4603 = vunpack.c.l.b16 %v4467
      %v4604 = vunpack.c.l.b16 %v4468
      %v4605 = vunpack.c.l.b16 %v4469
      %v4606 = vunpack.c.l.b16 %v4470
      %v4607 = vunpack.c.l.b16 %v4471
      %v4608 = vunpack.c.l.b16 %v4472
      %v4609 = vunpack.c.l.b16 %v4473
      %v4610 = vunpack.c.l.b16 %v4474
      %v4611 = vunpack.c.l.b16 %v4475
      %v4612 = vunpack.c.l.b16 %v4476
      %v4613 = vunpack.c.l.b16 %v4477
      %v4614 = vunpack.c.l.b16 %v4478
      %v4615 = vunpack.c.l.b16 %v4479
      %v4616 = vunpack.c.l.b16 %v4480
      %v4617 = vunpack.c.l.b16 %v4481
      %v4618 = vunpack.c.l.b16 %v4482
      %v4619 = vunpack.c.l.b16 %v4483
      %v4620 = vunpack.c.l.b16 %v4484
      %v4621 = vunpack.c.l.b16 %v4485
      %v4622 = vunpack.c.l.b16 %v4486
      %v4623 = vunpack.c.l.b16 %v4487
      %v4624 = vunpack.c.l.b16 %v4488
      %v4625 = vunpack.c.l.b16 %v4489
      %v4626 = vunpack.c.l.b16 %v4490
      %v4627 = vunpack.c.l.b16 %v4491
      %v4628 = vunpack.c.l.b16 %v4492
      %v4629 = vunpack.c.l.b16 %v4493
      %v4630 = vunpack.c.l.b16 %v4494
      %v4631 = vunpack.c.l.b16 %v4495
      %v4632 = vunpack.c.l.b16 %v4496
      %v4633 = vunpack.c.l.b16 %v4497
      %v4634 = vunpack.c.l.b16 %v4498
      %v4635 = vunpack.c.l.b16 %v4499
      %v4636 = vunpack.c.l.b16 %v4500
      %v4637 = vunpack.c.l.b16 %v4501
      %v4638 = vunpack.c.l.b16 %v4502
      %v4639 = vpack.c.b16 %v4576, %v4575
      %v4640 = vpack.c.b16 %v4578, %v4577
      %v4641 = vpack.c.b16 %v4580, %v4579
      %v4642 = vpack.c.b16 %v4582, %v4581
      %v4643 = vpack.c.b16 %v4584, %v4583
      %v4644 = vpack.c.b16 %v4586, %v4585
      %v4645 = vpack.c.b16 %v4588, %v4587
      %v4646 = vpack.c.b16 %v4590, %v4589
      %v4647 = vpack.c.b16 %v4592, %v4591
      %v4648 = vpack.c.b16 %v4594, %v4593
      %v4649 = vpack.c.b16 %v4596, %v4595
      %v4650 = vpack.c.b16 %v4598, %v4597
      %v4651 = vpack.c.b16 %v4600, %v4599
      %v4652 = vpack.c.b16 %v4602, %v4601
      %v4653 = vpack.c.b16 %v4604, %v4603
      %v4654 = vpack.c.b16 %v4606, %v4605
      %v4655 = vpack.c.b16 %v4608, %v4607
      %v4656 = vpack.c.b16 %v4610, %v4609
      %v4657 = vpack.c.b16 %v4612, %v4611
      %v4658 = vpack.c.b16 %v4614, %v4613
      %v4659 = vpack.c.b16 %v4616, %v4615
      %v4660 = vpack.c.b16 %v4618, %v4617
      %v4661 = vpack.c.b16 %v4620, %v4619
      %v4662 = vpack.c.b16 %v4622, %v4621
      %v4663 = vpack.c.b16 %v4624, %v4623
      %v4664 = vpack.c.b16 %v4626, %v4625
      %v4665 = vpack.c.b16 %v4628, %v4627
      %v4666 = vpack.c.b16 %v4630, %v4629
      %v4667 = vpack.c.b16 %v4632, %v4631
      %v4668 = vpack.c.b16 %v4634, %v4633
      %v4669 = vpack.c.b16 %v4636, %v4635
      %v4670 = vpack.c.b16 %v4638, %v4637
      %4703 = vmatprep.subr.bf16.mxu0 0
      %4704 = vmatpush1.bf16.msra.mxu0 %v4639
      %4705 = vmatprep.subr.bf16.mxu0 0
      %4706 = vmatpush1.bf16.msra.mxu0 %v4640
      %4707 = vmatprep.subr.bf16.mxu0 0
      %4708 = vmatpush1.bf16.msra.mxu0 %v4641
      %4709 = vmatprep.subr.bf16.mxu0 0
      %4710 = vmatpush1.bf16.msra.mxu0 %v4642
      %4711 = vmatprep.subr.bf16.mxu0 0
      %4712 = vmatpush1.bf16.msra.mxu0 %v4643
      %4713 = vmatprep.subr.bf16.mxu0 0
      %4714 = vmatpush1.bf16.msra.mxu0 %v4644
      %4715 = vmatprep.subr.bf16.mxu0 0
      %4716 = vmatpush1.bf16.msra.mxu0 %v4645
      %4717 = vmatprep.subr.bf16.mxu0 0
      %4718 = vmatpush1.bf16.msra.mxu0 %v4646
      %4719 = vmatprep.subr.bf16.mxu0 0
      %4720 = vmatpush1.bf16.msra.mxu0 %v4647
      %4721 = vmatprep.subr.bf16.mxu0 0
      %4722 = vmatpush1.bf16.msra.mxu0 %v4648
      %4723 = vmatprep.subr.bf16.mxu0 0
      %4724 = vmatpush1.bf16.msra.mxu0 %v4649
      %4725 = vmatprep.subr.bf16.mxu0 0
      %4726 = vmatpush1.bf16.msra.mxu0 %v4650
      %4727 = vmatprep.subr.bf16.mxu0 0
      %4728 = vmatpush1.bf16.msra.mxu0 %v4651
      %4729 = vmatprep.subr.bf16.mxu0 0
      %4730 = vmatpush1.bf16.msra.mxu0 %v4652
      %4731 = vmatprep.subr.bf16.mxu0 0
      %4732 = vmatpush1.bf16.msra.mxu0 %v4653
      %4733 = vmatprep.subr.bf16.mxu0 0
      %4734 = vmatpush1.bf16.msra.mxu0 %v4654
      %4735 = vmatprep.mubr.bf16.mxu0 %v4375
      %4736 = vmatmul.mubr.bf16.gmra.mrb[0].mxu0 %v4374
      %v4737 = vpop.f32.mrb[0].mxu0
      %v4738 = vadd.f32 %v4509, %v4737
      %v4739 = vpop.f32.mrb[0].mxu0
      %v4740 = vpop.f32.mrb[0].mxu0
      %v4741 = vadd.f32 %v4509, %v4740
      %v4742 = vpop.f32.mrb[0].mxu0
      %4743 = vmatprep.mubr.bf16.mxu0 %v4379
      %4744 = vmatmul.mubr.bf16.gmra.mrb[0].mxu0 %v4378
      %v4745 = vpop.f32.mrb[0].mxu0
      %v4746 = vadd.f32 %v4509, %v4745
      %v4747 = vpop.f32.mrb[0].mxu0
      %v4748 = vpop.f32.mrb[0].mxu0
      %v4749 = vadd.f32 %v4509, %v4748
      %v4750 = vpop.f32.mrb[0].mxu0
      %4751 = vmatprep.mubr.bf16.mxu0 %v4383
      %4752 = vmatmul.mubr.bf16.gmra.mrb[0].mxu0 %v4382
      %v4753 = vpop.f32.mrb[0].mxu0
      %v4754 = vadd.f32 %v4509, %v4753
      %v4755 = vpop.f32.mrb[0].mxu0
      %v4756 = vpop.f32.mrb[0].mxu0
      %v4757 = vadd.f32 %v4509, %v4756
      %v4758 = vpop.f32.mrb[0].mxu0
      %4759 = vmatprep.mubr.bf16.mxu0 %v4387
      %4760 = vmatmul.mubr.bf16.gmra.mrb[0].mxu0 %v4386
      %v4761 = vpop.f32.mrb[0].mxu0
      %v4762 = vadd.f32 %v4509, %v4761
      %v4763 = vpop.f32.mrb[0].mxu0
      %v4764 = vpop.f32.mrb[0].mxu0
      %v4765 = vadd.f32 %v4509, %v4764
      %v4766 = vpop.f32.mrb[0].mxu0
      %4767 = vmatprep.mubr.bf16.mxu0 %v4391
      %4768 = vmatmul.mubr.bf16.gmra.mrb[0].mxu0 %v4390
      %v4769 = vpop.f32.mrb[0].mxu0
      %v4770 = vadd.f32 %v4509, %v4769
      %v4771 = vpop.f32.mrb[0].mxu0
      %v4772 = vpop.f32.mrb[0].mxu0
      %v4773 = vadd.f32 %v4509, %v4772
      %v4774 = vpop.f32.mrb[0].mxu0
      %4775 = vmatprep.mubr.bf16.mxu0 %v4395
      %4776 = vmatmul.mubr.bf16.gmra.mrb[0].mxu0 %v4394
      %v4777 = vpop.f32.mrb[0].mxu0
      %v4778 = vadd.f32 %v4509, %v4777
      %v4779 = vpop.f32.mrb[0].mxu0
      %v4780 = vpop.f32.mrb[0].mxu0
      %v4781 = vadd.f32 %v4509, %v4780
      %v4782 = vpop.f32.mrb[0].mxu0
      %4783 = vmatprep.mubr.bf16.mxu0 %v4399
      %4784 = vmatmul.mubr.bf16.gmra.mrb[0].mxu0 %v4398
      %v4785 = vpop.f32.mrb[0].mxu0
      %v4786 = vadd.f32 %v4509, %v4785
      %v4787 = vpop.f32.mrb[0].mxu0
      %v4788 = vpop.f32.mrb[0].mxu0
      %v4789 = vadd.f32 %v4509, %v4788
      %v4790 = vpop.f32.mrb[0].mxu0
      %4791 = vmatprep.mubr.bf16.mxu0 %v4403
      %4792 = vmatmul.mubr.bf16.gmra.mrb[0].mxu0 %v4402
      %v4793 = vpop.f32.mrb[0].mxu0
      %v4794 = vadd.f32 %v4509, %v4793
      %v4795 = vpop.f32.mrb[0].mxu0
      %v4796 = vpop.f32.mrb[0].mxu0
      %v4797 = vadd.f32 %v4509, %v4796
      %v4798 = vpop.f32.mrb[0].mxu0
      %4799 = vmatprep.mubr.bf16.mxu0 %v4407
      %4800 = vmatmul.mubr.bf16.gmra.mrb[0].mxu0 %v4406
      %v4801 = vpop.f32.mrb[0].mxu0
      %v4802 = vadd.f32 %v4509, %v4801
      %v4803 = vpop.f32.mrb[0].mxu0
      %v4804 = vpop.f32.mrb[0].mxu0
      %v4805 = vadd.f32 %v4509, %v4804
      %v4806 = vpop.f32.mrb[0].mxu0
      %4807 = vmatprep.mubr.bf16.mxu0 %v4411
      %4808 = vmatmul.mubr.bf16.gmra.mrb[0].mxu0 %v4410
      %v4809 = vpop.f32.mrb[0].mxu0
      %v4810 = vadd.f32 %v4509, %v4809
      %v4811 = vpop.f32.mrb[0].mxu0
      %v4812 = vpop.f32.mrb[0].mxu0
      %v4813 = vadd.f32 %v4509, %v4812
      %v4814 = vpop.f32.mrb[0].mxu0
      %4815 = vmatprep.mubr.bf16.mxu0 %v4415
      %4816 = vmatmul.mubr.bf16.gmra.mrb[0].mxu0 %v4414
      %v4817 = vpop.f32.mrb[0].mxu0
      %v4818 = vadd.f32 %v4509, %v4817
      %v4819 = vpop.f32.mrb[0].mxu0
      %v4820 = vpop.f32.mrb[0].mxu0
      %v4821 = vadd.f32 %v4509, %v4820
      %v4822 = vpop.f32.mrb[0].mxu0
      %4823 = vmatprep.mubr.bf16.mxu0 %v4419
      %4824 = vmatmul.mubr.bf16.gmra.mrb[0].mxu0 %v4418
      %v4825 = vpop.f32.mrb[0].mxu0
      %v4826 = vadd.f32 %v4509, %v4825
      %v4827 = vpop.f32.mrb[0].mxu0
      %v4828 = vpop.f32.mrb[0].mxu0
      %v4829 = vadd.f32 %v4509, %v4828
      %v4830 = vpop.f32.mrb[0].mxu0
      %4831 = vmatprep.mubr.bf16.mxu0 %v4423
      %4832 = vmatmul.mubr.bf16.gmra.mrb[0].mxu0 %v4422
      %v4833 = vpop.f32.mrb[0].mxu0
      %v4834 = vadd.f32 %v4509, %v4833
      %v4835 = vpop.f32.mrb[0].mxu0
      %v4836 = vpop.f32.mrb[0].mxu0
      %v4837 = vadd.f32 %v4509, %v4836
      %v4838 = vpop.f32.mrb[0].mxu0
      %4839 = vmatprep.mubr.bf16.mxu0 %v4427
      %4840 = vmatmul.mubr.bf16.gmra.mrb[0].mxu0 %v4426
      %v4841 = vpop.f32.mrb[0].mxu0
      %v4842 = vadd.f32 %v4509, %v4841
      %v4843 = vpop.f32.mrb[0].mxu0
      %v4844 = vpop.f32.mrb[0].mxu0
      %v4845 = vadd.f32 %v4509, %v4844
      %v4846 = vpop.f32.mrb[0].mxu0
      %4847 = vmatprep.mubr.bf16.mxu0 %v4431
      %4848 = vmatmul.mubr.bf16.gmra.mrb[0].mxu0 %v4430
      %v4849 = vpop.f32.mrb[0].mxu0
      %v4850 = vadd.f32 %v4509, %v4849
      %v4851 = vpop.f32.mrb[0].mxu0
      %v4852 = vpop.f32.mrb[0].mxu0
      %v4853 = vadd.f32 %v4509, %v4852
      %v4854 = vpop.f32.mrb[0].mxu0
      %4855 = vmatprep.mubr.bf16.mxu0 %v4435
      %4856 = vmatmul.mubr.bf16.gmra.mrb[0].mxu0 %v4434
      %v4857 = vpop.f32.mrb[0].mxu0
      %v4858 = vadd.f32 %v4509, %v4857
      %v4859 = vpop.f32.mrb[0].mxu0
      %v4860 = vpop.f32.mrb[0].mxu0
      %v4861 = vadd.f32 %v4509, %v4860
      %v4862 = vpop.f32.mrb[0].mxu0
      %4863 = vdwg.mxu0
      %4864 = vmatprep.subr.bf16.mxu0 0
      %4865 = vmatpush1.bf16.msra.mxu0 %v4655
      %4866 = vmatprep.subr.bf16.mxu0 0
      %4867 = vmatpush1.bf16.msra.mxu0 %v4656
      %4868 = vmatprep.subr.bf16.mxu0 0
      %4869 = vmatpush1.bf16.msra.mxu0 %v4657
      %4870 = vmatprep.subr.bf16.mxu0 0
      %4871 = vmatpush1.bf16.msra.mxu0 %v4658
      %4872 = vmatprep.subr.bf16.mxu0 0
      %4873 = vmatpush1.bf16.msra.mxu0 %v4659
      %4874 = vmatprep.subr.bf16.mxu0 0
      %4875 = vmatpush1.bf16.msra.mxu0 %v4660
      %4876 = vmatprep.subr.bf16.mxu0 0
      %4877 = vmatpush1.bf16.msra.mxu0 %v4661
      %4878 = vmatprep.subr.bf16.mxu0 0
      %4879 = vmatpush1.bf16.msra.mxu0 %v4662
      %4880 = vmatprep.subr.bf16.mxu0 0
      %4881 = vmatpush1.bf16.msra.mxu0 %v4663
      %4882 = vmatprep.subr.bf16.mxu0 0
      %4883 = vmatpush1.bf16.msra.mxu0 %v4664
      %4884 = vmatprep.subr.bf16.mxu0 0
      %4885 = vmatpush1.bf16.msra.mxu0 %v4665
      %4886 = vmatprep.subr.bf16.mxu0 0
      %4887 = vmatpush1.bf16.msra.mxu0 %v4666
      %4888 = vmatprep.subr.bf16.mxu0 0
      %4889 = vmatpush1.bf16.msra.mxu0 %v4667
      %4890 = vmatprep.subr.bf16.mxu0 0
      %4891 = vmatpush1.bf16.msra.mxu0 %v4668
      %4892 = vmatprep.subr.bf16.mxu0 0
      %4893 = vmatpush1.bf16.msra.mxu0 %v4669
      %4894 = vmatprep.subr.bf16.mxu0 0
      %4895 = vmatpush1.bf16.msra.mxu0 %v4670
      %4896 = vmatprep.mubr.bf16.mxu0 %v4377
      %4897 = vmatmul.mubr.bf16.gmra.mrb[0].mxu0 %v4376
      %v4898 = vpop.f32.mrb[0].mxu0
      %v4899 = vadd.f32 %v4738, %v4898
      %v4900 = vpop.f32.mrb[0].mxu0
      %v4901 = vpop.f32.mrb[0].mxu0
      %v4902 = vadd.f32 %v4741, %v4901
      %v4903 = vpop.f32.mrb[0].mxu0
      %4904 = vmatprep.mubr.bf16.mxu0 %v4381
      %4905 = vmatmul.mubr.bf16.gmra.mrb[0].mxu0 %v4380
      %v4906 = vpop.f32.mrb[0].mxu0
      %v4907 = vadd.f32 %v4746, %v4906
      %v4908 = vpop.f32.mrb[0].mxu0
      %v4909 = vpop.f32.mrb[0].mxu0
      %v4910 = vadd.f32 %v4749, %v4909
      %v4911 = vpop.f32.mrb[0].mxu0
      %4912 = vmatprep.mubr.bf16.mxu0 %v4385
      %4913 = vmatmul.mubr.bf16.gmra.mrb[0].mxu0 %v4384
      %v4914 = vpop.f32.mrb[0].mxu0
      %v4915 = vadd.f32 %v4754, %v4914
      %v4916 = vpop.f32.mrb[0].mxu0
      %v4917 = vpop.f32.mrb[0].mxu0
      %v4918 = vadd.f32 %v4757, %v4917
      %v4919 = vpop.f32.mrb[0].mxu0
      %4920 = vmatprep.mubr.bf16.mxu0 %v4389
      %4921 = vmatmul.mubr.bf16.gmra.mrb[0].mxu0 %v4388
      %v4922 = vpop.f32.mrb[0].mxu0
      %v4923 = vadd.f32 %v4762, %v4922
      %v4924 = vpop.f32.mrb[0].mxu0
      %v4925 = vpop.f32.mrb[0].mxu0
      %v4926 = vadd.f32 %v4765, %v4925
      %v4927 = vpop.f32.mrb[0].mxu0
      %4928 = vmatprep.mubr.bf16.mxu0 %v4393
      %4929 = vmatmul.mubr.bf16.gmra.mrb[0].mxu0 %v4392
      %v4930 = vpop.f32.mrb[0].mxu0
      %v4931 = vadd.f32 %v4770, %v4930
      %v4932 = vpop.f32.mrb[0].mxu0
      %v4933 = vpop.f32.mrb[0].mxu0
      %v4934 = vadd.f32 %v4773, %v4933
      %v4935 = vpop.f32.mrb[0].mxu0
      %4936 = vmatprep.mubr.bf16.mxu0 %v4397
      %4937 = vmatmul.mubr.bf16.gmra.mrb[0].mxu0 %v4396
      %v4938 = vpop.f32.mrb[0].mxu0
      %v4939 = vadd.f32 %v4778, %v4938
      %v4940 = vpop.f32.mrb[0].mxu0
      %v4941 = vpop.f32.mrb[0].mxu0
      %v4942 = vadd.f32 %v4781, %v4941
      %v4943 = vpop.f32.mrb[0].mxu0
      %4944 = vmatprep.mubr.bf16.mxu0 %v4401
      %4945 = vmatmul.mubr.bf16.gmra.mrb[0].mxu0 %v4400
      %v4946 = vpop.f32.mrb[0].mxu0
      %v4947 = vadd.f32 %v4786, %v4946
      %v4948 = vpop.f32.mrb[0].mxu0
      %v4949 = vpop.f32.mrb[0].mxu0
      %v4950 = vadd.f32 %v4789, %v4949
      %v4951 = vpop.f32.mrb[0].mxu0
      %4952 = vmatprep.mubr.bf16.mxu0 %v4405
      %4953 = vmatmul.mubr.bf16.gmra.mrb[0].mxu0 %v4404
      %v4954 = vpop.f32.mrb[0].mxu0
      %v4955 = vadd.f32 %v4794, %v4954
      %v4956 = vpop.f32.mrb[0].mxu0
      %v4957 = vpop.f32.mrb[0].mxu0
      %v4958 = vadd.f32 %v4797, %v4957
      %v4959 = vpop.f32.mrb[0].mxu0
      %4960 = vmatprep.mubr.bf16.mxu0 %v4409
      %4961 = vmatmul.mubr.bf16.gmra.mrb[0].mxu0 %v4408
      %v4962 = vpop.f32.mrb[0].mxu0
      %v4963 = vadd.f32 %v4802, %v4962
      %v4964 = vpop.f32.mrb[0].mxu0
      %v4965 = vpop.f32.mrb[0].mxu0
      %v4966 = vadd.f32 %v4805, %v4965
      %v4967 = vpop.f32.mrb[0].mxu0
      %4968 = vmatprep.mubr.bf16.mxu0 %v4413
      %4969 = vmatmul.mubr.bf16.gmra.mrb[0].mxu0 %v4412
      %v4970 = vpop.f32.mrb[0].mxu0
      %v4971 = vadd.f32 %v4810, %v4970
      %v4972 = vpop.f32.mrb[0].mxu0
      %v4973 = vpop.f32.mrb[0].mxu0
      %v4974 = vadd.f32 %v4813, %v4973
      %v4975 = vpop.f32.mrb[0].mxu0
      %4976 = vmatprep.mubr.bf16.mxu0 %v4417
      %4977 = vmatmul.mubr.bf16.gmra.mrb[0].mxu0 %v4416
      %v4978 = vpop.f32.mrb[0].mxu0
      %v4979 = vadd.f32 %v4818, %v4978
      %v4980 = vpop.f32.mrb[0].mxu0
      %v4981 = vpop.f32.mrb[0].mxu0
      %v4982 = vadd.f32 %v4821, %v4981
      %v4983 = vpop.f32.mrb[0].mxu0
      %4984 = vmatprep.mubr.bf16.mxu0 %v4421
      %4985 = vmatmul.mubr.bf16.gmra.mrb[0].mxu0 %v4420
      %v4986 = vpop.f32.mrb[0].mxu0
      %v4987 = vadd.f32 %v4826, %v4986
      %v4988 = vpop.f32.mrb[0].mxu0
      %v4989 = vpop.f32.mrb[0].mxu0
      %v4990 = vadd.f32 %v4829, %v4989
      %v4991 = vpop.f32.mrb[0].mxu0
      %4992 = vmatprep.mubr.bf16.mxu0 %v4425
      %4993 = vmatmul.mubr.bf16.gmra.mrb[0].mxu0 %v4424
      %v4994 = vpop.f32.mrb[0].mxu0
      %v4995 = vadd.f32 %v4834, %v4994
      %v4996 = vpop.f32.mrb[0].mxu0
      %v4997 = vpop.f32.mrb[0].mxu0
      %v4998 = vadd.f32 %v4837, %v4997
      %v4999 = vpop.f32.mrb[0].mxu0
      %5000 = vmatprep.mubr.bf16.mxu0 %v4429
      %5001 = vmatmul.mubr.bf16.gmra.mrb[0].mxu0 %v4428
      %v5002 = vpop.f32.mrb[0].mxu0
      %v5003 = vadd.f32 %v4842, %v5002
      %v5004 = vpop.f32.mrb[0].mxu0
      %v5005 = vpop.f32.mrb[0].mxu0
      %v5006 = vadd.f32 %v4845, %v5005
      %v5007 = vpop.f32.mrb[0].mxu0
      %5008 = vmatprep.mubr.bf16.mxu0 %v4433
      %5009 = vmatmul.mubr.bf16.gmra.mrb[0].mxu0 %v4432
      %v5010 = vpop.f32.mrb[0].mxu0
      %v5011 = vadd.f32 %v4850, %v5010
      %v5012 = vpop.f32.mrb[0].mxu0
      %v5013 = vpop.f32.mrb[0].mxu0
      %v5014 = vadd.f32 %v4853, %v5013
      %v5015 = vpop.f32.mrb[0].mxu0
      %5016 = vmatprep.mubr.bf16.mxu0 %v4437
      %5017 = vmatmul.mubr.bf16.gmra.mrb[0].mxu0 %v4436
      %v5018 = vpop.f32.mrb[0].mxu0
      %v5019 = vadd.f32 %v4858, %v5018
      %v5020 = vpop.f32.mrb[0].mxu0
      %v5021 = vpop.f32.mrb[0].mxu0
      %v5022 = vadd.f32 %v4861, %v5021
      %v5023 = vpop.f32.mrb[0].mxu0
      %5024 = vdwg.mxu0
      %v5025 = vpack.c.bf16 %v4902, %v4899
      %v5026 = vpack.c.bf16 %v4910, %v4907
      %v5027 = vpack.c.bf16 %v4918, %v4915
      %v5028 = vpack.c.bf16 %v4926, %v4923
      %v5029 = vpack.c.bf16 %v4934, %v4931
      %v5030 = vpack.c.bf16 %v4942, %v4939
      %v5031 = vpack.c.bf16 %v4950, %v4947
      %v5032 = vpack.c.bf16 %v4958, %v4955
      %v5033 = vpack.c.bf16 %v4966, %v4963
      %v5034 = vpack.c.bf16 %v4974, %v4971
      %v5035 = vpack.c.bf16 %v4982, %v4979
      %v5036 = vpack.c.bf16 %v4990, %v4987
      %v5037 = vpack.c.bf16 %v4998, %v4995
      %v5038 = vpack.c.bf16 %v5006, %v5003
      %v5039 = vpack.c.bf16 %v5014, %v5011
      %v5040 = vpack.c.bf16 %v5022, %v5019
      %5041 = vst [vmem:[#allocation2] sm:$0xff] %v5025
      %5042 = vst [vmem:[#allocation2 + $0x8] sm:$0xff] %v5026
      %5043 = vst [vmem:[#allocation2 + $0x10] sm:$0xff] %v5027
      %5044 = vst [vmem:[#allocation2 + $0x18] sm:$0xff] %v5028
      %5045 = vst [vmem:[#allocation2 + $0x20] sm:$0xff] %v5029
      %5046 = vst [vmem:[#allocation2 + $0x28] sm:$0xff] %v5030
      %5047 = vst [vmem:[#allocation2 + $0x30] sm:$0xff] %v5031
      %5048 = vst [vmem:[#allocation2 + $0x38] sm:$0xff] %v5032
      %5049 = vst [vmem:[#allocation2 + $0x40] sm:$0xff] %v5033
      %5050 = vst [vmem:[#allocation2 + $0x48] sm:$0xff] %v5034
      %5051 = vst [vmem:[#allocation2 + $0x50] sm:$0xff] %v5035
      %5052 = vst [vmem:[#allocation2 + $0x58] sm:$0xff] %v5036
      %5053 = vst [vmem:[#allocation2 + $0x60] sm:$0xff] %v5037
      %5054 = vst [vmem:[#allocation2 + $0x68] sm:$0xff] %v5038
      %5055 = vst [vmem:[#allocation2 + $0x70] sm:$0xff] %v5039
      %5056 = vst [vmem:[#allocation2 + $0x78] sm:$0xff] %v5040
      %v5057 = vld [vmem:[#allocation2] sm:$0xff]
      %v5058 = vld [vmem:[#allocation2 + $0x8] sm:$0xff]
      %v5059 = vld [vmem:[#allocation2 + $0x10] sm:$0xff]
      %v5060 = vld [vmem:[#allocation2 + $0x18] sm:$0xff]
      %v5061 = vld [vmem:[#allocation2 + $0x20] sm:$0xff]
      %v5062 = vld [vmem:[#allocation2 + $0x28] sm:$0xff]
      %v5063 = vld [vmem:[#allocation2 + $0x30] sm:$0xff]
      %v5064 = vld [vmem:[#allocation2 + $0x38] sm:$0xff]
      %v5065 = vld [vmem:[#allocation2 + $0x40] sm:$0xff]
      %v5066 = vld [vmem:[#allocation2 + $0x48] sm:$0xff]
      %v5067 = vld [vmem:[#allocation2 + $0x50] sm:$0xff]
      %v5068 = vld [vmem:[#allocation2 + $0x58] sm:$0xff]
      %v5069 = vld [vmem:[#allocation2 + $0x60] sm:$0xff]
      %v5070 = vld [vmem:[#allocation2 + $0x68] sm:$0xff]
      %v5071 = vld [vmem:[#allocation2 + $0x70] sm:$0xff]
      %v5072 = vld [vmem:[#allocation2 + $0x78] sm:$0xff]
      %5073 = vst [vmem:[#allocation4] sm:$0xff] %v5057
      %5074 = vst [vmem:[#allocation4 + $0x20] sm:$0xff] %v5058
      %5075 = vst [vmem:[#allocation4 + $0x40] sm:$0xff] %v5059
      %5076 = vst [vmem:[#allocation4 + $0x60] sm:$0xff] %v5060
      %5077 = vst [vmem:[#allocation4 + $0x80] sm:$0xff] %v5061
      %5078 = vst [vmem:[#allocation4 + $0xa0] sm:$0xff] %v5062
      %5079 = vst [vmem:[#allocation4 + $0xc0] sm:$0xff] %v5063
      %5080 = vst [vmem:[#allocation4 + $0xe0] sm:$0xff] %v5064
      %5081 = vst [vmem:[#allocation4 + $0x100] sm:$0xff] %v5065
      %5082 = vst [vmem:[#allocation4 + $0x120] sm:$0xff] %v5066
      %5083 = vst [vmem:[#allocation4 + $0x140] sm:$0xff] %v5067
      %5084 = vst [vmem:[#allocation4 + $0x160] sm:$0xff] %v5068
      %5085 = vst [vmem:[#allocation4 + $0x180] sm:$0xff] %v5069
      %5086 = vst [vmem:[#allocation4 + $0x1a0] sm:$0xff] %v5070
      %5087 = vst [vmem:[#allocation4 + $0x1c0] sm:$0xff] %v5071
      %5088 = vst [vmem:[#allocation4 + $0x1e0] sm:$0xff] %v5072
      %v5089 = vld [vmem:[#allocation2] sm:$0xff]
      %v5090 = vld [vmem:[#allocation2 + $0x8] sm:$0xff]
      %v5091 = vld [vmem:[#allocation2 + $0x10] sm:$0xff]
      %v5092 = vld [vmem:[#allocation2 + $0x18] sm:$0xff]
      %v5093 = vld [vmem:[#allocation2 + $0x20] sm:$0xff]
      %v5094 = vld [vmem:[#allocation2 + $0x28] sm:$0xff]
      %v5095 = vld [vmem:[#allocation2 + $0x30] sm:$0xff]
      %v5096 = vld [vmem:[#allocation2 + $0x38] sm:$0xff]
      %v5097 = vld [vmem:[#allocation2 + $0x40] sm:$0xff]
      %v5098 = vld [vmem:[#allocation2 + $0x48] sm:$0xff]
      %v5099 = vld [vmem:[#allocation2 + $0x50] sm:$0xff]
      %v5100 = vld [vmem:[#allocation2 + $0x58] sm:$0xff]
      %v5101 = vld [vmem:[#allocation2 + $0x60] sm:$0xff]
      %v5102 = vld [vmem:[#allocation2 + $0x68] sm:$0xff]
      %v5103 = vld [vmem:[#allocation2 + $0x70] sm:$0xff]
      %v5104 = vld [vmem:[#allocation2 + $0x78] sm:$0xff]
      %v5105 = vld [vmem:[#allocation2 + $0x80] sm:$0x1]
      %v5107 = vshrl.u32 %v5089, 16
      %v5109 = vshll.u32 %v5089, 16
      %v5111 = vrot.slane %v5109, 1
      %v5112 = vor.u32 %v5107, %v5111
      %v5114 = vshll.u32 %v5090, 16
      %v5116 = vrot.slane %v5114, 1
      %v5117 = vsel %vm671, %v5112, %v5116
      %v5118 = vshrl.u32 %v5090, 16
      %v5120 = vor.u32 %v5118, %v5116
      %v5122 = vshll.u32 %v5091, 16
      %v5124 = vrot.slane %v5122, 1
      %v5125 = vsel %vm671, %v5120, %v5124
      %v5126 = vshrl.u32 %v5091, 16
      %v5128 = vor.u32 %v5126, %v5124
      %v5130 = vshll.u32 %v5092, 16
      %v5132 = vrot.slane %v5130, 1
      %v5133 = vsel %vm671, %v5128, %v5132
      %v5134 = vshrl.u32 %v5092, 16
      %v5136 = vor.u32 %v5134, %v5132
      %v5138 = vshll.u32 %v5093, 16
      %v5140 = vrot.slane %v5138, 1
      %v5141 = vsel %vm671, %v5136, %v5140
      %v5142 = vshrl.u32 %v5093, 16
      %v5144 = vor.u32 %v5142, %v5140
      %v5146 = vshll.u32 %v5094, 16
      %v5148 = vrot.slane %v5146, 1
      %v5149 = vsel %vm671, %v5144, %v5148
      %v5150 = vshrl.u32 %v5094, 16
      %v5152 = vor.u32 %v5150, %v5148
      %v5154 = vshll.u32 %v5095, 16
      %v5156 = vrot.slane %v5154, 1
      %v5157 = vsel %vm671, %v5152, %v5156
      %v5158 = vshrl.u32 %v5095, 16
      %v5160 = vor.u32 %v5158, %v5156
      %v5162 = vshll.u32 %v5096, 16
      %v5164 = vrot.slane %v5162, 1
      %v5165 = vsel %vm671, %v5160, %v5164
      %v5166 = vshrl.u32 %v5096, 16
      %v5168 = vor.u32 %v5166, %v5164
      %v5170 = vshll.u32 %v5097, 16
      %v5172 = vrot.slane %v5170, 1
      %v5173 = vsel %vm671, %v5168, %v5172
      %v5174 = vshrl.u32 %v5097, 16
      %v5176 = vor.u32 %v5174, %v5172
      %v5178 = vshll.u32 %v5098, 16
      %v5180 = vrot.slane %v5178, 1
      %v5181 = vsel %vm671, %v5176, %v5180
      %v5182 = vshrl.u32 %v5098, 16
      %v5184 = vor.u32 %v5182, %v5180
      %v5186 = vshll.u32 %v5099, 16
      %v5188 = vrot.slane %v5186, 1
      %v5189 = vsel %vm671, %v5184, %v5188
      %v5190 = vshrl.u32 %v5099, 16
      %v5192 = vor.u32 %v5190, %v5188
      %v5194 = vshll.u32 %v5100, 16
      %v5196 = vrot.slane %v5194, 1
      %v5197 = vsel %vm671, %v5192, %v5196
      %v5198 = vshrl.u32 %v5100, 16
      %v5200 = vor.u32 %v5198, %v5196
      %v5202 = vshll.u32 %v5101, 16
      %v5204 = vrot.slane %v5202, 1
      %v5205 = vsel %vm671, %v5200, %v5204
      %v5206 = vshrl.u32 %v5101, 16
      %v5208 = vor.u32 %v5206, %v5204
      %v5210 = vshll.u32 %v5102, 16
      %v5212 = vrot.slane %v5210, 1
      %v5213 = vsel %vm671, %v5208, %v5212
      %v5214 = vshrl.u32 %v5102, 16
      %v5216 = vor.u32 %v5214, %v5212
      %v5218 = vshll.u32 %v5103, 16
      %v5220 = vrot.slane %v5218, 1
      %v5221 = vsel %vm671, %v5216, %v5220
      %v5222 = vshrl.u32 %v5103, 16
      %v5224 = vor.u32 %v5222, %v5220
      %v5226 = vshll.u32 %v5104, 16
      %v5228 = vrot.slane %v5226, 1
      %v5229 = vsel %vm671, %v5224, %v5228
      %v5230 = vshrl.u32 %v5104, 16
      %v5232 = vor.u32 %v5230, %v5228
      %v5234 = vshll.u32 %v5105, 16
      %v5236 = vrot.slane %v5234, 1
      %v5237 = vsel %vm671, %v5232, %v5236
      %5254 = vst [vmem:[#allocation4 + $0x8] sm:$0xff] %v5117
      %5255 = vst [vmem:[#allocation4 + $0x28] sm:$0xff] %v5125
      %5256 = vst [vmem:[#allocation4 + $0x48] sm:$0xff] %v5133
      %5257 = vst [vmem:[#allocation4 + $0x68] sm:$0xff] %v5141
      %5258 = vst [vmem:[#allocation4 + $0x88] sm:$0xff] %v5149
      %5259 = vst [vmem:[#allocation4 + $0xa8] sm:$0xff] %v5157
      %5260 = vst [vmem:[#allocation4 + $0xc8] sm:$0xff] %v5165
      %5261 = vst [vmem:[#allocation4 + $0xe8] sm:$0xff] %v5173
      %5262 = vst [vmem:[#allocation4 + $0x108] sm:$0xff] %v5181
      %5263 = vst [vmem:[#allocation4 + $0x128] sm:$0xff] %v5189
      %5264 = vst [vmem:[#allocation4 + $0x148] sm:$0xff] %v5197
      %5265 = vst [vmem:[#allocation4 + $0x168] sm:$0xff] %v5205
      %5266 = vst [vmem:[#allocation4 + $0x188] sm:$0xff] %v5213
      %5267 = vst [vmem:[#allocation4 + $0x1a8] sm:$0xff] %v5221
      %5268 = vst [vmem:[#allocation4 + $0x1c8] sm:$0xff] %v5229
      %5269 = vst [vmem:[#allocation4 + $0x1e8] sm:$0xff] %v5237
      %v5270 = vld [vmem:[#allocation2 + $0x8] sm:$0xff]
      %v5271 = vld [vmem:[#allocation2 + $0x10] sm:$0xff]
      %v5272 = vld [vmem:[#allocation2 + $0x18] sm:$0xff]
      %v5273 = vld [vmem:[#allocation2 + $0x20] sm:$0xff]
      %v5274 = vld [vmem:[#allocation2 + $0x28] sm:$0xff]
      %v5275 = vld [vmem:[#allocation2 + $0x30] sm:$0xff]
      %v5276 = vld [vmem:[#allocation2 + $0x38] sm:$0xff]
      %v5277 = vld [vmem:[#allocation2 + $0x40] sm:$0xff]
      %v5278 = vld [vmem:[#allocation2 + $0x48] sm:$0xff]
      %v5279 = vld [vmem:[#allocation2 + $0x50] sm:$0xff]
      %v5280 = vld [vmem:[#allocation2 + $0x58] sm:$0xff]
      %v5281 = vld [vmem:[#allocation2 + $0x60] sm:$0xff]
      %v5282 = vld [vmem:[#allocation2 + $0x68] sm:$0xff]
      %v5283 = vld [vmem:[#allocation2 + $0x70] sm:$0xff]
      %v5284 = vld [vmem:[#allocation2 + $0x78] sm:$0xff]
      %v5285 = vld [vmem:[#allocation2 + $0x80] sm:$0xff]
      %5286 = vst [vmem:[#allocation4 + $0x10] sm:$0xff] %v5270
      %5287 = vst [vmem:[#allocation4 + $0x30] sm:$0xff] %v5271
      %5288 = vst [vmem:[#allocation4 + $0x50] sm:$0xff] %v5272
      %5289 = vst [vmem:[#allocation4 + $0x70] sm:$0xff] %v5273
      %5290 = vst [vmem:[#allocation4 + $0x90] sm:$0xff] %v5274
      %5291 = vst [vmem:[#allocation4 + $0xb0] sm:$0xff] %v5275
      %5292 = vst [vmem:[#allocation4 + $0xd0] sm:$0xff] %v5276
      %5293 = vst [vmem:[#allocation4 + $0xf0] sm:$0xff] %v5277
      %5294 = vst [vmem:[#allocation4 + $0x110] sm:$0xff] %v5278
      %5295 = vst [vmem:[#allocation4 + $0x130] sm:$0xff] %v5279
      %5296 = vst [vmem:[#allocation4 + $0x150] sm:$0xff] %v5280
      %5297 = vst [vmem:[#allocation4 + $0x170] sm:$0xff] %v5281
      %5298 = vst [vmem:[#allocation4 + $0x190] sm:$0xff] %v5282
      %5299 = vst [vmem:[#allocation4 + $0x1b0] sm:$0xff] %v5283
      %5300 = vst [vmem:[#allocation4 + $0x1d0] sm:$0xff] %v5284
      %5301 = vst [vmem:[#allocation4 + $0x1f0] sm:$0xff] %v5285
      %v5302 = vld [vmem:[#allocation2 + $0x8] sm:$0xff]
      %v5303 = vld [vmem:[#allocation2 + $0x10] sm:$0xff]
      %v5304 = vld [vmem:[#allocation2 + $0x18] sm:$0xff]
      %v5305 = vld [vmem:[#allocation2 + $0x20] sm:$0xff]
      %v5306 = vld [vmem:[#allocation2 + $0x28] sm:$0xff]
      %v5307 = vld [vmem:[#allocation2 + $0x30] sm:$0xff]
      %v5308 = vld [vmem:[#allocation2 + $0x38] sm:$0xff]
      %v5309 = vld [vmem:[#allocation2 + $0x40] sm:$0xff]
      %v5310 = vld [vmem:[#allocation2 + $0x48] sm:$0xff]
      %v5311 = vld [vmem:[#allocation2 + $0x50] sm:$0xff]
      %v5312 = vld [vmem:[#allocation2 + $0x58] sm:$0xff]
      %v5313 = vld [vmem:[#allocation2 + $0x60] sm:$0xff]
      %v5314 = vld [vmem:[#allocation2 + $0x68] sm:$0xff]
      %v5315 = vld [vmem:[#allocation2 + $0x70] sm:$0xff]
      %v5316 = vld [vmem:[#allocation2 + $0x78] sm:$0xff]
      %v5317 = vld [vmem:[#allocation2 + $0x80] sm:$0xff]
      %v5318 = vld [vmem:[#allocation2 + $0x88] sm:$0x1]
      %v5320 = vshrl.u32 %v5302, 16
      %v5322 = vshll.u32 %v5302, 16
      %v5324 = vrot.slane %v5322, 1
      %v5325 = vor.u32 %v5320, %v5324
      %v5327 = vshll.u32 %v5303, 16
      %v5329 = vrot.slane %v5327, 1
      %v5330 = vsel %vm671, %v5325, %v5329
      %v5331 = vshrl.u32 %v5303, 16
      %v5333 = vor.u32 %v5331, %v5329
      %v5335 = vshll.u32 %v5304, 16
      %v5337 = vrot.slane %v5335, 1
      %v5338 = vsel %vm671, %v5333, %v5337
      %v5339 = vshrl.u32 %v5304, 16
      %v5341 = vor.u32 %v5339, %v5337
      %v5343 = vshll.u32 %v5305, 16
      %v5345 = vrot.slane %v5343, 1
      %v5346 = vsel %vm671, %v5341, %v5345
      %v5347 = vshrl.u32 %v5305, 16
      %v5349 = vor.u32 %v5347, %v5345
      %v5351 = vshll.u32 %v5306, 16
      %v5353 = vrot.slane %v5351, 1
      %v5354 = vsel %vm671, %v5349, %v5353
      %v5355 = vshrl.u32 %v5306, 16
      %v5357 = vor.u32 %v5355, %v5353
      %v5359 = vshll.u32 %v5307, 16
      %v5361 = vrot.slane %v5359, 1
      %v5362 = vsel %vm671, %v5357, %v5361
      %v5363 = vshrl.u32 %v5307, 16
      %v5365 = vor.u32 %v5363, %v5361
      %v5367 = vshll.u32 %v5308, 16
      %v5369 = vrot.slane %v5367, 1
      %v5370 = vsel %vm671, %v5365, %v5369
      %v5371 = vshrl.u32 %v5308, 16
      %v5373 = vor.u32 %v5371, %v5369
      %v5375 = vshll.u32 %v5309, 16
      %v5377 = vrot.slane %v5375, 1
      %v5378 = vsel %vm671, %v5373, %v5377
      %v5379 = vshrl.u32 %v5309, 16
      %v5381 = vor.u32 %v5379, %v5377
      %v5383 = vshll.u32 %v5310, 16
      %v5385 = vrot.slane %v5383, 1
      %v5386 = vsel %vm671, %v5381, %v5385
      %v5387 = vshrl.u32 %v5310, 16
      %v5389 = vor.u32 %v5387, %v5385
      %v5391 = vshll.u32 %v5311, 16
      %v5393 = vrot.slane %v5391, 1
      %v5394 = vsel %vm671, %v5389, %v5393
      %v5395 = vshrl.u32 %v5311, 16
      %v5397 = vor.u32 %v5395, %v5393
      %v5399 = vshll.u32 %v5312, 16
      %v5401 = vrot.slane %v5399, 1
      %v5402 = vsel %vm671, %v5397, %v5401
      %v5403 = vshrl.u32 %v5312, 16
      %v5405 = vor.u32 %v5403, %v5401
      %v5407 = vshll.u32 %v5313, 16
      %v5409 = vrot.slane %v5407, 1
      %v5410 = vsel %vm671, %v5405, %v5409
      %v5411 = vshrl.u32 %v5313, 16
      %v5413 = vor.u32 %v5411, %v5409
      %v5415 = vshll.u32 %v5314, 16
      %v5417 = vrot.slane %v5415, 1
      %v5418 = vsel %vm671, %v5413, %v5417
      %v5419 = vshrl.u32 %v5314, 16
      %v5421 = vor.u32 %v5419, %v5417
      %v5423 = vshll.u32 %v5315, 16
      %v5425 = vrot.slane %v5423, 1
      %v5426 = vsel %vm671, %v5421, %v5425
      %v5427 = vshrl.u32 %v5315, 16
      %v5429 = vor.u32 %v5427, %v5425
      %v5431 = vshll.u32 %v5316, 16
      %v5433 = vrot.slane %v5431, 1
      %v5434 = vsel %vm671, %v5429, %v5433
      %v5435 = vshrl.u32 %v5316, 16
      %v5437 = vor.u32 %v5435, %v5433
      %v5439 = vshll.u32 %v5317, 16
      %v5441 = vrot.slane %v5439, 1
      %v5442 = vsel %vm671, %v5437, %v5441
      %v5443 = vshrl.u32 %v5317, 16
      %v5445 = vor.u32 %v5443, %v5441
      %v5447 = vshll.u32 %v5318, 16
      %v5449 = vrot.slane %v5447, 1
      %v5450 = vsel %vm671, %v5445, %v5449
      %5467 = vst [vmem:[#allocation4 + $0x18] sm:$0xff] %v5330
      %5468 = vst [vmem:[#allocation4 + $0x38] sm:$0xff] %v5338
      %5469 = vst [vmem:[#allocation4 + $0x58] sm:$0xff] %v5346
      %5470 = vst [vmem:[#allocation4 + $0x78] sm:$0xff] %v5354
      %5471 = vst [vmem:[#allocation4 + $0x98] sm:$0xff] %v5362
      %5472 = vst [vmem:[#allocation4 + $0xb8] sm:$0xff] %v5370
      %5473 = vst [vmem:[#allocation4 + $0xd8] sm:$0xff] %v5378
      %5474 = vst [vmem:[#allocation4 + $0xf8] sm:$0xff] %v5386
      %5475 = vst [vmem:[#allocation4 + $0x118] sm:$0xff] %v5394
      %5476 = vst [vmem:[#allocation4 + $0x138] sm:$0xff] %v5402
      %5477 = vst [vmem:[#allocation4 + $0x158] sm:$0xff] %v5410
      %5478 = vst [vmem:[#allocation4 + $0x178] sm:$0xff] %v5418
      %5479 = vst [vmem:[#allocation4 + $0x198] sm:$0xff] %v5426
      %5480 = vst [vmem:[#allocation4 + $0x1b8] sm:$0xff] %v5434
      %5481 = vst [vmem:[#allocation4 + $0x1d8] sm:$0xff] %v5442
      %5482 = vst [vmem:[#allocation4 + $0x1f8] sm:$0xff] %v5450
      %v5483 = vld [vmem:[#allocation4] sm:$0xff]
      %v5484 = vld [vmem:[#allocation4 + $0x8] sm:$0xff]
      %v5485 = vld [vmem:[#allocation4 + $0x10] sm:$0xff]
      %v5486 = vld [vmem:[#allocation4 + $0x18] sm:$0xff]
      %v5487 = vld [vmem:[#allocation4 + $0x20] sm:$0xff]
      %v5488 = vld [vmem:[#allocation4 + $0x28] sm:$0xff]
      %v5489 = vld [vmem:[#allocation4 + $0x30] sm:$0xff]
      %v5490 = vld [vmem:[#allocation4 + $0x38] sm:$0xff]
      %v5491 = vld [vmem:[#allocation4 + $0x40] sm:$0xff]
      %v5492 = vld [vmem:[#allocation4 + $0x48] sm:$0xff]
      %v5493 = vld [vmem:[#allocation4 + $0x50] sm:$0xff]
      %v5494 = vld [vmem:[#allocation4 + $0x58] sm:$0xff]
      %v5495 = vld [vmem:[#allocation4 + $0x60] sm:$0xff]
      %v5496 = vld [vmem:[#allocation4 + $0x68] sm:$0xff]
      %v5497 = vld [vmem:[#allocation4 + $0x70] sm:$0xff]
      %v5498 = vld [vmem:[#allocation4 + $0x78] sm:$0xff]
      %v5499 = vld [vmem:[#allocation4 + $0x80] sm:$0xff]
      %v5500 = vld [vmem:[#allocation4 + $0x88] sm:$0xff]
      %v5501 = vld [vmem:[#allocation4 + $0x90] sm:$0xff]
      %v5502 = vld [vmem:[#allocation4 + $0x98] sm:$0xff]
      %v5503 = vld [vmem:[#allocation4 + $0xa0] sm:$0xff]
      %v5504 = vld [vmem:[#allocation4 + $0xa8] sm:$0xff]
      %v5505 = vld [vmem:[#allocation4 + $0xb0] sm:$0xff]
      %v5506 = vld [vmem:[#allocation4 + $0xb8] sm:$0xff]
      %v5507 = vld [vmem:[#allocation4 + $0xc0] sm:$0xff]
      %v5508 = vld [vmem:[#allocation4 + $0xc8] sm:$0xff]
      %v5509 = vld [vmem:[#allocation4 + $0xd0] sm:$0xff]
      %v5510 = vld [vmem:[#allocation4 + $0xd8] sm:$0xff]
      %v5511 = vld [vmem:[#allocation4 + $0xe0] sm:$0xff]
      %v5512 = vld [vmem:[#allocation4 + $0xe8] sm:$0xff]
      %v5513 = vld [vmem:[#allocation4 + $0xf0] sm:$0xff]
      %v5514 = vld [vmem:[#allocation4 + $0xf8] sm:$0xff]
      %v5515 = vld [vmem:[#allocation4 + $0x100] sm:$0xff]
      %v5516 = vld [vmem:[#allocation4 + $0x108] sm:$0xff]
      %v5517 = vld [vmem:[#allocation4 + $0x110] sm:$0xff]
      %v5518 = vld [vmem:[#allocation4 + $0x118] sm:$0xff]
      %v5519 = vld [vmem:[#allocation4 + $0x120] sm:$0xff]
      %v5520 = vld [vmem:[#allocation4 + $0x128] sm:$0xff]
      %v5521 = vld [vmem:[#allocation4 + $0x130] sm:$0xff]
      %v5522 = vld [vmem:[#allocation4 + $0x138] sm:$0xff]
      %v5523 = vld [vmem:[#allocation4 + $0x140] sm:$0xff]
      %v5524 = vld [vmem:[#allocation4 + $0x148] sm:$0xff]
      %v5525 = vld [vmem:[#allocation4 + $0x150] sm:$0xff]
      %v5526 = vld [vmem:[#allocation4 + $0x158] sm:$0xff]
      %v5527 = vld [vmem:[#allocation4 + $0x160] sm:$0xff]
      %v5528 = vld [vmem:[#allocation4 + $0x168] sm:$0xff]
      %v5529 = vld [vmem:[#allocation4 + $0x170] sm:$0xff]
      %v5530 = vld [vmem:[#allocation4 + $0x178] sm:$0xff]
      %v5531 = vld [vmem:[#allocation4 + $0x180] sm:$0xff]
      %v5532 = vld [vmem:[#allocation4 + $0x188] sm:$0xff]
      %v5533 = vld [vmem:[#allocation4 + $0x190] sm:$0xff]
      %v5534 = vld [vmem:[#allocation4 + $0x198] sm:$0xff]
      %v5535 = vld [vmem:[#allocation4 + $0x1a0] sm:$0xff]
      %v5536 = vld [vmem:[#allocation4 + $0x1a8] sm:$0xff]
      %v5537 = vld [vmem:[#allocation4 + $0x1b0] sm:$0xff]
      %v5538 = vld [vmem:[#allocation4 + $0x1b8] sm:$0xff]
      %v5539 = vld [vmem:[#allocation4 + $0x1c0] sm:$0xff]
      %v5540 = vld [vmem:[#allocation4 + $0x1c8] sm:$0xff]
      %v5541 = vld [vmem:[#allocation4 + $0x1d0] sm:$0xff]
      %v5542 = vld [vmem:[#allocation4 + $0x1d8] sm:$0xff]
      %v5543 = vld [vmem:[#allocation4 + $0x1e0] sm:$0xff]
      %v5544 = vld [vmem:[#allocation4 + $0x1e8] sm:$0xff]
      %v5545 = vld [vmem:[#allocation4 + $0x1f0] sm:$0xff]
      %v5546 = vld [vmem:[#allocation4 + $0x1f8] sm:$0xff]
      %s5547 = scalar_lea.vmem %s3, 1024
      %v5548 = vld [vmem:[%s5547] sm:$0xf]
      %v5549 = vld [vmem:[%s5547 + $0x4] sm:$0xf]
      %v5550 = vld [vmem:[%s5547 + $0x8] sm:$0xf]
      %v5551 = vld [vmem:[%s5547 + $0xc] sm:$0xf]
      %v5552 = vld [vmem:[%s5547 + $0x10] sm:$0xf]
      %v5553 = vld [vmem:[%s5547 + $0x14] sm:$0xf]
      %v5554 = vld [vmem:[%s5547 + $0x18] sm:$0xf]
      %v5555 = vld [vmem:[%s5547 + $0x1c] sm:$0xf]
      %v5556 = vld [vmem:[%s5547 + $0x20] sm:$0xf]
      %v5557 = vld [vmem:[%s5547 + $0x24] sm:$0xf]
      %v5558 = vld [vmem:[%s5547 + $0x28] sm:$0xf]
      %v5559 = vld [vmem:[%s5547 + $0x2c] sm:$0xf]
      %v5560 = vld [vmem:[%s5547 + $0x30] sm:$0xf]
      %v5561 = vld [vmem:[%s5547 + $0x34] sm:$0xf]
      %v5562 = vld [vmem:[%s5547 + $0x38] sm:$0xf]
      %v5563 = vld [vmem:[%s5547 + $0x3c] sm:$0xf]
      %v5564 = vld [vmem:[%s5547 + $0x40] sm:$0xf]
      %v5565 = vld [vmem:[%s5547 + $0x44] sm:$0xf]
      %v5566 = vld [vmem:[%s5547 + $0x48] sm:$0xf]
      %v5567 = vld [vmem:[%s5547 + $0x4c] sm:$0xf]
      %v5568 = vld [vmem:[%s5547 + $0x50] sm:$0xf]
      %v5569 = vld [vmem:[%s5547 + $0x54] sm:$0xf]
      %v5570 = vld [vmem:[%s5547 + $0x58] sm:$0xf]
      %v5571 = vld [vmem:[%s5547 + $0x5c] sm:$0xf]
      %v5572 = vld [vmem:[%s5547 + $0x60] sm:$0xf]
      %v5573 = vld [vmem:[%s5547 + $0x64] sm:$0xf]
      %v5574 = vld [vmem:[%s5547 + $0x68] sm:$0xf]
      %v5575 = vld [vmem:[%s5547 + $0x6c] sm:$0xf]
      %v5576 = vld [vmem:[%s5547 + $0x70] sm:$0xf]
      %v5577 = vld [vmem:[%s5547 + $0x74] sm:$0xf]
      %v5578 = vld [vmem:[%s5547 + $0x78] sm:$0xf]
      %v5579 = vld [vmem:[%s5547 + $0x7c] sm:$0xf]
      %v5580 = vld [vmem:[%s5547 + $0x80] sm:$0xf]
      %v5581 = vld [vmem:[%s5547 + $0x84] sm:$0xf]
      %v5582 = vld [vmem:[%s5547 + $0x88] sm:$0xf]
      %v5583 = vld [vmem:[%s5547 + $0x8c] sm:$0xf]
      %v5584 = vld [vmem:[%s5547 + $0x90] sm:$0xf]
      %v5585 = vld [vmem:[%s5547 + $0x94] sm:$0xf]
      %v5586 = vld [vmem:[%s5547 + $0x98] sm:$0xf]
      %v5587 = vld [vmem:[%s5547 + $0x9c] sm:$0xf]
      %v5588 = vld [vmem:[%s5547 + $0xa0] sm:$0xf]
      %v5589 = vld [vmem:[%s5547 + $0xa4] sm:$0xf]
      %v5590 = vld [vmem:[%s5547 + $0xa8] sm:$0xf]
      %v5591 = vld [vmem:[%s5547 + $0xac] sm:$0xf]
      %v5592 = vld [vmem:[%s5547 + $0xb0] sm:$0xf]
      %v5593 = vld [vmem:[%s5547 + $0xb4] sm:$0xf]
      %v5594 = vld [vmem:[%s5547 + $0xb8] sm:$0xf]
      %v5595 = vld [vmem:[%s5547 + $0xbc] sm:$0xf]
      %v5596 = vld [vmem:[%s5547 + $0xc0] sm:$0xf]
      %v5597 = vld [vmem:[%s5547 + $0xc4] sm:$0xf]
      %v5598 = vld [vmem:[%s5547 + $0xc8] sm:$0xf]
      %v5599 = vld [vmem:[%s5547 + $0xcc] sm:$0xf]
      %v5600 = vld [vmem:[%s5547 + $0xd0] sm:$0xf]
      %v5601 = vld [vmem:[%s5547 + $0xd4] sm:$0xf]
      %v5602 = vld [vmem:[%s5547 + $0xd8] sm:$0xf]
      %v5603 = vld [vmem:[%s5547 + $0xdc] sm:$0xf]
      %v5604 = vld [vmem:[%s5547 + $0xe0] sm:$0xf]
      %v5605 = vld [vmem:[%s5547 + $0xe4] sm:$0xf]
      %v5606 = vld [vmem:[%s5547 + $0xe8] sm:$0xf]
      %v5607 = vld [vmem:[%s5547 + $0xec] sm:$0xf]
      %v5608 = vld [vmem:[%s5547 + $0xf0] sm:$0xf]
      %v5609 = vld [vmem:[%s5547 + $0xf4] sm:$0xf]
      %v5610 = vld [vmem:[%s5547 + $0xf8] sm:$0xf]
      %v5611 = vld [vmem:[%s5547 + $0xfc] sm:$0xf]
      %s5612 = scalar_lea.vmem %s4, 4
      %v5613 = vld [vmem:[%s5612] sm:$0x1]
      %v5615 = vlaneseq
      %v5616 = vshrl.u32 %v5615, 7
      %v5617 = vsub.s32 0, %v5616
      %v5618 = vrot.slane %v5613, %v5617
      %v5684 = vunpack.c.l.b16 %v5548
      %v5685 = vunpack.c.l.b16 %v5549
      %v5686 = vunpack.c.l.b16 %v5550
      %v5687 = vunpack.c.l.b16 %v5551
      %v5688 = vunpack.c.l.b16 %v5552
      %v5689 = vunpack.c.l.b16 %v5553
      %v5690 = vunpack.c.l.b16 %v5554
      %v5691 = vunpack.c.l.b16 %v5555
      %v5692 = vunpack.c.l.b16 %v5556
      %v5693 = vunpack.c.l.b16 %v5557
      %v5694 = vunpack.c.l.b16 %v5558
      %v5695 = vunpack.c.l.b16 %v5559
      %v5696 = vunpack.c.l.b16 %v5560
      %v5697 = vunpack.c.l.b16 %v5561
      %v5698 = vunpack.c.l.b16 %v5562
      %v5699 = vunpack.c.l.b16 %v5563
      %v5700 = vunpack.c.l.b16 %v5564
      %v5701 = vunpack.c.l.b16 %v5565
      %v5702 = vunpack.c.l.b16 %v5566
      %v5703 = vunpack.c.l.b16 %v5567
      %v5704 = vunpack.c.l.b16 %v5568
      %v5705 = vunpack.c.l.b16 %v5569
      %v5706 = vunpack.c.l.b16 %v5570
      %v5707 = vunpack.c.l.b16 %v5571
      %v5708 = vunpack.c.l.b16 %v5572
      %v5709 = vunpack.c.l.b16 %v5573
      %v5710 = vunpack.c.l.b16 %v5574
      %v5711 = vunpack.c.l.b16 %v5575
      %v5712 = vunpack.c.l.b16 %v5576
      %v5713 = vunpack.c.l.b16 %v5577
      %v5714 = vunpack.c.l.b16 %v5578
      %v5715 = vunpack.c.l.b16 %v5579
      %v5716 = vunpack.c.l.b16 %v5580
      %v5717 = vunpack.c.l.b16 %v5581
      %v5718 = vunpack.c.l.b16 %v5582
      %v5719 = vunpack.c.l.b16 %v5583
      %v5720 = vunpack.c.l.b16 %v5584
      %v5721 = vunpack.c.l.b16 %v5585
      %v5722 = vunpack.c.l.b16 %v5586
      %v5723 = vunpack.c.l.b16 %v5587
      %v5724 = vunpack.c.l.b16 %v5588
      %v5725 = vunpack.c.l.b16 %v5589
      %v5726 = vunpack.c.l.b16 %v5590
      %v5727 = vunpack.c.l.b16 %v5591
      %v5728 = vunpack.c.l.b16 %v5592
      %v5729 = vunpack.c.l.b16 %v5593
      %v5730 = vunpack.c.l.b16 %v5594
      %v5731 = vunpack.c.l.b16 %v5595
      %v5732 = vunpack.c.l.b16 %v5596
      %v5733 = vunpack.c.l.b16 %v5597
      %v5734 = vunpack.c.l.b16 %v5598
      %v5735 = vunpack.c.l.b16 %v5599
      %v5736 = vunpack.c.l.b16 %v5600
      %v5737 = vunpack.c.l.b16 %v5601
      %v5738 = vunpack.c.l.b16 %v5602
      %v5739 = vunpack.c.l.b16 %v5603
      %v5740 = vunpack.c.l.b16 %v5604
      %v5741 = vunpack.c.l.b16 %v5605
      %v5742 = vunpack.c.l.b16 %v5606
      %v5743 = vunpack.c.l.b16 %v5607
      %v5744 = vunpack.c.l.b16 %v5608
      %v5745 = vunpack.c.l.b16 %v5609
      %v5746 = vunpack.c.l.b16 %v5610
      %v5747 = vunpack.c.l.b16 %v5611
      %v5748 = vpack.c.b16 %v5685, %v5684
      %v5749 = vpack.c.b16 %v5687, %v5686
      %v5750 = vpack.c.b16 %v5689, %v5688
      %v5751 = vpack.c.b16 %v5691, %v5690
      %v5752 = vpack.c.b16 %v5693, %v5692
      %v5753 = vpack.c.b16 %v5695, %v5694
      %v5754 = vpack.c.b16 %v5697, %v5696
      %v5755 = vpack.c.b16 %v5699, %v5698
      %v5756 = vpack.c.b16 %v5701, %v5700
      %v5757 = vpack.c.b16 %v5703, %v5702
      %v5758 = vpack.c.b16 %v5705, %v5704
      %v5759 = vpack.c.b16 %v5707, %v5706
      %v5760 = vpack.c.b16 %v5709, %v5708
      %v5761 = vpack.c.b16 %v5711, %v5710
      %v5762 = vpack.c.b16 %v5713, %v5712
      %v5763 = vpack.c.b16 %v5715, %v5714
      %v5764 = vpack.c.b16 %v5717, %v5716
      %v5765 = vpack.c.b16 %v5719, %v5718
      %v5766 = vpack.c.b16 %v5721, %v5720
      %v5767 = vpack.c.b16 %v5723, %v5722
      %v5768 = vpack.c.b16 %v5725, %v5724
      %v5769 = vpack.c.b16 %v5727, %v5726
      %v5770 = vpack.c.b16 %v5729, %v5728
      %v5771 = vpack.c.b16 %v5731, %v5730
      %v5772 = vpack.c.b16 %v5733, %v5732
      %v5773 = vpack.c.b16 %v5735, %v5734
      %v5774 = vpack.c.b16 %v5737, %v5736
      %v5775 = vpack.c.b16 %v5739, %v5738
      %v5776 = vpack.c.b16 %v5741, %v5740
      %v5777 = vpack.c.b16 %v5743, %v5742
      %v5778 = vpack.c.b16 %v5745, %v5744
      %v5779 = vpack.c.b16 %v5747, %v5746
      %5812 = vmatprep.subr.bf16.mxu0 0
      %5813 = vmatpush1.bf16.msra.mxu0 %v5748
      %5814 = vmatprep.subr.bf16.mxu0 0
      %5815 = vmatpush1.bf16.msra.mxu0 %v5749
      %5816 = vmatprep.subr.bf16.mxu0 0
      %5817 = vmatpush1.bf16.msra.mxu0 %v5750
      %5818 = vmatprep.subr.bf16.mxu0 0
      %5819 = vmatpush1.bf16.msra.mxu0 %v5751
      %5820 = vmatprep.subr.bf16.mxu0 0
      %5821 = vmatpush1.bf16.msra.mxu0 %v5752
      %5822 = vmatprep.subr.bf16.mxu0 0
      %5823 = vmatpush1.bf16.msra.mxu0 %v5753
      %5824 = vmatprep.subr.bf16.mxu0 0
      %5825 = vmatpush1.bf16.msra.mxu0 %v5754
      %5826 = vmatprep.subr.bf16.mxu0 0
      %5827 = vmatpush1.bf16.msra.mxu0 %v5755
      %5828 = vmatprep.subr.bf16.mxu0 0
      %5829 = vmatpush1.bf16.msra.mxu0 %v5756
      %5830 = vmatprep.subr.bf16.mxu0 0
      %5831 = vmatpush1.bf16.msra.mxu0 %v5757
      %5832 = vmatprep.subr.bf16.mxu0 0
      %5833 = vmatpush1.bf16.msra.mxu0 %v5758
      %5834 = vmatprep.subr.bf16.mxu0 0
      %5835 = vmatpush1.bf16.msra.mxu0 %v5759
      %5836 = vmatprep.subr.bf16.mxu0 0
      %5837 = vmatpush1.bf16.msra.mxu0 %v5760
      %5838 = vmatprep.subr.bf16.mxu0 0
      %5839 = vmatpush1.bf16.msra.mxu0 %v5761
      %5840 = vmatprep.subr.bf16.mxu0 0
      %5841 = vmatpush1.bf16.msra.mxu0 %v5762
      %5842 = vmatprep.subr.bf16.mxu0 0
      %5843 = vmatpush1.bf16.msra.mxu0 %v5763
      %5844 = vmatprep.mubr.bf16.mxu0 %v5484
      %5845 = vmatmul.mubr.bf16.gmra.mrb[0].mxu0 %v5483
      %v5846 = vpop.f32.mrb[0].mxu0
      %v5847 = vadd.f32 %v5618, %v5846
      %v5848 = vpop.f32.mrb[0].mxu0
      %v5849 = vpop.f32.mrb[0].mxu0
      %v5850 = vadd.f32 %v5618, %v5849
      %v5851 = vpop.f32.mrb[0].mxu0
      %5852 = vmatprep.mubr.bf16.mxu0 %v5488
      %5853 = vmatmul.mubr.bf16.gmra.mrb[0].mxu0 %v5487
      %v5854 = vpop.f32.mrb[0].mxu0
      %v5855 = vadd.f32 %v5618, %v5854
      %v5856 = vpop.f32.mrb[0].mxu0
      %v5857 = vpop.f32.mrb[0].mxu0
      %v5858 = vadd.f32 %v5618, %v5857
      %v5859 = vpop.f32.mrb[0].mxu0
      %5860 = vmatprep.mubr.bf16.mxu0 %v5492
      %5861 = vmatmul.mubr.bf16.gmra.mrb[0].mxu0 %v5491
      %v5862 = vpop.f32.mrb[0].mxu0
      %v5863 = vadd.f32 %v5618, %v5862
      %v5864 = vpop.f32.mrb[0].mxu0
      %v5865 = vpop.f32.mrb[0].mxu0
      %v5866 = vadd.f32 %v5618, %v5865
      %v5867 = vpop.f32.mrb[0].mxu0
      %5868 = vmatprep.mubr.bf16.mxu0 %v5496
      %5869 = vmatmul.mubr.bf16.gmra.mrb[0].mxu0 %v5495
      %v5870 = vpop.f32.mrb[0].mxu0
      %v5871 = vadd.f32 %v5618, %v5870
      %v5872 = vpop.f32.mrb[0].mxu0
      %v5873 = vpop.f32.mrb[0].mxu0
      %v5874 = vadd.f32 %v5618, %v5873
      %v5875 = vpop.f32.mrb[0].mxu0
      %5876 = vmatprep.mubr.bf16.mxu0 %v5500
      %5877 = vmatmul.mubr.bf16.gmra.mrb[0].mxu0 %v5499
      %v5878 = vpop.f32.mrb[0].mxu0
      %v5879 = vadd.f32 %v5618, %v5878
      %v5880 = vpop.f32.mrb[0].mxu0
      %v5881 = vpop.f32.mrb[0].mxu0
      %v5882 = vadd.f32 %v5618, %v5881
      %v5883 = vpop.f32.mrb[0].mxu0
      %5884 = vmatprep.mubr.bf16.mxu0 %v5504
      %5885 = vmatmul.mubr.bf16.gmra.mrb[0].mxu0 %v5503
      %v5886 = vpop.f32.mrb[0].mxu0
      %v5887 = vadd.f32 %v5618, %v5886
      %v5888 = vpop.f32.mrb[0].mxu0
      %v5889 = vpop.f32.mrb[0].mxu0
      %v5890 = vadd.f32 %v5618, %v5889
      %v5891 = vpop.f32.mrb[0].mxu0
      %5892 = vmatprep.mubr.bf16.mxu0 %v5508
      %5893 = vmatmul.mubr.bf16.gmra.mrb[0].mxu0 %v5507
      %v5894 = vpop.f32.mrb[0].mxu0
      %v5895 = vadd.f32 %v5618, %v5894
      %v5896 = vpop.f32.mrb[0].mxu0
      %v5897 = vpop.f32.mrb[0].mxu0
      %v5898 = vadd.f32 %v5618, %v5897
      %v5899 = vpop.f32.mrb[0].mxu0
      %5900 = vmatprep.mubr.bf16.mxu0 %v5512
      %5901 = vmatmul.mubr.bf16.gmra.mrb[0].mxu0 %v5511
      %v5902 = vpop.f32.mrb[0].mxu0
      %v5903 = vadd.f32 %v5618, %v5902
      %v5904 = vpop.f32.mrb[0].mxu0
      %v5905 = vpop.f32.mrb[0].mxu0
      %v5906 = vadd.f32 %v5618, %v5905
      %v5907 = vpop.f32.mrb[0].mxu0
      %5908 = vmatprep.mubr.bf16.mxu0 %v5516
      %5909 = vmatmul.mubr.bf16.gmra.mrb[0].mxu0 %v5515
      %v5910 = vpop.f32.mrb[0].mxu0
      %v5911 = vadd.f32 %v5618, %v5910
      %v5912 = vpop.f32.mrb[0].mxu0
      %v5913 = vpop.f32.mrb[0].mxu0
      %v5914 = vadd.f32 %v5618, %v5913
      %v5915 = vpop.f32.mrb[0].mxu0
      %5916 = vmatprep.mubr.bf16.mxu0 %v5520
      %5917 = vmatmul.mubr.bf16.gmra.mrb[0].mxu0 %v5519
      %v5918 = vpop.f32.mrb[0].mxu0
      %v5919 = vadd.f32 %v5618, %v5918
      %v5920 = vpop.f32.mrb[0].mxu0
      %v5921 = vpop.f32.mrb[0].mxu0
      %v5922 = vadd.f32 %v5618, %v5921
      %v5923 = vpop.f32.mrb[0].mxu0
      %5924 = vmatprep.mubr.bf16.mxu0 %v5524
      %5925 = vmatmul.mubr.bf16.gmra.mrb[0].mxu0 %v5523
      %v5926 = vpop.f32.mrb[0].mxu0
      %v5927 = vadd.f32 %v5618, %v5926
      %v5928 = vpop.f32.mrb[0].mxu0
      %v5929 = vpop.f32.mrb[0].mxu0
      %v5930 = vadd.f32 %v5618, %v5929
      %v5931 = vpop.f32.mrb[0].mxu0
      %5932 = vmatprep.mubr.bf16.mxu0 %v5528
      %5933 = vmatmul.mubr.bf16.gmra.mrb[0].mxu0 %v5527
      %v5934 = vpop.f32.mrb[0].mxu0
      %v5935 = vadd.f32 %v5618, %v5934
      %v5936 = vpop.f32.mrb[0].mxu0
      %v5937 = vpop.f32.mrb[0].mxu0
      %v5938 = vadd.f32 %v5618, %v5937
      %v5939 = vpop.f32.mrb[0].mxu0
      %5940 = vmatprep.mubr.bf16.mxu0 %v5532
      %5941 = vmatmul.mubr.bf16.gmra.mrb[0].mxu0 %v5531
      %v5942 = vpop.f32.mrb[0].mxu0
      %v5943 = vadd.f32 %v5618, %v5942
      %v5944 = vpop.f32.mrb[0].mxu0
      %v5945 = vpop.f32.mrb[0].mxu0
      %v5946 = vadd.f32 %v5618, %v5945
      %v5947 = vpop.f32.mrb[0].mxu0
      %5948 = vmatprep.mubr.bf16.mxu0 %v5536
      %5949 = vmatmul.mubr.bf16.gmra.mrb[0].mxu0 %v5535
      %v5950 = vpop.f32.mrb[0].mxu0
      %v5951 = vadd.f32 %v5618, %v5950
      %v5952 = vpop.f32.mrb[0].mxu0
      %v5953 = vpop.f32.mrb[0].mxu0
      %v5954 = vadd.f32 %v5618, %v5953
      %v5955 = vpop.f32.mrb[0].mxu0
      %5956 = vmatprep.mubr.bf16.mxu0 %v5540
      %5957 = vmatmul.mubr.bf16.gmra.mrb[0].mxu0 %v5539
      %v5958 = vpop.f32.mrb[0].mxu0
      %v5959 = vadd.f32 %v5618, %v5958
      %v5960 = vpop.f32.mrb[0].mxu0
      %v5961 = vpop.f32.mrb[0].mxu0
      %v5962 = vadd.f32 %v5618, %v5961
      %v5963 = vpop.f32.mrb[0].mxu0
      %5964 = vmatprep.mubr.bf16.mxu0 %v5544
      %5965 = vmatmul.mubr.bf16.gmra.mrb[0].mxu0 %v5543
      %v5966 = vpop.f32.mrb[0].mxu0
      %v5967 = vadd.f32 %v5618, %v5966
      %v5968 = vpop.f32.mrb[0].mxu0
      %v5969 = vpop.f32.mrb[0].mxu0
      %v5970 = vadd.f32 %v5618, %v5969
      %v5971 = vpop.f32.mrb[0].mxu0
      %5972 = vdwg.mxu0
      %5973 = vmatprep.subr.bf16.mxu0 0
      %5974 = vmatpush1.bf16.msra.mxu0 %v5764
      %5975 = vmatprep.subr.bf16.mxu0 0
      %5976 = vmatpush1.bf16.msra.mxu0 %v5765
      %5977 = vmatprep.subr.bf16.mxu0 0
      %5978 = vmatpush1.bf16.msra.mxu0 %v5766
      %5979 = vmatprep.subr.bf16.mxu0 0
      %5980 = vmatpush1.bf16.msra.mxu0 %v5767
      %5981 = vmatprep.subr.bf16.mxu0 0
      %5982 = vmatpush1.bf16.msra.mxu0 %v5768
      %5983 = vmatprep.subr.bf16.mxu0 0
      %5984 = vmatpush1.bf16.msra.mxu0 %v5769
      %5985 = vmatprep.subr.bf16.mxu0 0
      %5986 = vmatpush1.bf16.msra.mxu0 %v5770
      %5987 = vmatprep.subr.bf16.mxu0 0
      %5988 = vmatpush1.bf16.msra.mxu0 %v5771
      %5989 = vmatprep.subr.bf16.mxu0 0
      %5990 = vmatpush1.bf16.msra.mxu0 %v5772
      %5991 = vmatprep.subr.bf16.mxu0 0
      %5992 = vmatpush1.bf16.msra.mxu0 %v5773
      %5993 = vmatprep.subr.bf16.mxu0 0
      %5994 = vmatpush1.bf16.msra.mxu0 %v5774
      %5995 = vmatprep.subr.bf16.mxu0 0
      %5996 = vmatpush1.bf16.msra.mxu0 %v5775
      %5997 = vmatprep.subr.bf16.mxu0 0
      %5998 = vmatpush1.bf16.msra.mxu0 %v5776
      %5999 = vmatprep.subr.bf16.mxu0 0
      %6000 = vmatpush1.bf16.msra.mxu0 %v5777
      %6001 = vmatprep.subr.bf16.mxu0 0
      %6002 = vmatpush1.bf16.msra.mxu0 %v5778
      %6003 = vmatprep.subr.bf16.mxu0 0
      %6004 = vmatpush1.bf16.msra.mxu0 %v5779
      %6005 = vmatprep.mubr.bf16.mxu0 %v5486
      %6006 = vmatmul.mubr.bf16.gmra.mrb[0].mxu0 %v5485
      %v6007 = vpop.f32.mrb[0].mxu0
      %v6008 = vadd.f32 %v5847, %v6007
      %v6009 = vpop.f32.mrb[0].mxu0
      %v6010 = vpop.f32.mrb[0].mxu0
      %v6011 = vadd.f32 %v5850, %v6010
      %v6012 = vpop.f32.mrb[0].mxu0
      %6013 = vmatprep.mubr.bf16.mxu0 %v5490
      %6014 = vmatmul.mubr.bf16.gmra.mrb[0].mxu0 %v5489
      %v6015 = vpop.f32.mrb[0].mxu0
      %v6016 = vadd.f32 %v5855, %v6015
      %v6017 = vpop.f32.mrb[0].mxu0
      %v6018 = vpop.f32.mrb[0].mxu0
      %v6019 = vadd.f32 %v5858, %v6018
      %v6020 = vpop.f32.mrb[0].mxu0
      %6021 = vmatprep.mubr.bf16.mxu0 %v5494
      %6022 = vmatmul.mubr.bf16.gmra.mrb[0].mxu0 %v5493
      %v6023 = vpop.f32.mrb[0].mxu0
      %v6024 = vadd.f32 %v5863, %v6023
      %v6025 = vpop.f32.mrb[0].mxu0
      %v6026 = vpop.f32.mrb[0].mxu0
      %v6027 = vadd.f32 %v5866, %v6026
      %v6028 = vpop.f32.mrb[0].mxu0
      %6029 = vmatprep.mubr.bf16.mxu0 %v5498
      %6030 = vmatmul.mubr.bf16.gmra.mrb[0].mxu0 %v5497
      %v6031 = vpop.f32.mrb[0].mxu0
      %v6032 = vadd.f32 %v5871, %v6031
      %v6033 = vpop.f32.mrb[0].mxu0
      %v6034 = vpop.f32.mrb[0].mxu0
      %v6035 = vadd.f32 %v5874, %v6034
      %v6036 = vpop.f32.mrb[0].mxu0
      %6037 = vmatprep.mubr.bf16.mxu0 %v5502
      %6038 = vmatmul.mubr.bf16.gmra.mrb[0].mxu0 %v5501
      %v6039 = vpop.f32.mrb[0].mxu0
      %v6040 = vadd.f32 %v5879, %v6039
      %v6041 = vpop.f32.mrb[0].mxu0
      %v6042 = vpop.f32.mrb[0].mxu0
      %v6043 = vadd.f32 %v5882, %v6042
      %v6044 = vpop.f32.mrb[0].mxu0
      %6045 = vmatprep.mubr.bf16.mxu0 %v5506
      %6046 = vmatmul.mubr.bf16.gmra.mrb[0].mxu0 %v5505
      %v6047 = vpop.f32.mrb[0].mxu0
      %v6048 = vadd.f32 %v5887, %v6047
      %v6049 = vpop.f32.mrb[0].mxu0
      %v6050 = vpop.f32.mrb[0].mxu0
      %v6051 = vadd.f32 %v5890, %v6050
      %v6052 = vpop.f32.mrb[0].mxu0
      %6053 = vmatprep.mubr.bf16.mxu0 %v5510
      %6054 = vmatmul.mubr.bf16.gmra.mrb[0].mxu0 %v5509
      %v6055 = vpop.f32.mrb[0].mxu0
      %v6056 = vadd.f32 %v5895, %v6055
      %v6057 = vpop.f32.mrb[0].mxu0
      %v6058 = vpop.f32.mrb[0].mxu0
      %v6059 = vadd.f32 %v5898, %v6058
      %v6060 = vpop.f32.mrb[0].mxu0
      %6061 = vmatprep.mubr.bf16.mxu0 %v5514
      %6062 = vmatmul.mubr.bf16.gmra.mrb[0].mxu0 %v5513
      %v6063 = vpop.f32.mrb[0].mxu0
      %v6064 = vadd.f32 %v5903, %v6063
      %v6065 = vpop.f32.mrb[0].mxu0
      %v6066 = vpop.f32.mrb[0].mxu0
      %v6067 = vadd.f32 %v5906, %v6066
      %v6068 = vpop.f32.mrb[0].mxu0
      %6069 = vmatprep.mubr.bf16.mxu0 %v5518
      %6070 = vmatmul.mubr.bf16.gmra.mrb[0].mxu0 %v5517
      %v6071 = vpop.f32.mrb[0].mxu0
      %v6072 = vadd.f32 %v5911, %v6071
      %v6073 = vpop.f32.mrb[0].mxu0
      %v6074 = vpop.f32.mrb[0].mxu0
      %v6075 = vadd.f32 %v5914, %v6074
      %v6076 = vpop.f32.mrb[0].mxu0
      %6077 = vmatprep.mubr.bf16.mxu0 %v5522
      %6078 = vmatmul.mubr.bf16.gmra.mrb[0].mxu0 %v5521
      %v6079 = vpop.f32.mrb[0].mxu0
      %v6080 = vadd.f32 %v5919, %v6079
      %v6081 = vpop.f32.mrb[0].mxu0
      %v6082 = vpop.f32.mrb[0].mxu0
      %v6083 = vadd.f32 %v5922, %v6082
      %v6084 = vpop.f32.mrb[0].mxu0
      %6085 = vmatprep.mubr.bf16.mxu0 %v5526
      %6086 = vmatmul.mubr.bf16.gmra.mrb[0].mxu0 %v5525
      %v6087 = vpop.f32.mrb[0].mxu0
      %v6088 = vadd.f32 %v5927, %v6087
      %v6089 = vpop.f32.mrb[0].mxu0
      %v6090 = vpop.f32.mrb[0].mxu0
      %v6091 = vadd.f32 %v5930, %v6090
      %v6092 = vpop.f32.mrb[0].mxu0
      %6093 = vmatprep.mubr.bf16.mxu0 %v5530
      %6094 = vmatmul.mubr.bf16.gmra.mrb[0].mxu0 %v5529
      %v6095 = vpop.f32.mrb[0].mxu0
      %v6096 = vadd.f32 %v5935, %v6095
      %v6097 = vpop.f32.mrb[0].mxu0
      %v6098 = vpop.f32.mrb[0].mxu0
      %v6099 = vadd.f32 %v5938, %v6098
      %v6100 = vpop.f32.mrb[0].mxu0
      %6101 = vmatprep.mubr.bf16.mxu0 %v5534
      %6102 = vmatmul.mubr.bf16.gmra.mrb[0].mxu0 %v5533
      %v6103 = vpop.f32.mrb[0].mxu0
      %v6104 = vadd.f32 %v5943, %v6103
      %v6105 = vpop.f32.mrb[0].mxu0
      %v6106 = vpop.f32.mrb[0].mxu0
      %v6107 = vadd.f32 %v5946, %v6106
      %v6108 = vpop.f32.mrb[0].mxu0
      %6109 = vmatprep.mubr.bf16.mxu0 %v5538
      %6110 = vmatmul.mubr.bf16.gmra.mrb[0].mxu0 %v5537
      %v6111 = vpop.f32.mrb[0].mxu0
      %v6112 = vadd.f32 %v5951, %v6111
      %v6113 = vpop.f32.mrb[0].mxu0
      %v6114 = vpop.f32.mrb[0].mxu0
      %v6115 = vadd.f32 %v5954, %v6114
      %v6116 = vpop.f32.mrb[0].mxu0
      %6117 = vmatprep.mubr.bf16.mxu0 %v5542
      %6118 = vmatmul.mubr.bf16.gmra.mrb[0].mxu0 %v5541
      %v6119 = vpop.f32.mrb[0].mxu0
      %v6120 = vadd.f32 %v5959, %v6119
      %v6121 = vpop.f32.mrb[0].mxu0
      %v6122 = vpop.f32.mrb[0].mxu0
      %v6123 = vadd.f32 %v5962, %v6122
      %v6124 = vpop.f32.mrb[0].mxu0
      %6125 = vmatprep.mubr.bf16.mxu0 %v5546
      %6126 = vmatmul.mubr.bf16.gmra.mrb[0].mxu0 %v5545
      %v6127 = vpop.f32.mrb[0].mxu0
      %v6128 = vadd.f32 %v5967, %v6127
      %v6129 = vpop.f32.mrb[0].mxu0
      %v6130 = vpop.f32.mrb[0].mxu0
      %v6131 = vadd.f32 %v5970, %v6130
      %v6132 = vpop.f32.mrb[0].mxu0
      %6133 = vdwg.mxu0
      %v6134 = vpack.c.bf16 %v6011, %v6008
      %v6135 = vpack.c.bf16 %v6019, %v6016
      %v6136 = vpack.c.bf16 %v6027, %v6024
      %v6137 = vpack.c.bf16 %v6035, %v6032
      %v6138 = vpack.c.bf16 %v6043, %v6040
      %v6139 = vpack.c.bf16 %v6051, %v6048
      %v6140 = vpack.c.bf16 %v6059, %v6056
      %v6141 = vpack.c.bf16 %v6067, %v6064
      %v6142 = vpack.c.bf16 %v6075, %v6072
      %v6143 = vpack.c.bf16 %v6083, %v6080
      %v6144 = vpack.c.bf16 %v6091, %v6088
      %v6145 = vpack.c.bf16 %v6099, %v6096
      %v6146 = vpack.c.bf16 %v6107, %v6104
      %v6147 = vpack.c.bf16 %v6115, %v6112
      %v6148 = vpack.c.bf16 %v6123, %v6120
      %v6149 = vpack.c.bf16 %v6131, %v6128
      %6150 = vst [vmem:[#allocation3] sm:$0xff] %v6134
      %6151 = vst [vmem:[#allocation3 + $0x8] sm:$0xff] %v6135
      %6152 = vst [vmem:[#allocation3 + $0x10] sm:$0xff] %v6136
      %6153 = vst [vmem:[#allocation3 + $0x18] sm:$0xff] %v6137
      %6154 = vst [vmem:[#allocation3 + $0x20] sm:$0xff] %v6138
      %6155 = vst [vmem:[#allocation3 + $0x28] sm:$0xff] %v6139
      %6156 = vst [vmem:[#allocation3 + $0x30] sm:$0xff] %v6140
      %6157 = vst [vmem:[#allocation3 + $0x38] sm:$0xff] %v6141
      %6158 = vst [vmem:[#allocation3 + $0x40] sm:$0xff] %v6142
      %6159 = vst [vmem:[#allocation3 + $0x48] sm:$0xff] %v6143
      %6160 = vst [vmem:[#allocation3 + $0x50] sm:$0xff] %v6144
      %6161 = vst [vmem:[#allocation3 + $0x58] sm:$0xff] %v6145
      %6162 = vst [vmem:[#allocation3 + $0x60] sm:$0xff] %v6146
      %6163 = vst [vmem:[#allocation3 + $0x68] sm:$0xff] %v6147
      %6164 = vst [vmem:[#allocation3 + $0x70] sm:$0xff] %v6148
      %6165 = vst [vmem:[#allocation3 + $0x78] sm:$0xff] %v6149
      %v6166 = vld [vmem:[#allocation3] sm:$0xff]
      %v6167 = vld [vmem:[#allocation3 + $0x8] sm:$0xff]
      %v6168 = vld [vmem:[#allocation3 + $0x10] sm:$0xff]
      %v6169 = vld [vmem:[#allocation3 + $0x18] sm:$0xff]
      %v6170 = vld [vmem:[#allocation3 + $0x20] sm:$0xff]
      %v6171 = vld [vmem:[#allocation3 + $0x28] sm:$0xff]
      %v6172 = vld [vmem:[#allocation3 + $0x30] sm:$0xff]
      %v6173 = vld [vmem:[#allocation3 + $0x38] sm:$0xff]
      %v6174 = vld [vmem:[#allocation3 + $0x40] sm:$0xff]
      %v6175 = vld [vmem:[#allocation3 + $0x48] sm:$0xff]
      %v6176 = vld [vmem:[#allocation3 + $0x50] sm:$0xff]
      %v6177 = vld [vmem:[#allocation3 + $0x58] sm:$0xff]
      %v6178 = vld [vmem:[#allocation3 + $0x60] sm:$0xff]
      %v6179 = vld [vmem:[#allocation3 + $0x68] sm:$0xff]
      %v6180 = vld [vmem:[#allocation3 + $0x70] sm:$0xff]
      %v6181 = vld [vmem:[#allocation3 + $0x78] sm:$0xff]
      %6182 = vst [vmem:[#allocation4] sm:$0xff] %v6166
      %6183 = vst [vmem:[#allocation4 + $0x20] sm:$0xff] %v6167
      %6184 = vst [vmem:[#allocation4 + $0x40] sm:$0xff] %v6168
      %6185 = vst [vmem:[#allocation4 + $0x60] sm:$0xff] %v6169
      %6186 = vst [vmem:[#allocation4 + $0x80] sm:$0xff] %v6170
      %6187 = vst [vmem:[#allocation4 + $0xa0] sm:$0xff] %v6171
      %6188 = vst [vmem:[#allocation4 + $0xc0] sm:$0xff] %v6172
      %6189 = vst [vmem:[#allocation4 + $0xe0] sm:$0xff] %v6173
      %6190 = vst [vmem:[#allocation4 + $0x100] sm:$0xff] %v6174
      %6191 = vst [vmem:[#allocation4 + $0x120] sm:$0xff] %v6175
      %6192 = vst [vmem:[#allocation4 + $0x140] sm:$0xff] %v6176
      %6193 = vst [vmem:[#allocation4 + $0x160] sm:$0xff] %v6177
      %6194 = vst [vmem:[#allocation4 + $0x180] sm:$0xff] %v6178
      %6195 = vst [vmem:[#allocation4 + $0x1a0] sm:$0xff] %v6179
      %6196 = vst [vmem:[#allocation4 + $0x1c0] sm:$0xff] %v6180
      %6197 = vst [vmem:[#allocation4 + $0x1e0] sm:$0xff] %v6181
      %v6198 = vld [vmem:[#allocation3] sm:$0xff]
      %v6199 = vld [vmem:[#allocation3 + $0x8] sm:$0xff]
      %v6200 = vld [vmem:[#allocation3 + $0x10] sm:$0xff]
      %v6201 = vld [vmem:[#allocation3 + $0x18] sm:$0xff]
      %v6202 = vld [vmem:[#allocation3 + $0x20] sm:$0xff]
      %v6203 = vld [vmem:[#allocation3 + $0x28] sm:$0xff]
      %v6204 = vld [vmem:[#allocation3 + $0x30] sm:$0xff]
      %v6205 = vld [vmem:[#allocation3 + $0x38] sm:$0xff]
      %v6206 = vld [vmem:[#allocation3 + $0x40] sm:$0xff]
      %v6207 = vld [vmem:[#allocation3 + $0x48] sm:$0xff]
      %v6208 = vld [vmem:[#allocation3 + $0x50] sm:$0xff]
      %v6209 = vld [vmem:[#allocation3 + $0x58] sm:$0xff]
      %v6210 = vld [vmem:[#allocation3 + $0x60] sm:$0xff]
      %v6211 = vld [vmem:[#allocation3 + $0x68] sm:$0xff]
      %v6212 = vld [vmem:[#allocation3 + $0x70] sm:$0xff]
      %v6213 = vld [vmem:[#allocation3 + $0x78] sm:$0xff]
      %v6214 = vld [vmem:[#allocation3 + $0x80] sm:$0x1]
      %v6216 = vshrl.u32 %v6198, 16
      %v6218 = vshll.u32 %v6198, 16
      %v6220 = vrot.slane %v6218, 1
      %v6221 = vor.u32 %v6216, %v6220
      %v6223 = vshll.u32 %v6199, 16
      %v6225 = vrot.slane %v6223, 1
      %v6226 = vsel %vm671, %v6221, %v6225
      %v6227 = vshrl.u32 %v6199, 16
      %v6229 = vor.u32 %v6227, %v6225
      %v6231 = vshll.u32 %v6200, 16
      %v6233 = vrot.slane %v6231, 1
      %v6234 = vsel %vm671, %v6229, %v6233
      %v6235 = vshrl.u32 %v6200, 16
      %v6237 = vor.u32 %v6235, %v6233
      %v6239 = vshll.u32 %v6201, 16
      %v6241 = vrot.slane %v6239, 1
      %v6242 = vsel %vm671, %v6237, %v6241
      %v6243 = vshrl.u32 %v6201, 16
      %v6245 = vor.u32 %v6243, %v6241
      %v6247 = vshll.u32 %v6202, 16
      %v6249 = vrot.slane %v6247, 1
      %v6250 = vsel %vm671, %v6245, %v6249
      %v6251 = vshrl.u32 %v6202, 16
      %v6253 = vor.u32 %v6251, %v6249
      %v6255 = vshll.u32 %v6203, 16
      %v6257 = vrot.slane %v6255, 1
      %v6258 = vsel %vm671, %v6253, %v6257
      %v6259 = vshrl.u32 %v6203, 16
      %v6261 = vor.u32 %v6259, %v6257
      %v6263 = vshll.u32 %v6204, 16
      %v6265 = vrot.slane %v6263, 1
      %v6266 = vsel %vm671, %v6261, %v6265
      %v6267 = vshrl.u32 %v6204, 16
      %v6269 = vor.u32 %v6267, %v6265
      %v6271 = vshll.u32 %v6205, 16
      %v6273 = vrot.slane %v6271, 1
      %v6274 = vsel %vm671, %v6269, %v6273
      %v6275 = vshrl.u32 %v6205, 16
      %v6277 = vor.u32 %v6275, %v6273
      %v6279 = vshll.u32 %v6206, 16
      %v6281 = vrot.slane %v6279, 1
      %v6282 = vsel %vm671, %v6277, %v6281
      %v6283 = vshrl.u32 %v6206, 16
      %v6285 = vor.u32 %v6283, %v6281
      %v6287 = vshll.u32 %v6207, 16
      %v6289 = vrot.slane %v6287, 1
      %v6290 = vsel %vm671, %v6285, %v6289
      %v6291 = vshrl.u32 %v6207, 16
      %v6293 = vor.u32 %v6291, %v6289
      %v6295 = vshll.u32 %v6208, 16
      %v6297 = vrot.slane %v6295, 1
      %v6298 = vsel %vm671, %v6293, %v6297
      %v6299 = vshrl.u32 %v6208, 16
      %v6301 = vor.u32 %v6299, %v6297
      %v6303 = vshll.u32 %v6209, 16
      %v6305 = vrot.slane %v6303, 1
      %v6306 = vsel %vm671, %v6301, %v6305
      %v6307 = vshrl.u32 %v6209, 16
      %v6309 = vor.u32 %v6307, %v6305
      %v6311 = vshll.u32 %v6210, 16
      %v6313 = vrot.slane %v6311, 1
      %v6314 = vsel %vm671, %v6309, %v6313
      %v6315 = vshrl.u32 %v6210, 16
      %v6317 = vor.u32 %v6315, %v6313
      %v6319 = vshll.u32 %v6211, 16
      %v6321 = vrot.slane %v6319, 1
      %v6322 = vsel %vm671, %v6317, %v6321
      %v6323 = vshrl.u32 %v6211, 16
      %v6325 = vor.u32 %v6323, %v6321
      %v6327 = vshll.u32 %v6212, 16
      %v6329 = vrot.slane %v6327, 1
      %v6330 = vsel %vm671, %v6325, %v6329
      %v6331 = vshrl.u32 %v6212, 16
      %v6333 = vor.u32 %v6331, %v6329
      %v6335 = vshll.u32 %v6213, 16
      %v6337 = vrot.slane %v6335, 1
      %v6338 = vsel %vm671, %v6333, %v6337
      %v6339 = vshrl.u32 %v6213, 16
      %v6341 = vor.u32 %v6339, %v6337
      %v6343 = vshll.u32 %v6214, 16
      %v6345 = vrot.slane %v6343, 1
      %v6346 = vsel %vm671, %v6341, %v6345
      %6363 = vst [vmem:[#allocation4 + $0x8] sm:$0xff] %v6226
      %6364 = vst [vmem:[#allocation4 + $0x28] sm:$0xff] %v6234
      %6365 = vst [vmem:[#allocation4 + $0x48] sm:$0xff] %v6242
      %6366 = vst [vmem:[#allocation4 + $0x68] sm:$0xff] %v6250
      %6367 = vst [vmem:[#allocation4 + $0x88] sm:$0xff] %v6258
      %6368 = vst [vmem:[#allocation4 + $0xa8] sm:$0xff] %v6266
      %6369 = vst [vmem:[#allocation4 + $0xc8] sm:$0xff] %v6274
      %6370 = vst [vmem:[#allocation4 + $0xe8] sm:$0xff] %v6282
      %6371 = vst [vmem:[#allocation4 + $0x108] sm:$0xff] %v6290
      %6372 = vst [vmem:[#allocation4 + $0x128] sm:$0xff] %v6298
      %6373 = vst [vmem:[#allocation4 + $0x148] sm:$0xff] %v6306
      %6374 = vst [vmem:[#allocation4 + $0x168] sm:$0xff] %v6314
      %6375 = vst [vmem:[#allocation4 + $0x188] sm:$0xff] %v6322
      %6376 = vst [vmem:[#allocation4 + $0x1a8] sm:$0xff] %v6330
      %6377 = vst [vmem:[#allocation4 + $0x1c8] sm:$0xff] %v6338
      %6378 = vst [vmem:[#allocation4 + $0x1e8] sm:$0xff] %v6346
      %v6379 = vld [vmem:[#allocation3 + $0x8] sm:$0xff]
      %v6380 = vld [vmem:[#allocation3 + $0x10] sm:$0xff]
      %v6381 = vld [vmem:[#allocation3 + $0x18] sm:$0xff]
      %v6382 = vld [vmem:[#allocation3 + $0x20] sm:$0xff]
      %v6383 = vld [vmem:[#allocation3 + $0x28] sm:$0xff]
      %v6384 = vld [vmem:[#allocation3 + $0x30] sm:$0xff]
      %v6385 = vld [vmem:[#allocation3 + $0x38] sm:$0xff]
      %v6386 = vld [vmem:[#allocation3 + $0x40] sm:$0xff]
      %v6387 = vld [vmem:[#allocation3 + $0x48] sm:$0xff]
      %v6388 = vld [vmem:[#allocation3 + $0x50] sm:$0xff]
      %v6389 = vld [vmem:[#allocation3 + $0x58] sm:$0xff]
      %v6390 = vld [vmem:[#allocation3 + $0x60] sm:$0xff]
      %v6391 = vld [vmem:[#allocation3 + $0x68] sm:$0xff]
      %v6392 = vld [vmem:[#allocation3 + $0x70] sm:$0xff]
      %v6393 = vld [vmem:[#allocation3 + $0x78] sm:$0xff]
      %v6394 = vld [vmem:[#allocation3 + $0x80] sm:$0xff]
      %6395 = vst [vmem:[#allocation4 + $0x10] sm:$0xff] %v6379
      %6396 = vst [vmem:[#allocation4 + $0x30] sm:$0xff] %v6380
      %6397 = vst [vmem:[#allocation4 + $0x50] sm:$0xff] %v6381
      %6398 = vst [vmem:[#allocation4 + $0x70] sm:$0xff] %v6382
      %6399 = vst [vmem:[#allocation4 + $0x90] sm:$0xff] %v6383
      %6400 = vst [vmem:[#allocation4 + $0xb0] sm:$0xff] %v6384
      %6401 = vst [vmem:[#allocation4 + $0xd0] sm:$0xff] %v6385
      %6402 = vst [vmem:[#allocation4 + $0xf0] sm:$0xff] %v6386
      %6403 = vst [vmem:[#allocation4 + $0x110] sm:$0xff] %v6387
      %6404 = vst [vmem:[#allocation4 + $0x130] sm:$0xff] %v6388
      %6405 = vst [vmem:[#allocation4 + $0x150] sm:$0xff] %v6389
      %6406 = vst [vmem:[#allocation4 + $0x170] sm:$0xff] %v6390
      %6407 = vst [vmem:[#allocation4 + $0x190] sm:$0xff] %v6391
      %6408 = vst [vmem:[#allocation4 + $0x1b0] sm:$0xff] %v6392
      %6409 = vst [vmem:[#allocation4 + $0x1d0] sm:$0xff] %v6393
      %6410 = vst [vmem:[#allocation4 + $0x1f0] sm:$0xff] %v6394
      %v6411 = vld [vmem:[#allocation3 + $0x8] sm:$0xff]
      %v6412 = vld [vmem:[#allocation3 + $0x10] sm:$0xff]
      %v6413 = vld [vmem:[#allocation3 + $0x18] sm:$0xff]
      %v6414 = vld [vmem:[#allocation3 + $0x20] sm:$0xff]
      %v6415 = vld [vmem:[#allocation3 + $0x28] sm:$0xff]
      %v6416 = vld [vmem:[#allocation3 + $0x30] sm:$0xff]
      %v6417 = vld [vmem:[#allocation3 + $0x38] sm:$0xff]
      %v6418 = vld [vmem:[#allocation3 + $0x40] sm:$0xff]
      %v6419 = vld [vmem:[#allocation3 + $0x48] sm:$0xff]
      %v6420 = vld [vmem:[#allocation3 + $0x50] sm:$0xff]
      %v6421 = vld [vmem:[#allocation3 + $0x58] sm:$0xff]
      %v6422 = vld [vmem:[#allocation3 + $0x60] sm:$0xff]
      %v6423 = vld [vmem:[#allocation3 + $0x68] sm:$0xff]
      %v6424 = vld [vmem:[#allocation3 + $0x70] sm:$0xff]
      %v6425 = vld [vmem:[#allocation3 + $0x78] sm:$0xff]
      %v6426 = vld [vmem:[#allocation3 + $0x80] sm:$0xff]
      %v6427 = vld [vmem:[#allocation3 + $0x88] sm:$0x1]
      %v6429 = vshrl.u32 %v6411, 16
      %v6431 = vshll.u32 %v6411, 16
      %v6433 = vrot.slane %v6431, 1
      %v6434 = vor.u32 %v6429, %v6433
      %v6436 = vshll.u32 %v6412, 16
      %v6438 = vrot.slane %v6436, 1
      %v6439 = vsel %vm671, %v6434, %v6438
      %v6440 = vshrl.u32 %v6412, 16
      %v6442 = vor.u32 %v6440, %v6438
      %v6444 = vshll.u32 %v6413, 16
      %v6446 = vrot.slane %v6444, 1
      %v6447 = vsel %vm671, %v6442, %v6446
      %v6448 = vshrl.u32 %v6413, 16
      %v6450 = vor.u32 %v6448, %v6446
      %v6452 = vshll.u32 %v6414, 16
      %v6454 = vrot.slane %v6452, 1
      %v6455 = vsel %vm671, %v6450, %v6454
      %v6456 = vshrl.u32 %v6414, 16
      %v6458 = vor.u32 %v6456, %v6454
      %v6460 = vshll.u32 %v6415, 16
      %v6462 = vrot.slane %v6460, 1
      %v6463 = vsel %vm671, %v6458, %v6462
      %v6464 = vshrl.u32 %v6415, 16
      %v6466 = vor.u32 %v6464, %v6462
      %v6468 = vshll.u32 %v6416, 16
      %v6470 = vrot.slane %v6468, 1
      %v6471 = vsel %vm671, %v6466, %v6470
      %v6472 = vshrl.u32 %v6416, 16
      %v6474 = vor.u32 %v6472, %v6470
      %v6476 = vshll.u32 %v6417, 16
      %v6478 = vrot.slane %v6476, 1
      %v6479 = vsel %vm671, %v6474, %v6478
      %v6480 = vshrl.u32 %v6417, 16
      %v6482 = vor.u32 %v6480, %v6478
      %v6484 = vshll.u32 %v6418, 16
      %v6486 = vrot.slane %v6484, 1
      %v6487 = vsel %vm671, %v6482, %v6486
      %v6488 = vshrl.u32 %v6418, 16
      %v6490 = vor.u32 %v6488, %v6486
      %v6492 = vshll.u32 %v6419, 16
      %v6494 = vrot.slane %v6492, 1
      %v6495 = vsel %vm671, %v6490, %v6494
      %v6496 = vshrl.u32 %v6419, 16
      %v6498 = vor.u32 %v6496, %v6494
      %v6500 = vshll.u32 %v6420, 16
      %v6502 = vrot.slane %v6500, 1
      %v6503 = vsel %vm671, %v6498, %v6502
      %v6504 = vshrl.u32 %v6420, 16
      %v6506 = vor.u32 %v6504, %v6502
      %v6508 = vshll.u32 %v6421, 16
      %v6510 = vrot.slane %v6508, 1
      %v6511 = vsel %vm671, %v6506, %v6510
      %v6512 = vshrl.u32 %v6421, 16
      %v6514 = vor.u32 %v6512, %v6510
      %v6516 = vshll.u32 %v6422, 16
      %v6518 = vrot.slane %v6516, 1
      %v6519 = vsel %vm671, %v6514, %v6518
      %v6520 = vshrl.u32 %v6422, 16
      %v6522 = vor.u32 %v6520, %v6518
      %v6524 = vshll.u32 %v6423, 16
      %v6526 = vrot.slane %v6524, 1
      %v6527 = vsel %vm671, %v6522, %v6526
      %v6528 = vshrl.u32 %v6423, 16
      %v6530 = vor.u32 %v6528, %v6526
      %v6532 = vshll.u32 %v6424, 16
      %v6534 = vrot.slane %v6532, 1
      %v6535 = vsel %vm671, %v6530, %v6534
      %v6536 = vshrl.u32 %v6424, 16
      %v6538 = vor.u32 %v6536, %v6534
      %v6540 = vshll.u32 %v6425, 16
      %v6542 = vrot.slane %v6540, 1
      %v6543 = vsel %vm671, %v6538, %v6542
      %v6544 = vshrl.u32 %v6425, 16
      %v6546 = vor.u32 %v6544, %v6542
      %v6548 = vshll.u32 %v6426, 16
      %v6550 = vrot.slane %v6548, 1
      %v6551 = vsel %vm671, %v6546, %v6550
      %v6552 = vshrl.u32 %v6426, 16
      %v6554 = vor.u32 %v6552, %v6550
      %v6556 = vshll.u32 %v6427, 16
      %v6558 = vrot.slane %v6556, 1
      %v6559 = vsel %vm671, %v6554, %v6558
      %6576 = vst [vmem:[#allocation4 + $0x18] sm:$0xff] %v6439
      %6577 = vst [vmem:[#allocation4 + $0x38] sm:$0xff] %v6447
      %6578 = vst [vmem:[#allocation4 + $0x58] sm:$0xff] %v6455
      %6579 = vst [vmem:[#allocation4 + $0x78] sm:$0xff] %v6463
      %6580 = vst [vmem:[#allocation4 + $0x98] sm:$0xff] %v6471
      %6581 = vst [vmem:[#allocation4 + $0xb8] sm:$0xff] %v6479
      %6582 = vst [vmem:[#allocation4 + $0xd8] sm:$0xff] %v6487
      %6583 = vst [vmem:[#allocation4 + $0xf8] sm:$0xff] %v6495
      %6584 = vst [vmem:[#allocation4 + $0x118] sm:$0xff] %v6503
      %6585 = vst [vmem:[#allocation4 + $0x138] sm:$0xff] %v6511
      %6586 = vst [vmem:[#allocation4 + $0x158] sm:$0xff] %v6519
      %6587 = vst [vmem:[#allocation4 + $0x178] sm:$0xff] %v6527
      %6588 = vst [vmem:[#allocation4 + $0x198] sm:$0xff] %v6535
      %6589 = vst [vmem:[#allocation4 + $0x1b8] sm:$0xff] %v6543
      %6590 = vst [vmem:[#allocation4 + $0x1d8] sm:$0xff] %v6551
      %6591 = vst [vmem:[#allocation4 + $0x1f8] sm:$0xff] %v6559
      %v6592 = vld [vmem:[#allocation4] sm:$0xff]
      %v6593 = vld [vmem:[#allocation4 + $0x8] sm:$0xff]
      %v6594 = vld [vmem:[#allocation4 + $0x10] sm:$0xff]
      %v6595 = vld [vmem:[#allocation4 + $0x18] sm:$0xff]
      %v6596 = vld [vmem:[#allocation4 + $0x20] sm:$0xff]
      %v6597 = vld [vmem:[#allocation4 + $0x28] sm:$0xff]
      %v6598 = vld [vmem:[#allocation4 + $0x30] sm:$0xff]
      %v6599 = vld [vmem:[#allocation4 + $0x38] sm:$0xff]
      %v6600 = vld [vmem:[#allocation4 + $0x40] sm:$0xff]
      %v6601 = vld [vmem:[#allocation4 + $0x48] sm:$0xff]
      %v6602 = vld [vmem:[#allocation4 + $0x50] sm:$0xff]
      %v6603 = vld [vmem:[#allocation4 + $0x58] sm:$0xff]
      %v6604 = vld [vmem:[#allocation4 + $0x60] sm:$0xff]
      %v6605 = vld [vmem:[#allocation4 + $0x68] sm:$0xff]
      %v6606 = vld [vmem:[#allocation4 + $0x70] sm:$0xff]
      %v6607 = vld [vmem:[#allocation4 + $0x78] sm:$0xff]
      %v6608 = vld [vmem:[#allocation4 + $0x80] sm:$0xff]
      %v6609 = vld [vmem:[#allocation4 + $0x88] sm:$0xff]
      %v6610 = vld [vmem:[#allocation4 + $0x90] sm:$0xff]
      %v6611 = vld [vmem:[#allocation4 + $0x98] sm:$0xff]
      %v6612 = vld [vmem:[#allocation4 + $0xa0] sm:$0xff]
      %v6613 = vld [vmem:[#allocation4 + $0xa8] sm:$0xff]
      %v6614 = vld [vmem:[#allocation4 + $0xb0] sm:$0xff]
      %v6615 = vld [vmem:[#allocation4 + $0xb8] sm:$0xff]
      %v6616 = vld [vmem:[#allocation4 + $0xc0] sm:$0xff]
      %v6617 = vld [vmem:[#allocation4 + $0xc8] sm:$0xff]
      %v6618 = vld [vmem:[#allocation4 + $0xd0] sm:$0xff]
      %v6619 = vld [vmem:[#allocation4 + $0xd8] sm:$0xff]
      %v6620 = vld [vmem:[#allocation4 + $0xe0] sm:$0xff]
      %v6621 = vld [vmem:[#allocation4 + $0xe8] sm:$0xff]
      %v6622 = vld [vmem:[#allocation4 + $0xf0] sm:$0xff]
      %v6623 = vld [vmem:[#allocation4 + $0xf8] sm:$0xff]
      %v6624 = vld [vmem:[#allocation4 + $0x100] sm:$0xff]
      %v6625 = vld [vmem:[#allocation4 + $0x108] sm:$0xff]
      %v6626 = vld [vmem:[#allocation4 + $0x110] sm:$0xff]
      %v6627 = vld [vmem:[#allocation4 + $0x118] sm:$0xff]
      %v6628 = vld [vmem:[#allocation4 + $0x120] sm:$0xff]
      %v6629 = vld [vmem:[#allocation4 + $0x128] sm:$0xff]
      %v6630 = vld [vmem:[#allocation4 + $0x130] sm:$0xff]
      %v6631 = vld [vmem:[#allocation4 + $0x138] sm:$0xff]
      %v6632 = vld [vmem:[#allocation4 + $0x140] sm:$0xff]
      %v6633 = vld [vmem:[#allocation4 + $0x148] sm:$0xff]
      %v6634 = vld [vmem:[#allocation4 + $0x150] sm:$0xff]
      %v6635 = vld [vmem:[#allocation4 + $0x158] sm:$0xff]
      %v6636 = vld [vmem:[#allocation4 + $0x160] sm:$0xff]
      %v6637 = vld [vmem:[#allocation4 + $0x168] sm:$0xff]
      %v6638 = vld [vmem:[#allocation4 + $0x170] sm:$0xff]
      %v6639 = vld [vmem:[#allocation4 + $0x178] sm:$0xff]
      %v6640 = vld [vmem:[#allocation4 + $0x180] sm:$0xff]
      %v6641 = vld [vmem:[#allocation4 + $0x188] sm:$0xff]
      %v6642 = vld [vmem:[#allocation4 + $0x190] sm:$0xff]
      %v6643 = vld [vmem:[#allocation4 + $0x198] sm:$0xff]
      %v6644 = vld [vmem:[#allocation4 + $0x1a0] sm:$0xff]
      %v6645 = vld [vmem:[#allocation4 + $0x1a8] sm:$0xff]
      %v6646 = vld [vmem:[#allocation4 + $0x1b0] sm:$0xff]
      %v6647 = vld [vmem:[#allocation4 + $0x1b8] sm:$0xff]
      %v6648 = vld [vmem:[#allocation4 + $0x1c0] sm:$0xff]
      %v6649 = vld [vmem:[#allocation4 + $0x1c8] sm:$0xff]
      %v6650 = vld [vmem:[#allocation4 + $0x1d0] sm:$0xff]
      %v6651 = vld [vmem:[#allocation4 + $0x1d8] sm:$0xff]
      %v6652 = vld [vmem:[#allocation4 + $0x1e0] sm:$0xff]
      %v6653 = vld [vmem:[#allocation4 + $0x1e8] sm:$0xff]
      %v6654 = vld [vmem:[#allocation4 + $0x1f0] sm:$0xff]
      %v6655 = vld [vmem:[#allocation4 + $0x1f8] sm:$0xff]
      %s6656 = scalar_lea.vmem %s3, 1280
      %v6657 = vld [vmem:[%s6656] sm:$0xf]
      %v6658 = vld [vmem:[%s6656 + $0x4] sm:$0xf]
      %v6659 = vld [vmem:[%s6656 + $0x8] sm:$0xf]
      %v6660 = vld [vmem:[%s6656 + $0xc] sm:$0xf]
      %v6661 = vld [vmem:[%s6656 + $0x10] sm:$0xf]
      %v6662 = vld [vmem:[%s6656 + $0x14] sm:$0xf]
      %v6663 = vld [vmem:[%s6656 + $0x18] sm:$0xf]
      %v6664 = vld [vmem:[%s6656 + $0x1c] sm:$0xf]
      %v6665 = vld [vmem:[%s6656 + $0x20] sm:$0xf]
      %v6666 = vld [vmem:[%s6656 + $0x24] sm:$0xf]
      %v6667 = vld [vmem:[%s6656 + $0x28] sm:$0xf]
      %v6668 = vld [vmem:[%s6656 + $0x2c] sm:$0xf]
      %v6669 = vld [vmem:[%s6656 + $0x30] sm:$0xf]
      %v6670 = vld [vmem:[%s6656 + $0x34] sm:$0xf]
      %v6671 = vld [vmem:[%s6656 + $0x38] sm:$0xf]
      %v6672 = vld [vmem:[%s6656 + $0x3c] sm:$0xf]
      %v6673 = vld [vmem:[%s6656 + $0x40] sm:$0xf]
      %v6674 = vld [vmem:[%s6656 + $0x44] sm:$0xf]
      %v6675 = vld [vmem:[%s6656 + $0x48] sm:$0xf]
      %v6676 = vld [vmem:[%s6656 + $0x4c] sm:$0xf]
      %v6677 = vld [vmem:[%s6656 + $0x50] sm:$0xf]
      %v6678 = vld [vmem:[%s6656 + $0x54] sm:$0xf]
      %v6679 = vld [vmem:[%s6656 + $0x58] sm:$0xf]
      %v6680 = vld [vmem:[%s6656 + $0x5c] sm:$0xf]
      %v6681 = vld [vmem:[%s6656 + $0x60] sm:$0xf]
      %v6682 = vld [vmem:[%s6656 + $0x64] sm:$0xf]
      %v6683 = vld [vmem:[%s6656 + $0x68] sm:$0xf]
      %v6684 = vld [vmem:[%s6656 + $0x6c] sm:$0xf]
      %v6685 = vld [vmem:[%s6656 + $0x70] sm:$0xf]
      %v6686 = vld [vmem:[%s6656 + $0x74] sm:$0xf]
      %v6687 = vld [vmem:[%s6656 + $0x78] sm:$0xf]
      %v6688 = vld [vmem:[%s6656 + $0x7c] sm:$0xf]
      %v6689 = vld [vmem:[%s6656 + $0x80] sm:$0xf]
      %v6690 = vld [vmem:[%s6656 + $0x84] sm:$0xf]
      %v6691 = vld [vmem:[%s6656 + $0x88] sm:$0xf]
      %v6692 = vld [vmem:[%s6656 + $0x8c] sm:$0xf]
      %v6693 = vld [vmem:[%s6656 + $0x90] sm:$0xf]
      %v6694 = vld [vmem:[%s6656 + $0x94] sm:$0xf]
      %v6695 = vld [vmem:[%s6656 + $0x98] sm:$0xf]
      %v6696 = vld [vmem:[%s6656 + $0x9c] sm:$0xf]
      %v6697 = vld [vmem:[%s6656 + $0xa0] sm:$0xf]
      %v6698 = vld [vmem:[%s6656 + $0xa4] sm:$0xf]
      %v6699 = vld [vmem:[%s6656 + $0xa8] sm:$0xf]
      %v6700 = vld [vmem:[%s6656 + $0xac] sm:$0xf]
      %v6701 = vld [vmem:[%s6656 + $0xb0] sm:$0xf]
      %v6702 = vld [vmem:[%s6656 + $0xb4] sm:$0xf]
      %v6703 = vld [vmem:[%s6656 + $0xb8] sm:$0xf]
      %v6704 = vld [vmem:[%s6656 + $0xbc] sm:$0xf]
      %v6705 = vld [vmem:[%s6656 + $0xc0] sm:$0xf]
      %v6706 = vld [vmem:[%s6656 + $0xc4] sm:$0xf]
      %v6707 = vld [vmem:[%s6656 + $0xc8] sm:$0xf]
      %v6708 = vld [vmem:[%s6656 + $0xcc] sm:$0xf]
      %v6709 = vld [vmem:[%s6656 + $0xd0] sm:$0xf]
      %v6710 = vld [vmem:[%s6656 + $0xd4] sm:$0xf]
      %v6711 = vld [vmem:[%s6656 + $0xd8] sm:$0xf]
      %v6712 = vld [vmem:[%s6656 + $0xdc] sm:$0xf]
      %v6713 = vld [vmem:[%s6656 + $0xe0] sm:$0xf]
      %v6714 = vld [vmem:[%s6656 + $0xe4] sm:$0xf]
      %v6715 = vld [vmem:[%s6656 + $0xe8] sm:$0xf]
      %v6716 = vld [vmem:[%s6656 + $0xec] sm:$0xf]
      %v6717 = vld [vmem:[%s6656 + $0xf0] sm:$0xf]
      %v6718 = vld [vmem:[%s6656 + $0xf4] sm:$0xf]
      %v6719 = vld [vmem:[%s6656 + $0xf8] sm:$0xf]
      %v6720 = vld [vmem:[%s6656 + $0xfc] sm:$0xf]
      %s6721 = scalar_lea.vmem %s4, 5
      %v6722 = vld [vmem:[%s6721] sm:$0x1]
      %v6724 = vlaneseq
      %v6725 = vshrl.u32 %v6724, 7
      %v6726 = vsub.s32 0, %v6725
      %v6727 = vrot.slane %v6722, %v6726
      %v6793 = vunpack.c.l.b16 %v6657
      %v6794 = vunpack.c.l.b16 %v6658
      %v6795 = vunpack.c.l.b16 %v6659
      %v6796 = vunpack.c.l.b16 %v6660
      %v6797 = vunpack.c.l.b16 %v6661
      %v6798 = vunpack.c.l.b16 %v6662
      %v6799 = vunpack.c.l.b16 %v6663
      %v6800 = vunpack.c.l.b16 %v6664
      %v6801 = vunpack.c.l.b16 %v6665
      %v6802 = vunpack.c.l.b16 %v6666
      %v6803 = vunpack.c.l.b16 %v6667
      %v6804 = vunpack.c.l.b16 %v6668
      %v6805 = vunpack.c.l.b16 %v6669
      %v6806 = vunpack.c.l.b16 %v6670
      %v6807 = vunpack.c.l.b16 %v6671
      %v6808 = vunpack.c.l.b16 %v6672
      %v6809 = vunpack.c.l.b16 %v6673
      %v6810 = vunpack.c.l.b16 %v6674
      %v6811 = vunpack.c.l.b16 %v6675
      %v6812 = vunpack.c.l.b16 %v6676
      %v6813 = vunpack.c.l.b16 %v6677
      %v6814 = vunpack.c.l.b16 %v6678
      %v6815 = vunpack.c.l.b16 %v6679
      %v6816 = vunpack.c.l.b16 %v6680
      %v6817 = vunpack.c.l.b16 %v6681
      %v6818 = vunpack.c.l.b16 %v6682
      %v6819 = vunpack.c.l.b16 %v6683
      %v6820 = vunpack.c.l.b16 %v6684
      %v6821 = vunpack.c.l.b16 %v6685
      %v6822 = vunpack.c.l.b16 %v6686
      %v6823 = vunpack.c.l.b16 %v6687
      %v6824 = vunpack.c.l.b16 %v6688
      %v6825 = vunpack.c.l.b16 %v6689
      %v6826 = vunpack.c.l.b16 %v6690
      %v6827 = vunpack.c.l.b16 %v6691
      %v6828 = vunpack.c.l.b16 %v6692
      %v6829 = vunpack.c.l.b16 %v6693
      %v6830 = vunpack.c.l.b16 %v6694
      %v6831 = vunpack.c.l.b16 %v6695
      %v6832 = vunpack.c.l.b16 %v6696
      %v6833 = vunpack.c.l.b16 %v6697
      %v6834 = vunpack.c.l.b16 %v6698
      %v6835 = vunpack.c.l.b16 %v6699
      %v6836 = vunpack.c.l.b16 %v6700
      %v6837 = vunpack.c.l.b16 %v6701
      %v6838 = vunpack.c.l.b16 %v6702
      %v6839 = vunpack.c.l.b16 %v6703
      %v6840 = vunpack.c.l.b16 %v6704
      %v6841 = vunpack.c.l.b16 %v6705
      %v6842 = vunpack.c.l.b16 %v6706
      %v6843 = vunpack.c.l.b16 %v6707
      %v6844 = vunpack.c.l.b16 %v6708
      %v6845 = vunpack.c.l.b16 %v6709
      %v6846 = vunpack.c.l.b16 %v6710
      %v6847 = vunpack.c.l.b16 %v6711
      %v6848 = vunpack.c.l.b16 %v6712
      %v6849 = vunpack.c.l.b16 %v6713
      %v6850 = vunpack.c.l.b16 %v6714
      %v6851 = vunpack.c.l.b16 %v6715
      %v6852 = vunpack.c.l.b16 %v6716
      %v6853 = vunpack.c.l.b16 %v6717
      %v6854 = vunpack.c.l.b16 %v6718
      %v6855 = vunpack.c.l.b16 %v6719
      %v6856 = vunpack.c.l.b16 %v6720
      %v6857 = vpack.c.b16 %v6794, %v6793
      %v6858 = vpack.c.b16 %v6796, %v6795
      %v6859 = vpack.c.b16 %v6798, %v6797
      %v6860 = vpack.c.b16 %v6800, %v6799
      %v6861 = vpack.c.b16 %v6802, %v6801
      %v6862 = vpack.c.b16 %v6804, %v6803
      %v6863 = vpack.c.b16 %v6806, %v6805
      %v6864 = vpack.c.b16 %v6808, %v6807
      %v6865 = vpack.c.b16 %v6810, %v6809
      %v6866 = vpack.c.b16 %v6812, %v6811
      %v6867 = vpack.c.b16 %v6814, %v6813
      %v6868 = vpack.c.b16 %v6816, %v6815
      %v6869 = vpack.c.b16 %v6818, %v6817
      %v6870 = vpack.c.b16 %v6820, %v6819
      %v6871 = vpack.c.b16 %v6822, %v6821
      %v6872 = vpack.c.b16 %v6824, %v6823
      %v6873 = vpack.c.b16 %v6826, %v6825
      %v6874 = vpack.c.b16 %v6828, %v6827
      %v6875 = vpack.c.b16 %v6830, %v6829
      %v6876 = vpack.c.b16 %v6832, %v6831
      %v6877 = vpack.c.b16 %v6834, %v6833
      %v6878 = vpack.c.b16 %v6836, %v6835
      %v6879 = vpack.c.b16 %v6838, %v6837
      %v6880 = vpack.c.b16 %v6840, %v6839
      %v6881 = vpack.c.b16 %v6842, %v6841
      %v6882 = vpack.c.b16 %v6844, %v6843
      %v6883 = vpack.c.b16 %v6846, %v6845
      %v6884 = vpack.c.b16 %v6848, %v6847
      %v6885 = vpack.c.b16 %v6850, %v6849
      %v6886 = vpack.c.b16 %v6852, %v6851
      %v6887 = vpack.c.b16 %v6854, %v6853
      %v6888 = vpack.c.b16 %v6856, %v6855
      %6921 = vmatprep.subr.bf16.mxu0 0
      %6922 = vmatpush1.bf16.msra.mxu0 %v6857
      %6923 = vmatprep.subr.bf16.mxu0 0
      %6924 = vmatpush1.bf16.msra.mxu0 %v6858
      %6925 = vmatprep.subr.bf16.mxu0 0
      %6926 = vmatpush1.bf16.msra.mxu0 %v6859
      %6927 = vmatprep.subr.bf16.mxu0 0
      %6928 = vmatpush1.bf16.msra.mxu0 %v6860
      %6929 = vmatprep.subr.bf16.mxu0 0
      %6930 = vmatpush1.bf16.msra.mxu0 %v6861
      %6931 = vmatprep.subr.bf16.mxu0 0
      %6932 = vmatpush1.bf16.msra.mxu0 %v6862
      %6933 = vmatprep.subr.bf16.mxu0 0
      %6934 = vmatpush1.bf16.msra.mxu0 %v6863
      %6935 = vmatprep.subr.bf16.mxu0 0
      %6936 = vmatpush1.bf16.msra.mxu0 %v6864
      %6937 = vmatprep.subr.bf16.mxu0 0
      %6938 = vmatpush1.bf16.msra.mxu0 %v6865
      %6939 = vmatprep.subr.bf16.mxu0 0
      %6940 = vmatpush1.bf16.msra.mxu0 %v6866
      %6941 = vmatprep.subr.bf16.mxu0 0
      %6942 = vmatpush1.bf16.msra.mxu0 %v6867
      %6943 = vmatprep.subr.bf16.mxu0 0
      %6944 = vmatpush1.bf16.msra.mxu0 %v6868
      %6945 = vmatprep.subr.bf16.mxu0 0
      %6946 = vmatpush1.bf16.msra.mxu0 %v6869
      %6947 = vmatprep.subr.bf16.mxu0 0
      %6948 = vmatpush1.bf16.msra.mxu0 %v6870
      %6949 = vmatprep.subr.bf16.mxu0 0
      %6950 = vmatpush1.bf16.msra.mxu0 %v6871
      %6951 = vmatprep.subr.bf16.mxu0 0
      %6952 = vmatpush1.bf16.msra.mxu0 %v6872
      %6953 = vmatprep.mubr.bf16.mxu0 %v6593
      %6954 = vmatmul.mubr.bf16.gmra.mrb[0].mxu0 %v6592
      %v6955 = vpop.f32.mrb[0].mxu0
      %v6956 = vadd.f32 %v6727, %v6955
      %v6957 = vpop.f32.mrb[0].mxu0
      %v6958 = vpop.f32.mrb[0].mxu0
      %v6959 = vadd.f32 %v6727, %v6958
      %v6960 = vpop.f32.mrb[0].mxu0
      %6961 = vmatprep.mubr.bf16.mxu0 %v6597
      %6962 = vmatmul.mubr.bf16.gmra.mrb[0].mxu0 %v6596
      %v6963 = vpop.f32.mrb[0].mxu0
      %v6964 = vadd.f32 %v6727, %v6963
      %v6965 = vpop.f32.mrb[0].mxu0
      %v6966 = vpop.f32.mrb[0].mxu0
      %v6967 = vadd.f32 %v6727, %v6966
      %v6968 = vpop.f32.mrb[0].mxu0
      %6969 = vmatprep.mubr.bf16.mxu0 %v6601
      %6970 = vmatmul.mubr.bf16.gmra.mrb[0].mxu0 %v6600
      %v6971 = vpop.f32.mrb[0].mxu0
      %v6972 = vadd.f32 %v6727, %v6971
      %v6973 = vpop.f32.mrb[0].mxu0
      %v6974 = vpop.f32.mrb[0].mxu0
      %v6975 = vadd.f32 %v6727, %v6974
      %v6976 = vpop.f32.mrb[0].mxu0
      %6977 = vmatprep.mubr.bf16.mxu0 %v6605
      %6978 = vmatmul.mubr.bf16.gmra.mrb[0].mxu0 %v6604
      %v6979 = vpop.f32.mrb[0].mxu0
      %v6980 = vadd.f32 %v6727, %v6979
      %v6981 = vpop.f32.mrb[0].mxu0
      %v6982 = vpop.f32.mrb[0].mxu0
      %v6983 = vadd.f32 %v6727, %v6982
      %v6984 = vpop.f32.mrb[0].mxu0
      %6985 = vmatprep.mubr.bf16.mxu0 %v6609
      %6986 = vmatmul.mubr.bf16.gmra.mrb[0].mxu0 %v6608
      %v6987 = vpop.f32.mrb[0].mxu0
      %v6988 = vadd.f32 %v6727, %v6987
      %v6989 = vpop.f32.mrb[0].mxu0
      %v6990 = vpop.f32.mrb[0].mxu0
      %v6991 = vadd.f32 %v6727, %v6990
      %v6992 = vpop.f32.mrb[0].mxu0
      %6993 = vmatprep.mubr.bf16.mxu0 %v6613
      %6994 = vmatmul.mubr.bf16.gmra.mrb[0].mxu0 %v6612
      %v6995 = vpop.f32.mrb[0].mxu0
      %v6996 = vadd.f32 %v6727, %v6995
      %v6997 = vpop.f32.mrb[0].mxu0
      %v6998 = vpop.f32.mrb[0].mxu0
      %v6999 = vadd.f32 %v6727, %v6998
      %v7000 = vpop.f32.mrb[0].mxu0
      %7001 = vmatprep.mubr.bf16.mxu0 %v6617
      %7002 = vmatmul.mubr.bf16.gmra.mrb[0].mxu0 %v6616
      %v7003 = vpop.f32.mrb[0].mxu0
      %v7004 = vadd.f32 %v6727, %v7003
      %v7005 = vpop.f32.mrb[0].mxu0
      %v7006 = vpop.f32.mrb[0].mxu0
      %v7007 = vadd.f32 %v6727, %v7006
      %v7008 = vpop.f32.mrb[0].mxu0
      %7009 = vmatprep.mubr.bf16.mxu0 %v6621
      %7010 = vmatmul.mubr.bf16.gmra.mrb[0].mxu0 %v6620
      %v7011 = vpop.f32.mrb[0].mxu0
      %v7012 = vadd.f32 %v6727, %v7011
      %v7013 = vpop.f32.mrb[0].mxu0
      %v7014 = vpop.f32.mrb[0].mxu0
      %v7015 = vadd.f32 %v6727, %v7014
      %v7016 = vpop.f32.mrb[0].mxu0
      %7017 = vmatprep.mubr.bf16.mxu0 %v6625
      %7018 = vmatmul.mubr.bf16.gmra.mrb[0].mxu0 %v6624
      %v7019 = vpop.f32.mrb[0].mxu0
      %v7020 = vadd.f32 %v6727, %v7019
      %v7021 = vpop.f32.mrb[0].mxu0
      %v7022 = vpop.f32.mrb[0].mxu0
      %v7023 = vadd.f32 %v6727, %v7022
      %v7024 = vpop.f32.mrb[0].mxu0
      %7025 = vmatprep.mubr.bf16.mxu0 %v6629
      %7026 = vmatmul.mubr.bf16.gmra.mrb[0].mxu0 %v6628
      %v7027 = vpop.f32.mrb[0].mxu0
      %v7028 = vadd.f32 %v6727, %v7027
      %v7029 = vpop.f32.mrb[0].mxu0
      %v7030 = vpop.f32.mrb[0].mxu0
      %v7031 = vadd.f32 %v6727, %v7030
      %v7032 = vpop.f32.mrb[0].mxu0
      %7033 = vmatprep.mubr.bf16.mxu0 %v6633
      %7034 = vmatmul.mubr.bf16.gmra.mrb[0].mxu0 %v6632
      %v7035 = vpop.f32.mrb[0].mxu0
      %v7036 = vadd.f32 %v6727, %v7035
      %v7037 = vpop.f32.mrb[0].mxu0
      %v7038 = vpop.f32.mrb[0].mxu0
      %v7039 = vadd.f32 %v6727, %v7038
      %v7040 = vpop.f32.mrb[0].mxu0
      %7041 = vmatprep.mubr.bf16.mxu0 %v6637
      %7042 = vmatmul.mubr.bf16.gmra.mrb[0].mxu0 %v6636
      %v7043 = vpop.f32.mrb[0].mxu0
      %v7044 = vadd.f32 %v6727, %v7043
      %v7045 = vpop.f32.mrb[0].mxu0
      %v7046 = vpop.f32.mrb[0].mxu0
      %v7047 = vadd.f32 %v6727, %v7046
      %v7048 = vpop.f32.mrb[0].mxu0
      %7049 = vmatprep.mubr.bf16.mxu0 %v6641
      %7050 = vmatmul.mubr.bf16.gmra.mrb[0].mxu0 %v6640
      %v7051 = vpop.f32.mrb[0].mxu0
      %v7052 = vadd.f32 %v6727, %v7051
      %v7053 = vpop.f32.mrb[0].mxu0
      %v7054 = vpop.f32.mrb[0].mxu0
      %v7055 = vadd.f32 %v6727, %v7054
      %v7056 = vpop.f32.mrb[0].mxu0
      %7057 = vmatprep.mubr.bf16.mxu0 %v6645
      %7058 = vmatmul.mubr.bf16.gmra.mrb[0].mxu0 %v6644
      %v7059 = vpop.f32.mrb[0].mxu0
      %v7060 = vadd.f32 %v6727, %v7059
      %v7061 = vpop.f32.mrb[0].mxu0
      %v7062 = vpop.f32.mrb[0].mxu0
      %v7063 = vadd.f32 %v6727, %v7062
      %v7064 = vpop.f32.mrb[0].mxu0
      %7065 = vmatprep.mubr.bf16.mxu0 %v6649
      %7066 = vmatmul.mubr.bf16.gmra.mrb[0].mxu0 %v6648
      %v7067 = vpop.f32.mrb[0].mxu0
      %v7068 = vadd.f32 %v6727, %v7067
      %v7069 = vpop.f32.mrb[0].mxu0
      %v7070 = vpop.f32.mrb[0].mxu0
      %v7071 = vadd.f32 %v6727, %v7070
      %v7072 = vpop.f32.mrb[0].mxu0
      %7073 = vmatprep.mubr.bf16.mxu0 %v6653
      %7074 = vmatmul.mubr.bf16.gmra.mrb[0].mxu0 %v6652
      %v7075 = vpop.f32.mrb[0].mxu0
      %v7076 = vadd.f32 %v6727, %v7075
      %v7077 = vpop.f32.mrb[0].mxu0
      %v7078 = vpop.f32.mrb[0].mxu0
      %v7079 = vadd.f32 %v6727, %v7078
      %v7080 = vpop.f32.mrb[0].mxu0
      %7081 = vdwg.mxu0
      %7082 = vmatprep.subr.bf16.mxu0 0
      %7083 = vmatpush1.bf16.msra.mxu0 %v6873
      %7084 = vmatprep.subr.bf16.mxu0 0
      %7085 = vmatpush1.bf16.msra.mxu0 %v6874
      %7086 = vmatprep.subr.bf16.mxu0 0
      %7087 = vmatpush1.bf16.msra.mxu0 %v6875
      %7088 = vmatprep.subr.bf16.mxu0 0
      %7089 = vmatpush1.bf16.msra.mxu0 %v6876
      %7090 = vmatprep.subr.bf16.mxu0 0
      %7091 = vmatpush1.bf16.msra.mxu0 %v6877
      %7092 = vmatprep.subr.bf16.mxu0 0
      %7093 = vmatpush1.bf16.msra.mxu0 %v6878
      %7094 = vmatprep.subr.bf16.mxu0 0
      %7095 = vmatpush1.bf16.msra.mxu0 %v6879
      %7096 = vmatprep.subr.bf16.mxu0 0
      %7097 = vmatpush1.bf16.msra.mxu0 %v6880
      %7098 = vmatprep.subr.bf16.mxu0 0
      %7099 = vmatpush1.bf16.msra.mxu0 %v6881
      %7100 = vmatprep.subr.bf16.mxu0 0
      %7101 = vmatpush1.bf16.msra.mxu0 %v6882
      %7102 = vmatprep.subr.bf16.mxu0 0
      %7103 = vmatpush1.bf16.msra.mxu0 %v6883
      %7104 = vmatprep.subr.bf16.mxu0 0
      %7105 = vmatpush1.bf16.msra.mxu0 %v6884
      %7106 = vmatprep.subr.bf16.mxu0 0
      %7107 = vmatpush1.bf16.msra.mxu0 %v6885
      %7108 = vmatprep.subr.bf16.mxu0 0
      %7109 = vmatpush1.bf16.msra.mxu0 %v6886
      %7110 = vmatprep.subr.bf16.mxu0 0
      %7111 = vmatpush1.bf16.msra.mxu0 %v6887
      %7112 = vmatprep.subr.bf16.mxu0 0
      %7113 = vmatpush1.bf16.msra.mxu0 %v6888
      %7114 = vmatprep.mubr.bf16.mxu0 %v6595
      %7115 = vmatmul.mubr.bf16.gmra.mrb[0].mxu0 %v6594
      %v7116 = vpop.f32.mrb[0].mxu0
      %v7117 = vadd.f32 %v6956, %v7116
      %v7118 = vpop.f32.mrb[0].mxu0
      %v7119 = vpop.f32.mrb[0].mxu0
      %v7120 = vadd.f32 %v6959, %v7119
      %v7121 = vpop.f32.mrb[0].mxu0
      %7122 = vmatprep.mubr.bf16.mxu0 %v6599
      %7123 = vmatmul.mubr.bf16.gmra.mrb[0].mxu0 %v6598
      %v7124 = vpop.f32.mrb[0].mxu0
      %v7125 = vadd.f32 %v6964, %v7124
      %v7126 = vpop.f32.mrb[0].mxu0
      %v7127 = vpop.f32.mrb[0].mxu0
      %v7128 = vadd.f32 %v6967, %v7127
      %v7129 = vpop.f32.mrb[0].mxu0
      %7130 = vmatprep.mubr.bf16.mxu0 %v6603
      %7131 = vmatmul.mubr.bf16.gmra.mrb[0].mxu0 %v6602
      %v7132 = vpop.f32.mrb[0].mxu0
      %v7133 = vadd.f32 %v6972, %v7132
      %v7134 = vpop.f32.mrb[0].mxu0
      %v7135 = vpop.f32.mrb[0].mxu0
      %v7136 = vadd.f32 %v6975, %v7135
      %v7137 = vpop.f32.mrb[0].mxu0
      %7138 = vmatprep.mubr.bf16.mxu0 %v6607
      %7139 = vmatmul.mubr.bf16.gmra.mrb[0].mxu0 %v6606
      %v7140 = vpop.f32.mrb[0].mxu0
      %v7141 = vadd.f32 %v6980, %v7140
      %v7142 = vpop.f32.mrb[0].mxu0
      %v7143 = vpop.f32.mrb[0].mxu0
      %v7144 = vadd.f32 %v6983, %v7143
      %v7145 = vpop.f32.mrb[0].mxu0
      %7146 = vmatprep.mubr.bf16.mxu0 %v6611
      %7147 = vmatmul.mubr.bf16.gmra.mrb[0].mxu0 %v6610
      %v7148 = vpop.f32.mrb[0].mxu0
      %v7149 = vadd.f32 %v6988, %v7148
      %v7150 = vpop.f32.mrb[0].mxu0
      %v7151 = vpop.f32.mrb[0].mxu0
      %v7152 = vadd.f32 %v6991, %v7151
      %v7153 = vpop.f32.mrb[0].mxu0
      %7154 = vmatprep.mubr.bf16.mxu0 %v6615
      %7155 = vmatmul.mubr.bf16.gmra.mrb[0].mxu0 %v6614
      %v7156 = vpop.f32.mrb[0].mxu0
      %v7157 = vadd.f32 %v6996, %v7156
      %v7158 = vpop.f32.mrb[0].mxu0
      %v7159 = vpop.f32.mrb[0].mxu0
      %v7160 = vadd.f32 %v6999, %v7159
      %v7161 = vpop.f32.mrb[0].mxu0
      %7162 = vmatprep.mubr.bf16.mxu0 %v6619
      %7163 = vmatmul.mubr.bf16.gmra.mrb[0].mxu0 %v6618
      %v7164 = vpop.f32.mrb[0].mxu0
      %v7165 = vadd.f32 %v7004, %v7164
      %v7166 = vpop.f32.mrb[0].mxu0
      %v7167 = vpop.f32.mrb[0].mxu0
      %v7168 = vadd.f32 %v7007, %v7167
      %v7169 = vpop.f32.mrb[0].mxu0
      %7170 = vmatprep.mubr.bf16.mxu0 %v6623
      %7171 = vmatmul.mubr.bf16.gmra.mrb[0].mxu0 %v6622
      %v7172 = vpop.f32.mrb[0].mxu0
      %v7173 = vadd.f32 %v7012, %v7172
      %v7174 = vpop.f32.mrb[0].mxu0
      %v7175 = vpop.f32.mrb[0].mxu0
      %v7176 = vadd.f32 %v7015, %v7175
      %v7177 = vpop.f32.mrb[0].mxu0
      %7178 = vmatprep.mubr.bf16.mxu0 %v6627
      %7179 = vmatmul.mubr.bf16.gmra.mrb[0].mxu0 %v6626
      %v7180 = vpop.f32.mrb[0].mxu0
      %v7181 = vadd.f32 %v7020, %v7180
      %v7182 = vpop.f32.mrb[0].mxu0
      %v7183 = vpop.f32.mrb[0].mxu0
      %v7184 = vadd.f32 %v7023, %v7183
      %v7185 = vpop.f32.mrb[0].mxu0
      %7186 = vmatprep.mubr.bf16.mxu0 %v6631
      %7187 = vmatmul.mubr.bf16.gmra.mrb[0].mxu0 %v6630
      %v7188 = vpop.f32.mrb[0].mxu0
      %v7189 = vadd.f32 %v7028, %v7188
      %v7190 = vpop.f32.mrb[0].mxu0
      %v7191 = vpop.f32.mrb[0].mxu0
      %v7192 = vadd.f32 %v7031, %v7191
      %v7193 = vpop.f32.mrb[0].mxu0
      %7194 = vmatprep.mubr.bf16.mxu0 %v6635
      %7195 = vmatmul.mubr.bf16.gmra.mrb[0].mxu0 %v6634
      %v7196 = vpop.f32.mrb[0].mxu0
      %v7197 = vadd.f32 %v7036, %v7196
      %v7198 = vpop.f32.mrb[0].mxu0
      %v7199 = vpop.f32.mrb[0].mxu0
      %v7200 = vadd.f32 %v7039, %v7199
      %v7201 = vpop.f32.mrb[0].mxu0
      %7202 = vmatprep.mubr.bf16.mxu0 %v6639
      %7203 = vmatmul.mubr.bf16.gmra.mrb[0].mxu0 %v6638
      %v7204 = vpop.f32.mrb[0].mxu0
      %v7205 = vadd.f32 %v7044, %v7204
      %v7206 = vpop.f32.mrb[0].mxu0
      %v7207 = vpop.f32.mrb[0].mxu0
      %v7208 = vadd.f32 %v7047, %v7207
      %v7209 = vpop.f32.mrb[0].mxu0
      %7210 = vmatprep.mubr.bf16.mxu0 %v6643
      %7211 = vmatmul.mubr.bf16.gmra.mrb[0].mxu0 %v6642
      %v7212 = vpop.f32.mrb[0].mxu0
      %v7213 = vadd.f32 %v7052, %v7212
      %v7214 = vpop.f32.mrb[0].mxu0
      %v7215 = vpop.f32.mrb[0].mxu0
      %v7216 = vadd.f32 %v7055, %v7215
      %v7217 = vpop.f32.mrb[0].mxu0
      %7218 = vmatprep.mubr.bf16.mxu0 %v6647
      %7219 = vmatmul.mubr.bf16.gmra.mrb[0].mxu0 %v6646
      %v7220 = vpop.f32.mrb[0].mxu0
      %v7221 = vadd.f32 %v7060, %v7220
      %v7222 = vpop.f32.mrb[0].mxu0
      %v7223 = vpop.f32.mrb[0].mxu0
      %v7224 = vadd.f32 %v7063, %v7223
      %v7225 = vpop.f32.mrb[0].mxu0
      %7226 = vmatprep.mubr.bf16.mxu0 %v6651
      %7227 = vmatmul.mubr.bf16.gmra.mrb[0].mxu0 %v6650
      %v7228 = vpop.f32.mrb[0].mxu0
      %v7229 = vadd.f32 %v7068, %v7228
      %v7230 = vpop.f32.mrb[0].mxu0
      %v7231 = vpop.f32.mrb[0].mxu0
      %v7232 = vadd.f32 %v7071, %v7231
      %v7233 = vpop.f32.mrb[0].mxu0
      %7234 = vmatprep.mubr.bf16.mxu0 %v6655
      %7235 = vmatmul.mubr.bf16.gmra.mrb[0].mxu0 %v6654
      %v7236 = vpop.f32.mrb[0].mxu0
      %v7237 = vadd.f32 %v7076, %v7236
      %v7238 = vpop.f32.mrb[0].mxu0
      %v7239 = vpop.f32.mrb[0].mxu0
      %v7240 = vadd.f32 %v7079, %v7239
      %v7241 = vpop.f32.mrb[0].mxu0
      %7242 = vdwg.mxu0
      %v7243 = vxor.u32 %v7117, 2147483648
      %v7244 = vxor.u32 %v7120, 2147483648
      %v7245 = vxor.u32 %v7125, 2147483648
      %v7246 = vxor.u32 %v7128, 2147483648
      %v7247 = vxor.u32 %v7133, 2147483648
      %v7248 = vxor.u32 %v7136, 2147483648
      %v7249 = vxor.u32 %v7141, 2147483648
      %v7250 = vxor.u32 %v7144, 2147483648
      %v7251 = vxor.u32 %v7149, 2147483648
      %v7252 = vxor.u32 %v7152, 2147483648
      %v7253 = vxor.u32 %v7157, 2147483648
      %v7254 = vxor.u32 %v7160, 2147483648
      %v7255 = vxor.u32 %v7165, 2147483648
      %v7256 = vxor.u32 %v7168, 2147483648
      %v7257 = vxor.u32 %v7173, 2147483648
      %v7258 = vxor.u32 %v7176, 2147483648
      %v7259 = vxor.u32 %v7181, 2147483648
      %v7260 = vxor.u32 %v7184, 2147483648
      %v7261 = vxor.u32 %v7189, 2147483648
      %v7262 = vxor.u32 %v7192, 2147483648
      %v7263 = vxor.u32 %v7197, 2147483648
      %v7264 = vxor.u32 %v7200, 2147483648
      %v7265 = vxor.u32 %v7205, 2147483648
      %v7266 = vxor.u32 %v7208, 2147483648
      %v7267 = vxor.u32 %v7213, 2147483648
      %v7268 = vxor.u32 %v7216, 2147483648
      %v7269 = vxor.u32 %v7221, 2147483648
      %v7270 = vxor.u32 %v7224, 2147483648
      %v7271 = vxor.u32 %v7229, 2147483648
      %v7272 = vxor.u32 %v7232, 2147483648
      %v7273 = vxor.u32 %v7237, 2147483648
      %v7274 = vxor.u32 %v7240, 2147483648
      %v7275 = vmul.f32 %v7243, 1.442695
      %v7276 = vpow.pop %v7275
      %v7277 = vmul.f32 %v7244, 1.442695
      %v7278 = vpow.pop %v7277
      %v7279 = vmul.f32 %v7245, 1.442695
      %v7280 = vpow.pop %v7279
      %v7281 = vmul.f32 %v7246, 1.442695
      %v7282 = vpow.pop %v7281
      %v7283 = vmul.f32 %v7247, 1.442695
      %v7284 = vpow.pop %v7283
      %v7285 = vmul.f32 %v7248, 1.442695
      %v7286 = vpow.pop %v7285
      %v7287 = vmul.f32 %v7249, 1.442695
      %v7288 = vpow.pop %v7287
      %v7289 = vmul.f32 %v7250, 1.442695
      %v7290 = vpow.pop %v7289
      %v7291 = vmul.f32 %v7251, 1.442695
      %v7292 = vpow.pop %v7291
      %v7293 = vmul.f32 %v7252, 1.442695
      %v7294 = vpow.pop %v7293
      %v7295 = vmul.f32 %v7253, 1.442695
      %v7296 = vpow.pop %v7295
      %v7297 = vmul.f32 %v7254, 1.442695
      %v7298 = vpow.pop %v7297
      %v7299 = vmul.f32 %v7255, 1.442695
      %v7300 = vpow.pop %v7299
      %v7301 = vmul.f32 %v7256, 1.442695
      %v7302 = vpow.pop %v7301
      %v7303 = vmul.f32 %v7257, 1.442695
      %v7304 = vpow.pop %v7303
      %v7305 = vmul.f32 %v7258, 1.442695
      %v7306 = vpow.pop %v7305
      %v7307 = vmul.f32 %v7259, 1.442695
      %v7308 = vpow.pop %v7307
      %v7309 = vmul.f32 %v7260, 1.442695
      %v7310 = vpow.pop %v7309
      %v7311 = vmul.f32 %v7261, 1.442695
      %v7312 = vpow.pop %v7311
      %v7313 = vmul.f32 %v7262, 1.442695
      %v7314 = vpow.pop %v7313
      %v7315 = vmul.f32 %v7263, 1.442695
      %v7316 = vpow.pop %v7315
      %v7317 = vmul.f32 %v7264, 1.442695
      %v7318 = vpow.pop %v7317
      %v7319 = vmul.f32 %v7265, 1.442695
      %v7320 = vpow.pop %v7319
      %v7321 = vmul.f32 %v7266, 1.442695
      %v7322 = vpow.pop %v7321
      %v7323 = vmul.f32 %v7267, 1.442695
      %v7324 = vpow.pop %v7323
      %v7325 = vmul.f32 %v7268, 1.442695
      %v7326 = vpow.pop %v7325
      %v7327 = vmul.f32 %v7269, 1.442695
      %v7328 = vpow.pop %v7327
      %v7329 = vmul.f32 %v7270, 1.442695
      %v7330 = vpow.pop %v7329
      %v7331 = vmul.f32 %v7271, 1.442695
      %v7332 = vpow.pop %v7331
      %v7333 = vmul.f32 %v7272, 1.442695
      %v7334 = vpow.pop %v7333
      %v7335 = vmul.f32 %v7273, 1.442695
      %v7336 = vpow.pop %v7335
      %v7337 = vmul.f32 %v7274, 1.442695
      %v7338 = vpow.pop %v7337
      %v7339 = vadd.f32 %v7276, 1.0
      %v7340 = vadd.f32 %v7278, 1.0
      %v7341 = vadd.f32 %v7280, 1.0
      %v7342 = vadd.f32 %v7282, 1.0
      %v7343 = vadd.f32 %v7284, 1.0
      %v7344 = vadd.f32 %v7286, 1.0
      %v7345 = vadd.f32 %v7288, 1.0
      %v7346 = vadd.f32 %v7290, 1.0
      %v7347 = vadd.f32 %v7292, 1.0
      %v7348 = vadd.f32 %v7294, 1.0
      %v7349 = vadd.f32 %v7296, 1.0
      %v7350 = vadd.f32 %v7298, 1.0
      %v7351 = vadd.f32 %v7300, 1.0
      %v7352 = vadd.f32 %v7302, 1.0
      %v7353 = vadd.f32 %v7304, 1.0
      %v7354 = vadd.f32 %v7306, 1.0
      %v7355 = vadd.f32 %v7308, 1.0
      %v7356 = vadd.f32 %v7310, 1.0
      %v7357 = vadd.f32 %v7312, 1.0
      %v7358 = vadd.f32 %v7314, 1.0
      %v7359 = vadd.f32 %v7316, 1.0
      %v7360 = vadd.f32 %v7318, 1.0
      %v7361 = vadd.f32 %v7320, 1.0
      %v7362 = vadd.f32 %v7322, 1.0
      %v7363 = vadd.f32 %v7324, 1.0
      %v7364 = vadd.f32 %v7326, 1.0
      %v7365 = vadd.f32 %v7328, 1.0
      %v7366 = vadd.f32 %v7330, 1.0
      %v7367 = vadd.f32 %v7332, 1.0
      %v7368 = vadd.f32 %v7334, 1.0
      %v7369 = vadd.f32 %v7336, 1.0
      %v7370 = vadd.f32 %v7338, 1.0
      %v7371 = vrcp.pop %v7339
      %v7372 = vmul.f32 1.0, %v7371
      %v7373 = vrcp.pop %v7340
      %v7374 = vmul.f32 1.0, %v7373
      %v7375 = vrcp.pop %v7341
      %v7376 = vmul.f32 1.0, %v7375
      %v7377 = vrcp.pop %v7342
      %v7378 = vmul.f32 1.0, %v7377
      %v7379 = vrcp.pop %v7343
      %v7380 = vmul.f32 1.0, %v7379
      %v7381 = vrcp.pop %v7344
      %v7382 = vmul.f32 1.0, %v7381
      %v7383 = vrcp.pop %v7345
      %v7384 = vmul.f32 1.0, %v7383
      %v7385 = vrcp.pop %v7346
      %v7386 = vmul.f32 1.0, %v7385
      %v7387 = vrcp.pop %v7347
      %v7388 = vmul.f32 1.0, %v7387
      %v7389 = vrcp.pop %v7348
      %v7390 = vmul.f32 1.0, %v7389
      %v7391 = vrcp.pop %v7349
      %v7392 = vmul.f32 1.0, %v7391
      %v7393 = vrcp.pop %v7350
      %v7394 = vmul.f32 1.0, %v7393
      %v7395 = vrcp.pop %v7351
      %v7396 = vmul.f32 1.0, %v7395
      %v7397 = vrcp.pop %v7352
      %v7398 = vmul.f32 1.0, %v7397
      %v7399 = vrcp.pop %v7353
      %v7400 = vmul.f32 1.0, %v7399
      %v7401 = vrcp.pop %v7354
      %v7402 = vmul.f32 1.0, %v7401
      %v7403 = vrcp.pop %v7355
      %v7404 = vmul.f32 1.0, %v7403
      %v7405 = vrcp.pop %v7356
      %v7406 = vmul.f32 1.0, %v7405
      %v7407 = vrcp.pop %v7357
      %v7408 = vmul.f32 1.0, %v7407
      %v7409 = vrcp.pop %v7358
      %v7410 = vmul.f32 1.0, %v7409
      %v7411 = vrcp.pop %v7359
      %v7412 = vmul.f32 1.0, %v7411
      %v7413 = vrcp.pop %v7360
      %v7414 = vmul.f32 1.0, %v7413
      %v7415 = vrcp.pop %v7361
      %v7416 = vmul.f32 1.0, %v7415
      %v7417 = vrcp.pop %v7362
      %v7418 = vmul.f32 1.0, %v7417
      %v7419 = vrcp.pop %v7363
      %v7420 = vmul.f32 1.0, %v7419
      %v7421 = vrcp.pop %v7364
      %v7422 = vmul.f32 1.0, %v7421
      %v7423 = vrcp.pop %v7365
      %v7424 = vmul.f32 1.0, %v7423
      %v7425 = vrcp.pop %v7366
      %v7426 = vmul.f32 1.0, %v7425
      %v7427 = vrcp.pop %v7367
      %v7428 = vmul.f32 1.0, %v7427
      %v7429 = vrcp.pop %v7368
      %v7430 = vmul.f32 1.0, %v7429
      %v7431 = vrcp.pop %v7369
      %v7432 = vmul.f32 1.0, %v7431
      %v7433 = vrcp.pop %v7370
      %v7434 = vmul.f32 1.0, %v7433
      %7435 = vst [vmem:[%s224] sm:$0xff] %v7372
      %7436 = vst [vmem:[%s224 + $0x8] sm:$0xff] %v7374
      %7437 = vst [vmem:[%s224 + $0x10] sm:$0xff] %v7376
      %7438 = vst [vmem:[%s224 + $0x18] sm:$0xff] %v7378
      %7439 = vst [vmem:[%s224 + $0x20] sm:$0xff] %v7380
      %7440 = vst [vmem:[%s224 + $0x28] sm:$0xff] %v7382
      %7441 = vst [vmem:[%s224 + $0x30] sm:$0xff] %v7384
      %7442 = vst [vmem:[%s224 + $0x38] sm:$0xff] %v7386
      %7443 = vst [vmem:[%s224 + $0x40] sm:$0xff] %v7388
      %7444 = vst [vmem:[%s224 + $0x48] sm:$0xff] %v7390
      %7445 = vst [vmem:[%s224 + $0x50] sm:$0xff] %v7392
      %7446 = vst [vmem:[%s224 + $0x58] sm:$0xff] %v7394
      %7447 = vst [vmem:[%s224 + $0x60] sm:$0xff] %v7396
      %7448 = vst [vmem:[%s224 + $0x68] sm:$0xff] %v7398
      %7449 = vst [vmem:[%s224 + $0x70] sm:$0xff] %v7400
      %7450 = vst [vmem:[%s224 + $0x78] sm:$0xff] %v7402
      %7451 = vst [vmem:[%s224 + $0x80] sm:$0xff] %v7404
      %7452 = vst [vmem:[%s224 + $0x88] sm:$0xff] %v7406
      %7453 = vst [vmem:[%s224 + $0x90] sm:$0xff] %v7408
      %7454 = vst [vmem:[%s224 + $0x98] sm:$0xff] %v7410
      %7455 = vst [vmem:[%s224 + $0xa0] sm:$0xff] %v7412
      %7456 = vst [vmem:[%s224 + $0xa8] sm:$0xff] %v7414
      %7457 = vst [vmem:[%s224 + $0xb0] sm:$0xff] %v7416
      %7458 = vst [vmem:[%s224 + $0xb8] sm:$0xff] %v7418
      %7459 = vst [vmem:[%s224 + $0xc0] sm:$0xff] %v7420
      %7460 = vst [vmem:[%s224 + $0xc8] sm:$0xff] %v7422
      %7461 = vst [vmem:[%s224 + $0xd0] sm:$0xff] %v7424
      %7462 = vst [vmem:[%s224 + $0xd8] sm:$0xff] %v7426
      %7463 = vst [vmem:[%s224 + $0xe0] sm:$0xff] %v7428
      %7464 = vst [vmem:[%s224 + $0xe8] sm:$0xff] %v7430
      %7465 = vst [vmem:[%s224 + $0xf0] sm:$0xff] %v7432
      %7466 = vst [vmem:[%s224 + $0xf8] sm:$0xff] %v7434
      %p7467 = scmp.lt.s32.totalorder %s16, 1
      %s7468 = scalar_select %p7467, %s16, 1
      %s7469 = smul.addr %s7468, 32
      %s7470 = smul.addr %s7469, 8
      %s7471 = scalar_lea.vmem %s5, %s7470
      // Predicated region
      $region41: #{forward.1} parent=39 // pred_check
        %p7472 = pneg %p144
      $region42: #{forward.1} parent=39 // pred_check_branch
        %7474 = sbr.rel (%p7472) target = $region44
      $region43: #{forward.1} parent=39 // pred_region
        _
      $region44: #{forward.1} parent=39 // pred_fallthru
        _
    $region40: #{forward.1} parent=5 // pred_fallthru
      _
    %p7475 = scmp.le.s32.totalorder 2, %s11
    // Predicated region
    $region45: #{forward.1} parent=5 // pred_check
      %p7476 = pneg %p7475
    $region46: #{forward.1} parent=5 // pred_check_branch
      %7478 = sbr.rel (%p7476) target = $region48
    $region47: #{forward.1} parent=5 // pred_region
      %s7479 = ssub.s32 %s11, 2
      // Predicated region
      $region49: #{forward.1} parent=47 // pred_check
        %p7480 = pneg %p150
      $region50: #{forward.1} parent=47 // pred_check_branch
        %7482 = sbr.rel (%p7480) target = $region52
      $region51: #{forward.1} parent=47 // pred_region
        %p7483 = scmp.lt.s32.totalorder %s17, 1
        %s7484 = scalar_select %p7483, %s17, 1
        %s7485 = smul.addr %s7484, 32
        %s7486 = smul.addr %s7485, 8
        %s7487 = scalar_lea.vmem %s5, %s7486
      $region52: #{forward.1} parent=47 // pred_fallthru
        _
    $region48: #{forward.1} parent=5 // pred_fallthru
      _
  $region6: #{forward.1} parent=0 // loop_footer
    %s15 = sadd.s32 1, %s11
  $region7: #{forward.1} parent=0 // loop_footer_branch
    %10 = sbr.rel target = $region3
  $region8: #{forward.1} parent=0 // loop_exit
    _

</llo_original>
